<compile_context>
chip_gen: v5e
topology: v5e:2x2
jax: 0.10.0
libtpu: 0.0.40
codegen_flags: <defaults>
</compile_context>

<pallas_src>
import jax
import jax.numpy as jnp
from jax.experimental import pallas as pl
from jax.experimental.pallas import tpu as pltpu

_BN_EPS = 1e-5
_VMEM_LIMIT = 32 * 1024 * 1024  # conservative: fits every generation (v7x = 64 MiB phys)


# ----------------------------------------------------------------------------
# Tiling helpers
# ----------------------------------------------------------------------------
def _pick_tile(dim, target, align):
    """Largest tile <= target that divides dim and is a multiple of `align`
    (falls back to the full dim, which always satisfies TPU block rules)."""
    if dim <= target:
        return dim
    t = (target // align) * align
    while t >= align:
        if dim % t == 0:
            return t
        t -= align
    return dim


def _pick_row_tile(H, W, C, target_bytes=1 << 20):
    """Row-tile height for the 3x3 conv: divides H, keeps the halo tile well
    under 1 MiB, keeps TH*W sublane-aligned (multiple of 8) and leaves >= 2
    tiles when possible so the grid has parallel work to pipeline."""
    cap = max(4, H // 2)
    best = 1
    for th in range(1, min(H, cap) + 1):
        if H % th:
            continue
        if (th * W) % 8 != 0:
            continue
        if (th + 2) * (W + 2) * C * 4 > target_bytes:
            continue
        best = th
    if (best * W) % 8 != 0:   # fallback: full image (always a legal block)
        best = H
    return best


# ----------------------------------------------------------------------------
# Generic tiled matmul (+ bias, optional fused BN-apply + ReLU prologue)
# ----------------------------------------------------------------------------
def _make_matmul_kernel(fuse_act):
    def kernel(*refs):
        if fuse_act:
            x_ref, s_ref, t_ref, w_ref, b_ref, o_ref, acc_ref = refs
        else:
            x_ref, w_ref, b_ref, o_ref, acc_ref = refs

        @pl.when(pl.program_id(2) == 0)
        def _():
            acc_ref[...] = jnp.zeros_like(acc_ref)

        x = x_ref[...]
        if fuse_act:
            # fused BatchNorm-apply + ReLU of the producer layer (per channel)
            x = jnp.maximum(x * s_ref[...] + t_ref[...], 0.0)
        acc_ref[...] += jnp.dot(x, w_ref[...], preferred_element_type=jnp.float32)

        @pl.when(pl.program_id(2) == pl.num_programs(2) - 1)
        def _():
            o_ref[...] = (acc_ref[...] + b_ref[...]).astype(o_ref.dtype)

    return kernel


def matmul_bias(x, w, b, scale=None, shift=None):
    """(M, K) @ (K, N) + b, tiled over (M, N, K) with a resident fp32 VMEM
    accumulator.  If scale/shift are given, relu(x*scale + shift) is applied to
    the x block (per K-column) before the dot."""
    M, K = x.shape
    N = w.shape[1]
    TM = _pick_tile(M, 256, 8)
    TN = _pick_tile(N, 512, 128)
    TK = _pick_tile(K, 512, 128)
    fuse = scale is not None
    grid = (M // TM, N // TN, K // TK)

    in_specs = [pl.BlockSpec((TM, TK), lambda i, j, k: (i, k))]
    args = [x]
    if fuse:
        in_specs += [pl.BlockSpec((1, TK), lambda i, j, k: (0, k)),
                     pl.BlockSpec((1, TK), lambda i, j, k: (0, k))]
        args += [scale.reshape(1, K), shift.reshape(1, K)]
    in_specs += [pl.BlockSpec((TK, TN), lambda i, j, k: (k, j)),
                 pl.BlockSpec((1, TN), lambda i, j, k: (0, j))]
    args += [w, b.reshape(1, N)]

    return pl.pallas_call(
        _make_matmul_kernel(fuse),
        out_shape=jax.ShapeDtypeStruct((M, N), jnp.float32),
        grid=grid,
        in_specs=in_specs,
        out_specs=pl.BlockSpec((TM, TN), lambda i, j, k: (i, j)),
        scratch_shapes=[pltpu.VMEM((TM, TN), jnp.float32)],
        compiler_params=pltpu.CompilerParams(
            dimension_semantics=("parallel", "parallel", "arbitrary"),
            vmem_limit_bytes=_VMEM_LIMIT),
    )(*args)


# ----------------------------------------------------------------------------
# 3x3 conv (padding=1) with fused per-channel BatchNorm partial statistics
# ----------------------------------------------------------------------------
def _conv3x3_stats_kernel(x_ref, w_ref, b_ref, y_ref, s_ref):
    # x: (1, 1, TH+2, W+2, Cin)  halo row-tile of the zero-padded input
    # w: (9, Cin, Cout)          b: (1, Cout)
    # y: (1, TH*W, Cout)         s: (1, 1, 2, Cout)  per-tile sum / sum-of-squares
    th = x_ref.shape[2] - 2
    w_sp = x_ref.shape[3] - 2
    cin = x_ref.shape[4]
    cout = w_ref.shape[2]

    x = x_ref[0, 0]                                    # (TH+2, W+2, Cin)
    acc = jnp.zeros((th * w_sp, cout), jnp.float32)
    for dy in range(3):                                # in-kernel im2col:
        for dx in range(3):                            # 9 shifted MXU dots
            xs = x[dy:dy + th, dx:dx + w_sp, :].reshape(th * w_sp, cin)
            acc = acc + jnp.dot(xs, w_ref[dy * 3 + dx],
                                preferred_element_type=jnp.float32)
    y = acc + b_ref[...]
    y_ref[0] = y
    # fused partial statistics for the BatchNorm that follows (no extra HBM pass)
    s_ref[0, 0, 0:1, :] = jnp.sum(y, axis=0, keepdims=True)
    s_ref[0, 0, 1:2, :] = jnp.sum(y * y, axis=0, keepdims=True)


def _halo_row_tiles(x_nhwc, th):
    """(N,H,W,C) -> (N, T, TH+2, W+2, C): zero-padded row tiles with 1-row halo."""
    N, H, W, C = x_nhwc.shape
    xp = jnp.pad(x_nhwc, ((0, 0), (1, 1), (1, 1), (0, 0)))
    tiles = [xp[:, r * th:r * th + th + 2] for r in range(H // th)]
    return jnp.stack(tiles, axis=1)


def conv3x3_stats(x_nhwc, w9, b):
    """3x3 conv (padding=1) + bias.  Returns (y: (N, H*W, Cout), per-tile
    channel statistics: (N, T, 2, Cout))."""
    N, H, W, Cin = x_nhwc.shape
    Cout = w9.shape[2]
    th = _pick_row_tile(H, W, Cin)
    T = H // th
    TM = th * W
    xt = _halo_row_tiles(x_nhwc, th)
    return pl.pallas_call(
        _conv3x3_stats_kernel,
        out_shape=(jax.ShapeDtypeStruct((N, H * W, Cout), jnp.float32),
                   jax.ShapeDtypeStruct((N, T, 2, Cout), jnp.float32)),
        grid=(N, T),
        in_specs=[
            pl.BlockSpec((1, 1, th + 2, W + 2, Cin), lambda n, t: (n, t, 0, 0, 0)),
            pl.BlockSpec((9, Cin, Cout), lambda n, t: (0, 0, 0)),
            pl.BlockSpec((1, Cout), lambda n, t: (0, 0)),
        ],
        out_specs=(
            pl.BlockSpec((1, TM, Cout), lambda n, t: (n, t, 0)),
            pl.BlockSpec((1, 1, 2, Cout), lambda n, t: (n, t, 0, 0)),
        ),
        compiler_params=pltpu.CompilerParams(
            dimension_semantics=("parallel", "parallel"),
            vmem_limit_bytes=_VMEM_LIMIT),
    )(xt, w9, b.reshape(1, Cout))


# ----------------------------------------------------------------------------
# Elementwise BN-apply + ReLU (only used where it cannot be fused downstream,
# i.e. when the consumer is a zero-padded 3x3 conv)
# ----------------------------------------------------------------------------
def _scale_shift_relu_kernel(x_ref, s_ref, t_ref, o_ref):
    o_ref[0] = jnp.maximum(x_ref[0] * s_ref[...] + t_ref[...], 0.0)


def scale_shift_relu(x, scale, shift):
    B, M, C = x.shape
    tm = _pick_tile(M, 128, 8)
    return pl.pallas_call(
        _scale_shift_relu_kernel,
        out_shape=jax.ShapeDtypeStruct((B, M, C), jnp.float32),
        grid=(B, M // tm),
        in_specs=[
            pl.BlockSpec((1, tm, C), lambda b, t: (b, t, 0)),
            pl.BlockSpec((1, C), lambda b, t: (0, 0)),
            pl.BlockSpec((1, C), lambda b, t: (0, 0)),
        ],
        out_specs=pl.BlockSpec((1, tm, C), lambda b, t: (b, t, 0)),
        compiler_params=pltpu.CompilerParams(
            dimension_semantics=("parallel", "parallel"),
            vmem_limit_bytes=_VMEM_LIMIT),
    )(x, scale.reshape(1, C), shift.reshape(1, C))


# ----------------------------------------------------------------------------
# Layers (thin JAX glue around the Pallas kernels)
# ----------------------------------------------------------------------------
def bn_scale_shift(stats, count, gamma, beta):
    """Training-mode BatchNorm: batch statistics, biased variance, eps=1e-5."""
    s = stats.sum(axis=(0, 1))                   # (2, C) tiny reduction of partials
    mean = s[0] / count
    var = s[1] / count - mean * mean
    scale = gamma * jax.lax.rsqrt(var + _BN_EPS)
    shift = beta - mean * scale
    return scale, shift


def conv_block(x_nhwc, pa, pb):
    """conv3x3+BN+ReLU, conv3x3; returns the 2nd conv's PRE-BN output plus its
    (scale, shift) so its BN+ReLU fuses into the following matmul kernel."""
    N, H, W, _ = x_nhwc.shape
    cnt = jnp.float32(N * H * W)
    w9a, ba, ga, bta = pa
    ya, sta = conv3x3_stats(x_nhwc, w9a, ba)
    sca, sha = bn_scale_shift(sta, cnt, ga, bta)
    act_a = scale_shift_relu(ya, sca, sha)                       # (N, H*W, Ca)
    w9b, bb, gb, btb = pb
    yb, stb = conv3x3_stats(act_a.reshape(N, H, W, -1), w9b, bb)
    scb, shb = bn_scale_shift(stb, cnt, gb, btb)
    return yb, scb, shb                                          # yb: (N, H*W, Cb)


def conv_transpose_2x2(x_nmc, h, w, wcol, b4, scale=None, shift=None):
    """ConvTranspose2d(k=2, s=2) as a channel matmul + pixel-shuffle reshape.
    Optionally fuses the producer's BN-apply + ReLU as a per-channel prologue."""
    N, M, cin = x_nmc.shape
    cout = wcol.shape[1] // 4
    y = matmul_bias(x_nmc.reshape(N * M, cin), wcol, b4, scale=scale, shift=shift)
    y = y.reshape(N, h, w, 2, 2, cout).transpose(0, 1, 3, 2, 4, 5)
    return y.reshape(N, 2 * h, 2 * w, cout)                      # NHWC


def unet_decoder_forward(latent, skips, pp):
    """Matches UNetDecoder.forward (training-mode BatchNorm)."""
    enc1, enc2 = skips                                  # NCHW skips from the encoder
    N, _, H, W = enc1.shape
    h2, w2 = H // 2, W // 2
    h3, w3 = h2 // 2, w2 // 2

    # delatent: Linear + Unflatten.  The NCHW unflatten order was folded into a
    # one-time permutation of the weight columns (prepare_params), so the matmul
    # directly produces the channel-last bottleneck.
    wl_p, bl_p = pp["latent"]
    bott = matmul_bias(latent, wl_p, bl_p).reshape(N, h3 * w3, 128)

    # up_conv_2, concat with skip 2 (channel-last), conv_2 block
    up2 = conv_transpose_2x2(bott, h3, w3, *pp["up2"])                  # (N,h2,w2,64)
    x = jnp.concatenate([up2, jnp.transpose(enc2, (0, 2, 3, 1))], axis=-1)
    y2b, sc2b, sh2b = conv_block(x, pp["c2a"], pp["c2b"])

    # up_conv_1 (conv_2's last BN+ReLU fused into the matmul prologue)
    up1 = conv_transpose_2x2(y2b, h2, w2, *pp["up1"], scale=sc2b, shift=sh2b)
    x = jnp.concatenate([up1, jnp.transpose(enc1, (0, 2, 3, 1))], axis=-1)
    y1b, sc1b, sh1b = conv_block(x, pp["c1a"], pp["c1b"])

    # final 1x1 conv (conv_1's last BN+ReLU fused into the matmul prologue)
    wf, bf = pp["final"]
    out = matmul_bias(y1b.reshape(N * H * W, y1b.shape[-1]), wf, bf,
                      scale=sc1b, shift=sh1b)
    return out.reshape(N, H, W, -1).transpose(0, 3, 1, 2)               # NCHW

    # TODO(synk): BatchNorm running_mean/running_var buffer updates (training-
    # side state) are not modeled; only the forward output is reproduced.


# ----------------------------------------------------------------------------
# Parameters: PyTorch-shaped init + one-time Pallas-layout preparation
# ----------------------------------------------------------------------------
def init_params(key, latent_dim=64, out_channels=3, feat_hw=4):
    keys = iter(jax.random.split(key, 32))

    def conv_p(cin, cout):
        w = jax.random.normal(next(keys), (cout, cin, 3, 3), jnp.float32) * (2.0 / (cin * 9)) ** 0.5
        b = jax.random.normal(next(keys), (cout,), jnp.float32) * 0.01
        gamma = 1.0 + 0.1 * jax.random.normal(next(keys), (cout,), jnp.float32)
        beta = 0.1 * jax.random.normal(next(keys), (cout,), jnp.float32)
        return (w, b, gamma, beta)

    def tconv_p(cin, cout):
        w = jax.random.normal(next(keys), (cin, cout, 2, 2), jnp.float32) * (1.0 / (cin * 4)) ** 0.5
        b = jax.random.normal(next(keys), (cout,), jnp.float32) * 0.01
        return (w, b)

    F = 128 * feat_hw * feat_hw
    wl = jax.random.normal(next(keys), (F, latent_dim), jnp.float32) * (1.0 / latent_dim) ** 0.5
    bl = jax.random.normal(next(keys), (F,), jnp.float32) * 0.01
    wf = jax.random.normal(next(keys), (out_channels, 32, 1, 1), jnp.float32) * (1.0 / 32) ** 0.5
    bf = jax.random.normal(next(keys), (out_channels,), jnp.float32) * 0.01
    return {
        "latent": (wl, bl),
        "up2": tconv_p(128, 64),
        "c2a": conv_p(128, 64), "c2b": conv_p(64, 64),
        "up1": tconv_p(64, 32),
        "c1a": conv_p(64, 32), "c1b": conv_p(32, 32),
        "final": (wf, bf),
    }


def prepare_params(params, h3, w3):
    """One-time conversion of PyTorch-shaped weights into the kernel layouts
    (done outside jit so no per-call weight transposes/permutations remain)."""
    pp = {}
    wl, bl = params["latent"]                       # (F, latent_dim), F = 128*h3*w3 (NCHW order)
    L = wl.shape[1]
    wl_p = wl.T.reshape(L, 128, h3, w3).transpose(0, 2, 3, 1).reshape(L, h3 * w3 * 128)
    bl_p = bl.reshape(128, h3, w3).transpose(1, 2, 0).reshape(-1)
    pp["latent"] = (wl_p, bl_p)

    def tconv_prep(w, b):                           # (Cin, Cout, 2, 2) -> (Cin, 4*Cout)
        cin, cout = w.shape[0], w.shape[1]
        wcol = w.transpose(0, 2, 3, 1).reshape(cin, 4 * cout)
        return wcol, jnp.tile(b, 4)
    pp["up2"] = tconv_prep(*params["up2"])
    pp["up1"] = tconv_prep(*params["up1"])

    def conv_prep(w, b, gamma, beta):               # OIHW -> (9, Cin, Cout)
        cout, cin = w.shape[0], w.shape[1]
        return (w.transpose(2, 3, 1, 0).reshape(9, cin, cout), b, gamma, beta)
    for k in ("c2a", "c2b", "c1a", "c1b"):
        pp[k] = conv_prep(*params[k])

    wf, bf = params["final"]                        # (Cout, 32, 1, 1) -> (32, Cout)
    pp["final"] = (wf.reshape(wf.shape[0], wf.shape[1]).T, bf)
    return pp


# ----------------------------------------------------------------------------
# Pure-JAX reference (sanity check of the Pallas implementation)
# ----------------------------------------------------------------------------
def ref_forward(latent, skips, params):
    enc1, enc2 = skips
    N = latent.shape[0]
    H, W = enc1.shape[2], enc1.shape[3]
    h3, w3 = H // 4, W // 4
    hp = jax.lax.Precision.HIGHEST

    def conv3(x, w, b):
        y = jax.lax.conv_general_dilated(
            x, w, (1, 1), ((1, 1), (1, 1)),
            dimension_numbers=("NCHW", "OIHW", "NCHW"), precision=hp)
        return y + b[None, :, None, None]

    def bn_relu(x, gamma, beta):
        mean = x.mean(axis=(0, 2, 3), keepdims=True)
        var = x.var(axis=(0, 2, 3), keepdims=True)   # biased, PyTorch train mode
        xn = (x - mean) / jnp.sqrt(var + _BN_EPS)
        return jax.nn.relu(xn * gamma[None, :, None, None] + beta[None, :, None, None])

    def block(x, pa, pb):
        x = bn_relu(conv3(x, pa[0], pa[1]), pa[2], pa[3])
        return bn_relu(conv3(x, pb[0], pb[1]), pb[2], pb[3])

    def tconv(x, w, b):                              # ConvTranspose2d(k=2, s=2)
        n, _, h, w_ = x.shape
        cout = w.shape[1]
        y = jnp.einsum("nchw,cokl->nohkwl", x, w, precision=hp)
        return y.reshape(n, cout, 2 * h, 2 * w_) + b[None, :, None, None]

    wl, bl = params["latent"]
    bott = (jnp.dot(latent, wl.T, precision=hp) + bl).reshape(N, 128, h3, w3)
    x = tconv(bott, *params["up2"])
    x = jnp.concatenate([x, enc2], axis=1)
    x = block(x, params["c2a"], params["c2b"])
    x = tconv(x, *params["up1"])
    x = jnp.concatenate([x, enc1], axis=1)
    x = block(x, params["c1a"], params["c1b"])
    wf, bf = params["final"]
    out = jnp.einsum("nchw,oc->nohw", x, wf.reshape(wf.shape[0], wf.shape[1]),
                     precision=hp)
    return out + bf[None, :, None, None]


# ----------------------------------------------------------------------------
if __name__ == "__main__":
    key = jax.random.PRNGKey(0)
    kl, k1, k2, kp = jax.random.split(key, 4)

    # Scaled-down test: 16x16 output (module default is 224x224 -> 56x56 bottleneck)
    N, out_channels, H, W = 2, 3, 16, 16
    latent_dim = 64
    h3, w3 = H // 4, W // 4

    latent = jax.random.normal(kl, (N, latent_dim), jnp.float32)
    enc1 = jax.random.normal(k1, (N, 32, H, W), jnp.float32)            # skip 1
    enc2 = jax.random.normal(k2, (N, 64, H // 2, W // 2), jnp.float32)  # skip 2

    params = init_params(kp, latent_dim=latent_dim, out_channels=out_channels,
                         feat_hw=h3)
    pp = prepare_params(params, h3, w3)      # one-time Pallas-layout weight prep

    fwd = jax.jit(unet_decoder_forward)
    out = fwd(latent, [enc1, enc2], pp)
    jax.block_until_ready(out)
    assert out.shape == (N, out_channels, H, W)

    ref = ref_forward(latent, [enc1, enc2], params)
    err = float(jnp.max(jnp.abs(out - ref)))
    assert jnp.allclose(out, ref, rtol=1e-2, atol=1e-2), f"max abs err {err}"

    print("KERNEL_OK")
</pallas_src>

<mosaic_0001>
module attributes {stable_mosaic.version = 11 : i64} {
  func.func @kernel(%arg0: i32, %arg1: i32, %arg2: i32, %arg3: memref<32x128xf32, #tpu.memory_space<vmem>>, %arg4: memref<128x256xf32, #tpu.memory_space<vmem>>, %arg5: memref<1x256xf32, #tpu.memory_space<vmem>>, %arg6: memref<32x256xf32, #tpu.memory_space<vmem>>, %arg7: memref<32x256xf32, #tpu.memory_space<vmem>>) attributes {dimension_semantics = [#tpu.dimension_semantics<parallel>, #tpu.dimension_semantics<parallel>, #tpu.dimension_semantics<arbitrary>], iteration_bounds = array<i64: 1, 1, 1>, scalar_prefetch = 0 : i64, scratch_operands = 1 : i64, tpu.core_type = #tpu.core_type<tc>, window_params = [{transform_indices = @transform_0, window_bounds = array<i64: 32, 128>}, {transform_indices = @transform_1, window_bounds = array<i64: 128, 256>}, {transform_indices = @transform_2, window_bounds = array<i64: 1, 256>}, {transform_indices = @transform_3, window_bounds = array<i64: 32, 256>}]} {
    %c0_i32 = arith.constant 0 : i32
    %0 = arith.cmpi eq, %arg2, %c0_i32 : i32
    %1 = arith.extui %0 : i1 to i32
    %c0_i32_0 = arith.constant 0 : i32
    %2 = arith.cmpi ne, %1, %c0_i32_0 : i32
    scf.if %2 {
      %cst_10 = arith.constant 0.000000e+00 : f32
      %12 = vector.broadcast %cst_10 : f32 to vector<32x256xf32>
      %c0_11 = arith.constant 0 : index
      %c0_12 = arith.constant 0 : index
      %13 = vector.load %arg7[%c0_11, %c0_12] : memref<32x256xf32, #tpu.memory_space<vmem>>, vector<32x256xf32>
      tpu.vector_store %arg7[%c0_11, %c0_12], %12 {strides = array<i32>} : memref<32x256xf32, #tpu.memory_space<vmem>>, vector<32x256xf32>,
    } else {
    }
    %c0 = arith.constant 0 : index
    %c0_1 = arith.constant 0 : index
    %3 = vector.load %arg3[%c0, %c0_1] : memref<32x128xf32, #tpu.memory_space<vmem>>, vector<32x128xf32>
    %c0_2 = arith.constant 0 : index
    %c0_3 = arith.constant 0 : index
    %4 = vector.load %arg7[%c0_2, %c0_3] : memref<32x256xf32, #tpu.memory_space<vmem>>, vector<32x256xf32>
    %c0_4 = arith.constant 0 : index
    %c0_5 = arith.constant 0 : index
    %5 = vector.load %arg4[%c0_4, %c0_5] : memref<128x256xf32, #tpu.memory_space<vmem>>, vector<128x256xf32>
    %cst = arith.constant dense<0.000000e+00> : vector<32x256xf32>
    %6 = tpu.matmul %3, %5, %cst {dimension_numbers = #tpu.dot_dimension_numbers<[1], [0], [0], [1], [0, 0, 1, 1], [], []>} : vector<32x128xf32>, vector<128x256xf32>, vector<32x256xf32> -> vector<32x256xf32>
    %7 = arith.addf %4, %6 : vector<32x256xf32>
    %c0_6 = arith.constant 0 : index
    %c0_7 = arith.constant 0 : index
    %8 = vector.load %arg7[%c0_6, %c0_7] : memref<32x256xf32, #tpu.memory_space<vmem>>, vector<32x256xf32>
    tpu.vector_store %arg7[%c0_6, %c0_7], %7 {strides = array<i32>} : memref<32x256xf32, #tpu.memory_space<vmem>>, vector<32x256xf32>,
    %c0_i32_8 = arith.constant 0 : i32
    %9 = arith.cmpi eq, %arg2, %c0_i32_8 : i32
    %10 = arith.extui %9 : i1 to i32
    %c0_i32_9 = arith.constant 0 : i32
    %11 = arith.cmpi ne, %10, %c0_i32_9 : i32
    scf.if %11 {
      %c0_10 = arith.constant 0 : index
      %c0_11 = arith.constant 0 : index
      %12 = vector.load %arg7[%c0_10, %c0_11] : memref<32x256xf32, #tpu.memory_space<vmem>>, vector<32x256xf32>
      %c0_12 = arith.constant 0 : index
      %c0_13 = arith.constant 0 : index
      %13 = vector.load %arg5[%c0_12, %c0_13] : memref<1x256xf32, #tpu.memory_space<vmem>>, vector<1x256xf32>
      %14 = vector.broadcast %13 : vector<1x256xf32> to vector<32x256xf32>
      %15 = arith.addf %12, %14 : vector<32x256xf32>
      %c0_14 = arith.constant 0 : index
      %c0_15 = arith.constant 0 : index
      %16 = vector.load %arg6[%c0_14, %c0_15] : memref<32x256xf32, #tpu.memory_space<vmem>>, vector<32x256xf32>
      tpu.vector_store %arg6[%c0_14, %c0_15], %15 {strides = array<i32>} : memref<32x256xf32, #tpu.memory_space<vmem>>, vector<32x256xf32>,
    } else {
    }
    return
  }
  func.func @transform_0(%arg0: i32, %arg1: i32, %arg2: i32) -> (i32, i32) {
    %c0_i32 = arith.constant 0 : i32
    return %arg0, %arg2 : i32, i32
  }
  func.func @transform_1(%arg0: i32, %arg1: i32, %arg2: i32) -> (i32, i32) {
    %c0_i32 = arith.constant 0 : i32
    return %arg2, %arg1 : i32, i32
  }
  func.func @transform_2(%arg0: i32, %arg1: i32, %arg2: i32) -> (i32, i32) {
    %c0_i32 = arith.constant 0 : i32
    %c0_i32_0 = arith.constant 0 : i32
    return %c0_i32, %arg1 : i32, i32
  }
  func.func @transform_3(%arg0: i32, %arg1: i32, %arg2: i32) -> (i32, i32) {
    %c0_i32 = arith.constant 0 : i32
    return %arg0, %arg1 : i32, i32
  }
}

module attributes {stable_mosaic.version = 11 : i64} {
  func.func @kernel(%arg0: i32, %arg1: i32, %arg2: i32, %arg3: memref<2x64xf32, #tpu.memory_space<vmem>>, %arg4: memref<64x512xf32, #tpu.memory_space<vmem>>, %arg5: memref<1x512xf32, #tpu.memory_space<vmem>>, %arg6: memref<2x512xf32, #tpu.memory_space<vmem>>, %arg7: memref<2x512xf32, #tpu.memory_space<vmem>>) attributes {dimension_semantics = [#tpu.dimension_semantics<parallel>, #tpu.dimension_semantics<parallel>, #tpu.dimension_semantics<arbitrary>], iteration_bounds = array<i64: 1, 4, 1>, scalar_prefetch = 0 : i64, scratch_operands = 1 : i64, tpu.core_type = #tpu.core_type<tc>, window_params = [{transform_indices = @transform_0, window_bounds = array<i64: 2, 64>}, {transform_indices = @transform_1, window_bounds = array<i64: 64, 512>}, {transform_indices = @transform_2, window_bounds = array<i64: 1, 512>}, {transform_indices = @transform_3, window_bounds = array<i64: 2, 512>}]} {
    %c0_i32 = arith.constant 0 : i32
    %0 = arith.cmpi eq, %arg2, %c0_i32 : i32
    %1 = arith.extui %0 : i1 to i32
    %c0_i32_0 = arith.constant 0 : i32
    %2 = arith.cmpi ne, %1, %c0_i32_0 : i32
    scf.if %2 {
      %cst_10 = arith.constant 0.000000e+00 : f32
      %12 = vector.broadcast %cst_10 : f32 to vector<2x512xf32>
      %c0_11 = arith.constant 0 : index
      %c0_12 = arith.constant 0 : index
      %13 = vector.load %arg7[%c0_11, %c0_12] : memref<2x512xf32, #tpu.memory_space<vmem>>, vector<2x512xf32>
      tpu.vector_store %arg7[%c0_11, %c0_12], %12 {strides = array<i32>} : memref<2x512xf32, #tpu.memory_space<vmem>>, vector<2x512xf32>,
    } else {
    }
    %c0 = arith.constant 0 : index
    %c0_1 = arith.constant 0 : index
    %3 = vector.load %arg3[%c0, %c0_1] : memref<2x64xf32, #tpu.memory_space<vmem>>, vector<2x64xf32>
    %c0_2 = arith.constant 0 : index
    %c0_3 = arith.constant 0 : index
    %4 = vector.load %arg7[%c0_2, %c0_3] : memref<2x512xf32, #tpu.memory_space<vmem>>, vector<2x512xf32>
    %c0_4 = arith.constant 0 : index
    %c0_5 = arith.constant 0 : index
    %5 = vector.load %arg4[%c0_4, %c0_5] : memref<64x512xf32, #tpu.memory_space<vmem>>, vector<64x512xf32>
    %cst = arith.constant dense<0.000000e+00> : vector<2x512xf32>
    %6 = tpu.matmul %3, %5, %cst {dimension_numbers = #tpu.dot_dimension_numbers<[1], [0], [0], [1], [0, 0, 1, 1], [], []>} : vector<2x64xf32>, vector<64x512xf32>, vector<2x512xf32> -> vector<2x512xf32>
    %7 = arith.addf %4, %6 : vector<2x512xf32>
    %c0_6 = arith.constant 0 : index
    %c0_7 = arith.constant 0 : index
    %8 = vector.load %arg7[%c0_6, %c0_7] : memref<2x512xf32, #tpu.memory_space<vmem>>, vector<2x512xf32>
    tpu.vector_store %arg7[%c0_6, %c0_7], %7 {strides = array<i32>} : memref<2x512xf32, #tpu.memory_space<vmem>>, vector<2x512xf32>,
    %c0_i32_8 = arith.constant 0 : i32
    %9 = arith.cmpi eq, %arg2, %c0_i32_8 : i32
    %10 = arith.extui %9 : i1 to i32
    %c0_i32_9 = arith.constant 0 : i32
    %11 = arith.cmpi ne, %10, %c0_i32_9 : i32
    scf.if %11 {
      %c0_10 = arith.constant 0 : index
      %c0_11 = arith.constant 0 : index
      %12 = vector.load %arg7[%c0_10, %c0_11] : memref<2x512xf32, #tpu.memory_space<vmem>>, vector<2x512xf32>
      %c0_12 = arith.constant 0 : index
      %c0_13 = arith.constant 0 : index
      %13 = vector.load %arg5[%c0_12, %c0_13] : memref<1x512xf32, #tpu.memory_space<vmem>>, vector<1x512xf32>
      %14 = vector.broadcast %13 : vector<1x512xf32> to vector<2x512xf32>
      %15 = arith.addf %12, %14 : vector<2x512xf32>
      %c0_14 = arith.constant 0 : index
      %c0_15 = arith.constant 0 : index
      %16 = vector.load %arg6[%c0_14, %c0_15] : memref<2x512xf32, #tpu.memory_space<vmem>>, vector<2x512xf32>
      tpu.vector_store %arg6[%c0_14, %c0_15], %15 {strides = array<i32>} : memref<2x512xf32, #tpu.memory_space<vmem>>, vector<2x512xf32>,
    } else {
    }
    return
  }
  func.func @transform_0(%arg0: i32, %arg1: i32, %arg2: i32) -> (i32, i32) {
    %c0_i32 = arith.constant 0 : i32
    return %arg0, %arg2 : i32, i32
  }
  func.func @transform_1(%arg0: i32, %arg1: i32, %arg2: i32) -> (i32, i32) {
    %c0_i32 = arith.constant 0 : i32
    return %arg2, %arg1 : i32, i32
  }
  func.func @transform_2(%arg0: i32, %arg1: i32, %arg2: i32) -> (i32, i32) {
    %c0_i32 = arith.constant 0 : i32
    %c0_i32_0 = arith.constant 0 : i32
    return %c0_i32, %arg1 : i32, i32
  }
  func.func @transform_3(%arg0: i32, %arg1: i32, %arg2: i32) -> (i32, i32) {
    %c0_i32 = arith.constant 0 : i32
    return %arg0, %arg1 : i32, i32
  }
}

module attributes {stable_mosaic.version = 11 : i64} {
  func.func @_conv3x3_stats_kernel(%arg0: i32, %arg1: i32, %arg2: memref<1x1x6x10x128xf32, #tpu.memory_space<vmem>>, %arg3: memref<9x128x64xf32, #tpu.memory_space<vmem>>, %arg4: memref<1x64xf32, #tpu.memory_space<vmem>>, %arg5: memref<1x32x64xf32, #tpu.memory_space<vmem>>, %arg6: memref<1x1x2x64xf32, #tpu.memory_space<vmem>>) attributes {dimension_semantics = [#tpu.dimension_semantics<parallel>, #tpu.dimension_semantics<parallel>], iteration_bounds = array<i64: 2, 2>, scalar_prefetch = 0 : i64, scratch_operands = 0 : i64, tpu.core_type = #tpu.core_type<tc>, window_params = [{transform_indices = @transform_0, window_bounds = array<i64: 1, 1, 6, 10, 128>}, {pipeline_mode = #tpu.pipeline_mode<synchronous>, transform_indices = @transform_1, window_bounds = array<i64: 9, 128, 64>}, {pipeline_mode = #tpu.pipeline_mode<synchronous>, transform_indices = @transform_2, window_bounds = array<i64: 1, 64>}, {transform_indices = @transform_3, window_bounds = array<i64: 1, 32, 64>}, {transform_indices = @transform_4, window_bounds = array<i64: 1, 1, 2, 64>}]} {
    %c0 = arith.constant 0 : index
    %c0_0 = arith.constant 0 : index
    %c0_1 = arith.constant 0 : index
    %c0_2 = arith.constant 0 : index
    %c0_3 = arith.constant 0 : index
    %0 = vector.load %arg2[%c0, %c0_0, %c0_1, %c0_2, %c0_3] : memref<1x1x6x10x128xf32, #tpu.memory_space<vmem>>, vector<1x1x6x10x128xf32>
    %1 = vector.shape_cast %0 : vector<1x1x6x10x128xf32> to vector<6x10x128xf32>
    %cst = arith.constant 0.000000e+00 : f32
    %2 = vector.broadcast %cst : f32 to vector<32x64xf32>
    %3 = vector.extract_strided_slice %1 {offsets = [0, 0, 0], sizes = [4, 8, 128], strides = [1, 1, 1]} : vector<6x10x128xf32> to vector<4x8x128xf32>
    %4 = vector.shape_cast %3 : vector<4x8x128xf32> to vector<32x128xf32>
    %c0_4 = arith.constant 0 : index
    %c0_5 = arith.constant 0 : index
    %c0_6 = arith.constant 0 : index
    %5 = vector.load %arg3[%c0_4, %c0_5, %c0_6] : memref<9x128x64xf32, #tpu.memory_space<vmem>>, vector<1x128x64xf32>
    %6 = vector.shape_cast %5 : vector<1x128x64xf32> to vector<128x64xf32>
    %cst_7 = arith.constant dense<0.000000e+00> : vector<32x64xf32>
    %7 = tpu.matmul %4, %6, %cst_7 {dimension_numbers = #tpu.dot_dimension_numbers<[1], [0], [0], [1], [0, 0, 1, 1], [], []>} : vector<32x128xf32>, vector<128x64xf32>, vector<32x64xf32> -> vector<32x64xf32>
    %8 = arith.addf %2, %7 : vector<32x64xf32>
    %9 = vector.extract_strided_slice %1 {offsets = [0, 1, 0], sizes = [4, 8, 128], strides = [1, 1, 1]} : vector<6x10x128xf32> to vector<4x8x128xf32>
    %10 = vector.shape_cast %9 : vector<4x8x128xf32> to vector<32x128xf32>
    %c1 = arith.constant 1 : index
    %c0_8 = arith.constant 0 : index
    %c0_9 = arith.constant 0 : index
    %11 = vector.load %arg3[%c1, %c0_8, %c0_9] : memref<9x128x64xf32, #tpu.memory_space<vmem>>, vector<1x128x64xf32>
    %12 = vector.shape_cast %11 : vector<1x128x64xf32> to vector<128x64xf32>
    %cst_10 = arith.constant dense<0.000000e+00> : vector<32x64xf32>
    %13 = tpu.matmul %10, %12, %cst_10 {dimension_numbers = #tpu.dot_dimension_numbers<[1], [0], [0], [1], [0, 0, 1, 1], [], []>} : vector<32x128xf32>, vector<128x64xf32>, vector<32x64xf32> -> vector<32x64xf32>
    %14 = arith.addf %8, %13 : vector<32x64xf32>
    %15 = vector.extract_strided_slice %1 {offsets = [0, 2, 0], sizes = [4, 8, 128], strides = [1, 1, 1]} : vector<6x10x128xf32> to vector<4x8x128xf32>
    %16 = vector.shape_cast %15 : vector<4x8x128xf32> to vector<32x128xf32>
    %c2 = arith.constant 2 : index
    %c0_11 = arith.constant 0 : index
    %c0_12 = arith.constant 0 : index
    %17 = vector.load %arg3[%c2, %c0_11, %c0_12] : memref<9x128x64xf32, #tpu.memory_space<vmem>>, vector<1x128x64xf32>
    %18 = vector.shape_cast %17 : vector<1x128x64xf32> to vector<128x64xf32>
    %cst_13 = arith.constant dense<0.000000e+00> : vector<32x64xf32>
    %19 = tpu.matmul %16, %18, %cst_13 {dimension_numbers = #tpu.dot_dimension_numbers<[1], [0], [0], [1], [0, 0, 1, 1], [], []>} : vector<32x128xf32>, vector<128x64xf32>, vector<32x64xf32> -> vector<32x64xf32>
    %20 = arith.addf %14, %19 : vector<32x64xf32>
    %21 = vector.extract_strided_slice %1 {offsets = [1, 0, 0], sizes = [4, 8, 128], strides = [1, 1, 1]} : vector<6x10x128xf32> to vector<4x8x128xf32>
    %22 = vector.shape_cast %21 : vector<4x8x128xf32> to vector<32x128xf32>
    %c3 = arith.constant 3 : index
    %c0_14 = arith.constant 0 : index
    %c0_15 = arith.constant 0 : index
    %23 = vector.load %arg3[%c3, %c0_14, %c0_15] : memref<9x128x64xf32, #tpu.memory_space<vmem>>, vector<1x128x64xf32>
    %24 = vector.shape_cast %23 : vector<1x128x64xf32> to vector<128x64xf32>
    %cst_16 = arith.constant dense<0.000000e+00> : vector<32x64xf32>
    %25 = tpu.matmul %22, %24, %cst_16 {dimension_numbers = #tpu.dot_dimension_numbers<[1], [0], [0], [1], [0, 0, 1, 1], [], []>} : vector<32x128xf32>, vector<128x64xf32>, vector<32x64xf32> -> vector<32x64xf32>
    %26 = arith.addf %20, %25 : vector<32x64xf32>
    %27 = vector.extract_strided_slice %1 {offsets = [1, 1, 0], sizes = [4, 8, 128], strides = [1, 1, 1]} : vector<6x10x128xf32> to vector<4x8x128xf32>
    %28 = vector.shape_cast %27 : vector<4x8x128xf32> to vector<32x128xf32>
    %c4 = arith.constant 4 : index
    %c0_17 = arith.constant 0 : index
    %c0_18 = arith.constant 0 : index
    %29 = vector.load %arg3[%c4, %c0_17, %c0_18] : memref<9x128x64xf32, #tpu.memory_space<vmem>>, vector<1x128x64xf32>
    %30 = vector.shape_cast %29 : vector<1x128x64xf32> to vector<128x64xf32>
    %cst_19 = arith.constant dense<0.000000e+00> : vector<32x64xf32>
    %31 = tpu.matmul %28, %30, %cst_19 {dimension_numbers = #tpu.dot_dimension_numbers<[1], [0], [0], [1], [0, 0, 1, 1], [], []>} : vector<32x128xf32>, vector<128x64xf32>, vector<32x64xf32> -> vector<32x64xf32>
    %32 = arith.addf %26, %31 : vector<32x64xf32>
    %33 = vector.extract_strided_slice %1 {offsets = [1, 2, 0], sizes = [4, 8, 128], strides = [1, 1, 1]} : vector<6x10x128xf32> to vector<4x8x128xf32>
    %34 = vector.shape_cast %33 : vector<4x8x128xf32> to vector<32x128xf32>
    %c5 = arith.constant 5 : index
    %c0_20 = arith.constant 0 : index
    %c0_21 = arith.constant 0 : index
    %35 = vector.load %arg3[%c5, %c0_20, %c0_21] : memref<9x128x64xf32, #tpu.memory_space<vmem>>, vector<1x128x64xf32>
    %36 = vector.shape_cast %35 : vector<1x128x64xf32> to vector<128x64xf32>
    %cst_22 = arith.constant dense<0.000000e+00> : vector<32x64xf32>
    %37 = tpu.matmul %34, %36, %cst_22 {dimension_numbers = #tpu.dot_dimension_numbers<[1], [0], [0], [1], [0, 0, 1, 1], [], []>} : vector<32x128xf32>, vector<128x64xf32>, vector<32x64xf32> -> vector<32x64xf32>
    %38 = arith.addf %32, %37 : vector<32x64xf32>
    %39 = vector.extract_strided_slice %1 {offsets = [2, 0, 0], sizes = [4, 8, 128], strides = [1, 1, 1]} : vector<6x10x128xf32> to vector<4x8x128xf32>
    %40 = vector.shape_cast %39 : vector<4x8x128xf32> to vector<32x128xf32>
    %c6 = arith.constant 6 : index
    %c0_23 = arith.constant 0 : index
    %c0_24 = arith.constant 0 : index
    %41 = vector.load %arg3[%c6, %c0_23, %c0_24] : memref<9x128x64xf32, #tpu.memory_space<vmem>>, vector<1x128x64xf32>
    %42 = vector.shape_cast %41 : vector<1x128x64xf32> to vector<128x64xf32>
    %cst_25 = arith.constant dense<0.000000e+00> : vector<32x64xf32>
    %43 = tpu.matmul %40, %42, %cst_25 {dimension_numbers = #tpu.dot_dimension_numbers<[1], [0], [0], [1], [0, 0, 1, 1], [], []>} : vector<32x128xf32>, vector<128x64xf32>, vector<32x64xf32> -> vector<32x64xf32>
    %44 = arith.addf %38, %43 : vector<32x64xf32>
    %45 = vector.extract_strided_slice %1 {offsets = [2, 1, 0], sizes = [4, 8, 128], strides = [1, 1, 1]} : vector<6x10x128xf32> to vector<4x8x128xf32>
    %46 = vector.shape_cast %45 : vector<4x8x128xf32> to vector<32x128xf32>
    %c7 = arith.constant 7 : index
    %c0_26 = arith.constant 0 : index
    %c0_27 = arith.constant 0 : index
    %47 = vector.load %arg3[%c7, %c0_26, %c0_27] : memref<9x128x64xf32, #tpu.memory_space<vmem>>, vector<1x128x64xf32>
    %48 = vector.shape_cast %47 : vector<1x128x64xf32> to vector<128x64xf32>
    %cst_28 = arith.constant dense<0.000000e+00> : vector<32x64xf32>
    %49 = tpu.matmul %46, %48, %cst_28 {dimension_numbers = #tpu.dot_dimension_numbers<[1], [0], [0], [1], [0, 0, 1, 1], [], []>} : vector<32x128xf32>, vector<128x64xf32>, vector<32x64xf32> -> vector<32x64xf32>
    %50 = arith.addf %44, %49 : vector<32x64xf32>
    %51 = vector.extract_strided_slice %1 {offsets = [2, 2, 0], sizes = [4, 8, 128], strides = [1, 1, 1]} : vector<6x10x128xf32> to vector<4x8x128xf32>
    %52 = vector.shape_cast %51 : vector<4x8x128xf32> to vector<32x128xf32>
    %c8 = arith.constant 8 : index
    %c0_29 = arith.constant 0 : index
    %c0_30 = arith.constant 0 : index
    %53 = vector.load %arg3[%c8, %c0_29, %c0_30] : memref<9x128x64xf32, #tpu.memory_space<vmem>>, vector<1x128x64xf32>
    %54 = vector.shape_cast %53 : vector<1x128x64xf32> to vector<128x64xf32>
    %cst_31 = arith.constant dense<0.000000e+00> : vector<32x64xf32>
    %55 = tpu.matmul %52, %54, %cst_31 {dimension_numbers = #tpu.dot_dimension_numbers<[1], [0], [0], [1], [0, 0, 1, 1], [], []>} : vector<32x128xf32>, vector<128x64xf32>, vector<32x64xf32> -> vector<32x64xf32>
    %56 = arith.addf %50, %55 : vector<32x64xf32>
    %c0_32 = arith.constant 0 : index
    %c0_33 = arith.constant 0 : index
    %57 = vector.load %arg4[%c0_32, %c0_33] : memref<1x64xf32, #tpu.memory_space<vmem>>, vector<1x64xf32>
    %58 = vector.broadcast %57 : vector<1x64xf32> to vector<32x64xf32>
    %59 = arith.addf %56, %58 : vector<32x64xf32>
    %c0_34 = arith.constant 0 : index
    %c0_35 = arith.constant 0 : index
    %c0_36 = arith.constant 0 : index
    %60 = vector.load %arg5[%c0_34, %c0_35, %c0_36] : memref<1x32x64xf32, #tpu.memory_space<vmem>>, vector<1x32x64xf32>
    %61 = vector.shape_cast %60 : vector<1x32x64xf32> to vector<32x64xf32>
    %62 = vector.shape_cast %59 : vector<32x64xf32> to vector<1x32x64xf32>
    tpu.vector_store %arg5[%c0_34, %c0_35, %c0_36], %62 {strides = array<i32>} : memref<1x32x64xf32, #tpu.memory_space<vmem>>, vector<1x32x64xf32>,
    %cst_37 = arith.constant dense<0.000000e+00> : vector<64xf32>
    %63 = vector.multi_reduction <add>, %59, %cst_37 [0] : vector<32x64xf32> to vector<64xf32>
    %64 = vector.shape_cast %63 : vector<64xf32> to vector<1x64xf32>
    %c0_38 = arith.constant 0 : index
    %c0_39 = arith.constant 0 : index
    %c0_40 = arith.constant 0 : index
    %c0_41 = arith.constant 0 : index
    %65 = vector.load %arg6[%c0_38, %c0_39, %c0_40, %c0_41] : memref<1x1x2x64xf32, #tpu.memory_space<vmem>>, vector<1x1x1x64xf32>
    %66 = vector.shape_cast %65 : vector<1x1x1x64xf32> to vector<1x64xf32>
    %67 = vector.shape_cast %64 : vector<1x64xf32> to vector<1x1x1x64xf32>
    tpu.vector_store %arg6[%c0_38, %c0_39, %c0_40, %c0_41], %67 {strides = array<i32>} : memref<1x1x2x64xf32, #tpu.memory_space<vmem>>, vector<1x1x1x64xf32>,
    %68 = arith.mulf %59, %59 : vector<32x64xf32>
    %cst_42 = arith.constant dense<0.000000e+00> : vector<64xf32>
    %69 = vector.multi_reduction <add>, %68, %cst_42 [0] : vector<32x64xf32> to vector<64xf32>
    %70 = vector.shape_cast %69 : vector<64xf32> to vector<1x64xf32>
    %c0_43 = arith.constant 0 : index
    %c0_44 = arith.constant 0 : index
    %c1_45 = arith.constant 1 : index
    %c0_46 = arith.constant 0 : index
    %71 = vector.load %arg6[%c0_43, %c0_44, %c1_45, %c0_46] : memref<1x1x2x64xf32, #tpu.memory_space<vmem>>, vector<1x1x1x64xf32>
    %72 = vector.shape_cast %71 : vector<1x1x1x64xf32> to vector<1x64xf32>
    %73 = vector.shape_cast %70 : vector<1x64xf32> to vector<1x1x1x64xf32>
    tpu.vector_store %arg6[%c0_43, %c0_44, %c1_45, %c0_46], %73 {strides = array<i32>} : memref<1x1x2x64xf32, #tpu.memory_space<vmem>>, vector<1x1x1x64xf32>,
    return
  }
  func.func @transform_0(%arg0: i32, %arg1: i32) -> (i32, i32, i32, i32, i32) {
    %c0_i32 = arith.constant 0 : i32
    %c0_i32_0 = arith.constant 0 : i32
    %c0_i32_1 = arith.constant 0 : i32
    %c0_i32_2 = arith.constant 0 : i32
    return %arg0, %arg1, %c0_i32, %c0_i32_0, %c0_i32_1 : i32, i32, i32, i32, i32
  }
  func.func @transform_1(%arg0: i32, %arg1: i32) -> (i32, i32, i32) {
    %c0_i32 = arith.constant 0 : i32
    %c0_i32_0 = arith.constant 0 : i32
    %c0_i32_1 = arith.constant 0 : i32
    %c0_i32_2 = arith.constant 0 : i32
    return %c0_i32, %c0_i32_0, %c0_i32_1 : i32, i32, i32
  }
  func.func @transform_2(%arg0: i32, %arg1: i32) -> (i32, i32) {
    %c0_i32 = arith.constant 0 : i32
    %c0_i32_0 = arith.constant 0 : i32
    %c0_i32_1 = arith.constant 0 : i32
    return %c0_i32, %c0_i32_0 : i32, i32
  }
  func.func @transform_3(%arg0: i32, %arg1: i32) -> (i32, i32, i32) {
    %c0_i32 = arith.constant 0 : i32
    %c0_i32_0 = arith.constant 0 : i32
    return %arg0, %arg1, %c0_i32 : i32, i32, i32
  }
  func.func @transform_4(%arg0: i32, %arg1: i32) -> (i32, i32, i32, i32) {
    %c0_i32 = arith.constant 0 : i32
    %c0_i32_0 = arith.constant 0 : i32
    %c0_i32_1 = arith.constant 0 : i32
    return %arg0, %arg1, %c0_i32, %c0_i32_0 : i32, i32, i32, i32
  }
}

module attributes {stable_mosaic.version = 11 : i64} {
  func.func @_scale_shift_relu_kernel(%arg0: i32, %arg1: i32, %arg2: memref<1x64x64xf32, #tpu.memory_space<vmem>>, %arg3: memref<1x64xf32, #tpu.memory_space<vmem>>, %arg4: memref<1x64xf32, #tpu.memory_space<vmem>>, %arg5: memref<1x64x64xf32, #tpu.memory_space<vmem>>) attributes {dimension_semantics = [#tpu.dimension_semantics<parallel>, #tpu.dimension_semantics<parallel>], iteration_bounds = array<i64: 2, 1>, scalar_prefetch = 0 : i64, scratch_operands = 0 : i64, tpu.core_type = #tpu.core_type<tc>, window_params = [{transform_indices = @transform_0, window_bounds = array<i64: 1, 64, 64>}, {pipeline_mode = #tpu.pipeline_mode<synchronous>, transform_indices = @transform_1, window_bounds = array<i64: 1, 64>}, {pipeline_mode = #tpu.pipeline_mode<synchronous>, transform_indices = @transform_2, window_bounds = array<i64: 1, 64>}, {transform_indices = @transform_3, window_bounds = array<i64: 1, 64, 64>}]} {
    %c0 = arith.constant 0 : index
    %c0_0 = arith.constant 0 : index
    %c0_1 = arith.constant 0 : index
    %0 = vector.load %arg2[%c0, %c0_0, %c0_1] : memref<1x64x64xf32, #tpu.memory_space<vmem>>, vector<1x64x64xf32>
    %1 = vector.shape_cast %0 : vector<1x64x64xf32> to vector<64x64xf32>
    %c0_2 = arith.constant 0 : index
    %c0_3 = arith.constant 0 : index
    %2 = vector.load %arg3[%c0_2, %c0_3] : memref<1x64xf32, #tpu.memory_space<vmem>>, vector<1x64xf32>
    %3 = vector.broadcast %2 : vector<1x64xf32> to vector<64x64xf32>
    %4 = arith.mulf %1, %3 : vector<64x64xf32>
    %c0_4 = arith.constant 0 : index
    %c0_5 = arith.constant 0 : index
    %5 = vector.load %arg4[%c0_4, %c0_5] : memref<1x64xf32, #tpu.memory_space<vmem>>, vector<1x64xf32>
    %6 = vector.broadcast %5 : vector<1x64xf32> to vector<64x64xf32>
    %7 = arith.addf %4, %6 : vector<64x64xf32>
    %cst = arith.constant 0.000000e+00 : f32
    %8 = vector.broadcast %cst : f32 to vector<64x64xf32>
    %9 = arith.maximumf %7, %8 : vector<64x64xf32>
    %c0_6 = arith.constant 0 : index
    %c0_7 = arith.constant 0 : index
    %c0_8 = arith.constant 0 : index
    %10 = vector.load %arg5[%c0_6, %c0_7, %c0_8] : memref<1x64x64xf32, #tpu.memory_space<vmem>>, vector<1x64x64xf32>
    %11 = vector.shape_cast %10 : vector<1x64x64xf32> to vector<64x64xf32>
    %12 = vector.shape_cast %9 : vector<64x64xf32> to vector<1x64x64xf32>
    tpu.vector_store %arg5[%c0_6, %c0_7, %c0_8], %12 {strides = array<i32>} : memref<1x64x64xf32, #tpu.memory_space<vmem>>, vector<1x64x64xf32>,
    return
  }
  func.func @transform_0(%arg0: i32, %arg1: i32) -> (i32, i32, i32) {
    %c0_i32 = arith.constant 0 : i32
    %c0_i32_0 = arith.constant 0 : i32
    return %arg0, %arg1, %c0_i32 : i32, i32, i32
  }
  func.func @transform_1(%arg0: i32, %arg1: i32) -> (i32, i32) {
    %c0_i32 = arith.constant 0 : i32
    %c0_i32_0 = arith.constant 0 : i32
    %c0_i32_1 = arith.constant 0 : i32
    return %c0_i32, %c0_i32_0 : i32, i32
  }
  func.func @transform_2(%arg0: i32, %arg1: i32) -> (i32, i32) {
    %c0_i32 = arith.constant 0 : i32
    %c0_i32_0 = arith.constant 0 : i32
    %c0_i32_1 = arith.constant 0 : i32
    return %c0_i32, %c0_i32_0 : i32, i32
  }
  func.func @transform_3(%arg0: i32, %arg1: i32) -> (i32, i32, i32) {
    %c0_i32 = arith.constant 0 : i32
    %c0_i32_0 = arith.constant 0 : i32
    return %arg0, %arg1, %c0_i32 : i32, i32, i32
  }
}

module attributes {stable_mosaic.version = 11 : i64} {
  func.func @_conv3x3_stats_kernel(%arg0: i32, %arg1: i32, %arg2: memref<1x1x6x10x64xf32, #tpu.memory_space<vmem>>, %arg3: memref<9x64x64xf32, #tpu.memory_space<vmem>>, %arg4: memref<1x64xf32, #tpu.memory_space<vmem>>, %arg5: memref<1x32x64xf32, #tpu.memory_space<vmem>>, %arg6: memref<1x1x2x64xf32, #tpu.memory_space<vmem>>) attributes {dimension_semantics = [#tpu.dimension_semantics<parallel>, #tpu.dimension_semantics<parallel>], iteration_bounds = array<i64: 2, 2>, scalar_prefetch = 0 : i64, scratch_operands = 0 : i64, tpu.core_type = #tpu.core_type<tc>, window_params = [{transform_indices = @transform_0, window_bounds = array<i64: 1, 1, 6, 10, 64>}, {pipeline_mode = #tpu.pipeline_mode<synchronous>, transform_indices = @transform_1, window_bounds = array<i64: 9, 64, 64>}, {pipeline_mode = #tpu.pipeline_mode<synchronous>, transform_indices = @transform_2, window_bounds = array<i64: 1, 64>}, {transform_indices = @transform_3, window_bounds = array<i64: 1, 32, 64>}, {transform_indices = @transform_4, window_bounds = array<i64: 1, 1, 2, 64>}]} {
    %c0 = arith.constant 0 : index
    %c0_0 = arith.constant 0 : index
    %c0_1 = arith.constant 0 : index
    %c0_2 = arith.constant 0 : index
    %c0_3 = arith.constant 0 : index
    %0 = vector.load %arg2[%c0, %c0_0, %c0_1, %c0_2, %c0_3] : memref<1x1x6x10x64xf32, #tpu.memory_space<vmem>>, vector<1x1x6x10x64xf32>
    %1 = vector.shape_cast %0 : vector<1x1x6x10x64xf32> to vector<6x10x64xf32>
    %cst = arith.constant 0.000000e+00 : f32
    %2 = vector.broadcast %cst : f32 to vector<32x64xf32>
    %3 = vector.extract_strided_slice %1 {offsets = [0, 0, 0], sizes = [4, 8, 64], strides = [1, 1, 1]} : vector<6x10x64xf32> to vector<4x8x64xf32>
    %4 = vector.shape_cast %3 : vector<4x8x64xf32> to vector<32x64xf32>
    %c0_4 = arith.constant 0 : index
    %c0_5 = arith.constant 0 : index
    %c0_6 = arith.constant 0 : index
    %5 = vector.load %arg3[%c0_4, %c0_5, %c0_6] : memref<9x64x64xf32, #tpu.memory_space<vmem>>, vector<1x64x64xf32>
    %6 = vector.shape_cast %5 : vector<1x64x64xf32> to vector<64x64xf32>
    %cst_7 = arith.constant dense<0.000000e+00> : vector<32x64xf32>
    %7 = tpu.matmul %4, %6, %cst_7 {dimension_numbers = #tpu.dot_dimension_numbers<[1], [0], [0], [1], [0, 0, 1, 1], [], []>} : vector<32x64xf32>, vector<64x64xf32>, vector<32x64xf32> -> vector<32x64xf32>
    %8 = arith.addf %2, %7 : vector<32x64xf32>
    %9 = vector.extract_strided_slice %1 {offsets = [0, 1, 0], sizes = [4, 8, 64], strides = [1, 1, 1]} : vector<6x10x64xf32> to vector<4x8x64xf32>
    %10 = vector.shape_cast %9 : vector<4x8x64xf32> to vector<32x64xf32>
    %c1 = arith.constant 1 : index
    %c0_8 = arith.constant 0 : index
    %c0_9 = arith.constant 0 : index
    %11 = vector.load %arg3[%c1, %c0_8, %c0_9] : memref<9x64x64xf32, #tpu.memory_space<vmem>>, vector<1x64x64xf32>
    %12 = vector.shape_cast %11 : vector<1x64x64xf32> to vector<64x64xf32>
    %cst_10 = arith.constant dense<0.000000e+00> : vector<32x64xf32>
    %13 = tpu.matmul %10, %12, %cst_10 {dimension_numbers = #tpu.dot_dimension_numbers<[1], [0], [0], [1], [0, 0, 1, 1], [], []>} : vector<32x64xf32>, vector<64x64xf32>, vector<32x64xf32> -> vector<32x64xf32>
    %14 = arith.addf %8, %13 : vector<32x64xf32>
    %15 = vector.extract_strided_slice %1 {offsets = [0, 2, 0], sizes = [4, 8, 64], strides = [1, 1, 1]} : vector<6x10x64xf32> to vector<4x8x64xf32>
    %16 = vector.shape_cast %15 : vector<4x8x64xf32> to vector<32x64xf32>
    %c2 = arith.constant 2 : index
    %c0_11 = arith.constant 0 : index
    %c0_12 = arith.constant 0 : index
    %17 = vector.load %arg3[%c2, %c0_11, %c0_12] : memref<9x64x64xf32, #tpu.memory_space<vmem>>, vector<1x64x64xf32>
    %18 = vector.shape_cast %17 : vector<1x64x64xf32> to vector<64x64xf32>
    %cst_13 = arith.constant dense<0.000000e+00> : vector<32x64xf32>
    %19 = tpu.matmul %16, %18, %cst_13 {dimension_numbers = #tpu.dot_dimension_numbers<[1], [0], [0], [1], [0, 0, 1, 1], [], []>} : vector<32x64xf32>, vector<64x64xf32>, vector<32x64xf32> -> vector<32x64xf32>
    %20 = arith.addf %14, %19 : vector<32x64xf32>
    %21 = vector.extract_strided_slice %1 {offsets = [1, 0, 0], sizes = [4, 8, 64], strides = [1, 1, 1]} : vector<6x10x64xf32> to vector<4x8x64xf32>
    %22 = vector.shape_cast %21 : vector<4x8x64xf32> to vector<32x64xf32>
    %c3 = arith.constant 3 : index
    %c0_14 = arith.constant 0 : index
    %c0_15 = arith.constant 0 : index
    %23 = vector.load %arg3[%c3, %c0_14, %c0_15] : memref<9x64x64xf32, #tpu.memory_space<vmem>>, vector<1x64x64xf32>
    %24 = vector.shape_cast %23 : vector<1x64x64xf32> to vector<64x64xf32>
    %cst_16 = arith.constant dense<0.000000e+00> : vector<32x64xf32>
    %25 = tpu.matmul %22, %24, %cst_16 {dimension_numbers = #tpu.dot_dimension_numbers<[1], [0], [0], [1], [0, 0, 1, 1], [], []>} : vector<32x64xf32>, vector<64x64xf32>, vector<32x64xf32> -> vector<32x64xf32>
    %26 = arith.addf %20, %25 : vector<32x64xf32>
    %27 = vector.extract_strided_slice %1 {offsets = [1, 1, 0], sizes = [4, 8, 64], strides = [1, 1, 1]} : vector<6x10x64xf32> to vector<4x8x64xf32>
    %28 = vector.shape_cast %27 : vector<4x8x64xf32> to vector<32x64xf32>
    %c4 = arith.constant 4 : index
    %c0_17 = arith.constant 0 : index
    %c0_18 = arith.constant 0 : index
    %29 = vector.load %arg3[%c4, %c0_17, %c0_18] : memref<9x64x64xf32, #tpu.memory_space<vmem>>, vector<1x64x64xf32>
    %30 = vector.shape_cast %29 : vector<1x64x64xf32> to vector<64x64xf32>
    %cst_19 = arith.constant dense<0.000000e+00> : vector<32x64xf32>
    %31 = tpu.matmul %28, %30, %cst_19 {dimension_numbers = #tpu.dot_dimension_numbers<[1], [0], [0], [1], [0, 0, 1, 1], [], []>} : vector<32x64xf32>, vector<64x64xf32>, vector<32x64xf32> -> vector<32x64xf32>
    %32 = arith.addf %26, %31 : vector<32x64xf32>
    %33 = vector.extract_strided_slice %1 {offsets = [1, 2, 0], sizes = [4, 8, 64], strides = [1, 1, 1]} : vector<6x10x64xf32> to vector<4x8x64xf32>
    %34 = vector.shape_cast %33 : vector<4x8x64xf32> to vector<32x64xf32>
    %c5 = arith.constant 5 : index
    %c0_20 = arith.constant 0 : index
    %c0_21 = arith.constant 0 : index
    %35 = vector.load %arg3[%c5, %c0_20, %c0_21] : memref<9x64x64xf32, #tpu.memory_space<vmem>>, vector<1x64x64xf32>
    %36 = vector.shape_cast %35 : vector<1x64x64xf32> to vector<64x64xf32>
    %cst_22 = arith.constant dense<0.000000e+00> : vector<32x64xf32>
    %37 = tpu.matmul %34, %36, %cst_22 {dimension_numbers = #tpu.dot_dimension_numbers<[1], [0], [0], [1], [0, 0, 1, 1], [], []>} : vector<32x64xf32>, vector<64x64xf32>, vector<32x64xf32> -> vector<32x64xf32>
    %38 = arith.addf %32, %37 : vector<32x64xf32>
    %39 = vector.extract_strided_slice %1 {offsets = [2, 0, 0], sizes = [4, 8, 64], strides = [1, 1, 1]} : vector<6x10x64xf32> to vector<4x8x64xf32>
    %40 = vector.shape_cast %39 : vector<4x8x64xf32> to vector<32x64xf32>
    %c6 = arith.constant 6 : index
    %c0_23 = arith.constant 0 : index
    %c0_24 = arith.constant 0 : index
    %41 = vector.load %arg3[%c6, %c0_23, %c0_24] : memref<9x64x64xf32, #tpu.memory_space<vmem>>, vector<1x64x64xf32>
    %42 = vector.shape_cast %41 : vector<1x64x64xf32> to vector<64x64xf32>
    %cst_25 = arith.constant dense<0.000000e+00> : vector<32x64xf32>
    %43 = tpu.matmul %40, %42, %cst_25 {dimension_numbers = #tpu.dot_dimension_numbers<[1], [0], [0], [1], [0, 0, 1, 1], [], []>} : vector<32x64xf32>, vector<64x64xf32>, vector<32x64xf32> -> vector<32x64xf32>
    %44 = arith.addf %38, %43 : vector<32x64xf32>
    %45 = vector.extract_strided_slice %1 {offsets = [2, 1, 0], sizes = [4, 8, 64], strides = [1, 1, 1]} : vector<6x10x64xf32> to vector<4x8x64xf32>
    %46 = vector.shape_cast %45 : vector<4x8x64xf32> to vector<32x64xf32>
    %c7 = arith.constant 7 : index
    %c0_26 = arith.constant 0 : index
    %c0_27 = arith.constant 0 : index
    %47 = vector.load %arg3[%c7, %c0_26, %c0_27] : memref<9x64x64xf32, #tpu.memory_space<vmem>>, vector<1x64x64xf32>
    %48 = vector.shape_cast %47 : vector<1x64x64xf32> to vector<64x64xf32>
    %cst_28 = arith.constant dense<0.000000e+00> : vector<32x64xf32>
    %49 = tpu.matmul %46, %48, %cst_28 {dimension_numbers = #tpu.dot_dimension_numbers<[1], [0], [0], [1], [0, 0, 1, 1], [], []>} : vector<32x64xf32>, vector<64x64xf32>, vector<32x64xf32> -> vector<32x64xf32>
    %50 = arith.addf %44, %49 : vector<32x64xf32>
    %51 = vector.extract_strided_slice %1 {offsets = [2, 2, 0], sizes = [4, 8, 64], strides = [1, 1, 1]} : vector<6x10x64xf32> to vector<4x8x64xf32>
    %52 = vector.shape_cast %51 : vector<4x8x64xf32> to vector<32x64xf32>
    %c8 = arith.constant 8 : index
    %c0_29 = arith.constant 0 : index
    %c0_30 = arith.constant 0 : index
    %53 = vector.load %arg3[%c8, %c0_29, %c0_30] : memref<9x64x64xf32, #tpu.memory_space<vmem>>, vector<1x64x64xf32>
    %54 = vector.shape_cast %53 : vector<1x64x64xf32> to vector<64x64xf32>
    %cst_31 = arith.constant dense<0.000000e+00> : vector<32x64xf32>
    %55 = tpu.matmul %52, %54, %cst_31 {dimension_numbers = #tpu.dot_dimension_numbers<[1], [0], [0], [1], [0, 0, 1, 1], [], []>} : vector<32x64xf32>, vector<64x64xf32>, vector<32x64xf32> -> vector<32x64xf32>
    %56 = arith.addf %50, %55 : vector<32x64xf32>
    %c0_32 = arith.constant 0 : index
    %c0_33 = arith.constant 0 : index
    %57 = vector.load %arg4[%c0_32, %c0_33] : memref<1x64xf32, #tpu.memory_space<vmem>>, vector<1x64xf32>
    %58 = vector.broadcast %57 : vector<1x64xf32> to vector<32x64xf32>
    %59 = arith.addf %56, %58 : vector<32x64xf32>
    %c0_34 = arith.constant 0 : index
    %c0_35 = arith.constant 0 : index
    %c0_36 = arith.constant 0 : index
    %60 = vector.load %arg5[%c0_34, %c0_35, %c0_36] : memref<1x32x64xf32, #tpu.memory_space<vmem>>, vector<1x32x64xf32>
    %61 = vector.shape_cast %60 : vector<1x32x64xf32> to vector<32x64xf32>
    %62 = vector.shape_cast %59 : vector<32x64xf32> to vector<1x32x64xf32>
    tpu.vector_store %arg5[%c0_34, %c0_35, %c0_36], %62 {strides = array<i32>} : memref<1x32x64xf32, #tpu.memory_space<vmem>>, vector<1x32x64xf32>,
    %cst_37 = arith.constant dense<0.000000e+00> : vector<64xf32>
    %63 = vector.multi_reduction <add>, %59, %cst_37 [0] : vector<32x64xf32> to vector<64xf32>
    %64 = vector.shape_cast %63 : vector<64xf32> to vector<1x64xf32>
    %c0_38 = arith.constant 0 : index
    %c0_39 = arith.constant 0 : index
    %c0_40 = arith.constant 0 : index
    %c0_41 = arith.constant 0 : index
    %65 = vector.load %arg6[%c0_38, %c0_39, %c0_40, %c0_41] : memref<1x1x2x64xf32, #tpu.memory_space<vmem>>, vector<1x1x1x64xf32>
    %66 = vector.shape_cast %65 : vector<1x1x1x64xf32> to vector<1x64xf32>
    %67 = vector.shape_cast %64 : vector<1x64xf32> to vector<1x1x1x64xf32>
    tpu.vector_store %arg6[%c0_38, %c0_39, %c0_40, %c0_41], %67 {strides = array<i32>} : memref<1x1x2x64xf32, #tpu.memory_space<vmem>>, vector<1x1x1x64xf32>,
    %68 = arith.mulf %59, %59 : vector<32x64xf32>
    %cst_42 = arith.constant dense<0.000000e+00> : vector<64xf32>
    %69 = vector.multi_reduction <add>, %68, %cst_42 [0] : vector<32x64xf32> to vector<64xf32>
    %70 = vector.shape_cast %69 : vector<64xf32> to vector<1x64xf32>
    %c0_43 = arith.constant 0 : index
    %c0_44 = arith.constant 0 : index
    %c1_45 = arith.constant 1 : index
    %c0_46 = arith.constant 0 : index
    %71 = vector.load %arg6[%c0_43, %c0_44, %c1_45, %c0_46] : memref<1x1x2x64xf32, #tpu.memory_space<vmem>>, vector<1x1x1x64xf32>
    %72 = vector.shape_cast %71 : vector<1x1x1x64xf32> to vector<1x64xf32>
    %73 = vector.shape_cast %70 : vector<1x64xf32> to vector<1x1x1x64xf32>
    tpu.vector_store %arg6[%c0_43, %c0_44, %c1_45, %c0_46], %73 {strides = array<i32>} : memref<1x1x2x64xf32, #tpu.memory_space<vmem>>, vector<1x1x1x64xf32>,
    return
  }
  func.func @transform_0(%arg0: i32, %arg1: i32) -> (i32, i32, i32, i32, i32) {
    %c0_i32 = arith.constant 0 : i32
    %c0_i32_0 = arith.constant 0 : i32
    %c0_i32_1 = arith.constant 0 : i32
    %c0_i32_2 = arith.constant 0 : i32
    return %arg0, %arg1, %c0_i32, %c0_i32_0, %c0_i32_1 : i32, i32, i32, i32, i32
  }
  func.func @transform_1(%arg0: i32, %arg1: i32) -> (i32, i32, i32) {
    %c0_i32 = arith.constant 0 : i32
    %c0_i32_0 = arith.constant 0 : i32
    %c0_i32_1 = arith.constant 0 : i32
    %c0_i32_2 = arith.constant 0 : i32
    return %c0_i32, %c0_i32_0, %c0_i32_1 : i32, i32, i32
  }
  func.func @transform_2(%arg0: i32, %arg1: i32) -> (i32, i32) {
    %c0_i32 = arith.constant 0 : i32
    %c0_i32_0 = arith.constant 0 : i32
    %c0_i32_1 = arith.constant 0 : i32
    return %c0_i32, %c0_i32_0 : i32, i32
  }
  func.func @transform_3(%arg0: i32, %arg1: i32) -> (i32, i32, i32) {
    %c0_i32 = arith.constant 0 : i32
    %c0_i32_0 = arith.constant 0 : i32
    return %arg0, %arg1, %c0_i32 : i32, i32, i32
  }
  func.func @transform_4(%arg0: i32, %arg1: i32) -> (i32, i32, i32, i32) {
    %c0_i32 = arith.constant 0 : i32
    %c0_i32_0 = arith.constant 0 : i32
    %c0_i32_1 = arith.constant 0 : i32
    return %arg0, %arg1, %c0_i32, %c0_i32_0 : i32, i32, i32, i32
  }
}

module attributes {stable_mosaic.version = 11 : i64} {
  func.func @kernel(%arg0: i32, %arg1: i32, %arg2: i32, %arg3: memref<128x64xf32, #tpu.memory_space<vmem>>, %arg4: memref<1x64xf32, #tpu.memory_space<vmem>>, %arg5: memref<1x64xf32, #tpu.memory_space<vmem>>, %arg6: memref<64x128xf32, #tpu.memory_space<vmem>>, %arg7: memref<1x128xf32, #tpu.memory_space<vmem>>, %arg8: memref<128x128xf32, #tpu.memory_space<vmem>>, %arg9: memref<128x128xf32, #tpu.memory_space<vmem>>) attributes {dimension_semantics = [#tpu.dimension_semantics<parallel>, #tpu.dimension_semantics<parallel>, #tpu.dimension_semantics<arbitrary>], iteration_bounds = array<i64: 1, 1, 1>, scalar_prefetch = 0 : i64, scratch_operands = 1 : i64, tpu.core_type = #tpu.core_type<tc>, window_params = [{transform_indices = @transform_0, window_bounds = array<i64: 128, 64>}, {transform_indices = @transform_1, window_bounds = array<i64: 1, 64>}, {transform_indices = @transform_2, window_bounds = array<i64: 1, 64>}, {transform_indices = @transform_3, window_bounds = array<i64: 64, 128>}, {transform_indices = @transform_4, window_bounds = array<i64: 1, 128>}, {transform_indices = @transform_5, window_bounds = array<i64: 128, 128>}]} {
    %c0_i32 = arith.constant 0 : i32
    %0 = arith.cmpi eq, %arg2, %c0_i32 : i32
    %1 = arith.extui %0 : i1 to i32
    %c0_i32_0 = arith.constant 0 : i32
    %2 = arith.cmpi ne, %1, %c0_i32_0 : i32
    scf.if %2 {
      %cst_15 = arith.constant 0.000000e+00 : f32
      %20 = vector.broadcast %cst_15 : f32 to vector<128x128xf32>
      %c0_16 = arith.constant 0 : index
      %c0_17 = arith.constant 0 : index
      %21 = vector.load %arg9[%c0_16, %c0_17] : memref<128x128xf32, #tpu.memory_space<vmem>>, vector<128x128xf32>
      tpu.vector_store %arg9[%c0_16, %c0_17], %20 {strides = array<i32>} : memref<128x128xf32, #tpu.memory_space<vmem>>, vector<128x128xf32>,
    } else {
    }
    %c0 = arith.constant 0 : index
    %c0_1 = arith.constant 0 : index
    %3 = vector.load %arg3[%c0, %c0_1] : memref<128x64xf32, #tpu.memory_space<vmem>>, vector<128x64xf32>
    %c0_2 = arith.constant 0 : index
    %c0_3 = arith.constant 0 : index
    %4 = vector.load %arg4[%c0_2, %c0_3] : memref<1x64xf32, #tpu.memory_space<vmem>>, vector<1x64xf32>
    %5 = vector.broadcast %4 : vector<1x64xf32> to vector<128x64xf32>
    %6 = arith.mulf %3, %5 : vector<128x64xf32>
    %c0_4 = arith.constant 0 : index
    %c0_5 = arith.constant 0 : index
    %7 = vector.load %arg5[%c0_4, %c0_5] : memref<1x64xf32, #tpu.memory_space<vmem>>, vector<1x64xf32>
    %8 = vector.broadcast %7 : vector<1x64xf32> to vector<128x64xf32>
    %9 = arith.addf %6, %8 : vector<128x64xf32>
    %cst = arith.constant 0.000000e+00 : f32
    %10 = vector.broadcast %cst : f32 to vector<128x64xf32>
    %11 = arith.maximumf %9, %10 : vector<128x64xf32>
    %c0_6 = arith.constant 0 : index
    %c0_7 = arith.constant 0 : index
    %12 = vector.load %arg9[%c0_6, %c0_7] : memref<128x128xf32, #tpu.memory_space<vmem>>, vector<128x128xf32>
    %c0_8 = arith.constant 0 : index
    %c0_9 = arith.constant 0 : index
    %13 = vector.load %arg6[%c0_8, %c0_9] : memref<64x128xf32, #tpu.memory_space<vmem>>, vector<64x128xf32>
    %cst_10 = arith.constant dense<0.000000e+00> : vector<128x128xf32>
    %14 = tpu.matmul %11, %13, %cst_10 {dimension_numbers = #tpu.dot_dimension_numbers<[1], [0], [0], [1], [0, 0, 1, 1], [], []>} : vector<128x64xf32>, vector<64x128xf32>, vector<128x128xf32> -> vector<128x128xf32>
    %15 = arith.addf %12, %14 : vector<128x128xf32>
    %c0_11 = arith.constant 0 : index
    %c0_12 = arith.constant 0 : index
    %16 = vector.load %arg9[%c0_11, %c0_12] : memref<128x128xf32, #tpu.memory_space<vmem>>, vector<128x128xf32>
    tpu.vector_store %arg9[%c0_11, %c0_12], %15 {strides = array<i32>} : memref<128x128xf32, #tpu.memory_space<vmem>>, vector<128x128xf32>,
    %c0_i32_13 = arith.constant 0 : i32
    %17 = arith.cmpi eq, %arg2, %c0_i32_13 : i32
    %18 = arith.extui %17 : i1 to i32
    %c0_i32_14 = arith.constant 0 : i32
    %19 = arith.cmpi ne, %18, %c0_i32_14 : i32
    scf.if %19 {
      %c0_15 = arith.constant 0 : index
      %c0_16 = arith.constant 0 : index
      %20 = vector.load %arg9[%c0_15, %c0_16] : memref<128x128xf32, #tpu.memory_space<vmem>>, vector<128x128xf32>
      %c0_17 = arith.constant 0 : index
      %c0_18 = arith.constant 0 : index
      %21 = vector.load %arg7[%c0_17, %c0_18] : memref<1x128xf32, #tpu.memory_space<vmem>>, vector<1x128xf32>
      %22 = vector.broadcast %21 : vector<1x128xf32> to vector<128x128xf32>
      %23 = arith.addf %20, %22 : vector<128x128xf32>
      %c0_19 = arith.constant 0 : index
      %c0_20 = arith.constant 0 : index
      %24 = vector.load %arg8[%c0_19, %c0_20] : memref<128x128xf32, #tpu.memory_space<vmem>>, vector<128x128xf32>
      tpu.vector_store %arg8[%c0_19, %c0_20], %23 {strides = array<i32>} : memref<128x128xf32, #tpu.memory_space<vmem>>, vector<128x128xf32>,
    } else {
    }
    return
  }
  func.func @transform_0(%arg0: i32, %arg1: i32, %arg2: i32) -> (i32, i32) {
    %c0_i32 = arith.constant 0 : i32
    return %arg0, %arg2 : i32, i32
  }
  func.func @transform_1(%arg0: i32, %arg1: i32, %arg2: i32) -> (i32, i32) {
    %c0_i32 = arith.constant 0 : i32
    %c0_i32_0 = arith.constant 0 : i32
    return %c0_i32, %arg2 : i32, i32
  }
  func.func @transform_2(%arg0: i32, %arg1: i32, %arg2: i32) -> (i32, i32) {
    %c0_i32 = arith.constant 0 : i32
    %c0_i32_0 = arith.constant 0 : i32
    return %c0_i32, %arg2 : i32, i32
  }
  func.func @transform_3(%arg0: i32, %arg1: i32, %arg2: i32) -> (i32, i32) {
    %c0_i32 = arith.constant 0 : i32
    return %arg2, %arg1 : i32, i32
  }
  func.func @transform_4(%arg0: i32, %arg1: i32, %arg2: i32) -> (i32, i32) {
    %c0_i32 = arith.constant 0 : i32
    %c0_i32_0 = arith.constant 0 : i32
    return %c0_i32, %arg1 : i32, i32
  }
  func.func @transform_5(%arg0: i32, %arg1: i32, %arg2: i32) -> (i32, i32) {
    %c0_i32 = arith.constant 0 : i32
    return %arg0, %arg1 : i32, i32
  }
}

module attributes {stable_mosaic.version = 11 : i64} {
  func.func @_conv3x3_stats_kernel(%arg0: i32, %arg1: i32, %arg2: memref<1x1x10x18x64xf32, #tpu.memory_space<vmem>>, %arg3: memref<9x64x32xf32, #tpu.memory_space<vmem>>, %arg4: memref<1x32xf32, #tpu.memory_space<vmem>>, %arg5: memref<1x128x32xf32, #tpu.memory_space<vmem>>, %arg6: memref<1x1x2x32xf32, #tpu.memory_space<vmem>>) attributes {dimension_semantics = [#tpu.dimension_semantics<parallel>, #tpu.dimension_semantics<parallel>], iteration_bounds = array<i64: 2, 2>, scalar_prefetch = 0 : i64, scratch_operands = 0 : i64, tpu.core_type = #tpu.core_type<tc>, window_params = [{transform_indices = @transform_0, window_bounds = array<i64: 1, 1, 10, 18, 64>}, {pipeline_mode = #tpu.pipeline_mode<synchronous>, transform_indices = @transform_1, window_bounds = array<i64: 9, 64, 32>}, {pipeline_mode = #tpu.pipeline_mode<synchronous>, transform_indices = @transform_2, window_bounds = array<i64: 1, 32>}, {transform_indices = @transform_3, window_bounds = array<i64: 1, 128, 32>}, {transform_indices = @transform_4, window_bounds = array<i64: 1, 1, 2, 32>}]} {
    %c0 = arith.constant 0 : index
    %c0_0 = arith.constant 0 : index
    %c0_1 = arith.constant 0 : index
    %c0_2 = arith.constant 0 : index
    %c0_3 = arith.constant 0 : index
    %0 = vector.load %arg2[%c0, %c0_0, %c0_1, %c0_2, %c0_3] : memref<1x1x10x18x64xf32, #tpu.memory_space<vmem>>, vector<1x1x10x18x64xf32>
    %1 = vector.shape_cast %0 : vector<1x1x10x18x64xf32> to vector<10x18x64xf32>
    %cst = arith.constant 0.000000e+00 : f32
    %2 = vector.broadcast %cst : f32 to vector<128x32xf32>
    %3 = vector.extract_strided_slice %1 {offsets = [0, 0, 0], sizes = [8, 16, 64], strides = [1, 1, 1]} : vector<10x18x64xf32> to vector<8x16x64xf32>
    %4 = vector.shape_cast %3 : vector<8x16x64xf32> to vector<128x64xf32>
    %c0_4 = arith.constant 0 : index
    %c0_5 = arith.constant 0 : index
    %c0_6 = arith.constant 0 : index
    %5 = vector.load %arg3[%c0_4, %c0_5, %c0_6] : memref<9x64x32xf32, #tpu.memory_space<vmem>>, vector<1x64x32xf32>
    %6 = vector.shape_cast %5 : vector<1x64x32xf32> to vector<64x32xf32>
    %cst_7 = arith.constant dense<0.000000e+00> : vector<128x32xf32>
    %7 = tpu.matmul %4, %6, %cst_7 {dimension_numbers = #tpu.dot_dimension_numbers<[1], [0], [0], [1], [0, 0, 1, 1], [], []>} : vector<128x64xf32>, vector<64x32xf32>, vector<128x32xf32> -> vector<128x32xf32>
    %8 = arith.addf %2, %7 : vector<128x32xf32>
    %9 = vector.extract_strided_slice %1 {offsets = [0, 1, 0], sizes = [8, 16, 64], strides = [1, 1, 1]} : vector<10x18x64xf32> to vector<8x16x64xf32>
    %10 = vector.shape_cast %9 : vector<8x16x64xf32> to vector<128x64xf32>
    %c1 = arith.constant 1 : index
    %c0_8 = arith.constant 0 : index
    %c0_9 = arith.constant 0 : index
    %11 = vector.load %arg3[%c1, %c0_8, %c0_9] : memref<9x64x32xf32, #tpu.memory_space<vmem>>, vector<1x64x32xf32>
    %12 = vector.shape_cast %11 : vector<1x64x32xf32> to vector<64x32xf32>
    %cst_10 = arith.constant dense<0.000000e+00> : vector<128x32xf32>
    %13 = tpu.matmul %10, %12, %cst_10 {dimension_numbers = #tpu.dot_dimension_numbers<[1], [0], [0], [1], [0, 0, 1, 1], [], []>} : vector<128x64xf32>, vector<64x32xf32>, vector<128x32xf32> -> vector<128x32xf32>
    %14 = arith.addf %8, %13 : vector<128x32xf32>
    %15 = vector.extract_strided_slice %1 {offsets = [0, 2, 0], sizes = [8, 16, 64], strides = [1, 1, 1]} : vector<10x18x64xf32> to vector<8x16x64xf32>
    %16 = vector.shape_cast %15 : vector<8x16x64xf32> to vector<128x64xf32>
    %c2 = arith.constant 2 : index
    %c0_11 = arith.constant 0 : index
    %c0_12 = arith.constant 0 : index
    %17 = vector.load %arg3[%c2, %c0_11, %c0_12] : memref<9x64x32xf32, #tpu.memory_space<vmem>>, vector<1x64x32xf32>
    %18 = vector.shape_cast %17 : vector<1x64x32xf32> to vector<64x32xf32>
    %cst_13 = arith.constant dense<0.000000e+00> : vector<128x32xf32>
    %19 = tpu.matmul %16, %18, %cst_13 {dimension_numbers = #tpu.dot_dimension_numbers<[1], [0], [0], [1], [0, 0, 1, 1], [], []>} : vector<128x64xf32>, vector<64x32xf32>, vector<128x32xf32> -> vector<128x32xf32>
    %20 = arith.addf %14, %19 : vector<128x32xf32>
    %21 = vector.extract_strided_slice %1 {offsets = [1, 0, 0], sizes = [8, 16, 64], strides = [1, 1, 1]} : vector<10x18x64xf32> to vector<8x16x64xf32>
    %22 = vector.shape_cast %21 : vector<8x16x64xf32> to vector<128x64xf32>
    %c3 = arith.constant 3 : index
    %c0_14 = arith.constant 0 : index
    %c0_15 = arith.constant 0 : index
    %23 = vector.load %arg3[%c3, %c0_14, %c0_15] : memref<9x64x32xf32, #tpu.memory_space<vmem>>, vector<1x64x32xf32>
    %24 = vector.shape_cast %23 : vector<1x64x32xf32> to vector<64x32xf32>
    %cst_16 = arith.constant dense<0.000000e+00> : vector<128x32xf32>
    %25 = tpu.matmul %22, %24, %cst_16 {dimension_numbers = #tpu.dot_dimension_numbers<[1], [0], [0], [1], [0, 0, 1, 1], [], []>} : vector<128x64xf32>, vector<64x32xf32>, vector<128x32xf32> -> vector<128x32xf32>
    %26 = arith.addf %20, %25 : vector<128x32xf32>
    %27 = vector.extract_strided_slice %1 {offsets = [1, 1, 0], sizes = [8, 16, 64], strides = [1, 1, 1]} : vector<10x18x64xf32> to vector<8x16x64xf32>
    %28 = vector.shape_cast %27 : vector<8x16x64xf32> to vector<128x64xf32>
    %c4 = arith.constant 4 : index
    %c0_17 = arith.constant 0 : index
    %c0_18 = arith.constant 0 : index
    %29 = vector.load %arg3[%c4, %c0_17, %c0_18] : memref<9x64x32xf32, #tpu.memory_space<vmem>>, vector<1x64x32xf32>
    %30 = vector.shape_cast %29 : vector<1x64x32xf32> to vector<64x32xf32>
    %cst_19 = arith.constant dense<0.000000e+00> : vector<128x32xf32>
    %31 = tpu.matmul %28, %30, %cst_19 {dimension_numbers = #tpu.dot_dimension_numbers<[1], [0], [0], [1], [0, 0, 1, 1], [], []>} : vector<128x64xf32>, vector<64x32xf32>, vector<128x32xf32> -> vector<128x32xf32>
    %32 = arith.addf %26, %31 : vector<128x32xf32>
    %33 = vector.extract_strided_slice %1 {offsets = [1, 2, 0], sizes = [8, 16, 64], strides = [1, 1, 1]} : vector<10x18x64xf32> to vector<8x16x64xf32>
    %34 = vector.shape_cast %33 : vector<8x16x64xf32> to vector<128x64xf32>
    %c5 = arith.constant 5 : index
    %c0_20 = arith.constant 0 : index
    %c0_21 = arith.constant 0 : index
    %35 = vector.load %arg3[%c5, %c0_20, %c0_21] : memref<9x64x32xf32, #tpu.memory_space<vmem>>, vector<1x64x32xf32>
    %36 = vector.shape_cast %35 : vector<1x64x32xf32> to vector<64x32xf32>
    %cst_22 = arith.constant dense<0.000000e+00> : vector<128x32xf32>
    %37 = tpu.matmul %34, %36, %cst_22 {dimension_numbers = #tpu.dot_dimension_numbers<[1], [0], [0], [1], [0, 0, 1, 1], [], []>} : vector<128x64xf32>, vector<64x32xf32>, vector<128x32xf32> -> vector<128x32xf32>
    %38 = arith.addf %32, %37 : vector<128x32xf32>
    %39 = vector.extract_strided_slice %1 {offsets = [2, 0, 0], sizes = [8, 16, 64], strides = [1, 1, 1]} : vector<10x18x64xf32> to vector<8x16x64xf32>
    %40 = vector.shape_cast %39 : vector<8x16x64xf32> to vector<128x64xf32>
    %c6 = arith.constant 6 : index
    %c0_23 = arith.constant 0 : index
    %c0_24 = arith.constant 0 : index
    %41 = vector.load %arg3[%c6, %c0_23, %c0_24] : memref<9x64x32xf32, #tpu.memory_space<vmem>>, vector<1x64x32xf32>
    %42 = vector.shape_cast %41 : vector<1x64x32xf32> to vector<64x32xf32>
    %cst_25 = arith.constant dense<0.000000e+00> : vector<128x32xf32>
    %43 = tpu.matmul %40, %42, %cst_25 {dimension_numbers = #tpu.dot_dimension_numbers<[1], [0], [0], [1], [0, 0, 1, 1], [], []>} : vector<128x64xf32>, vector<64x32xf32>, vector<128x32xf32> -> vector<128x32xf32>
    %44 = arith.addf %38, %43 : vector<128x32xf32>
    %45 = vector.extract_strided_slice %1 {offsets = [2, 1, 0], sizes = [8, 16, 64], strides = [1, 1, 1]} : vector<10x18x64xf32> to vector<8x16x64xf32>
    %46 = vector.shape_cast %45 : vector<8x16x64xf32> to vector<128x64xf32>
    %c7 = arith.constant 7 : index
    %c0_26 = arith.constant 0 : index
    %c0_27 = arith.constant 0 : index
    %47 = vector.load %arg3[%c7, %c0_26, %c0_27] : memref<9x64x32xf32, #tpu.memory_space<vmem>>, vector<1x64x32xf32>
    %48 = vector.shape_cast %47 : vector<1x64x32xf32> to vector<64x32xf32>
    %cst_28 = arith.constant dense<0.000000e+00> : vector<128x32xf32>
    %49 = tpu.matmul %46, %48, %cst_28 {dimension_numbers = #tpu.dot_dimension_numbers<[1], [0], [0], [1], [0, 0, 1, 1], [], []>} : vector<128x64xf32>, vector<64x32xf32>, vector<128x32xf32> -> vector<128x32xf32>
    %50 = arith.addf %44, %49 : vector<128x32xf32>
    %51 = vector.extract_strided_slice %1 {offsets = [2, 2, 0], sizes = [8, 16, 64], strides = [1, 1, 1]} : vector<10x18x64xf32> to vector<8x16x64xf32>
    %52 = vector.shape_cast %51 : vector<8x16x64xf32> to vector<128x64xf32>
    %c8 = arith.constant 8 : index
    %c0_29 = arith.constant 0 : index
    %c0_30 = arith.constant 0 : index
    %53 = vector.load %arg3[%c8, %c0_29, %c0_30] : memref<9x64x32xf32, #tpu.memory_space<vmem>>, vector<1x64x32xf32>
    %54 = vector.shape_cast %53 : vector<1x64x32xf32> to vector<64x32xf32>
    %cst_31 = arith.constant dense<0.000000e+00> : vector<128x32xf32>
    %55 = tpu.matmul %52, %54, %cst_31 {dimension_numbers = #tpu.dot_dimension_numbers<[1], [0], [0], [1], [0, 0, 1, 1], [], []>} : vector<128x64xf32>, vector<64x32xf32>, vector<128x32xf32> -> vector<128x32xf32>
    %56 = arith.addf %50, %55 : vector<128x32xf32>
    %c0_32 = arith.constant 0 : index
    %c0_33 = arith.constant 0 : index
    %57 = vector.load %arg4[%c0_32, %c0_33] : memref<1x32xf32, #tpu.memory_space<vmem>>, vector<1x32xf32>
    %58 = vector.broadcast %57 : vector<1x32xf32> to vector<128x32xf32>
    %59 = arith.addf %56, %58 : vector<128x32xf32>
    %c0_34 = arith.constant 0 : index
    %c0_35 = arith.constant 0 : index
    %c0_36 = arith.constant 0 : index
    %60 = vector.load %arg5[%c0_34, %c0_35, %c0_36] : memref<1x128x32xf32, #tpu.memory_space<vmem>>, vector<1x128x32xf32>
    %61 = vector.shape_cast %60 : vector<1x128x32xf32> to vector<128x32xf32>
    %62 = vector.shape_cast %59 : vector<128x32xf32> to vector<1x128x32xf32>
    tpu.vector_store %arg5[%c0_34, %c0_35, %c0_36], %62 {strides = array<i32>} : memref<1x128x32xf32, #tpu.memory_space<vmem>>, vector<1x128x32xf32>,
    %cst_37 = arith.constant dense<0.000000e+00> : vector<32xf32>
    %63 = vector.multi_reduction <add>, %59, %cst_37 [0] : vector<128x32xf32> to vector<32xf32>
    %64 = vector.shape_cast %63 : vector<32xf32> to vector<1x32xf32>
    %c0_38 = arith.constant 0 : index
    %c0_39 = arith.constant 0 : index
    %c0_40 = arith.constant 0 : index
    %c0_41 = arith.constant 0 : index
    %65 = vector.load %arg6[%c0_38, %c0_39, %c0_40, %c0_41] : memref<1x1x2x32xf32, #tpu.memory_space<vmem>>, vector<1x1x1x32xf32>
    %66 = vector.shape_cast %65 : vector<1x1x1x32xf32> to vector<1x32xf32>
    %67 = vector.shape_cast %64 : vector<1x32xf32> to vector<1x1x1x32xf32>
    tpu.vector_store %arg6[%c0_38, %c0_39, %c0_40, %c0_41], %67 {strides = array<i32>} : memref<1x1x2x32xf32, #tpu.memory_space<vmem>>, vector<1x1x1x32xf32>,
    %68 = arith.mulf %59, %59 : vector<128x32xf32>
    %cst_42 = arith.constant dense<0.000000e+00> : vector<32xf32>
    %69 = vector.multi_reduction <add>, %68, %cst_42 [0] : vector<128x32xf32> to vector<32xf32>
    %70 = vector.shape_cast %69 : vector<32xf32> to vector<1x32xf32>
    %c0_43 = arith.constant 0 : index
    %c0_44 = arith.constant 0 : index
    %c1_45 = arith.constant 1 : index
    %c0_46 = arith.constant 0 : index
    %71 = vector.load %arg6[%c0_43, %c0_44, %c1_45, %c0_46] : memref<1x1x2x32xf32, #tpu.memory_space<vmem>>, vector<1x1x1x32xf32>
    %72 = vector.shape_cast %71 : vector<1x1x1x32xf32> to vector<1x32xf32>
    %73 = vector.shape_cast %70 : vector<1x32xf32> to vector<1x1x1x32xf32>
    tpu.vector_store %arg6[%c0_43, %c0_44, %c1_45, %c0_46], %73 {strides = array<i32>} : memref<1x1x2x32xf32, #tpu.memory_space<vmem>>, vector<1x1x1x32xf32>,
    return
  }
  func.func @transform_0(%arg0: i32, %arg1: i32) -> (i32, i32, i32, i32, i32) {
    %c0_i32 = arith.constant 0 : i32
    %c0_i32_0 = arith.constant 0 : i32
    %c0_i32_1 = arith.constant 0 : i32
    %c0_i32_2 = arith.constant 0 : i32
    return %arg0, %arg1, %c0_i32, %c0_i32_0, %c0_i32_1 : i32, i32, i32, i32, i32
  }
  func.func @transform_1(%arg0: i32, %arg1: i32) -> (i32, i32, i32) {
    %c0_i32 = arith.constant 0 : i32
    %c0_i32_0 = arith.constant 0 : i32
    %c0_i32_1 = arith.constant 0 : i32
    %c0_i32_2 = arith.constant 0 : i32
    return %c0_i32, %c0_i32_0, %c0_i32_1 : i32, i32, i32
  }
  func.func @transform_2(%arg0: i32, %arg1: i32) -> (i32, i32) {
    %c0_i32 = arith.constant 0 : i32
    %c0_i32_0 = arith.constant 0 : i32
    %c0_i32_1 = arith.constant 0 : i32
    return %c0_i32, %c0_i32_0 : i32, i32
  }
  func.func @transform_3(%arg0: i32, %arg1: i32) -> (i32, i32, i32) {
    %c0_i32 = arith.constant 0 : i32
    %c0_i32_0 = arith.constant 0 : i32
    return %arg0, %arg1, %c0_i32 : i32, i32, i32
  }
  func.func @transform_4(%arg0: i32, %arg1: i32) -> (i32, i32, i32, i32) {
    %c0_i32 = arith.constant 0 : i32
    %c0_i32_0 = arith.constant 0 : i32
    %c0_i32_1 = arith.constant 0 : i32
    return %arg0, %arg1, %c0_i32, %c0_i32_0 : i32, i32, i32, i32
  }
}

module attributes {stable_mosaic.version = 11 : i64} {
  func.func @_scale_shift_relu_kernel(%arg0: i32, %arg1: i32, %arg2: memref<1x128x32xf32, #tpu.memory_space<vmem>>, %arg3: memref<1x32xf32, #tpu.memory_space<vmem>>, %arg4: memref<1x32xf32, #tpu.memory_space<vmem>>, %arg5: memref<1x128x32xf32, #tpu.memory_space<vmem>>) attributes {dimension_semantics = [#tpu.dimension_semantics<parallel>, #tpu.dimension_semantics<parallel>], iteration_bounds = array<i64: 2, 2>, scalar_prefetch = 0 : i64, scratch_operands = 0 : i64, tpu.core_type = #tpu.core_type<tc>, window_params = [{transform_indices = @transform_0, window_bounds = array<i64: 1, 128, 32>}, {pipeline_mode = #tpu.pipeline_mode<synchronous>, transform_indices = @transform_1, window_bounds = array<i64: 1, 32>}, {pipeline_mode = #tpu.pipeline_mode<synchronous>, transform_indices = @transform_2, window_bounds = array<i64: 1, 32>}, {transform_indices = @transform_3, window_bounds = array<i64: 1, 128, 32>}]} {
    %c0 = arith.constant 0 : index
    %c0_0 = arith.constant 0 : index
    %c0_1 = arith.constant 0 : index
    %0 = vector.load %arg2[%c0, %c0_0, %c0_1] : memref<1x128x32xf32, #tpu.memory_space<vmem>>, vector<1x128x32xf32>
    %1 = vector.shape_cast %0 : vector<1x128x32xf32> to vector<128x32xf32>
    %c0_2 = arith.constant 0 : index
    %c0_3 = arith.constant 0 : index
    %2 = vector.load %arg3[%c0_2, %c0_3] : memref<1x32xf32, #tpu.memory_space<vmem>>, vector<1x32xf32>
    %3 = vector.broadcast %2 : vector<1x32xf32> to vector<128x32xf32>
    %4 = arith.mulf %1, %3 : vector<128x32xf32>
    %c0_4 = arith.constant 0 : index
    %c0_5 = arith.constant 0 : index
    %5 = vector.load %arg4[%c0_4, %c0_5] : memref<1x32xf32, #tpu.memory_space<vmem>>, vector<1x32xf32>
    %6 = vector.broadcast %5 : vector<1x32xf32> to vector<128x32xf32>
    %7 = arith.addf %4, %6 : vector<128x32xf32>
    %cst = arith.constant 0.000000e+00 : f32
    %8 = vector.broadcast %cst : f32 to vector<128x32xf32>
    %9 = arith.maximumf %7, %8 : vector<128x32xf32>
    %c0_6 = arith.constant 0 : index
    %c0_7 = arith.constant 0 : index
    %c0_8 = arith.constant 0 : index
    %10 = vector.load %arg5[%c0_6, %c0_7, %c0_8] : memref<1x128x32xf32, #tpu.memory_space<vmem>>, vector<1x128x32xf32>
    %11 = vector.shape_cast %10 : vector<1x128x32xf32> to vector<128x32xf32>
    %12 = vector.shape_cast %9 : vector<128x32xf32> to vector<1x128x32xf32>
    tpu.vector_store %arg5[%c0_6, %c0_7, %c0_8], %12 {strides = array<i32>} : memref<1x128x32xf32, #tpu.memory_space<vmem>>, vector<1x128x32xf32>,
    return
  }
  func.func @transform_0(%arg0: i32, %arg1: i32) -> (i32, i32, i32) {
    %c0_i32 = arith.constant 0 : i32
    %c0_i32_0 = arith.constant 0 : i32
    return %arg0, %arg1, %c0_i32 : i32, i32, i32
  }
  func.func @transform_1(%arg0: i32, %arg1: i32) -> (i32, i32) {
    %c0_i32 = arith.constant 0 : i32
    %c0_i32_0 = arith.constant 0 : i32
    %c0_i32_1 = arith.constant 0 : i32
    return %c0_i32, %c0_i32_0 : i32, i32
  }
  func.func @transform_2(%arg0: i32, %arg1: i32) -> (i32, i32) {
    %c0_i32 = arith.constant 0 : i32
    %c0_i32_0 = arith.constant 0 : i32
    %c0_i32_1 = arith.constant 0 : i32
    return %c0_i32, %c0_i32_0 : i32, i32
  }
  func.func @transform_3(%arg0: i32, %arg1: i32) -> (i32, i32, i32) {
    %c0_i32 = arith.constant 0 : i32
    %c0_i32_0 = arith.constant 0 : i32
    return %arg0, %arg1, %c0_i32 : i32, i32, i32
  }
}

module attributes {stable_mosaic.version = 11 : i64} {
  func.func @_conv3x3_stats_kernel(%arg0: i32, %arg1: i32, %arg2: memref<1x1x10x18x32xf32, #tpu.memory_space<vmem>>, %arg3: memref<9x32x32xf32, #tpu.memory_space<vmem>>, %arg4: memref<1x32xf32, #tpu.memory_space<vmem>>, %arg5: memref<1x128x32xf32, #tpu.memory_space<vmem>>, %arg6: memref<1x1x2x32xf32, #tpu.memory_space<vmem>>) attributes {dimension_semantics = [#tpu.dimension_semantics<parallel>, #tpu.dimension_semantics<parallel>], iteration_bounds = array<i64: 2, 2>, scalar_prefetch = 0 : i64, scratch_operands = 0 : i64, tpu.core_type = #tpu.core_type<tc>, window_params = [{transform_indices = @transform_0, window_bounds = array<i64: 1, 1, 10, 18, 32>}, {pipeline_mode = #tpu.pipeline_mode<synchronous>, transform_indices = @transform_1, window_bounds = array<i64: 9, 32, 32>}, {pipeline_mode = #tpu.pipeline_mode<synchronous>, transform_indices = @transform_2, window_bounds = array<i64: 1, 32>}, {transform_indices = @transform_3, window_bounds = array<i64: 1, 128, 32>}, {transform_indices = @transform_4, window_bounds = array<i64: 1, 1, 2, 32>}]} {
    %c0 = arith.constant 0 : index
    %c0_0 = arith.constant 0 : index
    %c0_1 = arith.constant 0 : index
    %c0_2 = arith.constant 0 : index
    %c0_3 = arith.constant 0 : index
    %0 = vector.load %arg2[%c0, %c0_0, %c0_1, %c0_2, %c0_3] : memref<1x1x10x18x32xf32, #tpu.memory_space<vmem>>, vector<1x1x10x18x32xf32>
    %1 = vector.shape_cast %0 : vector<1x1x10x18x32xf32> to vector<10x18x32xf32>
    %cst = arith.constant 0.000000e+00 : f32
    %2 = vector.broadcast %cst : f32 to vector<128x32xf32>
    %3 = vector.extract_strided_slice %1 {offsets = [0, 0, 0], sizes = [8, 16, 32], strides = [1, 1, 1]} : vector<10x18x32xf32> to vector<8x16x32xf32>
    %4 = vector.shape_cast %3 : vector<8x16x32xf32> to vector<128x32xf32>
    %c0_4 = arith.constant 0 : index
    %c0_5 = arith.constant 0 : index
    %c0_6 = arith.constant 0 : index
    %5 = vector.load %arg3[%c0_4, %c0_5, %c0_6] : memref<9x32x32xf32, #tpu.memory_space<vmem>>, vector<1x32x32xf32>
    %6 = vector.shape_cast %5 : vector<1x32x32xf32> to vector<32x32xf32>
    %cst_7 = arith.constant dense<0.000000e+00> : vector<128x32xf32>
    %7 = tpu.matmul %4, %6, %cst_7 {dimension_numbers = #tpu.dot_dimension_numbers<[1], [0], [0], [1], [0, 0, 1, 1], [], []>} : vector<128x32xf32>, vector<32x32xf32>, vector<128x32xf32> -> vector<128x32xf32>
    %8 = arith.addf %2, %7 : vector<128x32xf32>
    %9 = vector.extract_strided_slice %1 {offsets = [0, 1, 0], sizes = [8, 16, 32], strides = [1, 1, 1]} : vector<10x18x32xf32> to vector<8x16x32xf32>
    %10 = vector.shape_cast %9 : vector<8x16x32xf32> to vector<128x32xf32>
    %c1 = arith.constant 1 : index
    %c0_8 = arith.constant 0 : index
    %c0_9 = arith.constant 0 : index
    %11 = vector.load %arg3[%c1, %c0_8, %c0_9] : memref<9x32x32xf32, #tpu.memory_space<vmem>>, vector<1x32x32xf32>
    %12 = vector.shape_cast %11 : vector<1x32x32xf32> to vector<32x32xf32>
    %cst_10 = arith.constant dense<0.000000e+00> : vector<128x32xf32>
    %13 = tpu.matmul %10, %12, %cst_10 {dimension_numbers = #tpu.dot_dimension_numbers<[1], [0], [0], [1], [0, 0, 1, 1], [], []>} : vector<128x32xf32>, vector<32x32xf32>, vector<128x32xf32> -> vector<128x32xf32>
    %14 = arith.addf %8, %13 : vector<128x32xf32>
    %15 = vector.extract_strided_slice %1 {offsets = [0, 2, 0], sizes = [8, 16, 32], strides = [1, 1, 1]} : vector<10x18x32xf32> to vector<8x16x32xf32>
    %16 = vector.shape_cast %15 : vector<8x16x32xf32> to vector<128x32xf32>
    %c2 = arith.constant 2 : index
    %c0_11 = arith.constant 0 : index
    %c0_12 = arith.constant 0 : index
    %17 = vector.load %arg3[%c2, %c0_11, %c0_12] : memref<9x32x32xf32, #tpu.memory_space<vmem>>, vector<1x32x32xf32>
    %18 = vector.shape_cast %17 : vector<1x32x32xf32> to vector<32x32xf32>
    %cst_13 = arith.constant dense<0.000000e+00> : vector<128x32xf32>
    %19 = tpu.matmul %16, %18, %cst_13 {dimension_numbers = #tpu.dot_dimension_numbers<[1], [0], [0], [1], [0, 0, 1, 1], [], []>} : vector<128x32xf32>, vector<32x32xf32>, vector<128x32xf32> -> vector<128x32xf32>
    %20 = arith.addf %14, %19 : vector<128x32xf32>
    %21 = vector.extract_strided_slice %1 {offsets = [1, 0, 0], sizes = [8, 16, 32], strides = [1, 1, 1]} : vector<10x18x32xf32> to vector<8x16x32xf32>
    %22 = vector.shape_cast %21 : vector<8x16x32xf32> to vector<128x32xf32>
    %c3 = arith.constant 3 : index
    %c0_14 = arith.constant 0 : index
    %c0_15 = arith.constant 0 : index
    %23 = vector.load %arg3[%c3, %c0_14, %c0_15] : memref<9x32x32xf32, #tpu.memory_space<vmem>>, vector<1x32x32xf32>
    %24 = vector.shape_cast %23 : vector<1x32x32xf32> to vector<32x32xf32>
    %cst_16 = arith.constant dense<0.000000e+00> : vector<128x32xf32>
    %25 = tpu.matmul %22, %24, %cst_16 {dimension_numbers = #tpu.dot_dimension_numbers<[1], [0], [0], [1], [0, 0, 1, 1], [], []>} : vector<128x32xf32>, vector<32x32xf32>, vector<128x32xf32> -> vector<128x32xf32>
    %26 = arith.addf %20, %25 : vector<128x32xf32>
    %27 = vector.extract_strided_slice %1 {offsets = [1, 1, 0], sizes = [8, 16, 32], strides = [1, 1, 1]} : vector<10x18x32xf32> to vector<8x16x32xf32>
    %28 = vector.shape_cast %27 : vector<8x16x32xf32> to vector<128x32xf32>
    %c4 = arith.constant 4 : index
    %c0_17 = arith.constant 0 : index
    %c0_18 = arith.constant 0 : index
    %29 = vector.load %arg3[%c4, %c0_17, %c0_18] : memref<9x32x32xf32, #tpu.memory_space<vmem>>, vector<1x32x32xf32>
    %30 = vector.shape_cast %29 : vector<1x32x32xf32> to vector<32x32xf32>
    %cst_19 = arith.constant dense<0.000000e+00> : vector<128x32xf32>
    %31 = tpu.matmul %28, %30, %cst_19 {dimension_numbers = #tpu.dot_dimension_numbers<[1], [0], [0], [1], [0, 0, 1, 1], [], []>} : vector<128x32xf32>, vector<32x32xf32>, vector<128x32xf32> -> vector<128x32xf32>
    %32 = arith.addf %26, %31 : vector<128x32xf32>
    %33 = vector.extract_strided_slice %1 {offsets = [1, 2, 0], sizes = [8, 16, 32], strides = [1, 1, 1]} : vector<10x18x32xf32> to vector<8x16x32xf32>
    %34 = vector.shape_cast %33 : vector<8x16x32xf32> to vector<128x32xf32>
    %c5 = arith.constant 5 : index
    %c0_20 = arith.constant 0 : index
    %c0_21 = arith.constant 0 : index
    %35 = vector.load %arg3[%c5, %c0_20, %c0_21] : memref<9x32x32xf32, #tpu.memory_space<vmem>>, vector<1x32x32xf32>
    %36 = vector.shape_cast %35 : vector<1x32x32xf32> to vector<32x32xf32>
    %cst_22 = arith.constant dense<0.000000e+00> : vector<128x32xf32>
    %37 = tpu.matmul %34, %36, %cst_22 {dimension_numbers = #tpu.dot_dimension_numbers<[1], [0], [0], [1], [0, 0, 1, 1], [], []>} : vector<128x32xf32>, vector<32x32xf32>, vector<128x32xf32> -> vector<128x32xf32>
    %38 = arith.addf %32, %37 : vector<128x32xf32>
    %39 = vector.extract_strided_slice %1 {offsets = [2, 0, 0], sizes = [8, 16, 32], strides = [1, 1, 1]} : vector<10x18x32xf32> to vector<8x16x32xf32>
    %40 = vector.shape_cast %39 : vector<8x16x32xf32> to vector<128x32xf32>
    %c6 = arith.constant 6 : index
    %c0_23 = arith.constant 0 : index
    %c0_24 = arith.constant 0 : index
    %41 = vector.load %arg3[%c6, %c0_23, %c0_24] : memref<9x32x32xf32, #tpu.memory_space<vmem>>, vector<1x32x32xf32>
    %42 = vector.shape_cast %41 : vector<1x32x32xf32> to vector<32x32xf32>
    %cst_25 = arith.constant dense<0.000000e+00> : vector<128x32xf32>
    %43 = tpu.matmul %40, %42, %cst_25 {dimension_numbers = #tpu.dot_dimension_numbers<[1], [0], [0], [1], [0, 0, 1, 1], [], []>} : vector<128x32xf32>, vector<32x32xf32>, vector<128x32xf32> -> vector<128x32xf32>
    %44 = arith.addf %38, %43 : vector<128x32xf32>
    %45 = vector.extract_strided_slice %1 {offsets = [2, 1, 0], sizes = [8, 16, 32], strides = [1, 1, 1]} : vector<10x18x32xf32> to vector<8x16x32xf32>
    %46 = vector.shape_cast %45 : vector<8x16x32xf32> to vector<128x32xf32>
    %c7 = arith.constant 7 : index
    %c0_26 = arith.constant 0 : index
    %c0_27 = arith.constant 0 : index
    %47 = vector.load %arg3[%c7, %c0_26, %c0_27] : memref<9x32x32xf32, #tpu.memory_space<vmem>>, vector<1x32x32xf32>
    %48 = vector.shape_cast %47 : vector<1x32x32xf32> to vector<32x32xf32>
    %cst_28 = arith.constant dense<0.000000e+00> : vector<128x32xf32>
    %49 = tpu.matmul %46, %48, %cst_28 {dimension_numbers = #tpu.dot_dimension_numbers<[1], [0], [0], [1], [0, 0, 1, 1], [], []>} : vector<128x32xf32>, vector<32x32xf32>, vector<128x32xf32> -> vector<128x32xf32>
    %50 = arith.addf %44, %49 : vector<128x32xf32>
    %51 = vector.extract_strided_slice %1 {offsets = [2, 2, 0], sizes = [8, 16, 32], strides = [1, 1, 1]} : vector<10x18x32xf32> to vector<8x16x32xf32>
    %52 = vector.shape_cast %51 : vector<8x16x32xf32> to vector<128x32xf32>
    %c8 = arith.constant 8 : index
    %c0_29 = arith.constant 0 : index
    %c0_30 = arith.constant 0 : index
    %53 = vector.load %arg3[%c8, %c0_29, %c0_30] : memref<9x32x32xf32, #tpu.memory_space<vmem>>, vector<1x32x32xf32>
    %54 = vector.shape_cast %53 : vector<1x32x32xf32> to vector<32x32xf32>
    %cst_31 = arith.constant dense<0.000000e+00> : vector<128x32xf32>
    %55 = tpu.matmul %52, %54, %cst_31 {dimension_numbers = #tpu.dot_dimension_numbers<[1], [0], [0], [1], [0, 0, 1, 1], [], []>} : vector<128x32xf32>, vector<32x32xf32>, vector<128x32xf32> -> vector<128x32xf32>
    %56 = arith.addf %50, %55 : vector<128x32xf32>
    %c0_32 = arith.constant 0 : index
    %c0_33 = arith.constant 0 : index
    %57 = vector.load %arg4[%c0_32, %c0_33] : memref<1x32xf32, #tpu.memory_space<vmem>>, vector<1x32xf32>
    %58 = vector.broadcast %57 : vector<1x32xf32> to vector<128x32xf32>
    %59 = arith.addf %56, %58 : vector<128x32xf32>
    %c0_34 = arith.constant 0 : index
    %c0_35 = arith.constant 0 : index
    %c0_36 = arith.constant 0 : index
    %60 = vector.load %arg5[%c0_34, %c0_35, %c0_36] : memref<1x128x32xf32, #tpu.memory_space<vmem>>, vector<1x128x32xf32>
    %61 = vector.shape_cast %60 : vector<1x128x32xf32> to vector<128x32xf32>
    %62 = vector.shape_cast %59 : vector<128x32xf32> to vector<1x128x32xf32>
    tpu.vector_store %arg5[%c0_34, %c0_35, %c0_36], %62 {strides = array<i32>} : memref<1x128x32xf32, #tpu.memory_space<vmem>>, vector<1x128x32xf32>,
    %cst_37 = arith.constant dense<0.000000e+00> : vector<32xf32>
    %63 = vector.multi_reduction <add>, %59, %cst_37 [0] : vector<128x32xf32> to vector<32xf32>
    %64 = vector.shape_cast %63 : vector<32xf32> to vector<1x32xf32>
    %c0_38 = arith.constant 0 : index
    %c0_39 = arith.constant 0 : index
    %c0_40 = arith.constant 0 : index
    %c0_41 = arith.constant 0 : index
    %65 = vector.load %arg6[%c0_38, %c0_39, %c0_40, %c0_41] : memref<1x1x2x32xf32, #tpu.memory_space<vmem>>, vector<1x1x1x32xf32>
    %66 = vector.shape_cast %65 : vector<1x1x1x32xf32> to vector<1x32xf32>
    %67 = vector.shape_cast %64 : vector<1x32xf32> to vector<1x1x1x32xf32>
    tpu.vector_store %arg6[%c0_38, %c0_39, %c0_40, %c0_41], %67 {strides = array<i32>} : memref<1x1x2x32xf32, #tpu.memory_space<vmem>>, vector<1x1x1x32xf32>,
    %68 = arith.mulf %59, %59 : vector<128x32xf32>
    %cst_42 = arith.constant dense<0.000000e+00> : vector<32xf32>
    %69 = vector.multi_reduction <add>, %68, %cst_42 [0] : vector<128x32xf32> to vector<32xf32>
    %70 = vector.shape_cast %69 : vector<32xf32> to vector<1x32xf32>
    %c0_43 = arith.constant 0 : index
    %c0_44 = arith.constant 0 : index
    %c1_45 = arith.constant 1 : index
    %c0_46 = arith.constant 0 : index
    %71 = vector.load %arg6[%c0_43, %c0_44, %c1_45, %c0_46] : memref<1x1x2x32xf32, #tpu.memory_space<vmem>>, vector<1x1x1x32xf32>
    %72 = vector.shape_cast %71 : vector<1x1x1x32xf32> to vector<1x32xf32>
    %73 = vector.shape_cast %70 : vector<1x32xf32> to vector<1x1x1x32xf32>
    tpu.vector_store %arg6[%c0_43, %c0_44, %c1_45, %c0_46], %73 {strides = array<i32>} : memref<1x1x2x32xf32, #tpu.memory_space<vmem>>, vector<1x1x1x32xf32>,
    return
  }
  func.func @transform_0(%arg0: i32, %arg1: i32) -> (i32, i32, i32, i32, i32) {
    %c0_i32 = arith.constant 0 : i32
    %c0_i32_0 = arith.constant 0 : i32
    %c0_i32_1 = arith.constant 0 : i32
    %c0_i32_2 = arith.constant 0 : i32
    return %arg0, %arg1, %c0_i32, %c0_i32_0, %c0_i32_1 : i32, i32, i32, i32, i32
  }
  func.func @transform_1(%arg0: i32, %arg1: i32) -> (i32, i32, i32) {
    %c0_i32 = arith.constant 0 : i32
    %c0_i32_0 = arith.constant 0 : i32
    %c0_i32_1 = arith.constant 0 : i32
    %c0_i32_2 = arith.constant 0 : i32
    return %c0_i32, %c0_i32_0, %c0_i32_1 : i32, i32, i32
  }
  func.func @transform_2(%arg0: i32, %arg1: i32) -> (i32, i32) {
    %c0_i32 = arith.constant 0 : i32
    %c0_i32_0 = arith.constant 0 : i32
    %c0_i32_1 = arith.constant 0 : i32
    return %c0_i32, %c0_i32_0 : i32, i32
  }
  func.func @transform_3(%arg0: i32, %arg1: i32) -> (i32, i32, i32) {
    %c0_i32 = arith.constant 0 : i32
    %c0_i32_0 = arith.constant 0 : i32
    return %arg0, %arg1, %c0_i32 : i32, i32, i32
  }
  func.func @transform_4(%arg0: i32, %arg1: i32) -> (i32, i32, i32, i32) {
    %c0_i32 = arith.constant 0 : i32
    %c0_i32_0 = arith.constant 0 : i32
    %c0_i32_1 = arith.constant 0 : i32
    return %arg0, %arg1, %c0_i32, %c0_i32_0 : i32, i32, i32, i32
  }
}

module attributes {stable_mosaic.version = 11 : i64} {
  func.func @kernel(%arg0: i32, %arg1: i32, %arg2: i32, %arg3: memref<256x32xf32, #tpu.memory_space<vmem>>, %arg4: memref<1x32xf32, #tpu.memory_space<vmem>>, %arg5: memref<1x32xf32, #tpu.memory_space<vmem>>, %arg6: memref<32x3xf32, #tpu.memory_space<vmem>>, %arg7: memref<1x3xf32, #tpu.memory_space<vmem>>, %arg8: memref<256x3xf32, #tpu.memory_space<vmem>>, %arg9: memref<256x3xf32, #tpu.memory_space<vmem>>) attributes {dimension_semantics = [#tpu.dimension_semantics<parallel>, #tpu.dimension_semantics<parallel>, #tpu.dimension_semantics<arbitrary>], iteration_bounds = array<i64: 2, 1, 1>, scalar_prefetch = 0 : i64, scratch_operands = 1 : i64, tpu.core_type = #tpu.core_type<tc>, window_params = [{transform_indices = @transform_0, window_bounds = array<i64: 256, 32>}, {transform_indices = @transform_1, window_bounds = array<i64: 1, 32>}, {transform_indices = @transform_2, window_bounds = array<i64: 1, 32>}, {transform_indices = @transform_3, window_bounds = array<i64: 32, 3>}, {transform_indices = @transform_4, window_bounds = array<i64: 1, 3>}, {transform_indices = @transform_5, window_bounds = array<i64: 256, 3>}]} {
    %c0_i32 = arith.constant 0 : i32
    %0 = arith.cmpi eq, %arg2, %c0_i32 : i32
    %1 = arith.extui %0 : i1 to i32
    %c0_i32_0 = arith.constant 0 : i32
    %2 = arith.cmpi ne, %1, %c0_i32_0 : i32
    scf.if %2 {
      %cst_15 = arith.constant 0.000000e+00 : f32
      %20 = vector.broadcast %cst_15 : f32 to vector<256x3xf32>
      %c0_16 = arith.constant 0 : index
      %c0_17 = arith.constant 0 : index
      %21 = vector.load %arg9[%c0_16, %c0_17] : memref<256x3xf32, #tpu.memory_space<vmem>>, vector<256x3xf32>
      tpu.vector_store %arg9[%c0_16, %c0_17], %20 {strides = array<i32>} : memref<256x3xf32, #tpu.memory_space<vmem>>, vector<256x3xf32>,
    } else {
    }
    %c0 = arith.constant 0 : index
    %c0_1 = arith.constant 0 : index
    %3 = vector.load %arg3[%c0, %c0_1] : memref<256x32xf32, #tpu.memory_space<vmem>>, vector<256x32xf32>
    %c0_2 = arith.constant 0 : index
    %c0_3 = arith.constant 0 : index
    %4 = vector.load %arg4[%c0_2, %c0_3] : memref<1x32xf32, #tpu.memory_space<vmem>>, vector<1x32xf32>
    %5 = vector.broadcast %4 : vector<1x32xf32> to vector<256x32xf32>
    %6 = arith.mulf %3, %5 : vector<256x32xf32>
    %c0_4 = arith.constant 0 : index
    %c0_5 = arith.constant 0 : index
    %7 = vector.load %arg5[%c0_4, %c0_5] : memref<1x32xf32, #tpu.memory_space<vmem>>, vector<1x32xf32>
    %8 = vector.broadcast %7 : vector<1x32xf32> to vector<256x32xf32>
    %9 = arith.addf %6, %8 : vector<256x32xf32>
    %cst = arith.constant 0.000000e+00 : f32
    %10 = vector.broadcast %cst : f32 to vector<256x32xf32>
    %11 = arith.maximumf %9, %10 : vector<256x32xf32>
    %c0_6 = arith.constant 0 : index
    %c0_7 = arith.constant 0 : index
    %12 = vector.load %arg9[%c0_6, %c0_7] : memref<256x3xf32, #tpu.memory_space<vmem>>, vector<256x3xf32>
    %c0_8 = arith.constant 0 : index
    %c0_9 = arith.constant 0 : index
    %13 = vector.load %arg6[%c0_8, %c0_9] : memref<32x3xf32, #tpu.memory_space<vmem>>, vector<32x3xf32>
    %cst_10 = arith.constant dense<0.000000e+00> : vector<256x3xf32>
    %14 = tpu.matmul %11, %13, %cst_10 {dimension_numbers = #tpu.dot_dimension_numbers<[1], [0], [0], [1], [0, 0, 1, 1], [], []>} : vector<256x32xf32>, vector<32x3xf32>, vector<256x3xf32> -> vector<256x3xf32>
    %15 = arith.addf %12, %14 : vector<256x3xf32>
    %c0_11 = arith.constant 0 : index
    %c0_12 = arith.constant 0 : index
    %16 = vector.load %arg9[%c0_11, %c0_12] : memref<256x3xf32, #tpu.memory_space<vmem>>, vector<256x3xf32>
    tpu.vector_store %arg9[%c0_11, %c0_12], %15 {strides = array<i32>} : memref<256x3xf32, #tpu.memory_space<vmem>>, vector<256x3xf32>,
    %c0_i32_13 = arith.constant 0 : i32
    %17 = arith.cmpi eq, %arg2, %c0_i32_13 : i32
    %18 = arith.extui %17 : i1 to i32
    %c0_i32_14 = arith.constant 0 : i32
    %19 = arith.cmpi ne, %18, %c0_i32_14 : i32
    scf.if %19 {
      %c0_15 = arith.constant 0 : index
      %c0_16 = arith.constant 0 : index
      %20 = vector.load %arg9[%c0_15, %c0_16] : memref<256x3xf32, #tpu.memory_space<vmem>>, vector<256x3xf32>
      %c0_17 = arith.constant 0 : index
      %c0_18 = arith.constant 0 : index
      %21 = vector.load %arg7[%c0_17, %c0_18] : memref<1x3xf32, #tpu.memory_space<vmem>>, vector<1x3xf32>
      %22 = vector.broadcast %21 : vector<1x3xf32> to vector<256x3xf32>
      %23 = arith.addf %20, %22 : vector<256x3xf32>
      %c0_19 = arith.constant 0 : index
      %c0_20 = arith.constant 0 : index
      %24 = vector.load %arg8[%c0_19, %c0_20] : memref<256x3xf32, #tpu.memory_space<vmem>>, vector<256x3xf32>
      tpu.vector_store %arg8[%c0_19, %c0_20], %23 {strides = array<i32>} : memref<256x3xf32, #tpu.memory_space<vmem>>, vector<256x3xf32>,
    } else {
    }
    return
  }
  func.func @transform_0(%arg0: i32, %arg1: i32, %arg2: i32) -> (i32, i32) {
    %c0_i32 = arith.constant 0 : i32
    return %arg0, %arg2 : i32, i32
  }
  func.func @transform_1(%arg0: i32, %arg1: i32, %arg2: i32) -> (i32, i32) {
    %c0_i32 = arith.constant 0 : i32
    %c0_i32_0 = arith.constant 0 : i32
    return %c0_i32, %arg2 : i32, i32
  }
  func.func @transform_2(%arg0: i32, %arg1: i32, %arg2: i32) -> (i32, i32) {
    %c0_i32 = arith.constant 0 : i32
    %c0_i32_0 = arith.constant 0 : i32
    return %c0_i32, %arg2 : i32, i32
  }
  func.func @transform_3(%arg0: i32, %arg1: i32, %arg2: i32) -> (i32, i32) {
    %c0_i32 = arith.constant 0 : i32
    return %arg2, %arg1 : i32, i32
  }
  func.func @transform_4(%arg0: i32, %arg1: i32, %arg2: i32) -> (i32, i32) {
    %c0_i32 = arith.constant 0 : i32
    %c0_i32_0 = arith.constant 0 : i32
    return %c0_i32, %arg1 : i32, i32
  }
  func.func @transform_5(%arg0: i32, %arg1: i32, %arg2: i32) -> (i32, i32) {
    %c0_i32 = arith.constant 0 : i32
    return %arg0, %arg1 : i32, i32
  }
}

</mosaic_0001>

<llo_original>
// kernel: unet_decoder_forward.10
$region0: #{unet_decoder_forward.10}
  #allocation0 [shape = 'u32[]', space=smem, size = 0x4, offset = 0x4, fixed_abs, tag = 'smem constant byte address 0x4 - core index']
  #allocation1 [shape = 'u32[72,128]{1,0:T(1,128)}', space=vmem, size = 0x9000, scoped, tag = 'internal scratch']
  #allocation2 [shape = 'f32[2,512]{1,0:T(2,128)}', space=vmem, size = 0x1000, scoped, tag = 'scratch operand']
  %s0 = inlined_call_operand.vmem [shape: f32[2,64], index: 0, kind: input, shape index: {}]
  %s1 = inlined_call_operand.hbm [shape: f32[64,2048], index: 1, kind: input, shape index: {}]
  %s2 = inlined_call_operand.vmem [shape: f32[1,2048], index: 2, kind: input, shape index: {}]
  %s3 = inlined_call_operand.vmem [shape: f32[2,2048], index: 3, kind: output, shape index: {}]
  %s4 = sld [smem:[#allocation0]]
  $region57: #{unet_decoder_forward.10} parent=0
    _
  %s6 = ssub.s32 1, %s4
  %s7 = scalar_select 0, %s6, %s4
  $region1: #{unet_decoder_forward.10} parent=0
    #allocation3 [shape = 'u8[262144]{0}', space=vmem, size = 0x40000, scoped, tag = 'input window, operand 1']
    #allocation4 [shape = 's32[2]{0}', space=sflag, size = 0x8, scoped, tag = 'scoped memory for unet_decoder_forward.10']
    %8 = vsyncpa [#allocation4], 0
    %s9 = scalar_lea.sflag [#allocation4], 1
    %10 = vsyncpa %s9, 0
    loop: start=0, step=1, limit=6
    $region2: #{unet_decoder_forward.10} parent=1 // loop_pre_header
      _
    $region3: #{unet_decoder_forward.10} parent=1 // loop_header
      %s12 = sphi 0, %s16
      %p13 = scmp.ge.s32.totalorder %s12, 6
      %s19 = sphi 0, %s38
      %s20 = sphi 0, %s34
      %s21 = sphi 0, %s30
      %s22 = sphi 0, %s19
      %s23 = sphi 0, %s20
      %s24 = sphi 0, %s21
      %s25 = sphi 0, %s22
      %s26 = sphi 0, %s23
      %s27 = sphi 0, %s24
      %s43 = sphi 0, %s45
      %s46 = sphi 0, %s43
      %s47 = sphi 0, %s46
      %s63 = sphi 0, %s47
      %s71 = sphi 0, %s73
      %s74 = sphi 0, %s71
      %s75 = sphi 0, %s74
      %s91 = sphi 0, %s75
      %s97 = sphi 0, %s99
      %s100 = sphi 0, %s97
      %s101 = sphi 0, %s100
      %s117 = sphi 0, %s101
      %s125 = sphi 0, %s127
      %s128 = sphi 0, %s125
      %s129 = sphi 0, %s128
      %s145 = sphi 0, %s129
    $region4: #{unet_decoder_forward.10} parent=1 // loop_header_branch
      %15 = sbr.rel (%p13) target = $region8
    $region5: #{unet_decoder_forward.10} parent=1 // loop_body
      %s17 = ssub.s32 %s12, 1
      %s18 = ssub.s32 %s12, 2
      %s28 = sadd.s32 1, %s21
      %p29 = scmp.ge.s32.totalorder %s28, 1
      %s30 = scalar_select %p29, 0, %s28
      %s31 = sadd.s32 1, %s20
      %s32 = scalar_select %p29, %s31, %s20
      %p33 = scmp.ge.s32.totalorder %s32, 4
      %s34 = scalar_select %p33, 0, %s32
      %s35 = sadd.s32 1, %s19
      %s36 = scalar_select %p33, %s35, %s19
      %p37 = scmp.ge.s32.totalorder %s36, 1
      %s38 = scalar_select %p37, 0, %s36
      %s39 = ssub.s32 %s19, %s38
      %s40 = ssub.s32 %s21, %s30
      %s41 = sor.u32 %s39, %s40
      %p42 = scmp.eq.s32.totalorder %s41, 0
      %s44 = sadd.s32 %s43, 1
      %s45 = scalar_select %p42, %s43, %s44
      %p48 = pneg %p42
      %p49 = scmp.eq.s32.totalorder %s12, 3
      %p50 = por %p48, %p49
      %p51 = scmp.ne.s32.totalorder %s43, %s46
      %p52 = scmp.eq.s32.totalorder %s12, 0
      %p53 = por %p51, %p52
      %p54 = scmp.ne.s32.totalorder %s43, %s46
      %p55 = scmp.eq.s32.totalorder %s17, 3
      %p56 = por %p54, %p55
      %p57 = scmp.ne.s32.totalorder %s46, %s47
      %p58 = scmp.eq.s32.totalorder %s17, 0
      %p59 = por %p57, %p58
      %p60 = scmp.ne.s32.totalorder %s46, %s47
      %p61 = scmp.eq.s32.totalorder %s18, 3
      %p62 = por %p60, %p61
      %p64 = scmp.ne.s32.totalorder %s47, %s63
      %p65 = scmp.eq.s32.totalorder %s18, 0
      %p66 = por %p64, %p65
      %s67 = ssub.s32 %s21, %s30
      %s68 = ssub.s32 %s20, %s34
      %s69 = sor.u32 %s67, %s68
      %p70 = scmp.eq.s32.totalorder %s69, 0
      %s72 = sadd.s32 %s71, 1
      %s73 = scalar_select %p70, %s71, %s72
      %p76 = pneg %p70
      %p77 = scmp.eq.s32.totalorder %s12, 3
      %p78 = por %p76, %p77
      %p79 = scmp.ne.s32.totalorder %s71, %s74
      %p80 = scmp.eq.s32.totalorder %s12, 0
      %p81 = por %p79, %p80
      %p82 = scmp.ne.s32.totalorder %s71, %s74
      %p83 = scmp.eq.s32.totalorder %s17, 3
      %p84 = por %p82, %p83
      %p85 = scmp.ne.s32.totalorder %s74, %s75
      %p86 = scmp.eq.s32.totalorder %s17, 0
      %p87 = por %p85, %p86
      %p88 = scmp.ne.s32.totalorder %s74, %s75
      %p89 = scmp.eq.s32.totalorder %s18, 3
      %p90 = por %p88, %p89
      %p92 = scmp.ne.s32.totalorder %s75, %s91
      %p93 = scmp.eq.s32.totalorder %s18, 0
      %p94 = por %p92, %p93
      %s95 = ssub.s32 %s20, %s34
      %p96 = scmp.eq.s32.totalorder %s95, 0
      %s98 = sadd.s32 %s97, 1
      %s99 = scalar_select %p96, %s97, %s98
      %p102 = pneg %p96
      %p103 = scmp.eq.s32.totalorder %s12, 3
      %p104 = por %p102, %p103
      %p105 = scmp.ne.s32.totalorder %s97, %s100
      %p106 = scmp.eq.s32.totalorder %s12, 0
      %p107 = por %p105, %p106
      %p108 = scmp.ne.s32.totalorder %s97, %s100
      %p109 = scmp.eq.s32.totalorder %s17, 3
      %p110 = por %p108, %p109
      %p111 = scmp.ne.s32.totalorder %s100, %s101
      %p112 = scmp.eq.s32.totalorder %s17, 0
      %p113 = por %p111, %p112
      %p114 = scmp.ne.s32.totalorder %s100, %s101
      %p115 = scmp.eq.s32.totalorder %s18, 3
      %p116 = por %p114, %p115
      %p118 = scmp.ne.s32.totalorder %s101, %s117
      %p119 = scmp.eq.s32.totalorder %s18, 0
      %p120 = por %p118, %p119
      %s121 = ssub.s32 %s19, %s38
      %s122 = ssub.s32 %s20, %s34
      %s123 = sor.u32 %s121, %s122
      %p124 = scmp.eq.s32.totalorder %s123, 0
      %s126 = sadd.s32 %s125, 1
      %s127 = scalar_select %p124, %s125, %s126
      %p130 = pneg %p124
      %p131 = scmp.eq.s32.totalorder %s12, 3
      %p132 = por %p130, %p131
      %p133 = scmp.ne.s32.totalorder %s125, %s128
      %p134 = scmp.eq.s32.totalorder %s12, 0
      %p135 = por %p133, %p134
      %p136 = scmp.ne.s32.totalorder %s125, %s128
      %p137 = scmp.eq.s32.totalorder %s17, 3
      %p138 = por %p136, %p137
      %p139 = scmp.ne.s32.totalorder %s128, %s129
      %p140 = scmp.eq.s32.totalorder %s17, 0
      %p141 = por %p139, %p140
      %p142 = scmp.ne.s32.totalorder %s128, %s129
      %p143 = scmp.eq.s32.totalorder %s18, 3
      %p144 = por %p142, %p143
      %p146 = scmp.ne.s32.totalorder %s129, %s145
      %p147 = scmp.eq.s32.totalorder %s18, 0
      %p148 = por %p146, %p147
      %p149 = scmp.le.s32.totalorder 1, %s12
      %p150 = scmp.lt.s32.totalorder %s12, 5
      %p151 = pnand %p149, %p150
      %p152 = pneg %p151
      // Predicated region
      $region9: #{unet_decoder_forward.10} parent=5 // pred_check
        _
      $region10: #{unet_decoder_forward.10} parent=5 // pred_check_branch
        %154 = sbr.rel (%p151) target = $region12
      $region11: #{unet_decoder_forward.10} parent=5 // pred_region
        %s155 = ssub.s32 %s12, 1
        // Predicated region
        $region13: #{unet_decoder_forward.10} parent=11 // pred_check
          %p156 = pneg %p59
        $region14: #{unet_decoder_forward.10} parent=11 // pred_check_branch
          %158 = sbr.rel (%p156) target = $region16
        $region15: #{unet_decoder_forward.10} parent=11 // pred_region
          %p159 = scmp.lt.s32.totalorder %s22, 0
          %s160 = scalar_select %p159, %s22, 0
          %p161 = scmp.lt.s32.totalorder %s24, 0
          %s162 = scalar_select %p161, %s24, 0
          %s163 = sadd.s32 %s162, %s160
          %s164 = smul.addr %s163, 2
          %s165 = scalar_lea.vmem %s0, %s164
        $region16: #{unet_decoder_forward.10} parent=11 // pred_fallthru
          _
      $region12: #{unet_decoder_forward.10} parent=5 // pred_fallthru
        _
      %p166 = scmp.lt.s32.totalorder %s12, 4
      // Predicated region
      $region17: #{unet_decoder_forward.10} parent=5 // pred_check
        %p167 = pneg %p166
      $region18: #{unet_decoder_forward.10} parent=5 // pred_check_branch
        %169 = sbr.rel (%p167) target = $region20
      $region19: #{unet_decoder_forward.10} parent=5 // pred_region
        // Predicated region
        $region21: #{unet_decoder_forward.10} parent=19 // pred_check
          %p170 = pneg %p81
        $region22: #{unet_decoder_forward.10} parent=19 // pred_check_branch
          %172 = sbr.rel (%p170) target = $region24
        $region23: #{unet_decoder_forward.10} parent=19 // pred_region
          %s173 = sand.u32 %s71, 1
          %s174 = scalar_lea.sflag [#allocation4], %s173
          %s175 = sand.u32 %s71, 1
          %s176 = smul.addr %s175, 256
          %s177 = scalar_lea.vmem [#allocation3], %s176
          %s178 = smul.u32 8, %s21
          %s179 = smul.u32 4, %s20
          %181 = vsyncadd %s174, 0
          %s182 = smul.addr %s178, 16
          %s183 = sadd.s32 %s179, %s182
          %s184 = smul.addr %s183, 8
          %s185 = scalar_lea.hbm %s1, %s184
          %s186 = sshll.u32 %s185, 4
          %s187 = int_to_ptr.hbm [resolvable:$true] %s186
          %s188 = sshll.u32 %s177, 4
          %s189 = int_to_ptr.vmem [resolvable:$true] %s188
          %194 = dma.hbm_to_vmem [thread:$0]  %s187, 4096, %s189, %s174, 2048, 512, 32
        $region24: #{unet_decoder_forward.10} parent=19 // pred_fallthru
          _
        // Predicated region
        $region25: #{unet_decoder_forward.10} parent=19 // pred_check
          %p195 = pneg %p107
        $region26: #{unet_decoder_forward.10} parent=19 // pred_check_branch
          %197 = sbr.rel (%p195) target = $region28
        $region27: #{unet_decoder_forward.10} parent=19 // pred_region
          %s198 = smul.u32 4, %s20
          %p199 = scmp.lt.s32.totalorder %s198, 15
          %s200 = scalar_select %p199, %s198, 15
          %s201 = scalar_lea.vmem %s2, %s200
          %s202 = smul.u32 4, %s20
        $region28: #{unet_decoder_forward.10} parent=19 // pred_fallthru
          _
      $region20: #{unet_decoder_forward.10} parent=5 // pred_fallthru
        _
      %p203 = scmp.le.s32.totalorder 1, %s12
      %p204 = scmp.lt.s32.totalorder %s12, 5
      %p205 = pnand %p203, %p204
      %p206 = pneg %p205
      // Predicated region
      $region29: #{unet_decoder_forward.10} parent=5 // pred_check
        _
      $region30: #{unet_decoder_forward.10} parent=5 // pred_check_branch
        %208 = sbr.rel (%p205) target = $region32
      $region31: #{unet_decoder_forward.10} parent=5 // pred_region
        %s209 = ssub.s32 %s12, 1
        %s210 = sand.u32 %s74, 1
        %s211 = scalar_lea.sflag [#allocation4], %s210
        %s212 = sand.u32 %s74, 1
        %s213 = smul.addr %s212, 256
        %s214 = scalar_lea.vmem [#allocation3], %s213
        // Predicated region
        $region33: #{unet_decoder_forward.10} parent=31 // pred_check
          %p215 = pneg %p87
        $region34: #{unet_decoder_forward.10} parent=31 // pred_check_branch
          %217 = sbr.rel (%p215) target = $region36
        $region35: #{unet_decoder_forward.10} parent=31 // pred_region
          %219 = dma.done %s211, 4096
        $region36: #{unet_decoder_forward.10} parent=31 // pred_fallthru
          _
        %p220 = scmp.lt.s32.totalorder %s22, 0
        %s221 = scalar_select %p220, %s22, 0
        %p222 = scmp.lt.s32.totalorder %s24, 0
        %s223 = scalar_select %p222, %s24, 0
        %s224 = sadd.s32 %s223, %s221
        %s225 = smul.addr %s224, 2
        %s226 = scalar_lea.vmem %s0, %s225
        %p227 = pneg %p59
        %p228 = pneg %p56
        %s229 = sand.u32 %s74, 1
        %s230 = scalar_lea.sflag [#allocation4], %s229
        %s231 = sand.u32 %s74, 1
        %s232 = smul.addr %s231, 256
        %s233 = scalar_lea.vmem [#allocation3], %s232
        %p234 = pneg %p87
        %p235 = pneg %p84
        %s236 = smul.u32 4, %s23
        %p237 = scmp.lt.s32.totalorder %s236, 15
        %s238 = scalar_select %p237, %s236, 15
        %s239 = scalar_lea.vmem %s2, %s238
        %p240 = pneg %p113
        %p241 = pneg %p110
        %p242 = pneg %p141
        %p243 = pneg %p138
        %s244 = smul.u32 4, %s23
        %p245 = scmp.lt.s32.totalorder %s22, 0
        %s246 = scalar_select %p245, %s22, 0
        %p247 = scmp.lt.s32.totalorder %s244, 15
        %s248 = scalar_select %p247, %s244, 15
        %s249 = smul.addr %s246, 16
        %s250 = sadd.s32 %s248, %s249
        %s251 = smul.addr %s250, 2
        %s252 = scalar_lea.vmem %s3, %s251
        %p253 = scmp.lt.s32.totalorder %s22, 0
        %s254 = scalar_select %p253, %s22, 0
        %p255 = scmp.lt.s32.totalorder %s24, 0
        %s256 = scalar_select %p255, %s24, 0
        %s257 = sadd.s32 %s256, %s254
        %s258 = smul.addr %s257, 2
        %s259 = scalar_lea.vmem %s0, %s258
        %s260 = smul.u32 8, %s24
        %s261 = smul.u32 4, %s23
        %s262 = smul.u32 4, %s23
        %p263 = scmp.lt.s32.totalorder %s262, 15
        %s264 = scalar_select %p263, %s262, 15
        %s265 = scalar_lea.vmem %s2, %s264
        %s266 = smul.u32 4, %s23
        %s267 = smul.u32 4, %s23
        %p268 = scmp.lt.s32.totalorder %s22, 0
        %s269 = scalar_select %p268, %s22, 0
        %p270 = scmp.lt.s32.totalorder %s267, 15
        %s271 = scalar_select %p270, %s267, 15
        %s272 = smul.addr %s269, 16
        %s273 = sadd.s32 %s271, %s272
        %s274 = smul.addr %s273, 2
        %s275 = scalar_lea.vmem %s3, %s274
        %s276 = smul.u32 4, %s23
        %p277 = scmp.eq.s32.totalorder %s24, 0
        // Predicated region
        $region37: #{unet_decoder_forward.10} parent=31 // pred_check
          %p278 = pneg %p277
        $region38: #{unet_decoder_forward.10} parent=31 // pred_check_branch
          %280 = sbr.rel (%p278) target = $region40
        $region39: #{unet_decoder_forward.10} parent=31 // pred_region
          %281 = vst [vmem:[#allocation2] sm:$0xff] 0.0
        $region40: #{unet_decoder_forward.10} parent=31 // pred_fallthru
          _
        %v282 = vld [vmem:[%s259] sm:$0x3]
        %v283 = vld [vmem:[#allocation2] sm:$0xff]
        %v284 = vld [vmem:[%s214] sm:$0xff]
        %v285 = vld [vmem:[%s214 + $0x8] sm:$0xff]
        %v286 = vld [vmem:[%s214 + $0x10] sm:$0xff]
        %v287 = vld [vmem:[%s214 + $0x18] sm:$0xff]
        %v288 = vld [vmem:[%s214 + $0x20] sm:$0xff]
        %v289 = vld [vmem:[%s214 + $0x28] sm:$0xff]
        %v290 = vld [vmem:[%s214 + $0x30] sm:$0xff]
        %v291 = vld [vmem:[%s214 + $0x38] sm:$0xff]
        %v292 = vld [vmem:[%s214 + $0x40] sm:$0xff]
        %v293 = vld [vmem:[%s214 + $0x48] sm:$0xff]
        %v294 = vld [vmem:[%s214 + $0x50] sm:$0xff]
        %v295 = vld [vmem:[%s214 + $0x58] sm:$0xff]
        %v296 = vld [vmem:[%s214 + $0x60] sm:$0xff]
        %v297 = vld [vmem:[%s214 + $0x68] sm:$0xff]
        %v298 = vld [vmem:[%s214 + $0x70] sm:$0xff]
        %v299 = vld [vmem:[%s214 + $0x78] sm:$0xff]
        %v300 = vld [vmem:[%s214 + $0x80] sm:$0xff]
        %v301 = vld [vmem:[%s214 + $0x88] sm:$0xff]
        %v302 = vld [vmem:[%s214 + $0x90] sm:$0xff]
        %v303 = vld [vmem:[%s214 + $0x98] sm:$0xff]
        %v304 = vld [vmem:[%s214 + $0xa0] sm:$0xff]
        %v305 = vld [vmem:[%s214 + $0xa8] sm:$0xff]
        %v306 = vld [vmem:[%s214 + $0xb0] sm:$0xff]
        %v307 = vld [vmem:[%s214 + $0xb8] sm:$0xff]
        %v308 = vld [vmem:[%s214 + $0xc0] sm:$0xff]
        %v309 = vld [vmem:[%s214 + $0xc8] sm:$0xff]
        %v310 = vld [vmem:[%s214 + $0xd0] sm:$0xff]
        %v311 = vld [vmem:[%s214 + $0xd8] sm:$0xff]
        %v312 = vld [vmem:[%s214 + $0xe0] sm:$0xff]
        %v313 = vld [vmem:[%s214 + $0xe8] sm:$0xff]
        %v314 = vld [vmem:[%s214 + $0xf0] sm:$0xff]
        %v315 = vld [vmem:[%s214 + $0xf8] sm:$0xff]
        %vm316 = vcmask 523264
        %v318 = vsel %vm316, %v282, 0
        %320 = vmatpush.msra.mxu0 0.0
        %321 = vmatpush.msra.mxu0 0.0
        %322 = vmatpush.msra.mxu0 0.0
        %323 = vmatpush.msra.mxu0 0.0
        %324 = vmatpush.msra.mxu0 0.0
        %325 = vmatpush.msra.mxu0 0.0
        %326 = vmatpush.msra.mxu0 0.0
        %327 = vmatpush.msra.mxu0 0.0
        %328 = vmatpush.msra.mxu0 %v312
        %329 = vmatpush.msra.mxu0 %v308
        %330 = vmatpush.msra.mxu0 %v304
        %331 = vmatpush.msra.mxu0 %v300
        %332 = vmatpush.msra.mxu0 %v296
        %333 = vmatpush.msra.mxu0 %v292
        %334 = vmatpush.msra.mxu0 %v288
        %335 = vmatpush.msra.mxu0 %v284
        %336 = vmatmul.f32.gmra.mxu0 %v318
        %v337 = vpop.f32.mrf.mxu0
        %v338 = vadd.f32 0.0, %v337
        %339 = vdwg.mxu0
        %340 = vmatpush.msra.mxu0 0.0
        %341 = vmatpush.msra.mxu0 0.0
        %342 = vmatpush.msra.mxu0 0.0
        %343 = vmatpush.msra.mxu0 0.0
        %344 = vmatpush.msra.mxu0 0.0
        %345 = vmatpush.msra.mxu0 0.0
        %346 = vmatpush.msra.mxu0 0.0
        %347 = vmatpush.msra.mxu0 0.0
        %348 = vmatpush.msra.mxu0 %v313
        %349 = vmatpush.msra.mxu0 %v309
        %350 = vmatpush.msra.mxu0 %v305
        %351 = vmatpush.msra.mxu0 %v301
        %352 = vmatpush.msra.mxu0 %v297
        %353 = vmatpush.msra.mxu0 %v293
        %354 = vmatpush.msra.mxu0 %v289
        %355 = vmatpush.msra.mxu0 %v285
        %356 = vmatmul.f32.gmra.mxu0 %v318
        %v357 = vpop.f32.mrf.mxu0
        %v358 = vadd.f32 0.0, %v357
        %359 = vdwg.mxu0
        %360 = vmatpush.msra.mxu0 0.0
        %361 = vmatpush.msra.mxu0 0.0
        %362 = vmatpush.msra.mxu0 0.0
        %363 = vmatpush.msra.mxu0 0.0
        %364 = vmatpush.msra.mxu0 0.0
        %365 = vmatpush.msra.mxu0 0.0
        %366 = vmatpush.msra.mxu0 0.0
        %367 = vmatpush.msra.mxu0 0.0
        %368 = vmatpush.msra.mxu0 %v314
        %369 = vmatpush.msra.mxu0 %v310
        %370 = vmatpush.msra.mxu0 %v306
        %371 = vmatpush.msra.mxu0 %v302
        %372 = vmatpush.msra.mxu0 %v298
        %373 = vmatpush.msra.mxu0 %v294
        %374 = vmatpush.msra.mxu0 %v290
        %375 = vmatpush.msra.mxu0 %v286
        %376 = vmatmul.f32.gmra.mxu0 %v318
        %v377 = vpop.f32.mrf.mxu0
        %v378 = vadd.f32 0.0, %v377
        %379 = vdwg.mxu0
        %380 = vmatpush.msra.mxu0 0.0
        %381 = vmatpush.msra.mxu0 0.0
        %382 = vmatpush.msra.mxu0 0.0
        %383 = vmatpush.msra.mxu0 0.0
        %384 = vmatpush.msra.mxu0 0.0
        %385 = vmatpush.msra.mxu0 0.0
        %386 = vmatpush.msra.mxu0 0.0
        %387 = vmatpush.msra.mxu0 0.0
        %388 = vmatpush.msra.mxu0 %v315
        %389 = vmatpush.msra.mxu0 %v311
        %390 = vmatpush.msra.mxu0 %v307
        %391 = vmatpush.msra.mxu0 %v303
        %392 = vmatpush.msra.mxu0 %v299
        %393 = vmatpush.msra.mxu0 %v295
        %394 = vmatpush.msra.mxu0 %v291
        %395 = vmatpush.msra.mxu0 %v287
        %396 = vmatmul.f32.gmra.mxu0 %v318
        %v397 = vpop.f32.mrf.mxu0
        %v398 = vadd.f32 0.0, %v397
        %399 = vdwg.mxu0
        %v404 = vrot.slane %v358, 6
        %v405 = vrot.slane %v378, 4
        %v406 = vrot.slane %v398, 2
        %vm407 = vcmask 1041408
        %v408 = vsel %vm407, %v338, %v404
        %vm409 = vcmask 1045508
        %v410 = vsel %vm409, %v405, %v406
        %vm411 = vcmask 1043456
        %v412 = vsel %vm411, %v408, %v410
        %v414 = vadd.f32 %v283, %v412
        %415 = vst [vmem:[#allocation2] sm:$0xff] %v414
        // Predicated region
        $region41: #{unet_decoder_forward.10} parent=31 // pred_check
          %p416 = pneg %p277
        $region42: #{unet_decoder_forward.10} parent=31 // pred_check_branch
          %418 = sbr.rel (%p416) target = $region44
        $region43: #{unet_decoder_forward.10} parent=31 // pred_region
          %v419 = vld [vmem:[#allocation2] sm:$0xff]
          %v420 = vld [vmem:[%s265] sm:$0xf]
          %v422 = vperm.slane %v420, 0
          %v423 = vperm.slane %v420, 1
          %v424 = vperm.slane %v420, 2
          %v425 = vperm.slane %v420, 3
          %v426 = vrot.slane %v423, 6
          %v427 = vrot.slane %v424, 4
          %v428 = vrot.slane %v425, 2
          %v429 = vsel %vm407, %v422, %v426
          %v430 = vsel %vm409, %v427, %v428
          %v431 = vsel %vm411, %v429, %v430
          %v433 = vadd.f32 %v419, %v431
          %434 = vst [vmem:[%s275] sm:$0xff] %v433
        $region44: #{unet_decoder_forward.10} parent=31 // pred_fallthru
          _
        %s435 = smul.u32 4, %s23
        %p436 = scmp.lt.s32.totalorder %s22, 0
        %s437 = scalar_select %p436, %s22, 0
        %p438 = scmp.lt.s32.totalorder %s435, 15
        %s439 = scalar_select %p438, %s435, 15
        %s440 = smul.addr %s437, 16
        %s441 = sadd.s32 %s439, %s440
        %s442 = smul.addr %s441, 2
        %s443 = scalar_lea.vmem %s3, %s442
        // Predicated region
        $region45: #{unet_decoder_forward.10} parent=31 // pred_check
          %p444 = pneg %p138
        $region46: #{unet_decoder_forward.10} parent=31 // pred_check_branch
          %446 = sbr.rel (%p444) target = $region48
        $region47: #{unet_decoder_forward.10} parent=31 // pred_region
          %s447 = smul.u32 4, %s23
        $region48: #{unet_decoder_forward.10} parent=31 // pred_fallthru
          _
      $region32: #{unet_decoder_forward.10} parent=5 // pred_fallthru
        _
      %p448 = scmp.le.s32.totalorder 2, %s12
      // Predicated region
      $region49: #{unet_decoder_forward.10} parent=5 // pred_check
        %p449 = pneg %p448
      $region50: #{unet_decoder_forward.10} parent=5 // pred_check_branch
        %451 = sbr.rel (%p449) target = $region52
      $region51: #{unet_decoder_forward.10} parent=5 // pred_region
        %s452 = ssub.s32 %s12, 2
        // Predicated region
        $region53: #{unet_decoder_forward.10} parent=51 // pred_check
          %p453 = pneg %p144
        $region54: #{unet_decoder_forward.10} parent=51 // pred_check_branch
          %455 = sbr.rel (%p453) target = $region56
        $region55: #{unet_decoder_forward.10} parent=51 // pred_region
          %s456 = smul.u32 4, %s26
          %p457 = scmp.lt.s32.totalorder %s25, 0
          %s458 = scalar_select %p457, %s25, 0
          %p459 = scmp.lt.s32.totalorder %s456, 15
          %s460 = scalar_select %p459, %s456, 15
          %s461 = smul.addr %s458, 16
          %s462 = sadd.s32 %s460, %s461
          %s463 = smul.addr %s462, 2
          %s464 = scalar_lea.vmem %s3, %s463
        $region56: #{unet_decoder_forward.10} parent=51 // pred_fallthru
          _
      $region52: #{unet_decoder_forward.10} parent=5 // pred_fallthru
        _
    $region6: #{unet_decoder_forward.10} parent=1 // loop_footer
      %s16 = sadd.s32 1, %s12
    $region7: #{unet_decoder_forward.10} parent=1 // loop_footer_branch
      %11 = sbr.rel target = $region3
    $region8: #{unet_decoder_forward.10} parent=1 // loop_exit
      _
    %465 = vsyncpa [#allocation4], 1
    %s466 = scalar_lea.sflag [#allocation4], 1
    %467 = vsyncpa %s466, 1

// kernel: unet_decoder_forward.11
$region0: #{unet_decoder_forward.11}
  #allocation0 [shape = 'u32[]', space=smem, size = 0x4, offset = 0x4, fixed_abs, tag = 'smem constant byte address 0x4 - core index']
  #allocation1 [shape = 'u32[72,128]{1,0:T(1,128)}', space=vmem, size = 0x9000, scoped, tag = 'internal scratch']
  #allocation2 [shape = 'f32[32,256]{1,0:T(8,128)}', space=vmem, size = 0x8000, scoped, tag = 'scratch operand']
  %s0 = inlined_call_operand.vmem [shape: f32[32,128], index: 0, kind: input, shape index: {}]
  %s1 = inlined_call_operand.hbm [shape: f32[128,256], index: 1, kind: input, shape index: {}]
  %s2 = inlined_call_operand.vmem [shape: f32[1,256], index: 2, kind: input, shape index: {}]
  %s3 = inlined_call_operand.vmem [shape: f32[32,256], index: 3, kind: output, shape index: {}]
  %s4 = sld [smem:[#allocation0]]
  $region34: #{unet_decoder_forward.11} parent=0
    _
  %s6 = ssub.s32 1, %s4
  %s7 = scalar_select 0, %s6, %s4
  $region1: #{unet_decoder_forward.11} parent=0
    #allocation3 [shape = 'u8[131072]{0}', space=vmem, size = 0x20000, scoped, tag = 'input window, operand 1, single buffered']
    #allocation4 [shape = 's32[1]{0}', space=sflag, size = 0x4, scoped, tag = 'scoped memory for unet_decoder_forward.11']
    %8 = vsyncpa [#allocation4], 0
    // Predicated region
    $region2: #{unet_decoder_forward.11} parent=1 // pred_check
      _
    $region3: #{unet_decoder_forward.11} parent=1 // pred_check_branch
      %10 = sbr.rel (0) target = $region5
    $region4: #{unet_decoder_forward.11} parent=1 // pred_region
      _
    $region5: #{unet_decoder_forward.11} parent=1 // pred_fallthru
      _
    // Predicated region
    $region6: #{unet_decoder_forward.11} parent=1 // pred_check
      _
    $region7: #{unet_decoder_forward.11} parent=1 // pred_check_branch
      %12 = sbr.rel (0) target = $region9
    $region8: #{unet_decoder_forward.11} parent=1 // pred_region
      %14 = vsyncadd [#allocation4], 0
      %s15 = sshll.u32 %s1, 4
      %s16 = int_to_ptr.hbm [resolvable:$true] %s15
      %s17 = sshll.u32 [#allocation3], 4
      %s18 = int_to_ptr.vmem [resolvable:$true] %s17
      %23 = dma.hbm_to_vmem [thread:$0]  %s16, 4096, %s18, [#allocation4], 256, 256, 16
    $region9: #{unet_decoder_forward.11} parent=1 // pred_fallthru
      _
    // Predicated region
    $region10: #{unet_decoder_forward.11} parent=1 // pred_check
      _
    $region11: #{unet_decoder_forward.11} parent=1 // pred_check_branch
      %25 = sbr.rel (0) target = $region13
    $region12: #{unet_decoder_forward.11} parent=1 // pred_region
      _
    $region13: #{unet_decoder_forward.11} parent=1 // pred_fallthru
      _
    // Predicated region
    $region14: #{unet_decoder_forward.11} parent=1 // pred_check
      _
    $region15: #{unet_decoder_forward.11} parent=1 // pred_check_branch
      %27 = sbr.rel (0) target = $region17
    $region16: #{unet_decoder_forward.11} parent=1 // pred_region
      %29 = dma.done [#allocation4], 4096
    $region17: #{unet_decoder_forward.11} parent=1 // pred_fallthru
      _
    %p30 = scmp.eq.s32.totalorder 0, 0
    // Predicated region
    $region18: #{unet_decoder_forward.11} parent=1 // pred_check
      %p31 = pneg %p30
    $region19: #{unet_decoder_forward.11} parent=1 // pred_check_branch
      %33 = sbr.rel (%p31) target = $region21
    $region20: #{unet_decoder_forward.11} parent=1 // pred_region
      %34 = vst [vmem:[#allocation2] sm:$0xff] 0.0
      %35 = vst [vmem:[#allocation2 + $0x8] sm:$0xff] 0.0
      %36 = vst [vmem:[#allocation2 + $0x10] sm:$0xff] 0.0
      %37 = vst [vmem:[#allocation2 + $0x18] sm:$0xff] 0.0
      %38 = vst [vmem:[#allocation2 + $0x20] sm:$0xff] 0.0
      %39 = vst [vmem:[#allocation2 + $0x28] sm:$0xff] 0.0
      %40 = vst [vmem:[#allocation2 + $0x30] sm:$0xff] 0.0
      %41 = vst [vmem:[#allocation2 + $0x38] sm:$0xff] 0.0
    $region21: #{unet_decoder_forward.11} parent=1 // pred_fallthru
      _
    %v42 = vld [vmem:[%s0] sm:$0xff]
    %v43 = vld [vmem:[%s0 + $0x8] sm:$0xff]
    %v44 = vld [vmem:[%s0 + $0x10] sm:$0xff]
    %v45 = vld [vmem:[%s0 + $0x18] sm:$0xff]
    %v46 = vld [vmem:[#allocation2] sm:$0xff]
    %v47 = vld [vmem:[#allocation2 + $0x8] sm:$0xff]
    %v48 = vld [vmem:[#allocation2 + $0x10] sm:$0xff]
    %v49 = vld [vmem:[#allocation2 + $0x18] sm:$0xff]
    %v50 = vld [vmem:[#allocation2 + $0x20] sm:$0xff]
    %v51 = vld [vmem:[#allocation2 + $0x28] sm:$0xff]
    %v52 = vld [vmem:[#allocation2 + $0x30] sm:$0xff]
    %v53 = vld [vmem:[#allocation2 + $0x38] sm:$0xff]
    %v54 = vld [vmem:[#allocation3] sm:$0xff]
    %v55 = vld [vmem:[#allocation3 + $0x8] sm:$0xff]
    %v56 = vld [vmem:[#allocation3 + $0x10] sm:$0xff]
    %v57 = vld [vmem:[#allocation3 + $0x18] sm:$0xff]
    %v58 = vld [vmem:[#allocation3 + $0x20] sm:$0xff]
    %v59 = vld [vmem:[#allocation3 + $0x28] sm:$0xff]
    %v60 = vld [vmem:[#allocation3 + $0x30] sm:$0xff]
    %v61 = vld [vmem:[#allocation3 + $0x38] sm:$0xff]
    %v62 = vld [vmem:[#allocation3 + $0x40] sm:$0xff]
    %v63 = vld [vmem:[#allocation3 + $0x48] sm:$0xff]
    %v64 = vld [vmem:[#allocation3 + $0x50] sm:$0xff]
    %v65 = vld [vmem:[#allocation3 + $0x58] sm:$0xff]
    %v66 = vld [vmem:[#allocation3 + $0x60] sm:$0xff]
    %v67 = vld [vmem:[#allocation3 + $0x68] sm:$0xff]
    %v68 = vld [vmem:[#allocation3 + $0x70] sm:$0xff]
    %v69 = vld [vmem:[#allocation3 + $0x78] sm:$0xff]
    %v70 = vld [vmem:[#allocation3 + $0x80] sm:$0xff]
    %v71 = vld [vmem:[#allocation3 + $0x88] sm:$0xff]
    %v72 = vld [vmem:[#allocation3 + $0x90] sm:$0xff]
    %v73 = vld [vmem:[#allocation3 + $0x98] sm:$0xff]
    %v74 = vld [vmem:[#allocation3 + $0xa0] sm:$0xff]
    %v75 = vld [vmem:[#allocation3 + $0xa8] sm:$0xff]
    %v76 = vld [vmem:[#allocation3 + $0xb0] sm:$0xff]
    %v77 = vld [vmem:[#allocation3 + $0xb8] sm:$0xff]
    %v78 = vld [vmem:[#allocation3 + $0xc0] sm:$0xff]
    %v79 = vld [vmem:[#allocation3 + $0xc8] sm:$0xff]
    %v80 = vld [vmem:[#allocation3 + $0xd0] sm:$0xff]
    %v81 = vld [vmem:[#allocation3 + $0xd8] sm:$0xff]
    %v82 = vld [vmem:[#allocation3 + $0xe0] sm:$0xff]
    %v83 = vld [vmem:[#allocation3 + $0xe8] sm:$0xff]
    %v84 = vld [vmem:[#allocation3 + $0xf0] sm:$0xff]
    %v85 = vld [vmem:[#allocation3 + $0xf8] sm:$0xff]
    %86 = vmatpush.msra.mxu0 %v84
    %87 = vmatpush.msra.mxu0 %v82
    %88 = vmatpush.msra.mxu0 %v80
    %89 = vmatpush.msra.mxu0 %v78
    %90 = vmatpush.msra.mxu0 %v76
    %91 = vmatpush.msra.mxu0 %v74
    %92 = vmatpush.msra.mxu0 %v72
    %93 = vmatpush.msra.mxu0 %v70
    %94 = vmatpush.msra.mxu0 %v68
    %95 = vmatpush.msra.mxu0 %v66
    %96 = vmatpush.msra.mxu0 %v64
    %97 = vmatpush.msra.mxu0 %v62
    %98 = vmatpush.msra.mxu0 %v60
    %99 = vmatpush.msra.mxu0 %v58
    %100 = vmatpush.msra.mxu0 %v56
    %101 = vmatpush.msra.mxu0 %v54
    %102 = vmatmul.f32.gmra.mxu0 %v42
    %v103 = vpop.f32.mrf.mxu0
    %v104 = vadd.f32 0.0, %v103
    %105 = vmatmul.f32.gmra.mxu0 %v43
    %v106 = vpop.f32.mrf.mxu0
    %v107 = vadd.f32 0.0, %v106
    %108 = vmatmul.f32.gmra.mxu0 %v44
    %v109 = vpop.f32.mrf.mxu0
    %v110 = vadd.f32 0.0, %v109
    %111 = vmatmul.f32.gmra.mxu0 %v45
    %v112 = vpop.f32.mrf.mxu0
    %v113 = vadd.f32 0.0, %v112
    %114 = vdwg.mxu0
    %115 = vmatpush.msra.mxu0 %v85
    %116 = vmatpush.msra.mxu0 %v83
    %117 = vmatpush.msra.mxu0 %v81
    %118 = vmatpush.msra.mxu0 %v79
    %119 = vmatpush.msra.mxu0 %v77
    %120 = vmatpush.msra.mxu0 %v75
    %121 = vmatpush.msra.mxu0 %v73
    %122 = vmatpush.msra.mxu0 %v71
    %123 = vmatpush.msra.mxu0 %v69
    %124 = vmatpush.msra.mxu0 %v67
    %125 = vmatpush.msra.mxu0 %v65
    %126 = vmatpush.msra.mxu0 %v63
    %127 = vmatpush.msra.mxu0 %v61
    %128 = vmatpush.msra.mxu0 %v59
    %129 = vmatpush.msra.mxu0 %v57
    %130 = vmatpush.msra.mxu0 %v55
    %131 = vmatmul.f32.gmra.mxu0 %v42
    %v132 = vpop.f32.mrf.mxu0
    %v133 = vadd.f32 0.0, %v132
    %134 = vmatmul.f32.gmra.mxu0 %v43
    %v135 = vpop.f32.mrf.mxu0
    %v136 = vadd.f32 0.0, %v135
    %137 = vmatmul.f32.gmra.mxu0 %v44
    %v138 = vpop.f32.mrf.mxu0
    %v139 = vadd.f32 0.0, %v138
    %140 = vmatmul.f32.gmra.mxu0 %v45
    %v141 = vpop.f32.mrf.mxu0
    %v142 = vadd.f32 0.0, %v141
    %143 = vdwg.mxu0
    %v144 = vadd.f32 %v46, %v104
    %v145 = vadd.f32 %v47, %v133
    %v146 = vadd.f32 %v48, %v107
    %v147 = vadd.f32 %v49, %v136
    %v148 = vadd.f32 %v50, %v110
    %v149 = vadd.f32 %v51, %v139
    %v150 = vadd.f32 %v52, %v113
    %v151 = vadd.f32 %v53, %v142
    %152 = vst [vmem:[#allocation2] sm:$0xff] %v144
    %153 = vst [vmem:[#allocation2 + $0x8] sm:$0xff] %v145
    %154 = vst [vmem:[#allocation2 + $0x10] sm:$0xff] %v146
    %155 = vst [vmem:[#allocation2 + $0x18] sm:$0xff] %v147
    %156 = vst [vmem:[#allocation2 + $0x20] sm:$0xff] %v148
    %157 = vst [vmem:[#allocation2 + $0x28] sm:$0xff] %v149
    %158 = vst [vmem:[#allocation2 + $0x30] sm:$0xff] %v150
    %159 = vst [vmem:[#allocation2 + $0x38] sm:$0xff] %v151
    // Predicated region
    $region22: #{unet_decoder_forward.11} parent=1 // pred_check
      %p160 = pneg %p30
    $region23: #{unet_decoder_forward.11} parent=1 // pred_check_branch
      %162 = sbr.rel (%p160) target = $region25
    $region24: #{unet_decoder_forward.11} parent=1 // pred_region
      %v163 = vld [vmem:[#allocation2] sm:$0xff]
      %v164 = vld [vmem:[#allocation2 + $0x8] sm:$0xff]
      %v165 = vld [vmem:[#allocation2 + $0x10] sm:$0xff]
      %v166 = vld [vmem:[#allocation2 + $0x18] sm:$0xff]
      %v167 = vld [vmem:[#allocation2 + $0x20] sm:$0xff]
      %v168 = vld [vmem:[#allocation2 + $0x28] sm:$0xff]
      %v169 = vld [vmem:[#allocation2 + $0x30] sm:$0xff]
      %v170 = vld [vmem:[#allocation2 + $0x38] sm:$0xff]
      %v171 = vld [vmem:[%s2] sm:$0x3]
      %v173 = vperm.slane %v171, 0
      %v174 = vperm.slane %v171, 1
      %v177 = vadd.f32 %v163, %v173
      %v178 = vadd.f32 %v164, %v174
      %v179 = vadd.f32 %v165, %v173
      %v180 = vadd.f32 %v166, %v174
      %v181 = vadd.f32 %v167, %v173
      %v182 = vadd.f32 %v168, %v174
      %v183 = vadd.f32 %v169, %v173
      %v184 = vadd.f32 %v170, %v174
      %185 = vst [vmem:[%s3] sm:$0xff] %v177
      %186 = vst [vmem:[%s3 + $0x8] sm:$0xff] %v178
      %187 = vst [vmem:[%s3 + $0x10] sm:$0xff] %v179
      %188 = vst [vmem:[%s3 + $0x18] sm:$0xff] %v180
      %189 = vst [vmem:[%s3 + $0x20] sm:$0xff] %v181
      %190 = vst [vmem:[%s3 + $0x28] sm:$0xff] %v182
      %191 = vst [vmem:[%s3 + $0x30] sm:$0xff] %v183
      %192 = vst [vmem:[%s3 + $0x38] sm:$0xff] %v184
    $region25: #{unet_decoder_forward.11} parent=1 // pred_fallthru
      _
    // Predicated region
    $region26: #{unet_decoder_forward.11} parent=1 // pred_check
      _
    $region27: #{unet_decoder_forward.11} parent=1 // pred_check_branch
      %194 = sbr.rel (0) target = $region29
    $region28: #{unet_decoder_forward.11} parent=1 // pred_region
      _
    $region29: #{unet_decoder_forward.11} parent=1 // pred_fallthru
      _
    // Predicated region
    $region30: #{unet_decoder_forward.11} parent=1 // pred_check
      _
    $region31: #{unet_decoder_forward.11} parent=1 // pred_check_branch
      %196 = sbr.rel (0) target = $region33
    $region32: #{unet_decoder_forward.11} parent=1 // pred_region
      _
    $region33: #{unet_decoder_forward.11} parent=1 // pred_fallthru
      _
    %197 = vsyncpa [#allocation4], 1

// kernel: unet_decoder_forward.13
$region0: #{unet_decoder_forward.13}
  #allocation0 [shape = 'u32[]', space=smem, size = 0x4, offset = 0x4, fixed_abs, tag = 'smem constant byte address 0x4 - core index']
  #allocation1 [shape = 'u32[72,128]{1,0:T(1,128)}', space=vmem, size = 0x9000, scoped, tag = 'internal scratch']
  %s0 = inlined_call_operand.vmem [shape: f32[2,64,64], index: 0, kind: input, shape index: {}]
  %s1 = inlined_call_operand.vmem [shape: f32[1,64], index: 1, kind: input, shape index: {}]
  %s2 = inlined_call_operand.vmem [shape: f32[1,64], index: 2, kind: input, shape index: {}]
  %s3 = inlined_call_operand.vmem [shape: f32[2,64,64], index: 3, kind: output, shape index: {}]
  %s4 = sld [smem:[#allocation0]]
  $region45: #{unet_decoder_forward.13} parent=0
    _
  %s6 = ssub.s32 1, %s4
  %s7 = scalar_select 0, %s6, %s4
  loop: start=0, step=1, limit=4
  $region2: #{unet_decoder_forward.13} parent=0 // loop_pre_header
    _
  $region3: #{unet_decoder_forward.13} parent=0 // loop_header
    %s9 = sphi 0, %s13
    %p10 = scmp.ge.s32.totalorder %s9, 4
    %s16 = sphi 0, %s28
    %s17 = sphi 0, %s24
    %s18 = sphi 0, %s16
    %s19 = sphi 0, %s17
    %s20 = sphi 0, %s18
    %s21 = sphi 0, %s19
    %s33 = sphi 0, %s35
    %s36 = sphi 0, %s33
    %s37 = sphi 0, %s36
    %s53 = sphi 0, %s37
    %s57 = sphi 0, %s57
    %s59 = sphi 0, %s57
    %s60 = sphi 0, %s59
    %s74 = sphi 0, %s60
    %s78 = sphi 0, %s78
    %s80 = sphi 0, %s78
    %s81 = sphi 0, %s80
    %s95 = sphi 0, %s81
    %s103 = sphi 0, %s105
    %s106 = sphi 0, %s103
    %s107 = sphi 0, %s106
    %s123 = sphi 0, %s107
  $region4: #{unet_decoder_forward.13} parent=0 // loop_header_branch
    %12 = sbr.rel (%p10) target = $region8
  $region5: #{unet_decoder_forward.13} parent=0 // loop_body
    %s14 = ssub.s32 %s9, 1
    %s15 = ssub.s32 %s9, 2
    %s22 = sadd.s32 1, %s17
    %p23 = scmp.ge.s32.totalorder %s22, 1
    %s24 = scalar_select %p23, 0, %s22
    %s25 = sadd.s32 1, %s16
    %s26 = scalar_select %p23, %s25, %s16
    %p27 = scmp.ge.s32.totalorder %s26, 2
    %s28 = scalar_select %p27, 0, %s26
    %s29 = ssub.s32 %s16, %s28
    %s30 = ssub.s32 %s17, %s24
    %s31 = sor.u32 %s29, %s30
    %p32 = scmp.eq.s32.totalorder %s31, 0
    %s34 = sadd.s32 %s33, 1
    %s35 = scalar_select %p32, %s33, %s34
    %p38 = pneg %p32
    %p39 = scmp.eq.s32.totalorder %s9, 1
    %p40 = por %p38, %p39
    %p41 = scmp.ne.s32.totalorder %s33, %s36
    %p42 = scmp.eq.s32.totalorder %s9, 0
    %p43 = por %p41, %p42
    %p44 = scmp.ne.s32.totalorder %s33, %s36
    %p45 = scmp.eq.s32.totalorder %s14, 1
    %p46 = por %p44, %p45
    %p47 = scmp.ne.s32.totalorder %s36, %s37
    %p48 = scmp.eq.s32.totalorder %s14, 0
    %p49 = por %p47, %p48
    %p50 = scmp.ne.s32.totalorder %s36, %s37
    %p51 = scmp.eq.s32.totalorder %s15, 1
    %p52 = por %p50, %p51
    %p54 = scmp.ne.s32.totalorder %s37, %s53
    %p55 = scmp.eq.s32.totalorder %s15, 0
    %p56 = por %p54, %p55
    %s58 = sadd.s32 %s57, 1
    %p61 = scmp.eq.s32.totalorder %s9, 1
    %p62 = scmp.ne.s32.totalorder %s57, %s59
    %p63 = scmp.eq.s32.totalorder %s9, 0
    %p64 = por %p62, %p63
    %p65 = scmp.ne.s32.totalorder %s57, %s59
    %p66 = scmp.eq.s32.totalorder %s14, 1
    %p67 = por %p65, %p66
    %p68 = scmp.ne.s32.totalorder %s59, %s60
    %p69 = scmp.eq.s32.totalorder %s14, 0
    %p70 = por %p68, %p69
    %p71 = scmp.ne.s32.totalorder %s59, %s60
    %p72 = scmp.eq.s32.totalorder %s15, 1
    %p73 = por %p71, %p72
    %p75 = scmp.ne.s32.totalorder %s60, %s74
    %p76 = scmp.eq.s32.totalorder %s15, 0
    %p77 = por %p75, %p76
    %s79 = sadd.s32 %s78, 1
    %p82 = scmp.eq.s32.totalorder %s9, 1
    %p83 = scmp.ne.s32.totalorder %s78, %s80
    %p84 = scmp.eq.s32.totalorder %s9, 0
    %p85 = por %p83, %p84
    %p86 = scmp.ne.s32.totalorder %s78, %s80
    %p87 = scmp.eq.s32.totalorder %s14, 1
    %p88 = por %p86, %p87
    %p89 = scmp.ne.s32.totalorder %s80, %s81
    %p90 = scmp.eq.s32.totalorder %s14, 0
    %p91 = por %p89, %p90
    %p92 = scmp.ne.s32.totalorder %s80, %s81
    %p93 = scmp.eq.s32.totalorder %s15, 1
    %p94 = por %p92, %p93
    %p96 = scmp.ne.s32.totalorder %s81, %s95
    %p97 = scmp.eq.s32.totalorder %s15, 0
    %p98 = por %p96, %p97
    %s99 = ssub.s32 %s16, %s28
    %s100 = ssub.s32 %s17, %s24
    %s101 = sor.u32 %s99, %s100
    %p102 = scmp.eq.s32.totalorder %s101, 0
    %s104 = sadd.s32 %s103, 1
    %s105 = scalar_select %p102, %s103, %s104
    %p108 = pneg %p102
    %p109 = scmp.eq.s32.totalorder %s9, 1
    %p110 = por %p108, %p109
    %p111 = scmp.ne.s32.totalorder %s103, %s106
    %p112 = scmp.eq.s32.totalorder %s9, 0
    %p113 = por %p111, %p112
    %p114 = scmp.ne.s32.totalorder %s103, %s106
    %p115 = scmp.eq.s32.totalorder %s14, 1
    %p116 = por %p114, %p115
    %p117 = scmp.ne.s32.totalorder %s106, %s107
    %p118 = scmp.eq.s32.totalorder %s14, 0
    %p119 = por %p117, %p118
    %p120 = scmp.ne.s32.totalorder %s106, %s107
    %p121 = scmp.eq.s32.totalorder %s15, 1
    %p122 = por %p120, %p121
    %p124 = scmp.ne.s32.totalorder %s107, %s123
    %p125 = scmp.eq.s32.totalorder %s15, 0
    %p126 = por %p124, %p125
    %p127 = scmp.le.s32.totalorder 1, %s9
    %p128 = scmp.lt.s32.totalorder %s9, 3
    %p129 = pnand %p127, %p128
    %p130 = pneg %p129
    // Predicated region
    $region9: #{unet_decoder_forward.13} parent=5 // pred_check
      _
    $region10: #{unet_decoder_forward.13} parent=5 // pred_check_branch
      %132 = sbr.rel (%p129) target = $region12
    $region11: #{unet_decoder_forward.13} parent=5 // pred_region
      %s133 = ssub.s32 %s9, 1
      // Predicated region
      $region13: #{unet_decoder_forward.13} parent=11 // pred_check
        %p134 = pneg %p70
      $region14: #{unet_decoder_forward.13} parent=11 // pred_check_branch
        %136 = sbr.rel (%p134) target = $region16
      $region15: #{unet_decoder_forward.13} parent=11 // pred_region
        _
      $region16: #{unet_decoder_forward.13} parent=11 // pred_fallthru
        _
      // Predicated region
      $region17: #{unet_decoder_forward.13} parent=11 // pred_check
        %p137 = pneg %p91
      $region18: #{unet_decoder_forward.13} parent=11 // pred_check_branch
        %139 = sbr.rel (%p137) target = $region20
      $region19: #{unet_decoder_forward.13} parent=11 // pred_region
        _
      $region20: #{unet_decoder_forward.13} parent=11 // pred_fallthru
        _
    $region12: #{unet_decoder_forward.13} parent=5 // pred_fallthru
      _
    %p140 = scmp.lt.s32.totalorder %s9, 2
    // Predicated region
    $region21: #{unet_decoder_forward.13} parent=5 // pred_check
      %p141 = pneg %p140
    $region22: #{unet_decoder_forward.13} parent=5 // pred_check_branch
      %143 = sbr.rel (%p141) target = $region24
    $region23: #{unet_decoder_forward.13} parent=5 // pred_region
      // Predicated region
      $region25: #{unet_decoder_forward.13} parent=23 // pred_check
        %p144 = pneg %p43
      $region26: #{unet_decoder_forward.13} parent=23 // pred_check_branch
        %146 = sbr.rel (%p144) target = $region28
      $region27: #{unet_decoder_forward.13} parent=23 // pred_region
        %s147 = smul.u32 8, %s17
        %p148 = scmp.lt.s32.totalorder %s16, 1
        %s149 = scalar_select %p148, %s16, 1
        %p150 = scmp.lt.s32.totalorder %s147, 7
        %s151 = scalar_select %p150, %s147, 7
        %s152 = smul.addr %s149, 8
        %s153 = sadd.s32 %s151, %s152
        %s154 = smul.addr %s153, 8
        %s155 = scalar_lea.vmem %s0, %s154
        %s156 = smul.u32 8, %s17
      $region28: #{unet_decoder_forward.13} parent=23 // pred_fallthru
        _
    $region24: #{unet_decoder_forward.13} parent=5 // pred_fallthru
      _
    %p157 = scmp.le.s32.totalorder 1, %s9
    %p158 = scmp.lt.s32.totalorder %s9, 3
    %p159 = pnand %p157, %p158
    %p160 = pneg %p159
    // Predicated region
    $region29: #{unet_decoder_forward.13} parent=5 // pred_check
      _
    $region30: #{unet_decoder_forward.13} parent=5 // pred_check_branch
      %162 = sbr.rel (%p159) target = $region32
    $region31: #{unet_decoder_forward.13} parent=5 // pred_region
      %s163 = ssub.s32 %s9, 1
      %s164 = smul.u32 8, %s19
      %p165 = scmp.lt.s32.totalorder %s18, 1
      %s166 = scalar_select %p165, %s18, 1
      %p167 = scmp.lt.s32.totalorder %s164, 7
      %s168 = scalar_select %p167, %s164, 7
      %s169 = smul.addr %s166, 8
      %s170 = sadd.s32 %s168, %s169
      %s171 = smul.addr %s170, 8
      %s172 = scalar_lea.vmem %s0, %s171
      %p173 = pneg %p49
      %p174 = pneg %p46
      %p175 = pneg %p70
      %p176 = pneg %p67
      %p177 = pneg %p91
      %p178 = pneg %p88
      %p179 = pneg %p119
      %p180 = pneg %p116
      %s181 = smul.u32 8, %s19
      %p182 = scmp.lt.s32.totalorder %s18, 1
      %s183 = scalar_select %p182, %s18, 1
      %p184 = scmp.lt.s32.totalorder %s181, 7
      %s185 = scalar_select %p184, %s181, 7
      %s186 = smul.addr %s183, 8
      %s187 = sadd.s32 %s185, %s186
      %s188 = smul.addr %s187, 8
      %s189 = scalar_lea.vmem %s3, %s188
      %s190 = smul.u32 8, %s19
      %p191 = scmp.lt.s32.totalorder %s18, 1
      %s192 = scalar_select %p191, %s18, 1
      %p193 = scmp.lt.s32.totalorder %s190, 7
      %s194 = scalar_select %p193, %s190, 7
      %s195 = smul.addr %s192, 8
      %s196 = sadd.s32 %s194, %s195
      %s197 = smul.addr %s196, 8
      %s198 = scalar_lea.vmem %s0, %s197
      %s199 = smul.u32 8, %s19
      %s200 = smul.u32 8, %s19
      %p201 = scmp.lt.s32.totalorder %s18, 1
      %s202 = scalar_select %p201, %s18, 1
      %p203 = scmp.lt.s32.totalorder %s200, 7
      %s204 = scalar_select %p203, %s200, 7
      %s205 = smul.addr %s202, 8
      %s206 = sadd.s32 %s204, %s205
      %s207 = smul.addr %s206, 8
      %s208 = scalar_lea.vmem %s3, %s207
      %s209 = smul.u32 8, %s19
      %v210 = vld [vmem:[%s198] sm:$0xff]
      %v211 = vld [vmem:[%s198 + $0x8] sm:$0xff]
      %v212 = vld [vmem:[%s198 + $0x10] sm:$0xff]
      %v213 = vld [vmem:[%s198 + $0x18] sm:$0xff]
      %v214 = vld [vmem:[%s198 + $0x20] sm:$0xff]
      %v215 = vld [vmem:[%s198 + $0x28] sm:$0xff]
      %v216 = vld [vmem:[%s198 + $0x30] sm:$0xff]
      %v217 = vld [vmem:[%s198 + $0x38] sm:$0xff]
      %v218 = vld [vmem:[%s1] sm:$0x1]
      %v220 = vperm.slane %v218, 0
      %v222 = vmul.f32 %v210, %v220
      %v223 = vmul.f32 %v211, %v220
      %v224 = vmul.f32 %v212, %v220
      %v225 = vmul.f32 %v213, %v220
      %v226 = vmul.f32 %v214, %v220
      %v227 = vmul.f32 %v215, %v220
      %v228 = vmul.f32 %v216, %v220
      %v229 = vmul.f32 %v217, %v220
      %v230 = vld [vmem:[%s2] sm:$0x1]
      %v232 = vperm.slane %v230, 0
      %v234 = vadd.f32 %v222, %v232
      %v235 = vadd.f32 %v223, %v232
      %v236 = vadd.f32 %v224, %v232
      %v237 = vadd.f32 %v225, %v232
      %v238 = vadd.f32 %v226, %v232
      %v239 = vadd.f32 %v227, %v232
      %v240 = vadd.f32 %v228, %v232
      %v241 = vadd.f32 %v229, %v232
      %v242 = vmax.f32 %v234, 0.0
      %v243 = vmax.f32 %v235, 0.0
      %v244 = vmax.f32 %v236, 0.0
      %v245 = vmax.f32 %v237, 0.0
      %v246 = vmax.f32 %v238, 0.0
      %v247 = vmax.f32 %v239, 0.0
      %v248 = vmax.f32 %v240, 0.0
      %v249 = vmax.f32 %v241, 0.0
      %vm250 = vcmask 523264
      %251 = vst.msk [vmem:[%s208] sm:$0xff] %vm250, %v242
      %252 = vst.msk [vmem:[%s208 + $0x8] sm:$0xff] %vm250, %v243
      %253 = vst.msk [vmem:[%s208 + $0x10] sm:$0xff] %vm250, %v244
      %254 = vst.msk [vmem:[%s208 + $0x18] sm:$0xff] %vm250, %v245
      %255 = vst.msk [vmem:[%s208 + $0x20] sm:$0xff] %vm250, %v246
      %256 = vst.msk [vmem:[%s208 + $0x28] sm:$0xff] %vm250, %v247
      %257 = vst.msk [vmem:[%s208 + $0x30] sm:$0xff] %vm250, %v248
      %258 = vst.msk [vmem:[%s208 + $0x38] sm:$0xff] %vm250, %v249
      %s259 = smul.u32 8, %s19
      %p260 = scmp.lt.s32.totalorder %s18, 1
      %s261 = scalar_select %p260, %s18, 1
      %p262 = scmp.lt.s32.totalorder %s259, 7
      %s263 = scalar_select %p262, %s259, 7
      %s264 = smul.addr %s261, 8
      %s265 = sadd.s32 %s263, %s264
      %s266 = smul.addr %s265, 8
      %s267 = scalar_lea.vmem %s3, %s266
      // Predicated region
      $region33: #{unet_decoder_forward.13} parent=31 // pred_check
        %p268 = pneg %p116
      $region34: #{unet_decoder_forward.13} parent=31 // pred_check_branch
        %270 = sbr.rel (%p268) target = $region36
      $region35: #{unet_decoder_forward.13} parent=31 // pred_region
        %s271 = smul.u32 8, %s19
      $region36: #{unet_decoder_forward.13} parent=31 // pred_fallthru
        _
    $region32: #{unet_decoder_forward.13} parent=5 // pred_fallthru
      _
    %p272 = scmp.le.s32.totalorder 2, %s9
    // Predicated region
    $region37: #{unet_decoder_forward.13} parent=5 // pred_check
      %p273 = pneg %p272
    $region38: #{unet_decoder_forward.13} parent=5 // pred_check_branch
      %275 = sbr.rel (%p273) target = $region40
    $region39: #{unet_decoder_forward.13} parent=5 // pred_region
      %s276 = ssub.s32 %s9, 2
      // Predicated region
      $region41: #{unet_decoder_forward.13} parent=39 // pred_check
        %p277 = pneg %p122
      $region42: #{unet_decoder_forward.13} parent=39 // pred_check_branch
        %279 = sbr.rel (%p277) target = $region44
      $region43: #{unet_decoder_forward.13} parent=39 // pred_region
        %s280 = smul.u32 8, %s21
        %p281 = scmp.lt.s32.totalorder %s20, 1
        %s282 = scalar_select %p281, %s20, 1
        %p283 = scmp.lt.s32.totalorder %s280, 7
        %s284 = scalar_select %p283, %s280, 7
        %s285 = smul.addr %s282, 8
        %s286 = sadd.s32 %s284, %s285
        %s287 = smul.addr %s286, 8
        %s288 = scalar_lea.vmem %s3, %s287
      $region44: #{unet_decoder_forward.13} parent=39 // pred_fallthru
        _
    $region40: #{unet_decoder_forward.13} parent=5 // pred_fallthru
      _
  $region6: #{unet_decoder_forward.13} parent=0 // loop_footer
    %s13 = sadd.s32 1, %s9
  $region7: #{unet_decoder_forward.13} parent=0 // loop_footer_branch
    %8 = sbr.rel target = $region3
  $region8: #{unet_decoder_forward.13} parent=0 // loop_exit
    _

// kernel: unet_decoder_forward.12
$region0: #{unet_decoder_forward.12}
  #allocation0 [shape = 'u32[]', space=smem, size = 0x4, offset = 0x4, fixed_abs, tag = 'smem constant byte address 0x4 - core index']
  #allocation1 [shape = 'u32[72,128]{1,0:T(1,128)}', space=vmem, size = 0x9000, scoped, tag = 'internal scratch']
  %s0 = inlined_call_operand.vmem [shape: f32[2,2,6,10,128], index: 0, kind: input, shape index: {}]
  %s1 = inlined_call_operand.vmem [shape: f32[9,128,64], index: 1, kind: input, shape index: {}]
  %s2 = inlined_call_operand.vmem [shape: f32[1,64], index: 2, kind: input, shape index: {}]
  %s3 = inlined_call_operand.vmem [shape: f32[2,64,64], index: 3, kind: output, shape index: {0}]
  %s4 = inlined_call_operand.vmem [shape: f32[2,2,2,64], index: 4, kind: output, shape index: {1}]
  %5 = xla_tuple %s3, %s4
  %s6 = sld [smem:[#allocation0]]
  $region53: #{unet_decoder_forward.12} parent=0
    _
  %s8 = ssub.s32 1, %s6
  %s9 = scalar_select 0, %s8, %s6
  loop: start=0, step=1, limit=6
  $region2: #{unet_decoder_forward.12} parent=0 // loop_pre_header
    _
  $region3: #{unet_decoder_forward.12} parent=0 // loop_header
    %s11 = sphi 0, %s15
    %p12 = scmp.ge.s32.totalorder %s11, 6
    %s18 = sphi 0, %s30
    %s19 = sphi 0, %s26
    %s20 = sphi 0, %s18
    %s21 = sphi 0, %s19
    %s22 = sphi 0, %s20
    %s23 = sphi 0, %s21
    %s35 = sphi 0, %s37
    %s38 = sphi 0, %s35
    %s39 = sphi 0, %s38
    %s55 = sphi 0, %s39
    %s59 = sphi 0, %s59
    %s61 = sphi 0, %s59
    %s62 = sphi 0, %s61
    %s76 = sphi 0, %s62
    %s80 = sphi 0, %s80
    %s82 = sphi 0, %s80
    %s83 = sphi 0, %s82
    %s97 = sphi 0, %s83
    %s105 = sphi 0, %s107
    %s108 = sphi 0, %s105
    %s109 = sphi 0, %s108
    %s125 = sphi 0, %s109
    %s133 = sphi 0, %s135
    %s136 = sphi 0, %s133
    %s137 = sphi 0, %s136
    %s153 = sphi 0, %s137
  $region4: #{unet_decoder_forward.12} parent=0 // loop_header_branch
    %14 = sbr.rel (%p12) target = $region8
  $region5: #{unet_decoder_forward.12} parent=0 // loop_body
    %s16 = ssub.s32 %s11, 1
    %s17 = ssub.s32 %s11, 2
    %s24 = sadd.s32 1, %s19
    %p25 = scmp.ge.s32.totalorder %s24, 2
    %s26 = scalar_select %p25, 0, %s24
    %s27 = sadd.s32 1, %s18
    %s28 = scalar_select %p25, %s27, %s18
    %p29 = scmp.ge.s32.totalorder %s28, 2
    %s30 = scalar_select %p29, 0, %s28
    %s31 = ssub.s32 %s18, %s30
    %s32 = ssub.s32 %s19, %s26
    %s33 = sor.u32 %s31, %s32
    %p34 = scmp.eq.s32.totalorder %s33, 0
    %s36 = sadd.s32 %s35, 1
    %s37 = scalar_select %p34, %s35, %s36
    %p40 = pneg %p34
    %p41 = scmp.eq.s32.totalorder %s11, 3
    %p42 = por %p40, %p41
    %p43 = scmp.ne.s32.totalorder %s35, %s38
    %p44 = scmp.eq.s32.totalorder %s11, 0
    %p45 = por %p43, %p44
    %p46 = scmp.ne.s32.totalorder %s35, %s38
    %p47 = scmp.eq.s32.totalorder %s16, 3
    %p48 = por %p46, %p47
    %p49 = scmp.ne.s32.totalorder %s38, %s39
    %p50 = scmp.eq.s32.totalorder %s16, 0
    %p51 = por %p49, %p50
    %p52 = scmp.ne.s32.totalorder %s38, %s39
    %p53 = scmp.eq.s32.totalorder %s17, 3
    %p54 = por %p52, %p53
    %p56 = scmp.ne.s32.totalorder %s39, %s55
    %p57 = scmp.eq.s32.totalorder %s17, 0
    %p58 = por %p56, %p57
    %s60 = sadd.s32 %s59, 1
    %p63 = scmp.eq.s32.totalorder %s11, 3
    %p64 = scmp.ne.s32.totalorder %s59, %s61
    %p65 = scmp.eq.s32.totalorder %s11, 0
    %p66 = por %p64, %p65
    %p67 = scmp.ne.s32.totalorder %s59, %s61
    %p68 = scmp.eq.s32.totalorder %s16, 3
    %p69 = por %p67, %p68
    %p70 = scmp.ne.s32.totalorder %s61, %s62
    %p71 = scmp.eq.s32.totalorder %s16, 0
    %p72 = por %p70, %p71
    %p73 = scmp.ne.s32.totalorder %s61, %s62
    %p74 = scmp.eq.s32.totalorder %s17, 3
    %p75 = por %p73, %p74
    %p77 = scmp.ne.s32.totalorder %s62, %s76
    %p78 = scmp.eq.s32.totalorder %s17, 0
    %p79 = por %p77, %p78
    %s81 = sadd.s32 %s80, 1
    %p84 = scmp.eq.s32.totalorder %s11, 3
    %p85 = scmp.ne.s32.totalorder %s80, %s82
    %p86 = scmp.eq.s32.totalorder %s11, 0
    %p87 = por %p85, %p86
    %p88 = scmp.ne.s32.totalorder %s80, %s82
    %p89 = scmp.eq.s32.totalorder %s16, 3
    %p90 = por %p88, %p89
    %p91 = scmp.ne.s32.totalorder %s82, %s83
    %p92 = scmp.eq.s32.totalorder %s16, 0
    %p93 = por %p91, %p92
    %p94 = scmp.ne.s32.totalorder %s82, %s83
    %p95 = scmp.eq.s32.totalorder %s17, 3
    %p96 = por %p94, %p95
    %p98 = scmp.ne.s32.totalorder %s83, %s97
    %p99 = scmp.eq.s32.totalorder %s17, 0
    %p100 = por %p98, %p99
    %s101 = ssub.s32 %s18, %s30
    %s102 = ssub.s32 %s19, %s26
    %s103 = sor.u32 %s101, %s102
    %p104 = scmp.eq.s32.totalorder %s103, 0
    %s106 = sadd.s32 %s105, 1
    %s107 = scalar_select %p104, %s105, %s106
    %p110 = pneg %p104
    %p111 = scmp.eq.s32.totalorder %s11, 3
    %p112 = por %p110, %p111
    %p113 = scmp.ne.s32.totalorder %s105, %s108
    %p114 = scmp.eq.s32.totalorder %s11, 0
    %p115 = por %p113, %p114
    %p116 = scmp.ne.s32.totalorder %s105, %s108
    %p117 = scmp.eq.s32.totalorder %s16, 3
    %p118 = por %p116, %p117
    %p119 = scmp.ne.s32.totalorder %s108, %s109
    %p120 = scmp.eq.s32.totalorder %s16, 0
    %p121 = por %p119, %p120
    %p122 = scmp.ne.s32.totalorder %s108, %s109
    %p123 = scmp.eq.s32.totalorder %s17, 3
    %p124 = por %p122, %p123
    %p126 = scmp.ne.s32.totalorder %s109, %s125
    %p127 = scmp.eq.s32.totalorder %s17, 0
    %p128 = por %p126, %p127
    %s129 = ssub.s32 %s18, %s30
    %s130 = ssub.s32 %s19, %s26
    %s131 = sor.u32 %s129, %s130
    %p132 = scmp.eq.s32.totalorder %s131, 0
    %s134 = sadd.s32 %s133, 1
    %s135 = scalar_select %p132, %s133, %s134
    %p138 = pneg %p132
    %p139 = scmp.eq.s32.totalorder %s11, 3
    %p140 = por %p138, %p139
    %p141 = scmp.ne.s32.totalorder %s133, %s136
    %p142 = scmp.eq.s32.totalorder %s11, 0
    %p143 = por %p141, %p142
    %p144 = scmp.ne.s32.totalorder %s133, %s136
    %p145 = scmp.eq.s32.totalorder %s16, 3
    %p146 = por %p144, %p145
    %p147 = scmp.ne.s32.totalorder %s136, %s137
    %p148 = scmp.eq.s32.totalorder %s16, 0
    %p149 = por %p147, %p148
    %p150 = scmp.ne.s32.totalorder %s136, %s137
    %p151 = scmp.eq.s32.totalorder %s17, 3
    %p152 = por %p150, %p151
    %p154 = scmp.ne.s32.totalorder %s137, %s153
    %p155 = scmp.eq.s32.totalorder %s17, 0
    %p156 = por %p154, %p155
    %p157 = scmp.le.s32.totalorder 1, %s11
    %p158 = scmp.lt.s32.totalorder %s11, 5
    %p159 = pnand %p157, %p158
    %p160 = pneg %p159
    // Predicated region
    $region9: #{unet_decoder_forward.12} parent=5 // pred_check
      _
    $region10: #{unet_decoder_forward.12} parent=5 // pred_check_branch
      %162 = sbr.rel (%p159) target = $region12
    $region11: #{unet_decoder_forward.12} parent=5 // pred_region
      %s163 = ssub.s32 %s11, 1
      // Predicated region
      $region13: #{unet_decoder_forward.12} parent=11 // pred_check
        %p164 = pneg %p72
      $region14: #{unet_decoder_forward.12} parent=11 // pred_check_branch
        %166 = sbr.rel (%p164) target = $region16
      $region15: #{unet_decoder_forward.12} parent=11 // pred_region
        _
      $region16: #{unet_decoder_forward.12} parent=11 // pred_fallthru
        _
      // Predicated region
      $region17: #{unet_decoder_forward.12} parent=11 // pred_check
        %p167 = pneg %p93
      $region18: #{unet_decoder_forward.12} parent=11 // pred_check_branch
        %169 = sbr.rel (%p167) target = $region20
      $region19: #{unet_decoder_forward.12} parent=11 // pred_region
        _
      $region20: #{unet_decoder_forward.12} parent=11 // pred_fallthru
        _
    $region12: #{unet_decoder_forward.12} parent=5 // pred_fallthru
      _
    %p170 = scmp.lt.s32.totalorder %s11, 4
    // Predicated region
    $region21: #{unet_decoder_forward.12} parent=5 // pred_check
      %p171 = pneg %p170
    $region22: #{unet_decoder_forward.12} parent=5 // pred_check_branch
      %173 = sbr.rel (%p171) target = $region24
    $region23: #{unet_decoder_forward.12} parent=5 // pred_region
      // Predicated region
      $region25: #{unet_decoder_forward.12} parent=23 // pred_check
        %p174 = pneg %p45
      $region26: #{unet_decoder_forward.12} parent=23 // pred_check_branch
        %176 = sbr.rel (%p174) target = $region28
      $region27: #{unet_decoder_forward.12} parent=23 // pred_region
        %p177 = scmp.lt.s32.totalorder %s18, 1
        %s178 = scalar_select %p177, %s18, 1
        %p179 = scmp.lt.s32.totalorder %s19, 1
        %s180 = scalar_select %p179, %s19, 1
        %s181 = smul.addr %s180, 12
        %s182 = smul.addr %s178, 24
        %s183 = sadd.s32 %s181, %s182
        %s184 = smul.addr %s183, 8
        %s185 = scalar_lea.vmem %s0, %s184
      $region28: #{unet_decoder_forward.12} parent=23 // pred_fallthru
        _
    $region24: #{unet_decoder_forward.12} parent=5 // pred_fallthru
      _
    %p186 = scmp.le.s32.totalorder 1, %s11
    %p187 = scmp.lt.s32.totalorder %s11, 5
    %p188 = pnand %p186, %p187
    %p189 = pneg %p188
    // Predicated region
    $region29: #{unet_decoder_forward.12} parent=5 // pred_check
      _
    $region30: #{unet_decoder_forward.12} parent=5 // pred_check_branch
      %191 = sbr.rel (%p188) target = $region32
    $region31: #{unet_decoder_forward.12} parent=5 // pred_region
      %s192 = ssub.s32 %s11, 1
      %p193 = scmp.lt.s32.totalorder %s20, 1
      %s194 = scalar_select %p193, %s20, 1
      %p195 = scmp.lt.s32.totalorder %s21, 1
      %s196 = scalar_select %p195, %s21, 1
      %s197 = smul.addr %s196, 12
      %s198 = smul.addr %s194, 24
      %s199 = sadd.s32 %s197, %s198
      %s200 = smul.addr %s199, 8
      %s201 = scalar_lea.vmem %s0, %s200
      %p202 = pneg %p51
      %p203 = pneg %p48
      %p204 = pneg %p72
      %p205 = pneg %p69
      %p206 = pneg %p93
      %p207 = pneg %p90
      %p208 = pneg %p121
      %p209 = pneg %p118
      %s210 = smul.u32 4, %s21
      %p211 = scmp.lt.s32.totalorder %s20, 1
      %s212 = scalar_select %p211, %s20, 1
      %p213 = scmp.lt.s32.totalorder %s210, 7
      %s214 = scalar_select %p213, %s210, 7
      %s215 = smul.addr %s212, 8
      %s216 = sadd.s32 %s214, %s215
      %s217 = smul.addr %s216, 8
      %s218 = scalar_lea.vmem %s3, %s217
      %p219 = pneg %p149
      %p220 = pneg %p146
      %p221 = scmp.lt.s32.totalorder %s20, 1
      %s222 = scalar_select %p221, %s20, 1
      %p223 = scmp.lt.s32.totalorder %s21, 1
      %s224 = scalar_select %p223, %s21, 1
      %s225 = smul.addr %s222, 2
      %s226 = sadd.s32 %s224, %s225
      %s227 = smul.addr %s226, 2
      %s228 = scalar_lea.vmem %s4, %s227
      %p229 = scmp.lt.s32.totalorder %s20, 1
      %s230 = scalar_select %p229, %s20, 1
      %p231 = scmp.lt.s32.totalorder %s21, 1
      %s232 = scalar_select %p231, %s21, 1
      %s233 = smul.addr %s232, 12
      %s234 = smul.addr %s230, 24
      %s235 = sadd.s32 %s233, %s234
      %s236 = smul.addr %s235, 8
      %s237 = scalar_lea.vmem %s0, %s236
      %s238 = smul.u32 4, %s21
      %p239 = scmp.lt.s32.totalorder %s20, 1
      %s240 = scalar_select %p239, %s20, 1
      %p241 = scmp.lt.s32.totalorder %s238, 7
      %s242 = scalar_select %p241, %s238, 7
      %s243 = smul.addr %s240, 8
      %s244 = sadd.s32 %s242, %s243
      %s245 = smul.addr %s244, 8
      %s246 = scalar_lea.vmem %s3, %s245
      %s247 = smul.u32 4, %s21
      %p248 = scmp.lt.s32.totalorder %s20, 1
      %s249 = scalar_select %p248, %s20, 1
      %p250 = scmp.lt.s32.totalorder %s21, 1
      %s251 = scalar_select %p250, %s21, 1
      %s252 = smul.addr %s249, 2
      %s253 = sadd.s32 %s251, %s252
      %s254 = smul.addr %s253, 2
      %s255 = scalar_lea.vmem %s4, %s254
      %v256 = vld [vmem:[%s237] sm:$0xff]
      %v257 = vld [vmem:[%s237 + $0x8] sm:$0x3]
      %v258 = vld [vmem:[%s237 + $0x10] sm:$0xff]
      %v259 = vld [vmem:[%s237 + $0x18] sm:$0x3]
      %v260 = vld [vmem:[%s237 + $0x20] sm:$0xff]
      %v261 = vld [vmem:[%s237 + $0x28] sm:$0x3]
      %v262 = vld [vmem:[%s237 + $0x30] sm:$0xff]
      %v263 = vld [vmem:[%s237 + $0x38] sm:$0x3]
      %v264 = vld [vmem:[%s237 + $0x40] sm:$0xff]
      %v265 = vld [vmem:[%s237 + $0x48] sm:$0x3]
      %v266 = vld [vmem:[%s237 + $0x50] sm:$0xff]
      %v267 = vld [vmem:[%s237 + $0x58] sm:$0x3]
      %v268 = vld [vmem:[%s1] sm:$0xff]
      %v269 = vld [vmem:[%s1 + $0x8] sm:$0xff]
      %v270 = vld [vmem:[%s1 + $0x10] sm:$0xff]
      %v271 = vld [vmem:[%s1 + $0x18] sm:$0xff]
      %v272 = vld [vmem:[%s1 + $0x20] sm:$0xff]
      %v273 = vld [vmem:[%s1 + $0x28] sm:$0xff]
      %v274 = vld [vmem:[%s1 + $0x30] sm:$0xff]
      %v275 = vld [vmem:[%s1 + $0x38] sm:$0xff]
      %v276 = vld [vmem:[%s1 + $0x40] sm:$0xff]
      %v277 = vld [vmem:[%s1 + $0x48] sm:$0xff]
      %v278 = vld [vmem:[%s1 + $0x50] sm:$0xff]
      %v279 = vld [vmem:[%s1 + $0x58] sm:$0xff]
      %v280 = vld [vmem:[%s1 + $0x60] sm:$0xff]
      %v281 = vld [vmem:[%s1 + $0x68] sm:$0xff]
      %v282 = vld [vmem:[%s1 + $0x70] sm:$0xff]
      %v283 = vld [vmem:[%s1 + $0x78] sm:$0xff]
      %vm292 = vcmask 1046528
      %v293 = vrot.slane %v256, 1
      %v294 = vrot.slane %v257, 1
      %v295 = vsel %vm292, %v293, %v294
      %v296 = vrot.slane %v258, 1
      %v297 = vrot.slane %v259, 1
      %v298 = vsel %vm292, %v296, %v297
      %v299 = vrot.slane %v260, 1
      %v300 = vrot.slane %v261, 1
      %v301 = vsel %vm292, %v299, %v300
      %v302 = vrot.slane %v262, 1
      %v303 = vrot.slane %v263, 1
      %v304 = vsel %vm292, %v302, %v303
      %s309 = scalar_lea.vmem %s1, 128
      %v310 = vld [vmem:[%s309] sm:$0xff]
      %v311 = vld [vmem:[%s309 + $0x8] sm:$0xff]
      %v312 = vld [vmem:[%s309 + $0x10] sm:$0xff]
      %v313 = vld [vmem:[%s309 + $0x18] sm:$0xff]
      %v314 = vld [vmem:[%s309 + $0x20] sm:$0xff]
      %v315 = vld [vmem:[%s309 + $0x28] sm:$0xff]
      %v316 = vld [vmem:[%s309 + $0x30] sm:$0xff]
      %v317 = vld [vmem:[%s309 + $0x38] sm:$0xff]
      %v318 = vld [vmem:[%s309 + $0x40] sm:$0xff]
      %v319 = vld [vmem:[%s309 + $0x48] sm:$0xff]
      %v320 = vld [vmem:[%s309 + $0x50] sm:$0xff]
      %v321 = vld [vmem:[%s309 + $0x58] sm:$0xff]
      %v322 = vld [vmem:[%s309 + $0x60] sm:$0xff]
      %v323 = vld [vmem:[%s309 + $0x68] sm:$0xff]
      %v324 = vld [vmem:[%s309 + $0x70] sm:$0xff]
      %v325 = vld [vmem:[%s309 + $0x78] sm:$0xff]
      %326 = vmatpush.msra.mxu0 %v325
      %327 = vmatpush.msra.mxu0 %v324
      %328 = vmatpush.msra.mxu0 %v323
      %329 = vmatpush.msra.mxu0 %v322
      %330 = vmatpush.msra.mxu0 %v321
      %331 = vmatpush.msra.mxu0 %v320
      %332 = vmatpush.msra.mxu0 %v319
      %333 = vmatpush.msra.mxu0 %v318
      %334 = vmatpush.msra.mxu0 %v317
      %335 = vmatpush.msra.mxu0 %v316
      %336 = vmatpush.msra.mxu0 %v315
      %337 = vmatpush.msra.mxu0 %v314
      %338 = vmatpush.msra.mxu0 %v313
      %339 = vmatpush.msra.mxu0 %v312
      %340 = vmatpush.msra.mxu0 %v311
      %341 = vmatpush.msra.mxu0 %v310
      %342 = vmatmul.f32.gmra.mxu0 %v295
      %v343 = vpop.f32.mrf.mxu0
      %v344 = vadd.f32 0.0, %v343
      %345 = vmatmul.f32.gmra.mxu0 %v298
      %v346 = vpop.f32.mrf.mxu0
      %v347 = vadd.f32 0.0, %v346
      %348 = vmatmul.f32.gmra.mxu0 %v301
      %v349 = vpop.f32.mrf.mxu0
      %v350 = vadd.f32 0.0, %v349
      %351 = vmatmul.f32.gmra.mxu0 %v304
      %v352 = vpop.f32.mrf.mxu0
      %v353 = vadd.f32 0.0, %v352
      %354 = vdwg.mxu0
      %355 = vmatpush.msra.mxu0 %v283
      %356 = vmatpush.msra.mxu0 %v282
      %357 = vmatpush.msra.mxu0 %v281
      %358 = vmatpush.msra.mxu0 %v280
      %359 = vmatpush.msra.mxu0 %v279
      %360 = vmatpush.msra.mxu0 %v278
      %361 = vmatpush.msra.mxu0 %v277
      %362 = vmatpush.msra.mxu0 %v276
      %363 = vmatpush.msra.mxu0 %v275
      %364 = vmatpush.msra.mxu0 %v274
      %365 = vmatpush.msra.mxu0 %v273
      %366 = vmatpush.msra.mxu0 %v272
      %367 = vmatpush.msra.mxu0 %v271
      %368 = vmatpush.msra.mxu0 %v270
      %369 = vmatpush.msra.mxu0 %v269
      %370 = vmatpush.msra.mxu0 %v268
      %371 = vmatmul.f32.gmra.mxu0 %v256
      %v372 = vpop.f32.mrf.mxu0
      %v373 = vadd.f32 %v344, %v372
      %374 = vmatmul.f32.gmra.mxu0 %v258
      %v375 = vpop.f32.mrf.mxu0
      %v376 = vadd.f32 %v347, %v375
      %377 = vmatmul.f32.gmra.mxu0 %v260
      %v378 = vpop.f32.mrf.mxu0
      %v379 = vadd.f32 %v350, %v378
      %380 = vmatmul.f32.gmra.mxu0 %v262
      %v381 = vpop.f32.mrf.mxu0
      %v382 = vadd.f32 %v353, %v381
      %383 = vdwg.mxu0
      %vm384 = vcmask 1045504
      %v385 = vrot.slane %v256, 2
      %v386 = vrot.slane %v257, 2
      %v387 = vsel %vm384, %v385, %v386
      %v388 = vrot.slane %v258, 2
      %v389 = vrot.slane %v259, 2
      %v390 = vsel %vm384, %v388, %v389
      %v391 = vrot.slane %v260, 2
      %v392 = vrot.slane %v261, 2
      %v393 = vsel %vm384, %v391, %v392
      %v394 = vrot.slane %v262, 2
      %v395 = vrot.slane %v263, 2
      %v396 = vsel %vm384, %v394, %v395
      %s401 = scalar_lea.vmem %s1, 256
      %v402 = vld [vmem:[%s401] sm:$0xff]
      %v403 = vld [vmem:[%s401 + $0x8] sm:$0xff]
      %v404 = vld [vmem:[%s401 + $0x10] sm:$0xff]
      %v405 = vld [vmem:[%s401 + $0x18] sm:$0xff]
      %v406 = vld [vmem:[%s401 + $0x20] sm:$0xff]
      %v407 = vld [vmem:[%s401 + $0x28] sm:$0xff]
      %v408 = vld [vmem:[%s401 + $0x30] sm:$0xff]
      %v409 = vld [vmem:[%s401 + $0x38] sm:$0xff]
      %v410 = vld [vmem:[%s401 + $0x40] sm:$0xff]
      %v411 = vld [vmem:[%s401 + $0x48] sm:$0xff]
      %v412 = vld [vmem:[%s401 + $0x50] sm:$0xff]
      %v413 = vld [vmem:[%s401 + $0x58] sm:$0xff]
      %v414 = vld [vmem:[%s401 + $0x60] sm:$0xff]
      %v415 = vld [vmem:[%s401 + $0x68] sm:$0xff]
      %v416 = vld [vmem:[%s401 + $0x70] sm:$0xff]
      %v417 = vld [vmem:[%s401 + $0x78] sm:$0xff]
      %418 = vmatpush.msra.mxu0 %v417
      %419 = vmatpush.msra.mxu0 %v416
      %420 = vmatpush.msra.mxu0 %v415
      %421 = vmatpush.msra.mxu0 %v414
      %422 = vmatpush.msra.mxu0 %v413
      %423 = vmatpush.msra.mxu0 %v412
      %424 = vmatpush.msra.mxu0 %v411
      %425 = vmatpush.msra.mxu0 %v410
      %426 = vmatpush.msra.mxu0 %v409
      %427 = vmatpush.msra.mxu0 %v408
      %428 = vmatpush.msra.mxu0 %v407
      %429 = vmatpush.msra.mxu0 %v406
      %430 = vmatpush.msra.mxu0 %v405
      %431 = vmatpush.msra.mxu0 %v404
      %432 = vmatpush.msra.mxu0 %v403
      %433 = vmatpush.msra.mxu0 %v402
      %434 = vmatmul.f32.gmra.mxu0 %v387
      %v435 = vpop.f32.mrf.mxu0
      %v436 = vadd.f32 0.0, %v435
      %437 = vmatmul.f32.gmra.mxu0 %v390
      %v438 = vpop.f32.mrf.mxu0
      %v439 = vadd.f32 0.0, %v438
      %440 = vmatmul.f32.gmra.mxu0 %v393
      %v441 = vpop.f32.mrf.mxu0
      %v442 = vadd.f32 0.0, %v441
      %443 = vmatmul.f32.gmra.mxu0 %v396
      %v444 = vpop.f32.mrf.mxu0
      %v445 = vadd.f32 0.0, %v444
      %446 = vdwg.mxu0
      %v447 = vadd.f32 %v373, %v436
      %v448 = vadd.f32 %v376, %v439
      %v449 = vadd.f32 %v379, %v442
      %v450 = vadd.f32 %v382, %v445
      %s451 = scalar_lea.vmem %s1, 384
      %v452 = vld [vmem:[%s451] sm:$0xff]
      %v453 = vld [vmem:[%s451 + $0x8] sm:$0xff]
      %v454 = vld [vmem:[%s451 + $0x10] sm:$0xff]
      %v455 = vld [vmem:[%s451 + $0x18] sm:$0xff]
      %v456 = vld [vmem:[%s451 + $0x20] sm:$0xff]
      %v457 = vld [vmem:[%s451 + $0x28] sm:$0xff]
      %v458 = vld [vmem:[%s451 + $0x30] sm:$0xff]
      %v459 = vld [vmem:[%s451 + $0x38] sm:$0xff]
      %v460 = vld [vmem:[%s451 + $0x40] sm:$0xff]
      %v461 = vld [vmem:[%s451 + $0x48] sm:$0xff]
      %v462 = vld [vmem:[%s451 + $0x50] sm:$0xff]
      %v463 = vld [vmem:[%s451 + $0x58] sm:$0xff]
      %v464 = vld [vmem:[%s451 + $0x60] sm:$0xff]
      %v465 = vld [vmem:[%s451 + $0x68] sm:$0xff]
      %v466 = vld [vmem:[%s451 + $0x70] sm:$0xff]
      %v467 = vld [vmem:[%s451 + $0x78] sm:$0xff]
      %468 = vmatpush.msra.mxu0 %v467
      %469 = vmatpush.msra.mxu0 %v466
      %470 = vmatpush.msra.mxu0 %v465
      %471 = vmatpush.msra.mxu0 %v464
      %472 = vmatpush.msra.mxu0 %v463
      %473 = vmatpush.msra.mxu0 %v462
      %474 = vmatpush.msra.mxu0 %v461
      %475 = vmatpush.msra.mxu0 %v460
      %476 = vmatpush.msra.mxu0 %v459
      %477 = vmatpush.msra.mxu0 %v458
      %478 = vmatpush.msra.mxu0 %v457
      %479 = vmatpush.msra.mxu0 %v456
      %480 = vmatpush.msra.mxu0 %v455
      %481 = vmatpush.msra.mxu0 %v454
      %482 = vmatpush.msra.mxu0 %v453
      %483 = vmatpush.msra.mxu0 %v452
      %484 = vmatmul.f32.gmra.mxu0 %v258
      %v485 = vpop.f32.mrf.mxu0
      %v486 = vadd.f32 0.0, %v485
      %487 = vmatmul.f32.gmra.mxu0 %v260
      %v488 = vpop.f32.mrf.mxu0
      %v489 = vadd.f32 0.0, %v488
      %490 = vmatmul.f32.gmra.mxu0 %v262
      %v491 = vpop.f32.mrf.mxu0
      %v492 = vadd.f32 0.0, %v491
      %493 = vmatmul.f32.gmra.mxu0 %v264
      %v494 = vpop.f32.mrf.mxu0
      %v495 = vadd.f32 0.0, %v494
      %496 = vdwg.mxu0
      %v497 = vadd.f32 %v447, %v486
      %v498 = vadd.f32 %v448, %v489
      %v499 = vadd.f32 %v449, %v492
      %v500 = vadd.f32 %v450, %v495
      %v503 = vrot.slane %v264, 1
      %v504 = vrot.slane %v265, 1
      %v505 = vsel %vm292, %v503, %v504
      %s507 = scalar_lea.vmem %s1, 512
      %v508 = vld [vmem:[%s507] sm:$0xff]
      %v509 = vld [vmem:[%s507 + $0x8] sm:$0xff]
      %v510 = vld [vmem:[%s507 + $0x10] sm:$0xff]
      %v511 = vld [vmem:[%s507 + $0x18] sm:$0xff]
      %v512 = vld [vmem:[%s507 + $0x20] sm:$0xff]
      %v513 = vld [vmem:[%s507 + $0x28] sm:$0xff]
      %v514 = vld [vmem:[%s507 + $0x30] sm:$0xff]
      %v515 = vld [vmem:[%s507 + $0x38] sm:$0xff]
      %v516 = vld [vmem:[%s507 + $0x40] sm:$0xff]
      %v517 = vld [vmem:[%s507 + $0x48] sm:$0xff]
      %v518 = vld [vmem:[%s507 + $0x50] sm:$0xff]
      %v519 = vld [vmem:[%s507 + $0x58] sm:$0xff]
      %v520 = vld [vmem:[%s507 + $0x60] sm:$0xff]
      %v521 = vld [vmem:[%s507 + $0x68] sm:$0xff]
      %v522 = vld [vmem:[%s507 + $0x70] sm:$0xff]
      %v523 = vld [vmem:[%s507 + $0x78] sm:$0xff]
      %524 = vmatpush.msra.mxu0 %v523
      %525 = vmatpush.msra.mxu0 %v522
      %526 = vmatpush.msra.mxu0 %v521
      %527 = vmatpush.msra.mxu0 %v520
      %528 = vmatpush.msra.mxu0 %v519
      %529 = vmatpush.msra.mxu0 %v518
      %530 = vmatpush.msra.mxu0 %v517
      %531 = vmatpush.msra.mxu0 %v516
      %532 = vmatpush.msra.mxu0 %v515
      %533 = vmatpush.msra.mxu0 %v514
      %534 = vmatpush.msra.mxu0 %v513
      %535 = vmatpush.msra.mxu0 %v512
      %536 = vmatpush.msra.mxu0 %v511
      %537 = vmatpush.msra.mxu0 %v510
      %538 = vmatpush.msra.mxu0 %v509
      %539 = vmatpush.msra.mxu0 %v508
      %540 = vmatmul.f32.gmra.mxu0 %v298
      %v541 = vpop.f32.mrf.mxu0
      %v542 = vadd.f32 0.0, %v541
      %543 = vmatmul.f32.gmra.mxu0 %v301
      %v544 = vpop.f32.mrf.mxu0
      %v545 = vadd.f32 0.0, %v544
      %546 = vmatmul.f32.gmra.mxu0 %v304
      %v547 = vpop.f32.mrf.mxu0
      %v548 = vadd.f32 0.0, %v547
      %549 = vmatmul.f32.gmra.mxu0 %v505
      %v550 = vpop.f32.mrf.mxu0
      %v551 = vadd.f32 0.0, %v550
      %552 = vdwg.mxu0
      %v553 = vadd.f32 %v497, %v542
      %v554 = vadd.f32 %v498, %v545
      %v555 = vadd.f32 %v499, %v548
      %v556 = vadd.f32 %v500, %v551
      %v557 = vrot.slane %v264, 2
      %v558 = vrot.slane %v265, 2
      %v559 = vsel %vm384, %v557, %v558
      %s561 = scalar_lea.vmem %s1, 640
      %v562 = vld [vmem:[%s561] sm:$0xff]
      %v563 = vld [vmem:[%s561 + $0x8] sm:$0xff]
      %v564 = vld [vmem:[%s561 + $0x10] sm:$0xff]
      %v565 = vld [vmem:[%s561 + $0x18] sm:$0xff]
      %v566 = vld [vmem:[%s561 + $0x20] sm:$0xff]
      %v567 = vld [vmem:[%s561 + $0x28] sm:$0xff]
      %v568 = vld [vmem:[%s561 + $0x30] sm:$0xff]
      %v569 = vld [vmem:[%s561 + $0x38] sm:$0xff]
      %v570 = vld [vmem:[%s561 + $0x40] sm:$0xff]
      %v571 = vld [vmem:[%s561 + $0x48] sm:$0xff]
      %v572 = vld [vmem:[%s561 + $0x50] sm:$0xff]
      %v573 = vld [vmem:[%s561 + $0x58] sm:$0xff]
      %v574 = vld [vmem:[%s561 + $0x60] sm:$0xff]
      %v575 = vld [vmem:[%s561 + $0x68] sm:$0xff]
      %v576 = vld [vmem:[%s561 + $0x70] sm:$0xff]
      %v577 = vld [vmem:[%s561 + $0x78] sm:$0xff]
      %578 = vmatpush.msra.mxu0 %v577
      %579 = vmatpush.msra.mxu0 %v576
      %580 = vmatpush.msra.mxu0 %v575
      %581 = vmatpush.msra.mxu0 %v574
      %582 = vmatpush.msra.mxu0 %v573
      %583 = vmatpush.msra.mxu0 %v572
      %584 = vmatpush.msra.mxu0 %v571
      %585 = vmatpush.msra.mxu0 %v570
      %586 = vmatpush.msra.mxu0 %v569
      %587 = vmatpush.msra.mxu0 %v568
      %588 = vmatpush.msra.mxu0 %v567
      %589 = vmatpush.msra.mxu0 %v566
      %590 = vmatpush.msra.mxu0 %v565
      %591 = vmatpush.msra.mxu0 %v564
      %592 = vmatpush.msra.mxu0 %v563
      %593 = vmatpush.msra.mxu0 %v562
      %594 = vmatmul.f32.gmra.mxu0 %v390
      %v595 = vpop.f32.mrf.mxu0
      %v596 = vadd.f32 0.0, %v595
      %597 = vmatmul.f32.gmra.mxu0 %v393
      %v598 = vpop.f32.mrf.mxu0
      %v599 = vadd.f32 0.0, %v598
      %600 = vmatmul.f32.gmra.mxu0 %v396
      %v601 = vpop.f32.mrf.mxu0
      %v602 = vadd.f32 0.0, %v601
      %603 = vmatmul.f32.gmra.mxu0 %v559
      %v604 = vpop.f32.mrf.mxu0
      %v605 = vadd.f32 0.0, %v604
      %606 = vdwg.mxu0
      %v607 = vadd.f32 %v553, %v596
      %v608 = vadd.f32 %v554, %v599
      %v609 = vadd.f32 %v555, %v602
      %v610 = vadd.f32 %v556, %v605
      %s611 = scalar_lea.vmem %s1, 768
      %v612 = vld [vmem:[%s611] sm:$0xff]
      %v613 = vld [vmem:[%s611 + $0x8] sm:$0xff]
      %v614 = vld [vmem:[%s611 + $0x10] sm:$0xff]
      %v615 = vld [vmem:[%s611 + $0x18] sm:$0xff]
      %v616 = vld [vmem:[%s611 + $0x20] sm:$0xff]
      %v617 = vld [vmem:[%s611 + $0x28] sm:$0xff]
      %v618 = vld [vmem:[%s611 + $0x30] sm:$0xff]
      %v619 = vld [vmem:[%s611 + $0x38] sm:$0xff]
      %v620 = vld [vmem:[%s611 + $0x40] sm:$0xff]
      %v621 = vld [vmem:[%s611 + $0x48] sm:$0xff]
      %v622 = vld [vmem:[%s611 + $0x50] sm:$0xff]
      %v623 = vld [vmem:[%s611 + $0x58] sm:$0xff]
      %v624 = vld [vmem:[%s611 + $0x60] sm:$0xff]
      %v625 = vld [vmem:[%s611 + $0x68] sm:$0xff]
      %v626 = vld [vmem:[%s611 + $0x70] sm:$0xff]
      %v627 = vld [vmem:[%s611 + $0x78] sm:$0xff]
      %628 = vmatpush.msra.mxu0 %v627
      %629 = vmatpush.msra.mxu0 %v626
      %630 = vmatpush.msra.mxu0 %v625
      %631 = vmatpush.msra.mxu0 %v624
      %632 = vmatpush.msra.mxu0 %v623
      %633 = vmatpush.msra.mxu0 %v622
      %634 = vmatpush.msra.mxu0 %v621
      %635 = vmatpush.msra.mxu0 %v620
      %636 = vmatpush.msra.mxu0 %v619
      %637 = vmatpush.msra.mxu0 %v618
      %638 = vmatpush.msra.mxu0 %v617
      %639 = vmatpush.msra.mxu0 %v616
      %640 = vmatpush.msra.mxu0 %v615
      %641 = vmatpush.msra.mxu0 %v614
      %642 = vmatpush.msra.mxu0 %v613
      %643 = vmatpush.msra.mxu0 %v612
      %644 = vmatmul.f32.gmra.mxu0 %v260
      %v645 = vpop.f32.mrf.mxu0
      %v646 = vadd.f32 0.0, %v645
      %647 = vmatmul.f32.gmra.mxu0 %v262
      %v648 = vpop.f32.mrf.mxu0
      %v649 = vadd.f32 0.0, %v648
      %650 = vmatmul.f32.gmra.mxu0 %v264
      %v651 = vpop.f32.mrf.mxu0
      %v652 = vadd.f32 0.0, %v651
      %653 = vmatmul.f32.gmra.mxu0 %v266
      %v654 = vpop.f32.mrf.mxu0
      %v655 = vadd.f32 0.0, %v654
      %656 = vdwg.mxu0
      %v657 = vadd.f32 %v607, %v646
      %v658 = vadd.f32 %v608, %v649
      %v659 = vadd.f32 %v609, %v652
      %v660 = vadd.f32 %v610, %v655
      %v663 = vrot.slane %v266, 1
      %v664 = vrot.slane %v267, 1
      %v665 = vsel %vm292, %v663, %v664
      %s667 = scalar_lea.vmem %s1, 896
      %v668 = vld [vmem:[%s667] sm:$0xff]
      %v669 = vld [vmem:[%s667 + $0x8] sm:$0xff]
      %v670 = vld [vmem:[%s667 + $0x10] sm:$0xff]
      %v671 = vld [vmem:[%s667 + $0x18] sm:$0xff]
      %v672 = vld [vmem:[%s667 + $0x20] sm:$0xff]
      %v673 = vld [vmem:[%s667 + $0x28] sm:$0xff]
      %v674 = vld [vmem:[%s667 + $0x30] sm:$0xff]
      %v675 = vld [vmem:[%s667 + $0x38] sm:$0xff]
      %v676 = vld [vmem:[%s667 + $0x40] sm:$0xff]
      %v677 = vld [vmem:[%s667 + $0x48] sm:$0xff]
      %v678 = vld [vmem:[%s667 + $0x50] sm:$0xff]
      %v679 = vld [vmem:[%s667 + $0x58] sm:$0xff]
      %v680 = vld [vmem:[%s667 + $0x60] sm:$0xff]
      %v681 = vld [vmem:[%s667 + $0x68] sm:$0xff]
      %v682 = vld [vmem:[%s667 + $0x70] sm:$0xff]
      %v683 = vld [vmem:[%s667 + $0x78] sm:$0xff]
      %684 = vmatpush.msra.mxu0 %v683
      %685 = vmatpush.msra.mxu0 %v682
      %686 = vmatpush.msra.mxu0 %v681
      %687 = vmatpush.msra.mxu0 %v680
      %688 = vmatpush.msra.mxu0 %v679
      %689 = vmatpush.msra.mxu0 %v678
      %690 = vmatpush.msra.mxu0 %v677
      %691 = vmatpush.msra.mxu0 %v676
      %692 = vmatpush.msra.mxu0 %v675
      %693 = vmatpush.msra.mxu0 %v674
      %694 = vmatpush.msra.mxu0 %v673
      %695 = vmatpush.msra.mxu0 %v672
      %696 = vmatpush.msra.mxu0 %v671
      %697 = vmatpush.msra.mxu0 %v670
      %698 = vmatpush.msra.mxu0 %v669
      %699 = vmatpush.msra.mxu0 %v668
      %700 = vmatmul.f32.gmra.mxu0 %v301
      %v701 = vpop.f32.mrf.mxu0
      %v702 = vadd.f32 0.0, %v701
      %703 = vmatmul.f32.gmra.mxu0 %v304
      %v704 = vpop.f32.mrf.mxu0
      %v705 = vadd.f32 0.0, %v704
      %706 = vmatmul.f32.gmra.mxu0 %v505
      %v707 = vpop.f32.mrf.mxu0
      %v708 = vadd.f32 0.0, %v707
      %709 = vmatmul.f32.gmra.mxu0 %v665
      %v710 = vpop.f32.mrf.mxu0
      %v711 = vadd.f32 0.0, %v710
      %712 = vdwg.mxu0
      %v713 = vadd.f32 %v657, %v702
      %v714 = vadd.f32 %v658, %v705
      %v715 = vadd.f32 %v659, %v708
      %v716 = vadd.f32 %v660, %v711
      %v717 = vrot.slane %v266, 2
      %v718 = vrot.slane %v267, 2
      %v719 = vsel %vm384, %v717, %v718
      %s721 = scalar_lea.vmem %s1, 1024
      %v722 = vld [vmem:[%s721] sm:$0xff]
      %v723 = vld [vmem:[%s721 + $0x8] sm:$0xff]
      %v724 = vld [vmem:[%s721 + $0x10] sm:$0xff]
      %v725 = vld [vmem:[%s721 + $0x18] sm:$0xff]
      %v726 = vld [vmem:[%s721 + $0x20] sm:$0xff]
      %v727 = vld [vmem:[%s721 + $0x28] sm:$0xff]
      %v728 = vld [vmem:[%s721 + $0x30] sm:$0xff]
      %v729 = vld [vmem:[%s721 + $0x38] sm:$0xff]
      %v730 = vld [vmem:[%s721 + $0x40] sm:$0xff]
      %v731 = vld [vmem:[%s721 + $0x48] sm:$0xff]
      %v732 = vld [vmem:[%s721 + $0x50] sm:$0xff]
      %v733 = vld [vmem:[%s721 + $0x58] sm:$0xff]
      %v734 = vld [vmem:[%s721 + $0x60] sm:$0xff]
      %v735 = vld [vmem:[%s721 + $0x68] sm:$0xff]
      %v736 = vld [vmem:[%s721 + $0x70] sm:$0xff]
      %v737 = vld [vmem:[%s721 + $0x78] sm:$0xff]
      %738 = vmatpush.msra.mxu0 %v737
      %739 = vmatpush.msra.mxu0 %v736
      %740 = vmatpush.msra.mxu0 %v735
      %741 = vmatpush.msra.mxu0 %v734
      %742 = vmatpush.msra.mxu0 %v733
      %743 = vmatpush.msra.mxu0 %v732
      %744 = vmatpush.msra.mxu0 %v731
      %745 = vmatpush.msra.mxu0 %v730
      %746 = vmatpush.msra.mxu0 %v729
      %747 = vmatpush.msra.mxu0 %v728
      %748 = vmatpush.msra.mxu0 %v727
      %749 = vmatpush.msra.mxu0 %v726
      %750 = vmatpush.msra.mxu0 %v725
      %751 = vmatpush.msra.mxu0 %v724
      %752 = vmatpush.msra.mxu0 %v723
      %753 = vmatpush.msra.mxu0 %v722
      %754 = vmatmul.f32.gmra.mxu0 %v393
      %v755 = vpop.f32.mrf.mxu0
      %v756 = vadd.f32 0.0, %v755
      %757 = vmatmul.f32.gmra.mxu0 %v396
      %v758 = vpop.f32.mrf.mxu0
      %v759 = vadd.f32 0.0, %v758
      %760 = vmatmul.f32.gmra.mxu0 %v559
      %v761 = vpop.f32.mrf.mxu0
      %v762 = vadd.f32 0.0, %v761
      %763 = vmatmul.f32.gmra.mxu0 %v719
      %v764 = vpop.f32.mrf.mxu0
      %v765 = vadd.f32 0.0, %v764
      %766 = vdwg.mxu0
      %v767 = vadd.f32 %v713, %v756
      %v768 = vadd.f32 %v714, %v759
      %v769 = vadd.f32 %v715, %v762
      %v770 = vadd.f32 %v716, %v765
      %v771 = vld [vmem:[%s2] sm:$0x1]
      %v773 = vperm.slane %v771, 0
      %v775 = vadd.f32 %v767, %v773
      %v776 = vadd.f32 %v768, %v773
      %v777 = vadd.f32 %v769, %v773
      %v778 = vadd.f32 %v770, %v773
      %vm779 = vcmask 523264
      %780 = vst.msk [vmem:[%s246] sm:$0xff] %vm779, %v775
      %781 = vst.msk [vmem:[%s246 + $0x8] sm:$0xff] %vm779, %v776
      %782 = vst.msk [vmem:[%s246 + $0x10] sm:$0xff] %vm779, %v777
      %783 = vst.msk [vmem:[%s246 + $0x18] sm:$0xff] %vm779, %v778
      %v784 = vsel %vm779, %v775, 0.0
      %v785 = vsel %vm779, %v776, 0.0
      %v786 = vadd.f32 %v784, %v785
      %v787 = vsel %vm779, %v777, 0.0
      %v788 = vadd.f32 %v786, %v787
      %v789 = vsel %vm779, %v778, 0.0
      %v790 = vadd.f32 %v788, %v789
      %v791 = vrot.slane %v790, 4
      %v792 = vadd.f32 %v790, %v791
      %v793 = vrot.slane %v792, 2
      %v794 = vadd.f32 %v792, %v793
      %v795 = vrot.slane %v794, 1
      %v796 = vadd.f32 %v794, %v795
      %vm797 = vcmask 516096
      %798 = vst.msk [vmem:[%s255] sm:$0x1] %vm797, %v796
      %v799 = vmul.f32 %v775, %v775
      %v800 = vmul.f32 %v776, %v776
      %v801 = vmul.f32 %v777, %v777
      %v802 = vmul.f32 %v778, %v778
      %v803 = vsel %vm779, %v799, 0.0
      %v804 = vsel %vm779, %v800, 0.0
      %v805 = vadd.f32 %v803, %v804
      %v806 = vsel %vm779, %v801, 0.0
      %v807 = vadd.f32 %v805, %v806
      %v808 = vsel %vm779, %v802, 0.0
      %v809 = vadd.f32 %v807, %v808
      %v810 = vrot.slane %v809, 4
      %v811 = vadd.f32 %v809, %v810
      %v812 = vrot.slane %v811, 2
      %v813 = vadd.f32 %v811, %v812
      %v814 = vrot.slane %v813, 1
      %v815 = vadd.f32 %v813, %v814
      %816 = vst.msk [vmem:[%s255 + $0x1] sm:$0x1] %vm797, %v815
      %s817 = smul.u32 4, %s21
      %p818 = scmp.lt.s32.totalorder %s20, 1
      %s819 = scalar_select %p818, %s20, 1
      %p820 = scmp.lt.s32.totalorder %s817, 7
      %s821 = scalar_select %p820, %s817, 7
      %s822 = smul.addr %s819, 8
      %s823 = sadd.s32 %s821, %s822
      %s824 = smul.addr %s823, 8
      %s825 = scalar_lea.vmem %s3, %s824
      %p826 = scmp.lt.s32.totalorder %s20, 1
      %s827 = scalar_select %p826, %s20, 1
      %p828 = scmp.lt.s32.totalorder %s21, 1
      %s829 = scalar_select %p828, %s21, 1
      %s830 = smul.addr %s827, 2
      %s831 = sadd.s32 %s829, %s830
      %s832 = smul.addr %s831, 2
      %s833 = scalar_lea.vmem %s4, %s832
      // Predicated region
      $region33: #{unet_decoder_forward.12} parent=31 // pred_check
        %p834 = pneg %p118
      $region34: #{unet_decoder_forward.12} parent=31 // pred_check_branch
        %836 = sbr.rel (%p834) target = $region36
      $region35: #{unet_decoder_forward.12} parent=31 // pred_region
        %s837 = smul.u32 4, %s21
      $region36: #{unet_decoder_forward.12} parent=31 // pred_fallthru
        _
      // Predicated region
      $region37: #{unet_decoder_forward.12} parent=31 // pred_check
        %p838 = pneg %p146
      $region38: #{unet_decoder_forward.12} parent=31 // pred_check_branch
        %840 = sbr.rel (%p838) target = $region40
      $region39: #{unet_decoder_forward.12} parent=31 // pred_region
        _
      $region40: #{unet_decoder_forward.12} parent=31 // pred_fallthru
        _
    $region32: #{unet_decoder_forward.12} parent=5 // pred_fallthru
      _
    %p841 = scmp.le.s32.totalorder 2, %s11
    // Predicated region
    $region41: #{unet_decoder_forward.12} parent=5 // pred_check
      %p842 = pneg %p841
    $region42: #{unet_decoder_forward.12} parent=5 // pred_check_branch
      %844 = sbr.rel (%p842) target = $region44
    $region43: #{unet_decoder_forward.12} parent=5 // pred_region
      %s845 = ssub.s32 %s11, 2
      // Predicated region
      $region45: #{unet_decoder_forward.12} parent=43 // pred_check
        %p846 = pneg %p124
      $region46: #{unet_decoder_forward.12} parent=43 // pred_check_branch
        %848 = sbr.rel (%p846) target = $region48
      $region47: #{unet_decoder_forward.12} parent=43 // pred_region
        %s849 = smul.u32 4, %s23
        %p850 = scmp.lt.s32.totalorder %s22, 1
        %s851 = scalar_select %p850, %s22, 1
        %p852 = scmp.lt.s32.totalorder %s849, 7
        %s853 = scalar_select %p852, %s849, 7
        %s854 = smul.addr %s851, 8
        %s855 = sadd.s32 %s853, %s854
        %s856 = smul.addr %s855, 8
        %s857 = scalar_lea.vmem %s3, %s856
      $region48: #{unet_decoder_forward.12} parent=43 // pred_fallthru
        _
      // Predicated region
      $region49: #{unet_decoder_forward.12} parent=43 // pred_check
        %p858 = pneg %p152
      $region50: #{unet_decoder_forward.12} parent=43 // pred_check_branch
        %860 = sbr.rel (%p858) target = $region52
      $region51: #{unet_decoder_forward.12} parent=43 // pred_region
        %p861 = scmp.lt.s32.totalorder %s22, 1
        %s862 = scalar_select %p861, %s22, 1
        %p863 = scmp.lt.s32.totalorder %s23, 1
        %s864 = scalar_select %p863, %s23, 1
        %s865 = smul.addr %s862, 2
        %s866 = sadd.s32 %s864, %s865
        %s867 = smul.addr %s866, 2
        %s868 = scalar_lea.vmem %s4, %s867
      $region52: #{unet_decoder_forward.12} parent=43 // pred_fallthru
        _
    $region44: #{unet_decoder_forward.12} parent=5 // pred_fallthru
      _
  $region6: #{unet_decoder_forward.12} parent=0 // loop_footer
    %s15 = sadd.s32 1, %s11
  $region7: #{unet_decoder_forward.12} parent=0 // loop_footer_branch
    %10 = sbr.rel target = $region3
  $region8: #{unet_decoder_forward.12} parent=0 // loop_exit
    _

// kernel: unet_decoder_forward.15
$region0: #{unet_decoder_forward.15}
  #allocation0 [shape = 'u32[]', space=smem, size = 0x4, offset = 0x4, fixed_abs, tag = 'smem constant byte address 0x4 - core index']
  #allocation1 [shape = 'u32[72,128]{1,0:T(1,128)}', space=vmem, size = 0x9000, scoped, tag = 'internal scratch']
  #allocation2 [shape = 'f32[128,128]{1,0:T(8,128)}', space=vmem, size = 0x10000, scoped, tag = 'scratch operand']
  %s0 = inlined_call_operand.vmem [shape: f32[128,64], index: 0, kind: input, shape index: {}]
  %s1 = inlined_call_operand.vmem [shape: f32[1,64], index: 1, kind: input, shape index: {}]
  %s2 = inlined_call_operand.vmem [shape: f32[1,64], index: 2, kind: input, shape index: {}]
  %s3 = inlined_call_operand.vmem [shape: f32[64,128], index: 3, kind: input, shape index: {}]
  %s4 = inlined_call_operand.vmem [shape: f32[1,128], index: 4, kind: input, shape index: {}]
  %s5 = inlined_call_operand.vmem [shape: f32[128,128], index: 5, kind: output, shape index: {}]
  %s6 = sld [smem:[#allocation0]]
  $region38: #{unet_decoder_forward.15} parent=0
    _
  %s8 = ssub.s32 1, %s6
  %s9 = scalar_select 0, %s8, %s6
  // Predicated region
  $region2: #{unet_decoder_forward.15} parent=0 // pred_check
    _
  $region3: #{unet_decoder_forward.15} parent=0 // pred_check_branch
    %11 = sbr.rel (0) target = $region5
  $region4: #{unet_decoder_forward.15} parent=0 // pred_region
    _
  $region5: #{unet_decoder_forward.15} parent=0 // pred_fallthru
    _
  // Predicated region
  $region6: #{unet_decoder_forward.15} parent=0 // pred_check
    _
  $region7: #{unet_decoder_forward.15} parent=0 // pred_check_branch
    %13 = sbr.rel (0) target = $region9
  $region8: #{unet_decoder_forward.15} parent=0 // pred_region
    _
  $region9: #{unet_decoder_forward.15} parent=0 // pred_fallthru
    _
  // Predicated region
  $region10: #{unet_decoder_forward.15} parent=0 // pred_check
    _
  $region11: #{unet_decoder_forward.15} parent=0 // pred_check_branch
    %15 = sbr.rel (0) target = $region13
  $region12: #{unet_decoder_forward.15} parent=0 // pred_region
    _
  $region13: #{unet_decoder_forward.15} parent=0 // pred_fallthru
    _
  // Predicated region
  $region14: #{unet_decoder_forward.15} parent=0 // pred_check
    _
  $region15: #{unet_decoder_forward.15} parent=0 // pred_check_branch
    %17 = sbr.rel (0) target = $region17
  $region16: #{unet_decoder_forward.15} parent=0 // pred_region
    _
  $region17: #{unet_decoder_forward.15} parent=0 // pred_fallthru
    _
  // Predicated region
  $region18: #{unet_decoder_forward.15} parent=0 // pred_check
    _
  $region19: #{unet_decoder_forward.15} parent=0 // pred_check_branch
    %19 = sbr.rel (0) target = $region21
  $region20: #{unet_decoder_forward.15} parent=0 // pred_region
    _
  $region21: #{unet_decoder_forward.15} parent=0 // pred_fallthru
    _
  %p20 = scmp.eq.s32.totalorder 0, 0
  // Predicated region
  $region22: #{unet_decoder_forward.15} parent=0 // pred_check
    %p21 = pneg %p20
  $region23: #{unet_decoder_forward.15} parent=0 // pred_check_branch
    %23 = sbr.rel (%p21) target = $region25
  $region24: #{unet_decoder_forward.15} parent=0 // pred_region
    %24 = vst [vmem:[#allocation2] sm:$0xff] 0.0
    %25 = vst [vmem:[#allocation2 + $0x8] sm:$0xff] 0.0
    %26 = vst [vmem:[#allocation2 + $0x10] sm:$0xff] 0.0
    %27 = vst [vmem:[#allocation2 + $0x18] sm:$0xff] 0.0
    %28 = vst [vmem:[#allocation2 + $0x20] sm:$0xff] 0.0
    %29 = vst [vmem:[#allocation2 + $0x28] sm:$0xff] 0.0
    %30 = vst [vmem:[#allocation2 + $0x30] sm:$0xff] 0.0
    %31 = vst [vmem:[#allocation2 + $0x38] sm:$0xff] 0.0
    %32 = vst [vmem:[#allocation2 + $0x40] sm:$0xff] 0.0
    %33 = vst [vmem:[#allocation2 + $0x48] sm:$0xff] 0.0
    %34 = vst [vmem:[#allocation2 + $0x50] sm:$0xff] 0.0
    %35 = vst [vmem:[#allocation2 + $0x58] sm:$0xff] 0.0
    %36 = vst [vmem:[#allocation2 + $0x60] sm:$0xff] 0.0
    %37 = vst [vmem:[#allocation2 + $0x68] sm:$0xff] 0.0
    %38 = vst [vmem:[#allocation2 + $0x70] sm:$0xff] 0.0
    %39 = vst [vmem:[#allocation2 + $0x78] sm:$0xff] 0.0
  $region25: #{unet_decoder_forward.15} parent=0 // pred_fallthru
    _
  %v40 = vld [vmem:[%s0] sm:$0xff]
  %v41 = vld [vmem:[%s0 + $0x8] sm:$0xff]
  %v42 = vld [vmem:[%s0 + $0x10] sm:$0xff]
  %v43 = vld [vmem:[%s0 + $0x18] sm:$0xff]
  %v44 = vld [vmem:[%s0 + $0x20] sm:$0xff]
  %v45 = vld [vmem:[%s0 + $0x28] sm:$0xff]
  %v46 = vld [vmem:[%s0 + $0x30] sm:$0xff]
  %v47 = vld [vmem:[%s0 + $0x38] sm:$0xff]
  %v48 = vld [vmem:[%s0 + $0x40] sm:$0xff]
  %v49 = vld [vmem:[%s0 + $0x48] sm:$0xff]
  %v50 = vld [vmem:[%s0 + $0x50] sm:$0xff]
  %v51 = vld [vmem:[%s0 + $0x58] sm:$0xff]
  %v52 = vld [vmem:[%s0 + $0x60] sm:$0xff]
  %v53 = vld [vmem:[%s0 + $0x68] sm:$0xff]
  %v54 = vld [vmem:[%s0 + $0x70] sm:$0xff]
  %v55 = vld [vmem:[%s0 + $0x78] sm:$0xff]
  %v56 = vld [vmem:[%s1] sm:$0x1]
  %v58 = vperm.slane %v56, 0
  %v60 = vmul.f32 %v40, %v58
  %v61 = vmul.f32 %v41, %v58
  %v62 = vmul.f32 %v42, %v58
  %v63 = vmul.f32 %v43, %v58
  %v64 = vmul.f32 %v44, %v58
  %v65 = vmul.f32 %v45, %v58
  %v66 = vmul.f32 %v46, %v58
  %v67 = vmul.f32 %v47, %v58
  %v68 = vmul.f32 %v48, %v58
  %v69 = vmul.f32 %v49, %v58
  %v70 = vmul.f32 %v50, %v58
  %v71 = vmul.f32 %v51, %v58
  %v72 = vmul.f32 %v52, %v58
  %v73 = vmul.f32 %v53, %v58
  %v74 = vmul.f32 %v54, %v58
  %v75 = vmul.f32 %v55, %v58
  %v76 = vld [vmem:[%s2] sm:$0x1]
  %v78 = vperm.slane %v76, 0
  %v80 = vadd.f32 %v60, %v78
  %v81 = vadd.f32 %v61, %v78
  %v82 = vadd.f32 %v62, %v78
  %v83 = vadd.f32 %v63, %v78
  %v84 = vadd.f32 %v64, %v78
  %v85 = vadd.f32 %v65, %v78
  %v86 = vadd.f32 %v66, %v78
  %v87 = vadd.f32 %v67, %v78
  %v88 = vadd.f32 %v68, %v78
  %v89 = vadd.f32 %v69, %v78
  %v90 = vadd.f32 %v70, %v78
  %v91 = vadd.f32 %v71, %v78
  %v92 = vadd.f32 %v72, %v78
  %v93 = vadd.f32 %v73, %v78
  %v94 = vadd.f32 %v74, %v78
  %v95 = vadd.f32 %v75, %v78
  %v96 = vmax.f32 %v80, 0.0
  %v97 = vmax.f32 %v81, 0.0
  %v98 = vmax.f32 %v82, 0.0
  %v99 = vmax.f32 %v83, 0.0
  %v100 = vmax.f32 %v84, 0.0
  %v101 = vmax.f32 %v85, 0.0
  %v102 = vmax.f32 %v86, 0.0
  %v103 = vmax.f32 %v87, 0.0
  %v104 = vmax.f32 %v88, 0.0
  %v105 = vmax.f32 %v89, 0.0
  %v106 = vmax.f32 %v90, 0.0
  %v107 = vmax.f32 %v91, 0.0
  %v108 = vmax.f32 %v92, 0.0
  %v109 = vmax.f32 %v93, 0.0
  %v110 = vmax.f32 %v94, 0.0
  %v111 = vmax.f32 %v95, 0.0
  %v112 = vld [vmem:[#allocation2] sm:$0xff]
  %v113 = vld [vmem:[#allocation2 + $0x8] sm:$0xff]
  %v114 = vld [vmem:[#allocation2 + $0x10] sm:$0xff]
  %v115 = vld [vmem:[#allocation2 + $0x18] sm:$0xff]
  %v116 = vld [vmem:[#allocation2 + $0x20] sm:$0xff]
  %v117 = vld [vmem:[#allocation2 + $0x28] sm:$0xff]
  %v118 = vld [vmem:[#allocation2 + $0x30] sm:$0xff]
  %v119 = vld [vmem:[#allocation2 + $0x38] sm:$0xff]
  %v120 = vld [vmem:[#allocation2 + $0x40] sm:$0xff]
  %v121 = vld [vmem:[#allocation2 + $0x48] sm:$0xff]
  %v122 = vld [vmem:[#allocation2 + $0x50] sm:$0xff]
  %v123 = vld [vmem:[#allocation2 + $0x58] sm:$0xff]
  %v124 = vld [vmem:[#allocation2 + $0x60] sm:$0xff]
  %v125 = vld [vmem:[#allocation2 + $0x68] sm:$0xff]
  %v126 = vld [vmem:[#allocation2 + $0x70] sm:$0xff]
  %v127 = vld [vmem:[#allocation2 + $0x78] sm:$0xff]
  %v128 = vld [vmem:[%s3] sm:$0xff]
  %v129 = vld [vmem:[%s3 + $0x8] sm:$0xff]
  %v130 = vld [vmem:[%s3 + $0x10] sm:$0xff]
  %v131 = vld [vmem:[%s3 + $0x18] sm:$0xff]
  %v132 = vld [vmem:[%s3 + $0x20] sm:$0xff]
  %v133 = vld [vmem:[%s3 + $0x28] sm:$0xff]
  %v134 = vld [vmem:[%s3 + $0x30] sm:$0xff]
  %v135 = vld [vmem:[%s3 + $0x38] sm:$0xff]
  %vm136 = vcmask 523264
  %v138 = vsel %vm136, %v96, 0
  %v141 = vsel %vm136, %v97, 0
  %v144 = vsel %vm136, %v98, 0
  %v147 = vsel %vm136, %v99, 0
  %v150 = vsel %vm136, %v100, 0
  %v153 = vsel %vm136, %v101, 0
  %v156 = vsel %vm136, %v102, 0
  %v159 = vsel %vm136, %v103, 0
  %v162 = vsel %vm136, %v104, 0
  %v165 = vsel %vm136, %v105, 0
  %v168 = vsel %vm136, %v106, 0
  %v171 = vsel %vm136, %v107, 0
  %v174 = vsel %vm136, %v108, 0
  %v177 = vsel %vm136, %v109, 0
  %v180 = vsel %vm136, %v110, 0
  %v183 = vsel %vm136, %v111, 0
  %185 = vmatpush.msra.mxu0 0.0
  %186 = vmatpush.msra.mxu0 0.0
  %187 = vmatpush.msra.mxu0 0.0
  %188 = vmatpush.msra.mxu0 0.0
  %189 = vmatpush.msra.mxu0 0.0
  %190 = vmatpush.msra.mxu0 0.0
  %191 = vmatpush.msra.mxu0 0.0
  %192 = vmatpush.msra.mxu0 0.0
  %193 = vmatpush.msra.mxu0 %v135
  %194 = vmatpush.msra.mxu0 %v134
  %195 = vmatpush.msra.mxu0 %v133
  %196 = vmatpush.msra.mxu0 %v132
  %197 = vmatpush.msra.mxu0 %v131
  %198 = vmatpush.msra.mxu0 %v130
  %199 = vmatpush.msra.mxu0 %v129
  %200 = vmatpush.msra.mxu0 %v128
  %201 = vmatmul.f32.gmra.mxu0 %v138
  %v202 = vpop.f32.mrf.mxu0
  %v203 = vadd.f32 0.0, %v202
  %204 = vmatmul.f32.gmra.mxu0 %v141
  %v205 = vpop.f32.mrf.mxu0
  %v206 = vadd.f32 0.0, %v205
  %207 = vmatmul.f32.gmra.mxu0 %v144
  %v208 = vpop.f32.mrf.mxu0
  %v209 = vadd.f32 0.0, %v208
  %210 = vmatmul.f32.gmra.mxu0 %v147
  %v211 = vpop.f32.mrf.mxu0
  %v212 = vadd.f32 0.0, %v211
  %213 = vmatmul.f32.gmra.mxu0 %v150
  %v214 = vpop.f32.mrf.mxu0
  %v215 = vadd.f32 0.0, %v214
  %216 = vmatmul.f32.gmra.mxu0 %v153
  %v217 = vpop.f32.mrf.mxu0
  %v218 = vadd.f32 0.0, %v217
  %219 = vmatmul.f32.gmra.mxu0 %v156
  %v220 = vpop.f32.mrf.mxu0
  %v221 = vadd.f32 0.0, %v220
  %222 = vmatmul.f32.gmra.mxu0 %v159
  %v223 = vpop.f32.mrf.mxu0
  %v224 = vadd.f32 0.0, %v223
  %225 = vmatmul.f32.gmra.mxu0 %v162
  %v226 = vpop.f32.mrf.mxu0
  %v227 = vadd.f32 0.0, %v226
  %228 = vmatmul.f32.gmra.mxu0 %v165
  %v229 = vpop.f32.mrf.mxu0
  %v230 = vadd.f32 0.0, %v229
  %231 = vmatmul.f32.gmra.mxu0 %v168
  %v232 = vpop.f32.mrf.mxu0
  %v233 = vadd.f32 0.0, %v232
  %234 = vmatmul.f32.gmra.mxu0 %v171
  %v235 = vpop.f32.mrf.mxu0
  %v236 = vadd.f32 0.0, %v235
  %237 = vmatmul.f32.gmra.mxu0 %v174
  %v238 = vpop.f32.mrf.mxu0
  %v239 = vadd.f32 0.0, %v238
  %240 = vmatmul.f32.gmra.mxu0 %v177
  %v241 = vpop.f32.mrf.mxu0
  %v242 = vadd.f32 0.0, %v241
  %243 = vmatmul.f32.gmra.mxu0 %v180
  %v244 = vpop.f32.mrf.mxu0
  %v245 = vadd.f32 0.0, %v244
  %246 = vmatmul.f32.gmra.mxu0 %v183
  %v247 = vpop.f32.mrf.mxu0
  %v248 = vadd.f32 0.0, %v247
  %249 = vdwg.mxu0
  %v250 = vadd.f32 %v112, %v203
  %v251 = vadd.f32 %v113, %v206
  %v252 = vadd.f32 %v114, %v209
  %v253 = vadd.f32 %v115, %v212
  %v254 = vadd.f32 %v116, %v215
  %v255 = vadd.f32 %v117, %v218
  %v256 = vadd.f32 %v118, %v221
  %v257 = vadd.f32 %v119, %v224
  %v258 = vadd.f32 %v120, %v227
  %v259 = vadd.f32 %v121, %v230
  %v260 = vadd.f32 %v122, %v233
  %v261 = vadd.f32 %v123, %v236
  %v262 = vadd.f32 %v124, %v239
  %v263 = vadd.f32 %v125, %v242
  %v264 = vadd.f32 %v126, %v245
  %v265 = vadd.f32 %v127, %v248
  %266 = vst [vmem:[#allocation2] sm:$0xff] %v250
  %267 = vst [vmem:[#allocation2 + $0x8] sm:$0xff] %v251
  %268 = vst [vmem:[#allocation2 + $0x10] sm:$0xff] %v252
  %269 = vst [vmem:[#allocation2 + $0x18] sm:$0xff] %v253
  %270 = vst [vmem:[#allocation2 + $0x20] sm:$0xff] %v254
  %271 = vst [vmem:[#allocation2 + $0x28] sm:$0xff] %v255
  %272 = vst [vmem:[#allocation2 + $0x30] sm:$0xff] %v256
  %273 = vst [vmem:[#allocation2 + $0x38] sm:$0xff] %v257
  %274 = vst [vmem:[#allocation2 + $0x40] sm:$0xff] %v258
  %275 = vst [vmem:[#allocation2 + $0x48] sm:$0xff] %v259
  %276 = vst [vmem:[#allocation2 + $0x50] sm:$0xff] %v260
  %277 = vst [vmem:[#allocation2 + $0x58] sm:$0xff] %v261
  %278 = vst [vmem:[#allocation2 + $0x60] sm:$0xff] %v262
  %279 = vst [vmem:[#allocation2 + $0x68] sm:$0xff] %v263
  %280 = vst [vmem:[#allocation2 + $0x70] sm:$0xff] %v264
  %281 = vst [vmem:[#allocation2 + $0x78] sm:$0xff] %v265
  // Predicated region
  $region26: #{unet_decoder_forward.15} parent=0 // pred_check
    %p282 = pneg %p20
  $region27: #{unet_decoder_forward.15} parent=0 // pred_check_branch
    %284 = sbr.rel (%p282) target = $region29
  $region28: #{unet_decoder_forward.15} parent=0 // pred_region
    %v285 = vld [vmem:[#allocation2] sm:$0xff]
    %v286 = vld [vmem:[#allocation2 + $0x8] sm:$0xff]
    %v287 = vld [vmem:[#allocation2 + $0x10] sm:$0xff]
    %v288 = vld [vmem:[#allocation2 + $0x18] sm:$0xff]
    %v289 = vld [vmem:[#allocation2 + $0x20] sm:$0xff]
    %v290 = vld [vmem:[#allocation2 + $0x28] sm:$0xff]
    %v291 = vld [vmem:[#allocation2 + $0x30] sm:$0xff]
    %v292 = vld [vmem:[#allocation2 + $0x38] sm:$0xff]
    %v293 = vld [vmem:[#allocation2 + $0x40] sm:$0xff]
    %v294 = vld [vmem:[#allocation2 + $0x48] sm:$0xff]
    %v295 = vld [vmem:[#allocation2 + $0x50] sm:$0xff]
    %v296 = vld [vmem:[#allocation2 + $0x58] sm:$0xff]
    %v297 = vld [vmem:[#allocation2 + $0x60] sm:$0xff]
    %v298 = vld [vmem:[#allocation2 + $0x68] sm:$0xff]
    %v299 = vld [vmem:[#allocation2 + $0x70] sm:$0xff]
    %v300 = vld [vmem:[#allocation2 + $0x78] sm:$0xff]
    %v301 = vld [vmem:[%s4] sm:$0x1]
    %v303 = vperm.slane %v301, 0
    %v305 = vadd.f32 %v285, %v303
    %v306 = vadd.f32 %v286, %v303
    %v307 = vadd.f32 %v287, %v303
    %v308 = vadd.f32 %v288, %v303
    %v309 = vadd.f32 %v289, %v303
    %v310 = vadd.f32 %v290, %v303
    %v311 = vadd.f32 %v291, %v303
    %v312 = vadd.f32 %v292, %v303
    %v313 = vadd.f32 %v293, %v303
    %v314 = vadd.f32 %v294, %v303
    %v315 = vadd.f32 %v295, %v303
    %v316 = vadd.f32 %v296, %v303
    %v317 = vadd.f32 %v297, %v303
    %v318 = vadd.f32 %v298, %v303
    %v319 = vadd.f32 %v299, %v303
    %v320 = vadd.f32 %v300, %v303
    %321 = vst [vmem:[%s5] sm:$0xff] %v305
    %322 = vst [vmem:[%s5 + $0x8] sm:$0xff] %v306
    %323 = vst [vmem:[%s5 + $0x10] sm:$0xff] %v307
    %324 = vst [vmem:[%s5 + $0x18] sm:$0xff] %v308
    %325 = vst [vmem:[%s5 + $0x20] sm:$0xff] %v309
    %326 = vst [vmem:[%s5 + $0x28] sm:$0xff] %v310
    %327 = vst [vmem:[%s5 + $0x30] sm:$0xff] %v311
    %328 = vst [vmem:[%s5 + $0x38] sm:$0xff] %v312
    %329 = vst [vmem:[%s5 + $0x40] sm:$0xff] %v313
    %330 = vst [vmem:[%s5 + $0x48] sm:$0xff] %v314
    %331 = vst [vmem:[%s5 + $0x50] sm:$0xff] %v315
    %332 = vst [vmem:[%s5 + $0x58] sm:$0xff] %v316
    %333 = vst [vmem:[%s5 + $0x60] sm:$0xff] %v317
    %334 = vst [vmem:[%s5 + $0x68] sm:$0xff] %v318
    %335 = vst [vmem:[%s5 + $0x70] sm:$0xff] %v319
    %336 = vst [vmem:[%s5 + $0x78] sm:$0xff] %v320
  $region29: #{unet_decoder_forward.15} parent=0 // pred_fallthru
    _
  // Predicated region
  $region30: #{unet_decoder_forward.15} parent=0 // pred_check
    _
  $region31: #{unet_decoder_forward.15} parent=0 // pred_check_branch
    %338 = sbr.rel (0) target = $region33
  $region32: #{unet_decoder_forward.15} parent=0 // pred_region
    _
  $region33: #{unet_decoder_forward.15} parent=0 // pred_fallthru
    _
  // Predicated region
  $region34: #{unet_decoder_forward.15} parent=0 // pred_check
    _
  $region35: #{unet_decoder_forward.15} parent=0 // pred_check_branch
    %340 = sbr.rel (0) target = $region37
  $region36: #{unet_decoder_forward.15} parent=0 // pred_region
    _
  $region37: #{unet_decoder_forward.15} parent=0 // pred_fallthru
    _

// kernel: unet_decoder_forward.14
$region0: #{unet_decoder_forward.14}
  #allocation0 [shape = 'u32[]', space=smem, size = 0x4, offset = 0x4, fixed_abs, tag = 'smem constant byte address 0x4 - core index']
  #allocation1 [shape = 'u32[72,128]{1,0:T(1,128)}', space=vmem, size = 0x9000, scoped, tag = 'internal scratch']
  %s0 = inlined_call_operand.vmem [shape: f32[2,2,6,10,64], index: 0, kind: input, shape index: {}]
  %s1 = inlined_call_operand.vmem [shape: f32[9,64,64], index: 1, kind: input, shape index: {}]
  %s2 = inlined_call_operand.vmem [shape: f32[1,64], index: 2, kind: input, shape index: {}]
  %s3 = inlined_call_operand.vmem [shape: f32[2,64,64], index: 3, kind: output, shape index: {0}]
  %s4 = inlined_call_operand.vmem [shape: f32[2,2,2,64], index: 4, kind: output, shape index: {1}]
  %5 = xla_tuple %s3, %s4
  %s6 = sld [smem:[#allocation0]]
  $region53: #{unet_decoder_forward.14} parent=0
    _
  %s8 = ssub.s32 1, %s6
  %s9 = scalar_select 0, %s8, %s6
  loop: start=0, step=1, limit=6
  $region2: #{unet_decoder_forward.14} parent=0 // loop_pre_header
    _
  $region3: #{unet_decoder_forward.14} parent=0 // loop_header
    %s11 = sphi 0, %s15
    %p12 = scmp.ge.s32.totalorder %s11, 6
    %s18 = sphi 0, %s30
    %s19 = sphi 0, %s26
    %s20 = sphi 0, %s18
    %s21 = sphi 0, %s19
    %s22 = sphi 0, %s20
    %s23 = sphi 0, %s21
    %s35 = sphi 0, %s37
    %s38 = sphi 0, %s35
    %s39 = sphi 0, %s38
    %s55 = sphi 0, %s39
    %s59 = sphi 0, %s59
    %s61 = sphi 0, %s59
    %s62 = sphi 0, %s61
    %s76 = sphi 0, %s62
    %s80 = sphi 0, %s80
    %s82 = sphi 0, %s80
    %s83 = sphi 0, %s82
    %s97 = sphi 0, %s83
    %s105 = sphi 0, %s107
    %s108 = sphi 0, %s105
    %s109 = sphi 0, %s108
    %s125 = sphi 0, %s109
    %s133 = sphi 0, %s135
    %s136 = sphi 0, %s133
    %s137 = sphi 0, %s136
    %s153 = sphi 0, %s137
  $region4: #{unet_decoder_forward.14} parent=0 // loop_header_branch
    %14 = sbr.rel (%p12) target = $region8
  $region5: #{unet_decoder_forward.14} parent=0 // loop_body
    %s16 = ssub.s32 %s11, 1
    %s17 = ssub.s32 %s11, 2
    %s24 = sadd.s32 1, %s19
    %p25 = scmp.ge.s32.totalorder %s24, 2
    %s26 = scalar_select %p25, 0, %s24
    %s27 = sadd.s32 1, %s18
    %s28 = scalar_select %p25, %s27, %s18
    %p29 = scmp.ge.s32.totalorder %s28, 2
    %s30 = scalar_select %p29, 0, %s28
    %s31 = ssub.s32 %s18, %s30
    %s32 = ssub.s32 %s19, %s26
    %s33 = sor.u32 %s31, %s32
    %p34 = scmp.eq.s32.totalorder %s33, 0
    %s36 = sadd.s32 %s35, 1
    %s37 = scalar_select %p34, %s35, %s36
    %p40 = pneg %p34
    %p41 = scmp.eq.s32.totalorder %s11, 3
    %p42 = por %p40, %p41
    %p43 = scmp.ne.s32.totalorder %s35, %s38
    %p44 = scmp.eq.s32.totalorder %s11, 0
    %p45 = por %p43, %p44
    %p46 = scmp.ne.s32.totalorder %s35, %s38
    %p47 = scmp.eq.s32.totalorder %s16, 3
    %p48 = por %p46, %p47
    %p49 = scmp.ne.s32.totalorder %s38, %s39
    %p50 = scmp.eq.s32.totalorder %s16, 0
    %p51 = por %p49, %p50
    %p52 = scmp.ne.s32.totalorder %s38, %s39
    %p53 = scmp.eq.s32.totalorder %s17, 3
    %p54 = por %p52, %p53
    %p56 = scmp.ne.s32.totalorder %s39, %s55
    %p57 = scmp.eq.s32.totalorder %s17, 0
    %p58 = por %p56, %p57
    %s60 = sadd.s32 %s59, 1
    %p63 = scmp.eq.s32.totalorder %s11, 3
    %p64 = scmp.ne.s32.totalorder %s59, %s61
    %p65 = scmp.eq.s32.totalorder %s11, 0
    %p66 = por %p64, %p65
    %p67 = scmp.ne.s32.totalorder %s59, %s61
    %p68 = scmp.eq.s32.totalorder %s16, 3
    %p69 = por %p67, %p68
    %p70 = scmp.ne.s32.totalorder %s61, %s62
    %p71 = scmp.eq.s32.totalorder %s16, 0
    %p72 = por %p70, %p71
    %p73 = scmp.ne.s32.totalorder %s61, %s62
    %p74 = scmp.eq.s32.totalorder %s17, 3
    %p75 = por %p73, %p74
    %p77 = scmp.ne.s32.totalorder %s62, %s76
    %p78 = scmp.eq.s32.totalorder %s17, 0
    %p79 = por %p77, %p78
    %s81 = sadd.s32 %s80, 1
    %p84 = scmp.eq.s32.totalorder %s11, 3
    %p85 = scmp.ne.s32.totalorder %s80, %s82
    %p86 = scmp.eq.s32.totalorder %s11, 0
    %p87 = por %p85, %p86
    %p88 = scmp.ne.s32.totalorder %s80, %s82
    %p89 = scmp.eq.s32.totalorder %s16, 3
    %p90 = por %p88, %p89
    %p91 = scmp.ne.s32.totalorder %s82, %s83
    %p92 = scmp.eq.s32.totalorder %s16, 0
    %p93 = por %p91, %p92
    %p94 = scmp.ne.s32.totalorder %s82, %s83
    %p95 = scmp.eq.s32.totalorder %s17, 3
    %p96 = por %p94, %p95
    %p98 = scmp.ne.s32.totalorder %s83, %s97
    %p99 = scmp.eq.s32.totalorder %s17, 0
    %p100 = por %p98, %p99
    %s101 = ssub.s32 %s18, %s30
    %s102 = ssub.s32 %s19, %s26
    %s103 = sor.u32 %s101, %s102
    %p104 = scmp.eq.s32.totalorder %s103, 0
    %s106 = sadd.s32 %s105, 1
    %s107 = scalar_select %p104, %s105, %s106
    %p110 = pneg %p104
    %p111 = scmp.eq.s32.totalorder %s11, 3
    %p112 = por %p110, %p111
    %p113 = scmp.ne.s32.totalorder %s105, %s108
    %p114 = scmp.eq.s32.totalorder %s11, 0
    %p115 = por %p113, %p114
    %p116 = scmp.ne.s32.totalorder %s105, %s108
    %p117 = scmp.eq.s32.totalorder %s16, 3
    %p118 = por %p116, %p117
    %p119 = scmp.ne.s32.totalorder %s108, %s109
    %p120 = scmp.eq.s32.totalorder %s16, 0
    %p121 = por %p119, %p120
    %p122 = scmp.ne.s32.totalorder %s108, %s109
    %p123 = scmp.eq.s32.totalorder %s17, 3
    %p124 = por %p122, %p123
    %p126 = scmp.ne.s32.totalorder %s109, %s125
    %p127 = scmp.eq.s32.totalorder %s17, 0
    %p128 = por %p126, %p127
    %s129 = ssub.s32 %s18, %s30
    %s130 = ssub.s32 %s19, %s26
    %s131 = sor.u32 %s129, %s130
    %p132 = scmp.eq.s32.totalorder %s131, 0
    %s134 = sadd.s32 %s133, 1
    %s135 = scalar_select %p132, %s133, %s134
    %p138 = pneg %p132
    %p139 = scmp.eq.s32.totalorder %s11, 3
    %p140 = por %p138, %p139
    %p141 = scmp.ne.s32.totalorder %s133, %s136
    %p142 = scmp.eq.s32.totalorder %s11, 0
    %p143 = por %p141, %p142
    %p144 = scmp.ne.s32.totalorder %s133, %s136
    %p145 = scmp.eq.s32.totalorder %s16, 3
    %p146 = por %p144, %p145
    %p147 = scmp.ne.s32.totalorder %s136, %s137
    %p148 = scmp.eq.s32.totalorder %s16, 0
    %p149 = por %p147, %p148
    %p150 = scmp.ne.s32.totalorder %s136, %s137
    %p151 = scmp.eq.s32.totalorder %s17, 3
    %p152 = por %p150, %p151
    %p154 = scmp.ne.s32.totalorder %s137, %s153
    %p155 = scmp.eq.s32.totalorder %s17, 0
    %p156 = por %p154, %p155
    %p157 = scmp.le.s32.totalorder 1, %s11
    %p158 = scmp.lt.s32.totalorder %s11, 5
    %p159 = pnand %p157, %p158
    %p160 = pneg %p159
    // Predicated region
    $region9: #{unet_decoder_forward.14} parent=5 // pred_check
      _
    $region10: #{unet_decoder_forward.14} parent=5 // pred_check_branch
      %162 = sbr.rel (%p159) target = $region12
    $region11: #{unet_decoder_forward.14} parent=5 // pred_region
      %s163 = ssub.s32 %s11, 1
      // Predicated region
      $region13: #{unet_decoder_forward.14} parent=11 // pred_check
        %p164 = pneg %p72
      $region14: #{unet_decoder_forward.14} parent=11 // pred_check_branch
        %166 = sbr.rel (%p164) target = $region16
      $region15: #{unet_decoder_forward.14} parent=11 // pred_region
        _
      $region16: #{unet_decoder_forward.14} parent=11 // pred_fallthru
        _
      // Predicated region
      $region17: #{unet_decoder_forward.14} parent=11 // pred_check
        %p167 = pneg %p93
      $region18: #{unet_decoder_forward.14} parent=11 // pred_check_branch
        %169 = sbr.rel (%p167) target = $region20
      $region19: #{unet_decoder_forward.14} parent=11 // pred_region
        _
      $region20: #{unet_decoder_forward.14} parent=11 // pred_fallthru
        _
    $region12: #{unet_decoder_forward.14} parent=5 // pred_fallthru
      _
    %p170 = scmp.lt.s32.totalorder %s11, 4
    // Predicated region
    $region21: #{unet_decoder_forward.14} parent=5 // pred_check
      %p171 = pneg %p170
    $region22: #{unet_decoder_forward.14} parent=5 // pred_check_branch
      %173 = sbr.rel (%p171) target = $region24
    $region23: #{unet_decoder_forward.14} parent=5 // pred_region
      // Predicated region
      $region25: #{unet_decoder_forward.14} parent=23 // pred_check
        %p174 = pneg %p45
      $region26: #{unet_decoder_forward.14} parent=23 // pred_check_branch
        %176 = sbr.rel (%p174) target = $region28
      $region27: #{unet_decoder_forward.14} parent=23 // pred_region
        %p177 = scmp.lt.s32.totalorder %s18, 1
        %s178 = scalar_select %p177, %s18, 1
        %p179 = scmp.lt.s32.totalorder %s19, 1
        %s180 = scalar_select %p179, %s19, 1
        %s181 = smul.addr %s180, 12
        %s182 = smul.addr %s178, 24
        %s183 = sadd.s32 %s181, %s182
        %s184 = smul.addr %s183, 8
        %s185 = scalar_lea.vmem %s0, %s184
      $region28: #{unet_decoder_forward.14} parent=23 // pred_fallthru
        _
    $region24: #{unet_decoder_forward.14} parent=5 // pred_fallthru
      _
    %p186 = scmp.le.s32.totalorder 1, %s11
    %p187 = scmp.lt.s32.totalorder %s11, 5
    %p188 = pnand %p186, %p187
    %p189 = pneg %p188
    // Predicated region
    $region29: #{unet_decoder_forward.14} parent=5 // pred_check
      _
    $region30: #{unet_decoder_forward.14} parent=5 // pred_check_branch
      %191 = sbr.rel (%p188) target = $region32
    $region31: #{unet_decoder_forward.14} parent=5 // pred_region
      %s192 = ssub.s32 %s11, 1
      %p193 = scmp.lt.s32.totalorder %s20, 1
      %s194 = scalar_select %p193, %s20, 1
      %p195 = scmp.lt.s32.totalorder %s21, 1
      %s196 = scalar_select %p195, %s21, 1
      %s197 = smul.addr %s196, 12
      %s198 = smul.addr %s194, 24
      %s199 = sadd.s32 %s197, %s198
      %s200 = smul.addr %s199, 8
      %s201 = scalar_lea.vmem %s0, %s200
      %p202 = pneg %p51
      %p203 = pneg %p48
      %p204 = pneg %p72
      %p205 = pneg %p69
      %p206 = pneg %p93
      %p207 = pneg %p90
      %p208 = pneg %p121
      %p209 = pneg %p118
      %s210 = smul.u32 4, %s21
      %p211 = scmp.lt.s32.totalorder %s20, 1
      %s212 = scalar_select %p211, %s20, 1
      %p213 = scmp.lt.s32.totalorder %s210, 7
      %s214 = scalar_select %p213, %s210, 7
      %s215 = smul.addr %s212, 8
      %s216 = sadd.s32 %s214, %s215
      %s217 = smul.addr %s216, 8
      %s218 = scalar_lea.vmem %s3, %s217
      %p219 = pneg %p149
      %p220 = pneg %p146
      %p221 = scmp.lt.s32.totalorder %s20, 1
      %s222 = scalar_select %p221, %s20, 1
      %p223 = scmp.lt.s32.totalorder %s21, 1
      %s224 = scalar_select %p223, %s21, 1
      %s225 = smul.addr %s222, 2
      %s226 = sadd.s32 %s224, %s225
      %s227 = smul.addr %s226, 2
      %s228 = scalar_lea.vmem %s4, %s227
      %p229 = scmp.lt.s32.totalorder %s20, 1
      %s230 = scalar_select %p229, %s20, 1
      %p231 = scmp.lt.s32.totalorder %s21, 1
      %s232 = scalar_select %p231, %s21, 1
      %s233 = smul.addr %s232, 12
      %s234 = smul.addr %s230, 24
      %s235 = sadd.s32 %s233, %s234
      %s236 = smul.addr %s235, 8
      %s237 = scalar_lea.vmem %s0, %s236
      %s238 = smul.u32 4, %s21
      %p239 = scmp.lt.s32.totalorder %s20, 1
      %s240 = scalar_select %p239, %s20, 1
      %p241 = scmp.lt.s32.totalorder %s238, 7
      %s242 = scalar_select %p241, %s238, 7
      %s243 = smul.addr %s240, 8
      %s244 = sadd.s32 %s242, %s243
      %s245 = smul.addr %s244, 8
      %s246 = scalar_lea.vmem %s3, %s245
      %s247 = smul.u32 4, %s21
      %p248 = scmp.lt.s32.totalorder %s20, 1
      %s249 = scalar_select %p248, %s20, 1
      %p250 = scmp.lt.s32.totalorder %s21, 1
      %s251 = scalar_select %p250, %s21, 1
      %s252 = smul.addr %s249, 2
      %s253 = sadd.s32 %s251, %s252
      %s254 = smul.addr %s253, 2
      %s255 = scalar_lea.vmem %s4, %s254
      %v256 = vld [vmem:[%s237] sm:$0xff]
      %v257 = vld [vmem:[%s237 + $0x8] sm:$0x3]
      %v258 = vld [vmem:[%s237 + $0x10] sm:$0xff]
      %v259 = vld [vmem:[%s237 + $0x18] sm:$0x3]
      %v260 = vld [vmem:[%s237 + $0x20] sm:$0xff]
      %v261 = vld [vmem:[%s237 + $0x28] sm:$0x3]
      %v262 = vld [vmem:[%s237 + $0x30] sm:$0xff]
      %v263 = vld [vmem:[%s237 + $0x38] sm:$0x3]
      %v264 = vld [vmem:[%s237 + $0x40] sm:$0xff]
      %v265 = vld [vmem:[%s237 + $0x48] sm:$0x3]
      %v266 = vld [vmem:[%s237 + $0x50] sm:$0xff]
      %v267 = vld [vmem:[%s237 + $0x58] sm:$0x3]
      %v268 = vld [vmem:[%s1] sm:$0xff]
      %v269 = vld [vmem:[%s1 + $0x8] sm:$0xff]
      %v270 = vld [vmem:[%s1 + $0x10] sm:$0xff]
      %v271 = vld [vmem:[%s1 + $0x18] sm:$0xff]
      %v272 = vld [vmem:[%s1 + $0x20] sm:$0xff]
      %v273 = vld [vmem:[%s1 + $0x28] sm:$0xff]
      %v274 = vld [vmem:[%s1 + $0x30] sm:$0xff]
      %v275 = vld [vmem:[%s1 + $0x38] sm:$0xff]
      %vm284 = vcmask 1046528
      %v285 = vrot.slane %v256, 1
      %v286 = vrot.slane %v257, 1
      %v287 = vsel %vm284, %v285, %v286
      %v288 = vrot.slane %v258, 1
      %v289 = vrot.slane %v259, 1
      %v290 = vsel %vm284, %v288, %v289
      %v291 = vrot.slane %v260, 1
      %v292 = vrot.slane %v261, 1
      %v293 = vsel %vm284, %v291, %v292
      %v294 = vrot.slane %v262, 1
      %v295 = vrot.slane %v263, 1
      %v296 = vsel %vm284, %v294, %v295
      %s297 = scalar_lea.vmem %s1, 64
      %v298 = vld [vmem:[%s297] sm:$0xff]
      %v299 = vld [vmem:[%s297 + $0x8] sm:$0xff]
      %v300 = vld [vmem:[%s297 + $0x10] sm:$0xff]
      %v301 = vld [vmem:[%s297 + $0x18] sm:$0xff]
      %v302 = vld [vmem:[%s297 + $0x20] sm:$0xff]
      %v303 = vld [vmem:[%s297 + $0x28] sm:$0xff]
      %v304 = vld [vmem:[%s297 + $0x30] sm:$0xff]
      %v305 = vld [vmem:[%s297 + $0x38] sm:$0xff]
      %vm306 = vcmask 523264
      %v307 = vsel %vm306, %v287, 0
      %v309 = vsel %vm306, %v290, 0
      %v311 = vsel %vm306, %v293, 0
      %v313 = vsel %vm306, %v296, 0
      %315 = vmatpush.msra.mxu0 0.0
      %316 = vmatpush.msra.mxu0 0.0
      %317 = vmatpush.msra.mxu0 0.0
      %318 = vmatpush.msra.mxu0 0.0
      %319 = vmatpush.msra.mxu0 0.0
      %320 = vmatpush.msra.mxu0 0.0
      %321 = vmatpush.msra.mxu0 0.0
      %322 = vmatpush.msra.mxu0 0.0
      %323 = vmatpush.msra.mxu0 %v305
      %324 = vmatpush.msra.mxu0 %v304
      %325 = vmatpush.msra.mxu0 %v303
      %326 = vmatpush.msra.mxu0 %v302
      %327 = vmatpush.msra.mxu0 %v301
      %328 = vmatpush.msra.mxu0 %v300
      %329 = vmatpush.msra.mxu0 %v299
      %330 = vmatpush.msra.mxu0 %v298
      %331 = vmatmul.f32.gmra.mxu0 %v307
      %v332 = vpop.f32.mrf.mxu0
      %v333 = vadd.f32 0.0, %v332
      %334 = vmatmul.f32.gmra.mxu0 %v309
      %v335 = vpop.f32.mrf.mxu0
      %v336 = vadd.f32 0.0, %v335
      %337 = vmatmul.f32.gmra.mxu0 %v311
      %v338 = vpop.f32.mrf.mxu0
      %v339 = vadd.f32 0.0, %v338
      %340 = vmatmul.f32.gmra.mxu0 %v313
      %v341 = vpop.f32.mrf.mxu0
      %v342 = vadd.f32 0.0, %v341
      %343 = vdwg.mxu0
      %v344 = vsel %vm306, %v256, 0
      %v346 = vsel %vm306, %v258, 0
      %v348 = vsel %vm306, %v260, 0
      %v350 = vsel %vm306, %v262, 0
      %352 = vmatpush.msra.mxu0 0.0
      %353 = vmatpush.msra.mxu0 0.0
      %354 = vmatpush.msra.mxu0 0.0
      %355 = vmatpush.msra.mxu0 0.0
      %356 = vmatpush.msra.mxu0 0.0
      %357 = vmatpush.msra.mxu0 0.0
      %358 = vmatpush.msra.mxu0 0.0
      %359 = vmatpush.msra.mxu0 0.0
      %360 = vmatpush.msra.mxu0 %v275
      %361 = vmatpush.msra.mxu0 %v274
      %362 = vmatpush.msra.mxu0 %v273
      %363 = vmatpush.msra.mxu0 %v272
      %364 = vmatpush.msra.mxu0 %v271
      %365 = vmatpush.msra.mxu0 %v270
      %366 = vmatpush.msra.mxu0 %v269
      %367 = vmatpush.msra.mxu0 %v268
      %368 = vmatmul.f32.gmra.mxu0 %v344
      %v369 = vpop.f32.mrf.mxu0
      %v370 = vadd.f32 %v333, %v369
      %371 = vmatmul.f32.gmra.mxu0 %v346
      %v372 = vpop.f32.mrf.mxu0
      %v373 = vadd.f32 %v336, %v372
      %374 = vmatmul.f32.gmra.mxu0 %v348
      %v375 = vpop.f32.mrf.mxu0
      %v376 = vadd.f32 %v339, %v375
      %377 = vmatmul.f32.gmra.mxu0 %v350
      %v378 = vpop.f32.mrf.mxu0
      %v379 = vadd.f32 %v342, %v378
      %380 = vdwg.mxu0
      %vm381 = vcmask 1045504
      %v382 = vrot.slane %v256, 2
      %v383 = vrot.slane %v257, 2
      %v384 = vsel %vm381, %v382, %v383
      %v385 = vrot.slane %v258, 2
      %v386 = vrot.slane %v259, 2
      %v387 = vsel %vm381, %v385, %v386
      %v388 = vrot.slane %v260, 2
      %v389 = vrot.slane %v261, 2
      %v390 = vsel %vm381, %v388, %v389
      %v391 = vrot.slane %v262, 2
      %v392 = vrot.slane %v263, 2
      %v393 = vsel %vm381, %v391, %v392
      %s394 = scalar_lea.vmem %s1, 128
      %v395 = vld [vmem:[%s394] sm:$0xff]
      %v396 = vld [vmem:[%s394 + $0x8] sm:$0xff]
      %v397 = vld [vmem:[%s394 + $0x10] sm:$0xff]
      %v398 = vld [vmem:[%s394 + $0x18] sm:$0xff]
      %v399 = vld [vmem:[%s394 + $0x20] sm:$0xff]
      %v400 = vld [vmem:[%s394 + $0x28] sm:$0xff]
      %v401 = vld [vmem:[%s394 + $0x30] sm:$0xff]
      %v402 = vld [vmem:[%s394 + $0x38] sm:$0xff]
      %v403 = vsel %vm306, %v384, 0
      %v405 = vsel %vm306, %v387, 0
      %v407 = vsel %vm306, %v390, 0
      %v409 = vsel %vm306, %v393, 0
      %411 = vmatpush.msra.mxu0 0.0
      %412 = vmatpush.msra.mxu0 0.0
      %413 = vmatpush.msra.mxu0 0.0
      %414 = vmatpush.msra.mxu0 0.0
      %415 = vmatpush.msra.mxu0 0.0
      %416 = vmatpush.msra.mxu0 0.0
      %417 = vmatpush.msra.mxu0 0.0
      %418 = vmatpush.msra.mxu0 0.0
      %419 = vmatpush.msra.mxu0 %v402
      %420 = vmatpush.msra.mxu0 %v401
      %421 = vmatpush.msra.mxu0 %v400
      %422 = vmatpush.msra.mxu0 %v399
      %423 = vmatpush.msra.mxu0 %v398
      %424 = vmatpush.msra.mxu0 %v397
      %425 = vmatpush.msra.mxu0 %v396
      %426 = vmatpush.msra.mxu0 %v395
      %427 = vmatmul.f32.gmra.mxu0 %v403
      %v428 = vpop.f32.mrf.mxu0
      %v429 = vadd.f32 0.0, %v428
      %430 = vmatmul.f32.gmra.mxu0 %v405
      %v431 = vpop.f32.mrf.mxu0
      %v432 = vadd.f32 0.0, %v431
      %433 = vmatmul.f32.gmra.mxu0 %v407
      %v434 = vpop.f32.mrf.mxu0
      %v435 = vadd.f32 0.0, %v434
      %436 = vmatmul.f32.gmra.mxu0 %v409
      %v437 = vpop.f32.mrf.mxu0
      %v438 = vadd.f32 0.0, %v437
      %439 = vdwg.mxu0
      %v440 = vadd.f32 %v370, %v429
      %v441 = vadd.f32 %v373, %v432
      %v442 = vadd.f32 %v376, %v435
      %v443 = vadd.f32 %v379, %v438
      %s444 = scalar_lea.vmem %s1, 192
      %v445 = vld [vmem:[%s444] sm:$0xff]
      %v446 = vld [vmem:[%s444 + $0x8] sm:$0xff]
      %v447 = vld [vmem:[%s444 + $0x10] sm:$0xff]
      %v448 = vld [vmem:[%s444 + $0x18] sm:$0xff]
      %v449 = vld [vmem:[%s444 + $0x20] sm:$0xff]
      %v450 = vld [vmem:[%s444 + $0x28] sm:$0xff]
      %v451 = vld [vmem:[%s444 + $0x30] sm:$0xff]
      %v452 = vld [vmem:[%s444 + $0x38] sm:$0xff]
      %v454 = vsel %vm306, %v264, 0
      %456 = vmatpush.msra.mxu0 0.0
      %457 = vmatpush.msra.mxu0 0.0
      %458 = vmatpush.msra.mxu0 0.0
      %459 = vmatpush.msra.mxu0 0.0
      %460 = vmatpush.msra.mxu0 0.0
      %461 = vmatpush.msra.mxu0 0.0
      %462 = vmatpush.msra.mxu0 0.0
      %463 = vmatpush.msra.mxu0 0.0
      %464 = vmatpush.msra.mxu0 %v452
      %465 = vmatpush.msra.mxu0 %v451
      %466 = vmatpush.msra.mxu0 %v450
      %467 = vmatpush.msra.mxu0 %v449
      %468 = vmatpush.msra.mxu0 %v448
      %469 = vmatpush.msra.mxu0 %v447
      %470 = vmatpush.msra.mxu0 %v446
      %471 = vmatpush.msra.mxu0 %v445
      %472 = vmatmul.f32.gmra.mxu0 %v346
      %v473 = vpop.f32.mrf.mxu0
      %v474 = vadd.f32 0.0, %v473
      %475 = vmatmul.f32.gmra.mxu0 %v348
      %v476 = vpop.f32.mrf.mxu0
      %v477 = vadd.f32 0.0, %v476
      %478 = vmatmul.f32.gmra.mxu0 %v350
      %v479 = vpop.f32.mrf.mxu0
      %v480 = vadd.f32 0.0, %v479
      %481 = vmatmul.f32.gmra.mxu0 %v454
      %v482 = vpop.f32.mrf.mxu0
      %v483 = vadd.f32 0.0, %v482
      %484 = vdwg.mxu0
      %v485 = vadd.f32 %v440, %v474
      %v486 = vadd.f32 %v441, %v477
      %v487 = vadd.f32 %v442, %v480
      %v488 = vadd.f32 %v443, %v483
      %v490 = vrot.slane %v264, 1
      %v491 = vrot.slane %v265, 1
      %v492 = vsel %vm284, %v490, %v491
      %s493 = scalar_lea.vmem %s1, 256
      %v494 = vld [vmem:[%s493] sm:$0xff]
      %v495 = vld [vmem:[%s493 + $0x8] sm:$0xff]
      %v496 = vld [vmem:[%s493 + $0x10] sm:$0xff]
      %v497 = vld [vmem:[%s493 + $0x18] sm:$0xff]
      %v498 = vld [vmem:[%s493 + $0x20] sm:$0xff]
      %v499 = vld [vmem:[%s493 + $0x28] sm:$0xff]
      %v500 = vld [vmem:[%s493 + $0x30] sm:$0xff]
      %v501 = vld [vmem:[%s493 + $0x38] sm:$0xff]
      %v502 = vsel %vm306, %v492, 0
      %504 = vmatpush.msra.mxu0 0.0
      %505 = vmatpush.msra.mxu0 0.0
      %506 = vmatpush.msra.mxu0 0.0
      %507 = vmatpush.msra.mxu0 0.0
      %508 = vmatpush.msra.mxu0 0.0
      %509 = vmatpush.msra.mxu0 0.0
      %510 = vmatpush.msra.mxu0 0.0
      %511 = vmatpush.msra.mxu0 0.0
      %512 = vmatpush.msra.mxu0 %v501
      %513 = vmatpush.msra.mxu0 %v500
      %514 = vmatpush.msra.mxu0 %v499
      %515 = vmatpush.msra.mxu0 %v498
      %516 = vmatpush.msra.mxu0 %v497
      %517 = vmatpush.msra.mxu0 %v496
      %518 = vmatpush.msra.mxu0 %v495
      %519 = vmatpush.msra.mxu0 %v494
      %520 = vmatmul.f32.gmra.mxu0 %v309
      %v521 = vpop.f32.mrf.mxu0
      %v522 = vadd.f32 0.0, %v521
      %523 = vmatmul.f32.gmra.mxu0 %v311
      %v524 = vpop.f32.mrf.mxu0
      %v525 = vadd.f32 0.0, %v524
      %526 = vmatmul.f32.gmra.mxu0 %v313
      %v527 = vpop.f32.mrf.mxu0
      %v528 = vadd.f32 0.0, %v527
      %529 = vmatmul.f32.gmra.mxu0 %v502
      %v530 = vpop.f32.mrf.mxu0
      %v531 = vadd.f32 0.0, %v530
      %532 = vdwg.mxu0
      %v533 = vadd.f32 %v485, %v522
      %v534 = vadd.f32 %v486, %v525
      %v535 = vadd.f32 %v487, %v528
      %v536 = vadd.f32 %v488, %v531
      %v537 = vrot.slane %v264, 2
      %v538 = vrot.slane %v265, 2
      %v539 = vsel %vm381, %v537, %v538
      %s540 = scalar_lea.vmem %s1, 320
      %v541 = vld [vmem:[%s540] sm:$0xff]
      %v542 = vld [vmem:[%s540 + $0x8] sm:$0xff]
      %v543 = vld [vmem:[%s540 + $0x10] sm:$0xff]
      %v544 = vld [vmem:[%s540 + $0x18] sm:$0xff]
      %v545 = vld [vmem:[%s540 + $0x20] sm:$0xff]
      %v546 = vld [vmem:[%s540 + $0x28] sm:$0xff]
      %v547 = vld [vmem:[%s540 + $0x30] sm:$0xff]
      %v548 = vld [vmem:[%s540 + $0x38] sm:$0xff]
      %v549 = vsel %vm306, %v539, 0
      %551 = vmatpush.msra.mxu0 0.0
      %552 = vmatpush.msra.mxu0 0.0
      %553 = vmatpush.msra.mxu0 0.0
      %554 = vmatpush.msra.mxu0 0.0
      %555 = vmatpush.msra.mxu0 0.0
      %556 = vmatpush.msra.mxu0 0.0
      %557 = vmatpush.msra.mxu0 0.0
      %558 = vmatpush.msra.mxu0 0.0
      %559 = vmatpush.msra.mxu0 %v548
      %560 = vmatpush.msra.mxu0 %v547
      %561 = vmatpush.msra.mxu0 %v546
      %562 = vmatpush.msra.mxu0 %v545
      %563 = vmatpush.msra.mxu0 %v544
      %564 = vmatpush.msra.mxu0 %v543
      %565 = vmatpush.msra.mxu0 %v542
      %566 = vmatpush.msra.mxu0 %v541
      %567 = vmatmul.f32.gmra.mxu0 %v405
      %v568 = vpop.f32.mrf.mxu0
      %v569 = vadd.f32 0.0, %v568
      %570 = vmatmul.f32.gmra.mxu0 %v407
      %v571 = vpop.f32.mrf.mxu0
      %v572 = vadd.f32 0.0, %v571
      %573 = vmatmul.f32.gmra.mxu0 %v409
      %v574 = vpop.f32.mrf.mxu0
      %v575 = vadd.f32 0.0, %v574
      %576 = vmatmul.f32.gmra.mxu0 %v549
      %v577 = vpop.f32.mrf.mxu0
      %v578 = vadd.f32 0.0, %v577
      %579 = vdwg.mxu0
      %v580 = vadd.f32 %v533, %v569
      %v581 = vadd.f32 %v534, %v572
      %v582 = vadd.f32 %v535, %v575
      %v583 = vadd.f32 %v536, %v578
      %s584 = scalar_lea.vmem %s1, 384
      %v585 = vld [vmem:[%s584] sm:$0xff]
      %v586 = vld [vmem:[%s584 + $0x8] sm:$0xff]
      %v587 = vld [vmem:[%s584 + $0x10] sm:$0xff]
      %v588 = vld [vmem:[%s584 + $0x18] sm:$0xff]
      %v589 = vld [vmem:[%s584 + $0x20] sm:$0xff]
      %v590 = vld [vmem:[%s584 + $0x28] sm:$0xff]
      %v591 = vld [vmem:[%s584 + $0x30] sm:$0xff]
      %v592 = vld [vmem:[%s584 + $0x38] sm:$0xff]
      %v594 = vsel %vm306, %v266, 0
      %596 = vmatpush.msra.mxu0 0.0
      %597 = vmatpush.msra.mxu0 0.0
      %598 = vmatpush.msra.mxu0 0.0
      %599 = vmatpush.msra.mxu0 0.0
      %600 = vmatpush.msra.mxu0 0.0
      %601 = vmatpush.msra.mxu0 0.0
      %602 = vmatpush.msra.mxu0 0.0
      %603 = vmatpush.msra.mxu0 0.0
      %604 = vmatpush.msra.mxu0 %v592
      %605 = vmatpush.msra.mxu0 %v591
      %606 = vmatpush.msra.mxu0 %v590
      %607 = vmatpush.msra.mxu0 %v589
      %608 = vmatpush.msra.mxu0 %v588
      %609 = vmatpush.msra.mxu0 %v587
      %610 = vmatpush.msra.mxu0 %v586
      %611 = vmatpush.msra.mxu0 %v585
      %612 = vmatmul.f32.gmra.mxu0 %v348
      %v613 = vpop.f32.mrf.mxu0
      %v614 = vadd.f32 0.0, %v613
      %615 = vmatmul.f32.gmra.mxu0 %v350
      %v616 = vpop.f32.mrf.mxu0
      %v617 = vadd.f32 0.0, %v616
      %618 = vmatmul.f32.gmra.mxu0 %v454
      %v619 = vpop.f32.mrf.mxu0
      %v620 = vadd.f32 0.0, %v619
      %621 = vmatmul.f32.gmra.mxu0 %v594
      %v622 = vpop.f32.mrf.mxu0
      %v623 = vadd.f32 0.0, %v622
      %624 = vdwg.mxu0
      %v625 = vadd.f32 %v580, %v614
      %v626 = vadd.f32 %v581, %v617
      %v627 = vadd.f32 %v582, %v620
      %v628 = vadd.f32 %v583, %v623
      %v630 = vrot.slane %v266, 1
      %v631 = vrot.slane %v267, 1
      %v632 = vsel %vm284, %v630, %v631
      %s633 = scalar_lea.vmem %s1, 448
      %v634 = vld [vmem:[%s633] sm:$0xff]
      %v635 = vld [vmem:[%s633 + $0x8] sm:$0xff]
      %v636 = vld [vmem:[%s633 + $0x10] sm:$0xff]
      %v637 = vld [vmem:[%s633 + $0x18] sm:$0xff]
      %v638 = vld [vmem:[%s633 + $0x20] sm:$0xff]
      %v639 = vld [vmem:[%s633 + $0x28] sm:$0xff]
      %v640 = vld [vmem:[%s633 + $0x30] sm:$0xff]
      %v641 = vld [vmem:[%s633 + $0x38] sm:$0xff]
      %v642 = vsel %vm306, %v632, 0
      %644 = vmatpush.msra.mxu0 0.0
      %645 = vmatpush.msra.mxu0 0.0
      %646 = vmatpush.msra.mxu0 0.0
      %647 = vmatpush.msra.mxu0 0.0
      %648 = vmatpush.msra.mxu0 0.0
      %649 = vmatpush.msra.mxu0 0.0
      %650 = vmatpush.msra.mxu0 0.0
      %651 = vmatpush.msra.mxu0 0.0
      %652 = vmatpush.msra.mxu0 %v641
      %653 = vmatpush.msra.mxu0 %v640
      %654 = vmatpush.msra.mxu0 %v639
      %655 = vmatpush.msra.mxu0 %v638
      %656 = vmatpush.msra.mxu0 %v637
      %657 = vmatpush.msra.mxu0 %v636
      %658 = vmatpush.msra.mxu0 %v635
      %659 = vmatpush.msra.mxu0 %v634
      %660 = vmatmul.f32.gmra.mxu0 %v311
      %v661 = vpop.f32.mrf.mxu0
      %v662 = vadd.f32 0.0, %v661
      %663 = vmatmul.f32.gmra.mxu0 %v313
      %v664 = vpop.f32.mrf.mxu0
      %v665 = vadd.f32 0.0, %v664
      %666 = vmatmul.f32.gmra.mxu0 %v502
      %v667 = vpop.f32.mrf.mxu0
      %v668 = vadd.f32 0.0, %v667
      %669 = vmatmul.f32.gmra.mxu0 %v642
      %v670 = vpop.f32.mrf.mxu0
      %v671 = vadd.f32 0.0, %v670
      %672 = vdwg.mxu0
      %v673 = vadd.f32 %v625, %v662
      %v674 = vadd.f32 %v626, %v665
      %v675 = vadd.f32 %v627, %v668
      %v676 = vadd.f32 %v628, %v671
      %v677 = vrot.slane %v266, 2
      %v678 = vrot.slane %v267, 2
      %v679 = vsel %vm381, %v677, %v678
      %s680 = scalar_lea.vmem %s1, 512
      %v681 = vld [vmem:[%s680] sm:$0xff]
      %v682 = vld [vmem:[%s680 + $0x8] sm:$0xff]
      %v683 = vld [vmem:[%s680 + $0x10] sm:$0xff]
      %v684 = vld [vmem:[%s680 + $0x18] sm:$0xff]
      %v685 = vld [vmem:[%s680 + $0x20] sm:$0xff]
      %v686 = vld [vmem:[%s680 + $0x28] sm:$0xff]
      %v687 = vld [vmem:[%s680 + $0x30] sm:$0xff]
      %v688 = vld [vmem:[%s680 + $0x38] sm:$0xff]
      %v689 = vsel %vm306, %v679, 0
      %691 = vmatpush.msra.mxu0 0.0
      %692 = vmatpush.msra.mxu0 0.0
      %693 = vmatpush.msra.mxu0 0.0
      %694 = vmatpush.msra.mxu0 0.0
      %695 = vmatpush.msra.mxu0 0.0
      %696 = vmatpush.msra.mxu0 0.0
      %697 = vmatpush.msra.mxu0 0.0
      %698 = vmatpush.msra.mxu0 0.0
      %699 = vmatpush.msra.mxu0 %v688
      %700 = vmatpush.msra.mxu0 %v687
      %701 = vmatpush.msra.mxu0 %v686
      %702 = vmatpush.msra.mxu0 %v685
      %703 = vmatpush.msra.mxu0 %v684
      %704 = vmatpush.msra.mxu0 %v683
      %705 = vmatpush.msra.mxu0 %v682
      %706 = vmatpush.msra.mxu0 %v681
      %707 = vmatmul.f32.gmra.mxu0 %v407
      %v708 = vpop.f32.mrf.mxu0
      %v709 = vadd.f32 0.0, %v708
      %710 = vmatmul.f32.gmra.mxu0 %v409
      %v711 = vpop.f32.mrf.mxu0
      %v712 = vadd.f32 0.0, %v711
      %713 = vmatmul.f32.gmra.mxu0 %v549
      %v714 = vpop.f32.mrf.mxu0
      %v715 = vadd.f32 0.0, %v714
      %716 = vmatmul.f32.gmra.mxu0 %v689
      %v717 = vpop.f32.mrf.mxu0
      %v718 = vadd.f32 0.0, %v717
      %719 = vdwg.mxu0
      %v720 = vadd.f32 %v673, %v709
      %v721 = vadd.f32 %v674, %v712
      %v722 = vadd.f32 %v675, %v715
      %v723 = vadd.f32 %v676, %v718
      %v724 = vld [vmem:[%s2] sm:$0x1]
      %v726 = vperm.slane %v724, 0
      %v728 = vadd.f32 %v720, %v726
      %v729 = vadd.f32 %v721, %v726
      %v730 = vadd.f32 %v722, %v726
      %v731 = vadd.f32 %v723, %v726
      %732 = vst.msk [vmem:[%s246] sm:$0xff] %vm306, %v728
      %733 = vst.msk [vmem:[%s246 + $0x8] sm:$0xff] %vm306, %v729
      %734 = vst.msk [vmem:[%s246 + $0x10] sm:$0xff] %vm306, %v730
      %735 = vst.msk [vmem:[%s246 + $0x18] sm:$0xff] %vm306, %v731
      %v736 = vsel %vm306, %v728, 0.0
      %v737 = vsel %vm306, %v729, 0.0
      %v738 = vadd.f32 %v736, %v737
      %v739 = vsel %vm306, %v730, 0.0
      %v740 = vadd.f32 %v738, %v739
      %v741 = vsel %vm306, %v731, 0.0
      %v742 = vadd.f32 %v740, %v741
      %v743 = vrot.slane %v742, 4
      %v744 = vadd.f32 %v742, %v743
      %v745 = vrot.slane %v744, 2
      %v746 = vadd.f32 %v744, %v745
      %v747 = vrot.slane %v746, 1
      %v748 = vadd.f32 %v746, %v747
      %vm749 = vcmask 516096
      %750 = vst.msk [vmem:[%s255] sm:$0x1] %vm749, %v748
      %v751 = vmul.f32 %v728, %v728
      %v752 = vmul.f32 %v729, %v729
      %v753 = vmul.f32 %v730, %v730
      %v754 = vmul.f32 %v731, %v731
      %v755 = vsel %vm306, %v751, 0.0
      %v756 = vsel %vm306, %v752, 0.0
      %v757 = vadd.f32 %v755, %v756
      %v758 = vsel %vm306, %v753, 0.0
      %v759 = vadd.f32 %v757, %v758
      %v760 = vsel %vm306, %v754, 0.0
      %v761 = vadd.f32 %v759, %v760
      %v762 = vrot.slane %v761, 4
      %v763 = vadd.f32 %v761, %v762
      %v764 = vrot.slane %v763, 2
      %v765 = vadd.f32 %v763, %v764
      %v766 = vrot.slane %v765, 1
      %v767 = vadd.f32 %v765, %v766
      %768 = vst.msk [vmem:[%s255 + $0x1] sm:$0x1] %vm749, %v767
      %s769 = smul.u32 4, %s21
      %p770 = scmp.lt.s32.totalorder %s20, 1
      %s771 = scalar_select %p770, %s20, 1
      %p772 = scmp.lt.s32.totalorder %s769, 7
      %s773 = scalar_select %p772, %s769, 7
      %s774 = smul.addr %s771, 8
      %s775 = sadd.s32 %s773, %s774
      %s776 = smul.addr %s775, 8
      %s777 = scalar_lea.vmem %s3, %s776
      %p778 = scmp.lt.s32.totalorder %s20, 1
      %s779 = scalar_select %p778, %s20, 1
      %p780 = scmp.lt.s32.totalorder %s21, 1
      %s781 = scalar_select %p780, %s21, 1
      %s782 = smul.addr %s779, 2
      %s783 = sadd.s32 %s781, %s782
      %s784 = smul.addr %s783, 2
      %s785 = scalar_lea.vmem %s4, %s784
      // Predicated region
      $region33: #{unet_decoder_forward.14} parent=31 // pred_check
        %p786 = pneg %p118
      $region34: #{unet_decoder_forward.14} parent=31 // pred_check_branch
        %788 = sbr.rel (%p786) target = $region36
      $region35: #{unet_decoder_forward.14} parent=31 // pred_region
        %s789 = smul.u32 4, %s21
      $region36: #{unet_decoder_forward.14} parent=31 // pred_fallthru
        _
      // Predicated region
      $region37: #{unet_decoder_forward.14} parent=31 // pred_check
        %p790 = pneg %p146
      $region38: #{unet_decoder_forward.14} parent=31 // pred_check_branch
        %792 = sbr.rel (%p790) target = $region40
      $region39: #{unet_decoder_forward.14} parent=31 // pred_region
        _
      $region40: #{unet_decoder_forward.14} parent=31 // pred_fallthru
        _
    $region32: #{unet_decoder_forward.14} parent=5 // pred_fallthru
      _
    %p793 = scmp.le.s32.totalorder 2, %s11
    // Predicated region
    $region41: #{unet_decoder_forward.14} parent=5 // pred_check
      %p794 = pneg %p793
    $region42: #{unet_decoder_forward.14} parent=5 // pred_check_branch
      %796 = sbr.rel (%p794) target = $region44
    $region43: #{unet_decoder_forward.14} parent=5 // pred_region
      %s797 = ssub.s32 %s11, 2
      // Predicated region
      $region45: #{unet_decoder_forward.14} parent=43 // pred_check
        %p798 = pneg %p124
      $region46: #{unet_decoder_forward.14} parent=43 // pred_check_branch
        %800 = sbr.rel (%p798) target = $region48
      $region47: #{unet_decoder_forward.14} parent=43 // pred_region
        %s801 = smul.u32 4, %s23
        %p802 = scmp.lt.s32.totalorder %s22, 1
        %s803 = scalar_select %p802, %s22, 1
        %p804 = scmp.lt.s32.totalorder %s801, 7
        %s805 = scalar_select %p804, %s801, 7
        %s806 = smul.addr %s803, 8
        %s807 = sadd.s32 %s805, %s806
        %s808 = smul.addr %s807, 8
        %s809 = scalar_lea.vmem %s3, %s808
      $region48: #{unet_decoder_forward.14} parent=43 // pred_fallthru
        _
      // Predicated region
      $region49: #{unet_decoder_forward.14} parent=43 // pred_check
        %p810 = pneg %p152
      $region50: #{unet_decoder_forward.14} parent=43 // pred_check_branch
        %812 = sbr.rel (%p810) target = $region52
      $region51: #{unet_decoder_forward.14} parent=43 // pred_region
        %p813 = scmp.lt.s32.totalorder %s22, 1
        %s814 = scalar_select %p813, %s22, 1
        %p815 = scmp.lt.s32.totalorder %s23, 1
        %s816 = scalar_select %p815, %s23, 1
        %s817 = smul.addr %s814, 2
        %s818 = sadd.s32 %s816, %s817
        %s819 = smul.addr %s818, 2
        %s820 = scalar_lea.vmem %s4, %s819
      $region52: #{unet_decoder_forward.14} parent=43 // pred_fallthru
        _
    $region44: #{unet_decoder_forward.14} parent=5 // pred_fallthru
      _
  $region6: #{unet_decoder_forward.14} parent=0 // loop_footer
    %s15 = sadd.s32 1, %s11
  $region7: #{unet_decoder_forward.14} parent=0 // loop_footer_branch
    %10 = sbr.rel target = $region3
  $region8: #{unet_decoder_forward.14} parent=0 // loop_exit
    _

// kernel: unet_decoder_forward.17
$region0: #{unet_decoder_forward.17}
  #allocation0 [shape = 'u32[]', space=smem, size = 0x4, offset = 0x4, fixed_abs, tag = 'smem constant byte address 0x4 - core index']
  #allocation1 [shape = 'u32[72,128]{1,0:T(1,128)}', space=vmem, size = 0x9000, scoped, tag = 'internal scratch']
  %s0 = inlined_call_operand.vmem [shape: f32[2,256,32], index: 0, kind: input, shape index: {}]
  %s1 = inlined_call_operand.vmem [shape: f32[1,32], index: 1, kind: input, shape index: {}]
  %s2 = inlined_call_operand.vmem [shape: f32[1,32], index: 2, kind: input, shape index: {}]
  %s3 = inlined_call_operand.vmem [shape: f32[2,256,32], index: 3, kind: output, shape index: {}]
  %s4 = sld [smem:[#allocation0]]
  $region45: #{unet_decoder_forward.17} parent=0
    _
  %s6 = ssub.s32 1, %s4
  %s7 = scalar_select 0, %s6, %s4
  loop: start=0, step=1, limit=6
  $region2: #{unet_decoder_forward.17} parent=0 // loop_pre_header
    _
  $region3: #{unet_decoder_forward.17} parent=0 // loop_header
    %s9 = sphi 0, %s13
    %p10 = scmp.ge.s32.totalorder %s9, 6
    %s16 = sphi 0, %s28
    %s17 = sphi 0, %s24
    %s18 = sphi 0, %s16
    %s19 = sphi 0, %s17
    %s20 = sphi 0, %s18
    %s21 = sphi 0, %s19
    %s33 = sphi 0, %s35
    %s36 = sphi 0, %s33
    %s37 = sphi 0, %s36
    %s53 = sphi 0, %s37
    %s57 = sphi 0, %s57
    %s59 = sphi 0, %s57
    %s60 = sphi 0, %s59
    %s74 = sphi 0, %s60
    %s78 = sphi 0, %s78
    %s80 = sphi 0, %s78
    %s81 = sphi 0, %s80
    %s95 = sphi 0, %s81
    %s103 = sphi 0, %s105
    %s106 = sphi 0, %s103
    %s107 = sphi 0, %s106
    %s123 = sphi 0, %s107
  $region4: #{unet_decoder_forward.17} parent=0 // loop_header_branch
    %12 = sbr.rel (%p10) target = $region8
  $region5: #{unet_decoder_forward.17} parent=0 // loop_body
    %s14 = ssub.s32 %s9, 1
    %s15 = ssub.s32 %s9, 2
    %s22 = sadd.s32 1, %s17
    %p23 = scmp.ge.s32.totalorder %s22, 2
    %s24 = scalar_select %p23, 0, %s22
    %s25 = sadd.s32 1, %s16
    %s26 = scalar_select %p23, %s25, %s16
    %p27 = scmp.ge.s32.totalorder %s26, 2
    %s28 = scalar_select %p27, 0, %s26
    %s29 = ssub.s32 %s16, %s28
    %s30 = ssub.s32 %s17, %s24
    %s31 = sor.u32 %s29, %s30
    %p32 = scmp.eq.s32.totalorder %s31, 0
    %s34 = sadd.s32 %s33, 1
    %s35 = scalar_select %p32, %s33, %s34
    %p38 = pneg %p32
    %p39 = scmp.eq.s32.totalorder %s9, 3
    %p40 = por %p38, %p39
    %p41 = scmp.ne.s32.totalorder %s33, %s36
    %p42 = scmp.eq.s32.totalorder %s9, 0
    %p43 = por %p41, %p42
    %p44 = scmp.ne.s32.totalorder %s33, %s36
    %p45 = scmp.eq.s32.totalorder %s14, 3
    %p46 = por %p44, %p45
    %p47 = scmp.ne.s32.totalorder %s36, %s37
    %p48 = scmp.eq.s32.totalorder %s14, 0
    %p49 = por %p47, %p48
    %p50 = scmp.ne.s32.totalorder %s36, %s37
    %p51 = scmp.eq.s32.totalorder %s15, 3
    %p52 = por %p50, %p51
    %p54 = scmp.ne.s32.totalorder %s37, %s53
    %p55 = scmp.eq.s32.totalorder %s15, 0
    %p56 = por %p54, %p55
    %s58 = sadd.s32 %s57, 1
    %p61 = scmp.eq.s32.totalorder %s9, 3
    %p62 = scmp.ne.s32.totalorder %s57, %s59
    %p63 = scmp.eq.s32.totalorder %s9, 0
    %p64 = por %p62, %p63
    %p65 = scmp.ne.s32.totalorder %s57, %s59
    %p66 = scmp.eq.s32.totalorder %s14, 3
    %p67 = por %p65, %p66
    %p68 = scmp.ne.s32.totalorder %s59, %s60
    %p69 = scmp.eq.s32.totalorder %s14, 0
    %p70 = por %p68, %p69
    %p71 = scmp.ne.s32.totalorder %s59, %s60
    %p72 = scmp.eq.s32.totalorder %s15, 3
    %p73 = por %p71, %p72
    %p75 = scmp.ne.s32.totalorder %s60, %s74
    %p76 = scmp.eq.s32.totalorder %s15, 0
    %p77 = por %p75, %p76
    %s79 = sadd.s32 %s78, 1
    %p82 = scmp.eq.s32.totalorder %s9, 3
    %p83 = scmp.ne.s32.totalorder %s78, %s80
    %p84 = scmp.eq.s32.totalorder %s9, 0
    %p85 = por %p83, %p84
    %p86 = scmp.ne.s32.totalorder %s78, %s80
    %p87 = scmp.eq.s32.totalorder %s14, 3
    %p88 = por %p86, %p87
    %p89 = scmp.ne.s32.totalorder %s80, %s81
    %p90 = scmp.eq.s32.totalorder %s14, 0
    %p91 = por %p89, %p90
    %p92 = scmp.ne.s32.totalorder %s80, %s81
    %p93 = scmp.eq.s32.totalorder %s15, 3
    %p94 = por %p92, %p93
    %p96 = scmp.ne.s32.totalorder %s81, %s95
    %p97 = scmp.eq.s32.totalorder %s15, 0
    %p98 = por %p96, %p97
    %s99 = ssub.s32 %s16, %s28
    %s100 = ssub.s32 %s17, %s24
    %s101 = sor.u32 %s99, %s100
    %p102 = scmp.eq.s32.totalorder %s101, 0
    %s104 = sadd.s32 %s103, 1
    %s105 = scalar_select %p102, %s103, %s104
    %p108 = pneg %p102
    %p109 = scmp.eq.s32.totalorder %s9, 3
    %p110 = por %p108, %p109
    %p111 = scmp.ne.s32.totalorder %s103, %s106
    %p112 = scmp.eq.s32.totalorder %s9, 0
    %p113 = por %p111, %p112
    %p114 = scmp.ne.s32.totalorder %s103, %s106
    %p115 = scmp.eq.s32.totalorder %s14, 3
    %p116 = por %p114, %p115
    %p117 = scmp.ne.s32.totalorder %s106, %s107
    %p118 = scmp.eq.s32.totalorder %s14, 0
    %p119 = por %p117, %p118
    %p120 = scmp.ne.s32.totalorder %s106, %s107
    %p121 = scmp.eq.s32.totalorder %s15, 3
    %p122 = por %p120, %p121
    %p124 = scmp.ne.s32.totalorder %s107, %s123
    %p125 = scmp.eq.s32.totalorder %s15, 0
    %p126 = por %p124, %p125
    %p127 = scmp.le.s32.totalorder 1, %s9
    %p128 = scmp.lt.s32.totalorder %s9, 5
    %p129 = pnand %p127, %p128
    %p130 = pneg %p129
    // Predicated region
    $region9: #{unet_decoder_forward.17} parent=5 // pred_check
      _
    $region10: #{unet_decoder_forward.17} parent=5 // pred_check_branch
      %132 = sbr.rel (%p129) target = $region12
    $region11: #{unet_decoder_forward.17} parent=5 // pred_region
      %s133 = ssub.s32 %s9, 1
      // Predicated region
      $region13: #{unet_decoder_forward.17} parent=11 // pred_check
        %p134 = pneg %p70
      $region14: #{unet_decoder_forward.17} parent=11 // pred_check_branch
        %136 = sbr.rel (%p134) target = $region16
      $region15: #{unet_decoder_forward.17} parent=11 // pred_region
        _
      $region16: #{unet_decoder_forward.17} parent=11 // pred_fallthru
        _
      // Predicated region
      $region17: #{unet_decoder_forward.17} parent=11 // pred_check
        %p137 = pneg %p91
      $region18: #{unet_decoder_forward.17} parent=11 // pred_check_branch
        %139 = sbr.rel (%p137) target = $region20
      $region19: #{unet_decoder_forward.17} parent=11 // pred_region
        _
      $region20: #{unet_decoder_forward.17} parent=11 // pred_fallthru
        _
    $region12: #{unet_decoder_forward.17} parent=5 // pred_fallthru
      _
    %p140 = scmp.lt.s32.totalorder %s9, 4
    // Predicated region
    $region21: #{unet_decoder_forward.17} parent=5 // pred_check
      %p141 = pneg %p140
    $region22: #{unet_decoder_forward.17} parent=5 // pred_check_branch
      %143 = sbr.rel (%p141) target = $region24
    $region23: #{unet_decoder_forward.17} parent=5 // pred_region
      // Predicated region
      $region25: #{unet_decoder_forward.17} parent=23 // pred_check
        %p144 = pneg %p43
      $region26: #{unet_decoder_forward.17} parent=23 // pred_check_branch
        %146 = sbr.rel (%p144) target = $region28
      $region27: #{unet_decoder_forward.17} parent=23 // pred_region
        %s147 = smul.u32 16, %s17
        %p148 = scmp.lt.s32.totalorder %s16, 1
        %s149 = scalar_select %p148, %s16, 1
        %p150 = scmp.lt.s32.totalorder %s147, 31
        %s151 = scalar_select %p150, %s147, 31
        %s152 = smul.addr %s149, 32
        %s153 = sadd.s32 %s151, %s152
        %s154 = smul.addr %s153, 8
        %s155 = scalar_lea.vmem %s0, %s154
        %s156 = smul.u32 16, %s17
      $region28: #{unet_decoder_forward.17} parent=23 // pred_fallthru
        _
    $region24: #{unet_decoder_forward.17} parent=5 // pred_fallthru
      _
    %p157 = scmp.le.s32.totalorder 1, %s9
    %p158 = scmp.lt.s32.totalorder %s9, 5
    %p159 = pnand %p157, %p158
    %p160 = pneg %p159
    // Predicated region
    $region29: #{unet_decoder_forward.17} parent=5 // pred_check
      _
    $region30: #{unet_decoder_forward.17} parent=5 // pred_check_branch
      %162 = sbr.rel (%p159) target = $region32
    $region31: #{unet_decoder_forward.17} parent=5 // pred_region
      %s163 = ssub.s32 %s9, 1
      %s164 = smul.u32 16, %s19
      %p165 = scmp.lt.s32.totalorder %s18, 1
      %s166 = scalar_select %p165, %s18, 1
      %p167 = scmp.lt.s32.totalorder %s164, 31
      %s168 = scalar_select %p167, %s164, 31
      %s169 = smul.addr %s166, 32
      %s170 = sadd.s32 %s168, %s169
      %s171 = smul.addr %s170, 8
      %s172 = scalar_lea.vmem %s0, %s171
      %p173 = pneg %p49
      %p174 = pneg %p46
      %p175 = pneg %p70
      %p176 = pneg %p67
      %p177 = pneg %p91
      %p178 = pneg %p88
      %p179 = pneg %p119
      %p180 = pneg %p116
      %s181 = smul.u32 16, %s19
      %p182 = scmp.lt.s32.totalorder %s18, 1
      %s183 = scalar_select %p182, %s18, 1
      %p184 = scmp.lt.s32.totalorder %s181, 31
      %s185 = scalar_select %p184, %s181, 31
      %s186 = smul.addr %s183, 32
      %s187 = sadd.s32 %s185, %s186
      %s188 = smul.addr %s187, 8
      %s189 = scalar_lea.vmem %s3, %s188
      %s190 = smul.u32 16, %s19
      %p191 = scmp.lt.s32.totalorder %s18, 1
      %s192 = scalar_select %p191, %s18, 1
      %p193 = scmp.lt.s32.totalorder %s190, 31
      %s194 = scalar_select %p193, %s190, 31
      %s195 = smul.addr %s192, 32
      %s196 = sadd.s32 %s194, %s195
      %s197 = smul.addr %s196, 8
      %s198 = scalar_lea.vmem %s0, %s197
      %s199 = smul.u32 16, %s19
      %s200 = smul.u32 16, %s19
      %p201 = scmp.lt.s32.totalorder %s18, 1
      %s202 = scalar_select %p201, %s18, 1
      %p203 = scmp.lt.s32.totalorder %s200, 31
      %s204 = scalar_select %p203, %s200, 31
      %s205 = smul.addr %s202, 32
      %s206 = sadd.s32 %s204, %s205
      %s207 = smul.addr %s206, 8
      %s208 = scalar_lea.vmem %s3, %s207
      %s209 = smul.u32 16, %s19
      %v210 = vld [vmem:[%s198] sm:$0xff]
      %v211 = vld [vmem:[%s198 + $0x8] sm:$0xff]
      %v212 = vld [vmem:[%s198 + $0x10] sm:$0xff]
      %v213 = vld [vmem:[%s198 + $0x18] sm:$0xff]
      %v214 = vld [vmem:[%s198 + $0x20] sm:$0xff]
      %v215 = vld [vmem:[%s198 + $0x28] sm:$0xff]
      %v216 = vld [vmem:[%s198 + $0x30] sm:$0xff]
      %v217 = vld [vmem:[%s198 + $0x38] sm:$0xff]
      %v218 = vld [vmem:[%s198 + $0x40] sm:$0xff]
      %v219 = vld [vmem:[%s198 + $0x48] sm:$0xff]
      %v220 = vld [vmem:[%s198 + $0x50] sm:$0xff]
      %v221 = vld [vmem:[%s198 + $0x58] sm:$0xff]
      %v222 = vld [vmem:[%s198 + $0x60] sm:$0xff]
      %v223 = vld [vmem:[%s198 + $0x68] sm:$0xff]
      %v224 = vld [vmem:[%s198 + $0x70] sm:$0xff]
      %v225 = vld [vmem:[%s198 + $0x78] sm:$0xff]
      %v226 = vld [vmem:[%s1] sm:$0x1]
      %v228 = vperm.slane %v226, 0
      %v230 = vmul.f32 %v210, %v228
      %v231 = vmul.f32 %v211, %v228
      %v232 = vmul.f32 %v212, %v228
      %v233 = vmul.f32 %v213, %v228
      %v234 = vmul.f32 %v214, %v228
      %v235 = vmul.f32 %v215, %v228
      %v236 = vmul.f32 %v216, %v228
      %v237 = vmul.f32 %v217, %v228
      %v238 = vmul.f32 %v218, %v228
      %v239 = vmul.f32 %v219, %v228
      %v240 = vmul.f32 %v220, %v228
      %v241 = vmul.f32 %v221, %v228
      %v242 = vmul.f32 %v222, %v228
      %v243 = vmul.f32 %v223, %v228
      %v244 = vmul.f32 %v224, %v228
      %v245 = vmul.f32 %v225, %v228
      %v246 = vld [vmem:[%s2] sm:$0x1]
      %v248 = vperm.slane %v246, 0
      %v250 = vadd.f32 %v230, %v248
      %v251 = vadd.f32 %v231, %v248
      %v252 = vadd.f32 %v232, %v248
      %v253 = vadd.f32 %v233, %v248
      %v254 = vadd.f32 %v234, %v248
      %v255 = vadd.f32 %v235, %v248
      %v256 = vadd.f32 %v236, %v248
      %v257 = vadd.f32 %v237, %v248
      %v258 = vadd.f32 %v238, %v248
      %v259 = vadd.f32 %v239, %v248
      %v260 = vadd.f32 %v240, %v248
      %v261 = vadd.f32 %v241, %v248
      %v262 = vadd.f32 %v242, %v248
      %v263 = vadd.f32 %v243, %v248
      %v264 = vadd.f32 %v244, %v248
      %v265 = vadd.f32 %v245, %v248
      %v266 = vmax.f32 %v250, 0.0
      %v267 = vmax.f32 %v251, 0.0
      %v268 = vmax.f32 %v252, 0.0
      %v269 = vmax.f32 %v253, 0.0
      %v270 = vmax.f32 %v254, 0.0
      %v271 = vmax.f32 %v255, 0.0
      %v272 = vmax.f32 %v256, 0.0
      %v273 = vmax.f32 %v257, 0.0
      %v274 = vmax.f32 %v258, 0.0
      %v275 = vmax.f32 %v259, 0.0
      %v276 = vmax.f32 %v260, 0.0
      %v277 = vmax.f32 %v261, 0.0
      %v278 = vmax.f32 %v262, 0.0
      %v279 = vmax.f32 %v263, 0.0
      %v280 = vmax.f32 %v264, 0.0
      %v281 = vmax.f32 %v265, 0.0
      %vm282 = vcmask 261120
      %283 = vst.msk [vmem:[%s208] sm:$0xff] %vm282, %v266
      %284 = vst.msk [vmem:[%s208 + $0x8] sm:$0xff] %vm282, %v267
      %285 = vst.msk [vmem:[%s208 + $0x10] sm:$0xff] %vm282, %v268
      %286 = vst.msk [vmem:[%s208 + $0x18] sm:$0xff] %vm282, %v269
      %287 = vst.msk [vmem:[%s208 + $0x20] sm:$0xff] %vm282, %v270
      %288 = vst.msk [vmem:[%s208 + $0x28] sm:$0xff] %vm282, %v271
      %289 = vst.msk [vmem:[%s208 + $0x30] sm:$0xff] %vm282, %v272
      %290 = vst.msk [vmem:[%s208 + $0x38] sm:$0xff] %vm282, %v273
      %291 = vst.msk [vmem:[%s208 + $0x40] sm:$0xff] %vm282, %v274
      %292 = vst.msk [vmem:[%s208 + $0x48] sm:$0xff] %vm282, %v275
      %293 = vst.msk [vmem:[%s208 + $0x50] sm:$0xff] %vm282, %v276
      %294 = vst.msk [vmem:[%s208 + $0x58] sm:$0xff] %vm282, %v277
      %295 = vst.msk [vmem:[%s208 + $0x60] sm:$0xff] %vm282, %v278
      %296 = vst.msk [vmem:[%s208 + $0x68] sm:$0xff] %vm282, %v279
      %297 = vst.msk [vmem:[%s208 + $0x70] sm:$0xff] %vm282, %v280
      %298 = vst.msk [vmem:[%s208 + $0x78] sm:$0xff] %vm282, %v281
      %s299 = smul.u32 16, %s19
      %p300 = scmp.lt.s32.totalorder %s18, 1
      %s301 = scalar_select %p300, %s18, 1
      %p302 = scmp.lt.s32.totalorder %s299, 31
      %s303 = scalar_select %p302, %s299, 31
      %s304 = smul.addr %s301, 32
      %s305 = sadd.s32 %s303, %s304
      %s306 = smul.addr %s305, 8
      %s307 = scalar_lea.vmem %s3, %s306
      // Predicated region
      $region33: #{unet_decoder_forward.17} parent=31 // pred_check
        %p308 = pneg %p116
      $region34: #{unet_decoder_forward.17} parent=31 // pred_check_branch
        %310 = sbr.rel (%p308) target = $region36
      $region35: #{unet_decoder_forward.17} parent=31 // pred_region
        %s311 = smul.u32 16, %s19
      $region36: #{unet_decoder_forward.17} parent=31 // pred_fallthru
        _
    $region32: #{unet_decoder_forward.17} parent=5 // pred_fallthru
      _
    %p312 = scmp.le.s32.totalorder 2, %s9
    // Predicated region
    $region37: #{unet_decoder_forward.17} parent=5 // pred_check
      %p313 = pneg %p312
    $region38: #{unet_decoder_forward.17} parent=5 // pred_check_branch
      %315 = sbr.rel (%p313) target = $region40
    $region39: #{unet_decoder_forward.17} parent=5 // pred_region
      %s316 = ssub.s32 %s9, 2
      // Predicated region
      $region41: #{unet_decoder_forward.17} parent=39 // pred_check
        %p317 = pneg %p122
      $region42: #{unet_decoder_forward.17} parent=39 // pred_check_branch
        %319 = sbr.rel (%p317) target = $region44
      $region43: #{unet_decoder_forward.17} parent=39 // pred_region
        %s320 = smul.u32 16, %s21
        %p321 = scmp.lt.s32.totalorder %s20, 1
        %s322 = scalar_select %p321, %s20, 1
        %p323 = scmp.lt.s32.totalorder %s320, 31
        %s324 = scalar_select %p323, %s320, 31
        %s325 = smul.addr %s322, 32
        %s326 = sadd.s32 %s324, %s325
        %s327 = smul.addr %s326, 8
        %s328 = scalar_lea.vmem %s3, %s327
      $region44: #{unet_decoder_forward.17} parent=39 // pred_fallthru
        _
    $region40: #{unet_decoder_forward.17} parent=5 // pred_fallthru
      _
  $region6: #{unet_decoder_forward.17} parent=0 // loop_footer
    %s13 = sadd.s32 1, %s9
  $region7: #{unet_decoder_forward.17} parent=0 // loop_footer_branch
    %8 = sbr.rel target = $region3
  $region8: #{unet_decoder_forward.17} parent=0 // loop_exit
    _

// kernel: unet_decoder_forward.16
$region0: #{unet_decoder_forward.16}
  #allocation0 [shape = 'u32[]', space=smem, size = 0x4, offset = 0x4, fixed_abs, tag = 'smem constant byte address 0x4 - core index']
  #allocation1 [shape = 'u32[72,128]{1,0:T(1,128)}', space=vmem, size = 0x9000, scoped, tag = 'internal scratch']
  %s0 = inlined_call_operand.vmem [shape: f32[2,2,10,18,64], index: 0, kind: input, shape index: {}]
  %s1 = inlined_call_operand.vmem [shape: f32[9,64,32], index: 1, kind: input, shape index: {}]
  %s2 = inlined_call_operand.vmem [shape: f32[1,32], index: 2, kind: input, shape index: {}]
  %s3 = inlined_call_operand.vmem [shape: f32[2,256,32], index: 3, kind: output, shape index: {0}]
  %s4 = inlined_call_operand.vmem [shape: f32[2,2,2,32], index: 4, kind: output, shape index: {1}]
  %5 = xla_tuple %s3, %s4
  %s6 = sld [smem:[#allocation0]]
  $region53: #{unet_decoder_forward.16} parent=0
    _
  %s8 = ssub.s32 1, %s6
  %s9 = scalar_select 0, %s8, %s6
  loop: start=0, step=1, limit=6
  $region2: #{unet_decoder_forward.16} parent=0 // loop_pre_header
    _
  $region3: #{unet_decoder_forward.16} parent=0 // loop_header
    %s11 = sphi 0, %s15
    %p12 = scmp.ge.s32.totalorder %s11, 6
    %s18 = sphi 0, %s30
    %s19 = sphi 0, %s26
    %s20 = sphi 0, %s18
    %s21 = sphi 0, %s19
    %s22 = sphi 0, %s20
    %s23 = sphi 0, %s21
    %s35 = sphi 0, %s37
    %s38 = sphi 0, %s35
    %s39 = sphi 0, %s38
    %s55 = sphi 0, %s39
    %s59 = sphi 0, %s59
    %s61 = sphi 0, %s59
    %s62 = sphi 0, %s61
    %s76 = sphi 0, %s62
    %s80 = sphi 0, %s80
    %s82 = sphi 0, %s80
    %s83 = sphi 0, %s82
    %s97 = sphi 0, %s83
    %s105 = sphi 0, %s107
    %s108 = sphi 0, %s105
    %s109 = sphi 0, %s108
    %s125 = sphi 0, %s109
    %s133 = sphi 0, %s135
    %s136 = sphi 0, %s133
    %s137 = sphi 0, %s136
    %s153 = sphi 0, %s137
  $region4: #{unet_decoder_forward.16} parent=0 // loop_header_branch
    %14 = sbr.rel (%p12) target = $region8
  $region5: #{unet_decoder_forward.16} parent=0 // loop_body
    %s16 = ssub.s32 %s11, 1
    %s17 = ssub.s32 %s11, 2
    %s24 = sadd.s32 1, %s19
    %p25 = scmp.ge.s32.totalorder %s24, 2
    %s26 = scalar_select %p25, 0, %s24
    %s27 = sadd.s32 1, %s18
    %s28 = scalar_select %p25, %s27, %s18
    %p29 = scmp.ge.s32.totalorder %s28, 2
    %s30 = scalar_select %p29, 0, %s28
    %s31 = ssub.s32 %s18, %s30
    %s32 = ssub.s32 %s19, %s26
    %s33 = sor.u32 %s31, %s32
    %p34 = scmp.eq.s32.totalorder %s33, 0
    %s36 = sadd.s32 %s35, 1
    %s37 = scalar_select %p34, %s35, %s36
    %p40 = pneg %p34
    %p41 = scmp.eq.s32.totalorder %s11, 3
    %p42 = por %p40, %p41
    %p43 = scmp.ne.s32.totalorder %s35, %s38
    %p44 = scmp.eq.s32.totalorder %s11, 0
    %p45 = por %p43, %p44
    %p46 = scmp.ne.s32.totalorder %s35, %s38
    %p47 = scmp.eq.s32.totalorder %s16, 3
    %p48 = por %p46, %p47
    %p49 = scmp.ne.s32.totalorder %s38, %s39
    %p50 = scmp.eq.s32.totalorder %s16, 0
    %p51 = por %p49, %p50
    %p52 = scmp.ne.s32.totalorder %s38, %s39
    %p53 = scmp.eq.s32.totalorder %s17, 3
    %p54 = por %p52, %p53
    %p56 = scmp.ne.s32.totalorder %s39, %s55
    %p57 = scmp.eq.s32.totalorder %s17, 0
    %p58 = por %p56, %p57
    %s60 = sadd.s32 %s59, 1
    %p63 = scmp.eq.s32.totalorder %s11, 3
    %p64 = scmp.ne.s32.totalorder %s59, %s61
    %p65 = scmp.eq.s32.totalorder %s11, 0
    %p66 = por %p64, %p65
    %p67 = scmp.ne.s32.totalorder %s59, %s61
    %p68 = scmp.eq.s32.totalorder %s16, 3
    %p69 = por %p67, %p68
    %p70 = scmp.ne.s32.totalorder %s61, %s62
    %p71 = scmp.eq.s32.totalorder %s16, 0
    %p72 = por %p70, %p71
    %p73 = scmp.ne.s32.totalorder %s61, %s62
    %p74 = scmp.eq.s32.totalorder %s17, 3
    %p75 = por %p73, %p74
    %p77 = scmp.ne.s32.totalorder %s62, %s76
    %p78 = scmp.eq.s32.totalorder %s17, 0
    %p79 = por %p77, %p78
    %s81 = sadd.s32 %s80, 1
    %p84 = scmp.eq.s32.totalorder %s11, 3
    %p85 = scmp.ne.s32.totalorder %s80, %s82
    %p86 = scmp.eq.s32.totalorder %s11, 0
    %p87 = por %p85, %p86
    %p88 = scmp.ne.s32.totalorder %s80, %s82
    %p89 = scmp.eq.s32.totalorder %s16, 3
    %p90 = por %p88, %p89
    %p91 = scmp.ne.s32.totalorder %s82, %s83
    %p92 = scmp.eq.s32.totalorder %s16, 0
    %p93 = por %p91, %p92
    %p94 = scmp.ne.s32.totalorder %s82, %s83
    %p95 = scmp.eq.s32.totalorder %s17, 3
    %p96 = por %p94, %p95
    %p98 = scmp.ne.s32.totalorder %s83, %s97
    %p99 = scmp.eq.s32.totalorder %s17, 0
    %p100 = por %p98, %p99
    %s101 = ssub.s32 %s18, %s30
    %s102 = ssub.s32 %s19, %s26
    %s103 = sor.u32 %s101, %s102
    %p104 = scmp.eq.s32.totalorder %s103, 0
    %s106 = sadd.s32 %s105, 1
    %s107 = scalar_select %p104, %s105, %s106
    %p110 = pneg %p104
    %p111 = scmp.eq.s32.totalorder %s11, 3
    %p112 = por %p110, %p111
    %p113 = scmp.ne.s32.totalorder %s105, %s108
    %p114 = scmp.eq.s32.totalorder %s11, 0
    %p115 = por %p113, %p114
    %p116 = scmp.ne.s32.totalorder %s105, %s108
    %p117 = scmp.eq.s32.totalorder %s16, 3
    %p118 = por %p116, %p117
    %p119 = scmp.ne.s32.totalorder %s108, %s109
    %p120 = scmp.eq.s32.totalorder %s16, 0
    %p121 = por %p119, %p120
    %p122 = scmp.ne.s32.totalorder %s108, %s109
    %p123 = scmp.eq.s32.totalorder %s17, 3
    %p124 = por %p122, %p123
    %p126 = scmp.ne.s32.totalorder %s109, %s125
    %p127 = scmp.eq.s32.totalorder %s17, 0
    %p128 = por %p126, %p127
    %s129 = ssub.s32 %s18, %s30
    %s130 = ssub.s32 %s19, %s26
    %s131 = sor.u32 %s129, %s130
    %p132 = scmp.eq.s32.totalorder %s131, 0
    %s134 = sadd.s32 %s133, 1
    %s135 = scalar_select %p132, %s133, %s134
    %p138 = pneg %p132
    %p139 = scmp.eq.s32.totalorder %s11, 3
    %p140 = por %p138, %p139
    %p141 = scmp.ne.s32.totalorder %s133, %s136
    %p142 = scmp.eq.s32.totalorder %s11, 0
    %p143 = por %p141, %p142
    %p144 = scmp.ne.s32.totalorder %s133, %s136
    %p145 = scmp.eq.s32.totalorder %s16, 3
    %p146 = por %p144, %p145
    %p147 = scmp.ne.s32.totalorder %s136, %s137
    %p148 = scmp.eq.s32.totalorder %s16, 0
    %p149 = por %p147, %p148
    %p150 = scmp.ne.s32.totalorder %s136, %s137
    %p151 = scmp.eq.s32.totalorder %s17, 3
    %p152 = por %p150, %p151
    %p154 = scmp.ne.s32.totalorder %s137, %s153
    %p155 = scmp.eq.s32.totalorder %s17, 0
    %p156 = por %p154, %p155
    %p157 = scmp.le.s32.totalorder 1, %s11
    %p158 = scmp.lt.s32.totalorder %s11, 5
    %p159 = pnand %p157, %p158
    %p160 = pneg %p159
    // Predicated region
    $region9: #{unet_decoder_forward.16} parent=5 // pred_check
      _
    $region10: #{unet_decoder_forward.16} parent=5 // pred_check_branch
      %162 = sbr.rel (%p159) target = $region12
    $region11: #{unet_decoder_forward.16} parent=5 // pred_region
      %s163 = ssub.s32 %s11, 1
      // Predicated region
      $region13: #{unet_decoder_forward.16} parent=11 // pred_check
        %p164 = pneg %p72
      $region14: #{unet_decoder_forward.16} parent=11 // pred_check_branch
        %166 = sbr.rel (%p164) target = $region16
      $region15: #{unet_decoder_forward.16} parent=11 // pred_region
        _
      $region16: #{unet_decoder_forward.16} parent=11 // pred_fallthru
        _
      // Predicated region
      $region17: #{unet_decoder_forward.16} parent=11 // pred_check
        %p167 = pneg %p93
      $region18: #{unet_decoder_forward.16} parent=11 // pred_check_branch
        %169 = sbr.rel (%p167) target = $region20
      $region19: #{unet_decoder_forward.16} parent=11 // pred_region
        _
      $region20: #{unet_decoder_forward.16} parent=11 // pred_fallthru
        _
    $region12: #{unet_decoder_forward.16} parent=5 // pred_fallthru
      _
    %p170 = scmp.lt.s32.totalorder %s11, 4
    // Predicated region
    $region21: #{unet_decoder_forward.16} parent=5 // pred_check
      %p171 = pneg %p170
    $region22: #{unet_decoder_forward.16} parent=5 // pred_check_branch
      %173 = sbr.rel (%p171) target = $region24
    $region23: #{unet_decoder_forward.16} parent=5 // pred_region
      // Predicated region
      $region25: #{unet_decoder_forward.16} parent=23 // pred_check
        %p174 = pneg %p45
      $region26: #{unet_decoder_forward.16} parent=23 // pred_check_branch
        %176 = sbr.rel (%p174) target = $region28
      $region27: #{unet_decoder_forward.16} parent=23 // pred_region
        %p177 = scmp.lt.s32.totalorder %s18, 1
        %s178 = scalar_select %p177, %s18, 1
        %p179 = scmp.lt.s32.totalorder %s19, 1
        %s180 = scalar_select %p179, %s19, 1
        %s181 = smul.addr %s180, 30
        %s182 = smul.addr %s178, 60
        %s183 = sadd.s32 %s181, %s182
        %s184 = smul.addr %s183, 8
        %s185 = scalar_lea.vmem %s0, %s184
      $region28: #{unet_decoder_forward.16} parent=23 // pred_fallthru
        _
    $region24: #{unet_decoder_forward.16} parent=5 // pred_fallthru
      _
    %p186 = scmp.le.s32.totalorder 1, %s11
    %p187 = scmp.lt.s32.totalorder %s11, 5
    %p188 = pnand %p186, %p187
    %p189 = pneg %p188
    // Predicated region
    $region29: #{unet_decoder_forward.16} parent=5 // pred_check
      _
    $region30: #{unet_decoder_forward.16} parent=5 // pred_check_branch
      %191 = sbr.rel (%p188) target = $region32
    $region31: #{unet_decoder_forward.16} parent=5 // pred_region
      %s192 = ssub.s32 %s11, 1
      %p193 = scmp.lt.s32.totalorder %s20, 1
      %s194 = scalar_select %p193, %s20, 1
      %p195 = scmp.lt.s32.totalorder %s21, 1
      %s196 = scalar_select %p195, %s21, 1
      %s197 = smul.addr %s196, 30
      %s198 = smul.addr %s194, 60
      %s199 = sadd.s32 %s197, %s198
      %s200 = smul.addr %s199, 8
      %s201 = scalar_lea.vmem %s0, %s200
      %p202 = pneg %p51
      %p203 = pneg %p48
      %p204 = pneg %p72
      %p205 = pneg %p69
      %p206 = pneg %p93
      %p207 = pneg %p90
      %p208 = pneg %p121
      %p209 = pneg %p118
      %s210 = smul.u32 16, %s21
      %p211 = scmp.lt.s32.totalorder %s20, 1
      %s212 = scalar_select %p211, %s20, 1
      %p213 = scmp.lt.s32.totalorder %s210, 31
      %s214 = scalar_select %p213, %s210, 31
      %s215 = smul.addr %s212, 32
      %s216 = sadd.s32 %s214, %s215
      %s217 = smul.addr %s216, 8
      %s218 = scalar_lea.vmem %s3, %s217
      %p219 = pneg %p149
      %p220 = pneg %p146
      %p221 = scmp.lt.s32.totalorder %s20, 1
      %s222 = scalar_select %p221, %s20, 1
      %p223 = scmp.lt.s32.totalorder %s21, 1
      %s224 = scalar_select %p223, %s21, 1
      %s225 = smul.addr %s222, 2
      %s226 = sadd.s32 %s224, %s225
      %s227 = smul.addr %s226, 2
      %s228 = scalar_lea.vmem %s4, %s227
      %p229 = scmp.lt.s32.totalorder %s20, 1
      %s230 = scalar_select %p229, %s20, 1
      %p231 = scmp.lt.s32.totalorder %s21, 1
      %s232 = scalar_select %p231, %s21, 1
      %s233 = smul.addr %s232, 30
      %s234 = smul.addr %s230, 60
      %s235 = sadd.s32 %s233, %s234
      %s236 = smul.addr %s235, 8
      %s237 = scalar_lea.vmem %s0, %s236
      %s238 = smul.u32 16, %s21
      %p239 = scmp.lt.s32.totalorder %s20, 1
      %s240 = scalar_select %p239, %s20, 1
      %p241 = scmp.lt.s32.totalorder %s238, 31
      %s242 = scalar_select %p241, %s238, 31
      %s243 = smul.addr %s240, 32
      %s244 = sadd.s32 %s242, %s243
      %s245 = smul.addr %s244, 8
      %s246 = scalar_lea.vmem %s3, %s245
      %s247 = smul.u32 16, %s21
      %p248 = scmp.lt.s32.totalorder %s20, 1
      %s249 = scalar_select %p248, %s20, 1
      %p250 = scmp.lt.s32.totalorder %s21, 1
      %s251 = scalar_select %p250, %s21, 1
      %s252 = smul.addr %s249, 2
      %s253 = sadd.s32 %s251, %s252
      %s254 = smul.addr %s253, 2
      %s255 = scalar_lea.vmem %s4, %s254
      %v256 = vld [vmem:[%s237] sm:$0xff]
      %v257 = vld [vmem:[%s237 + $0x8] sm:$0xff]
      %v258 = vld [vmem:[%s237 + $0x10] sm:$0x3]
      %v259 = vld [vmem:[%s237 + $0x18] sm:$0xff]
      %v260 = vld [vmem:[%s237 + $0x20] sm:$0xff]
      %v261 = vld [vmem:[%s237 + $0x28] sm:$0x3]
      %v262 = vld [vmem:[%s237 + $0x30] sm:$0xff]
      %v263 = vld [vmem:[%s237 + $0x38] sm:$0xff]
      %v264 = vld [vmem:[%s237 + $0x40] sm:$0x3]
      %v265 = vld [vmem:[%s237 + $0x48] sm:$0xff]
      %v266 = vld [vmem:[%s237 + $0x50] sm:$0xff]
      %v267 = vld [vmem:[%s237 + $0x58] sm:$0x3]
      %v268 = vld [vmem:[%s237 + $0x60] sm:$0xff]
      %v269 = vld [vmem:[%s237 + $0x68] sm:$0xff]
      %v270 = vld [vmem:[%s237 + $0x70] sm:$0x3]
      %v271 = vld [vmem:[%s237 + $0x78] sm:$0xff]
      %v272 = vld [vmem:[%s237 + $0x80] sm:$0xff]
      %v273 = vld [vmem:[%s237 + $0x88] sm:$0x3]
      %v274 = vld [vmem:[%s237 + $0x90] sm:$0xff]
      %v275 = vld [vmem:[%s237 + $0x98] sm:$0xff]
      %v276 = vld [vmem:[%s237 + $0xa0] sm:$0x3]
      %v277 = vld [vmem:[%s237 + $0xa8] sm:$0xff]
      %v278 = vld [vmem:[%s237 + $0xb0] sm:$0xff]
      %v279 = vld [vmem:[%s237 + $0xb8] sm:$0x3]
      %v280 = vld [vmem:[%s237 + $0xc0] sm:$0xff]
      %v281 = vld [vmem:[%s237 + $0xc8] sm:$0xff]
      %v282 = vld [vmem:[%s237 + $0xd0] sm:$0x3]
      %v283 = vld [vmem:[%s237 + $0xd8] sm:$0xff]
      %v284 = vld [vmem:[%s237 + $0xe0] sm:$0xff]
      %v285 = vld [vmem:[%s237 + $0xe8] sm:$0x3]
      %v286 = vld [vmem:[%s1] sm:$0xff]
      %v287 = vld [vmem:[%s1 + $0x8] sm:$0xff]
      %v288 = vld [vmem:[%s1 + $0x10] sm:$0xff]
      %v289 = vld [vmem:[%s1 + $0x18] sm:$0xff]
      %v290 = vld [vmem:[%s1 + $0x20] sm:$0xff]
      %v291 = vld [vmem:[%s1 + $0x28] sm:$0xff]
      %v292 = vld [vmem:[%s1 + $0x30] sm:$0xff]
      %v293 = vld [vmem:[%s1 + $0x38] sm:$0xff]
      %vm318 = vcmask 1046528
      %v319 = vrot.slane %v256, 1
      %v320 = vrot.slane %v257, 1
      %v321 = vsel %vm318, %v319, %v320
      %v322 = vrot.slane %v258, 1
      %v323 = vsel %vm318, %v320, %v322
      %v324 = vrot.slane %v259, 1
      %v325 = vrot.slane %v260, 1
      %v326 = vsel %vm318, %v324, %v325
      %v327 = vrot.slane %v261, 1
      %v328 = vsel %vm318, %v325, %v327
      %v329 = vrot.slane %v262, 1
      %v330 = vrot.slane %v263, 1
      %v331 = vsel %vm318, %v329, %v330
      %v332 = vrot.slane %v264, 1
      %v333 = vsel %vm318, %v330, %v332
      %v334 = vrot.slane %v265, 1
      %v335 = vrot.slane %v266, 1
      %v336 = vsel %vm318, %v334, %v335
      %v337 = vrot.slane %v267, 1
      %v338 = vsel %vm318, %v335, %v337
      %v339 = vrot.slane %v268, 1
      %v340 = vrot.slane %v269, 1
      %v341 = vsel %vm318, %v339, %v340
      %v342 = vrot.slane %v270, 1
      %v343 = vsel %vm318, %v340, %v342
      %v344 = vrot.slane %v271, 1
      %v345 = vrot.slane %v272, 1
      %v346 = vsel %vm318, %v344, %v345
      %v347 = vrot.slane %v273, 1
      %v348 = vsel %vm318, %v345, %v347
      %v349 = vrot.slane %v274, 1
      %v350 = vrot.slane %v275, 1
      %v351 = vsel %vm318, %v349, %v350
      %v352 = vrot.slane %v276, 1
      %v353 = vsel %vm318, %v350, %v352
      %v354 = vrot.slane %v277, 1
      %v355 = vrot.slane %v278, 1
      %v356 = vsel %vm318, %v354, %v355
      %v357 = vrot.slane %v279, 1
      %v358 = vsel %vm318, %v355, %v357
      %s359 = scalar_lea.vmem %s1, 64
      %v360 = vld [vmem:[%s359] sm:$0xff]
      %v361 = vld [vmem:[%s359 + $0x8] sm:$0xff]
      %v362 = vld [vmem:[%s359 + $0x10] sm:$0xff]
      %v363 = vld [vmem:[%s359 + $0x18] sm:$0xff]
      %v364 = vld [vmem:[%s359 + $0x20] sm:$0xff]
      %v365 = vld [vmem:[%s359 + $0x28] sm:$0xff]
      %v366 = vld [vmem:[%s359 + $0x30] sm:$0xff]
      %v367 = vld [vmem:[%s359 + $0x38] sm:$0xff]
      %vm368 = vcmask 523264
      %v369 = vsel %vm368, %v321, 0
      %v371 = vsel %vm368, %v323, 0
      %v373 = vsel %vm368, %v326, 0
      %v375 = vsel %vm368, %v328, 0
      %v377 = vsel %vm368, %v331, 0
      %v379 = vsel %vm368, %v333, 0
      %v381 = vsel %vm368, %v336, 0
      %v383 = vsel %vm368, %v338, 0
      %v385 = vsel %vm368, %v341, 0
      %v387 = vsel %vm368, %v343, 0
      %v389 = vsel %vm368, %v346, 0
      %v391 = vsel %vm368, %v348, 0
      %v393 = vsel %vm368, %v351, 0
      %v395 = vsel %vm368, %v353, 0
      %v397 = vsel %vm368, %v356, 0
      %v399 = vsel %vm368, %v358, 0
      %401 = vmatpush.msra.mxu0 0.0
      %402 = vmatpush.msra.mxu0 0.0
      %403 = vmatpush.msra.mxu0 0.0
      %404 = vmatpush.msra.mxu0 0.0
      %405 = vmatpush.msra.mxu0 0.0
      %406 = vmatpush.msra.mxu0 0.0
      %407 = vmatpush.msra.mxu0 0.0
      %408 = vmatpush.msra.mxu0 0.0
      %409 = vmatpush.msra.mxu0 %v367
      %410 = vmatpush.msra.mxu0 %v366
      %411 = vmatpush.msra.mxu0 %v365
      %412 = vmatpush.msra.mxu0 %v364
      %413 = vmatpush.msra.mxu0 %v363
      %414 = vmatpush.msra.mxu0 %v362
      %415 = vmatpush.msra.mxu0 %v361
      %416 = vmatpush.msra.mxu0 %v360
      %417 = vmatmul.f32.gmra.mxu0 %v369
      %v418 = vpop.f32.mrf.mxu0
      %v419 = vadd.f32 0.0, %v418
      %420 = vmatmul.f32.gmra.mxu0 %v371
      %v421 = vpop.f32.mrf.mxu0
      %v422 = vadd.f32 0.0, %v421
      %423 = vmatmul.f32.gmra.mxu0 %v373
      %v424 = vpop.f32.mrf.mxu0
      %v425 = vadd.f32 0.0, %v424
      %426 = vmatmul.f32.gmra.mxu0 %v375
      %v427 = vpop.f32.mrf.mxu0
      %v428 = vadd.f32 0.0, %v427
      %429 = vmatmul.f32.gmra.mxu0 %v377
      %v430 = vpop.f32.mrf.mxu0
      %v431 = vadd.f32 0.0, %v430
      %432 = vmatmul.f32.gmra.mxu0 %v379
      %v433 = vpop.f32.mrf.mxu0
      %v434 = vadd.f32 0.0, %v433
      %435 = vmatmul.f32.gmra.mxu0 %v381
      %v436 = vpop.f32.mrf.mxu0
      %v437 = vadd.f32 0.0, %v436
      %438 = vmatmul.f32.gmra.mxu0 %v383
      %v439 = vpop.f32.mrf.mxu0
      %v440 = vadd.f32 0.0, %v439
      %441 = vmatmul.f32.gmra.mxu0 %v385
      %v442 = vpop.f32.mrf.mxu0
      %v443 = vadd.f32 0.0, %v442
      %444 = vmatmul.f32.gmra.mxu0 %v387
      %v445 = vpop.f32.mrf.mxu0
      %v446 = vadd.f32 0.0, %v445
      %447 = vmatmul.f32.gmra.mxu0 %v389
      %v448 = vpop.f32.mrf.mxu0
      %v449 = vadd.f32 0.0, %v448
      %450 = vmatmul.f32.gmra.mxu0 %v391
      %v451 = vpop.f32.mrf.mxu0
      %v452 = vadd.f32 0.0, %v451
      %453 = vmatmul.f32.gmra.mxu0 %v393
      %v454 = vpop.f32.mrf.mxu0
      %v455 = vadd.f32 0.0, %v454
      %456 = vmatmul.f32.gmra.mxu0 %v395
      %v457 = vpop.f32.mrf.mxu0
      %v458 = vadd.f32 0.0, %v457
      %459 = vmatmul.f32.gmra.mxu0 %v397
      %v460 = vpop.f32.mrf.mxu0
      %v461 = vadd.f32 0.0, %v460
      %462 = vmatmul.f32.gmra.mxu0 %v399
      %v463 = vpop.f32.mrf.mxu0
      %v464 = vadd.f32 0.0, %v463
      %465 = vdwg.mxu0
      %v466 = vsel %vm368, %v256, 0
      %v468 = vsel %vm368, %v257, 0
      %v470 = vsel %vm368, %v259, 0
      %v472 = vsel %vm368, %v260, 0
      %v474 = vsel %vm368, %v262, 0
      %v476 = vsel %vm368, %v263, 0
      %v478 = vsel %vm368, %v265, 0
      %v480 = vsel %vm368, %v266, 0
      %v482 = vsel %vm368, %v268, 0
      %v484 = vsel %vm368, %v269, 0
      %v486 = vsel %vm368, %v271, 0
      %v488 = vsel %vm368, %v272, 0
      %v490 = vsel %vm368, %v274, 0
      %v492 = vsel %vm368, %v275, 0
      %v494 = vsel %vm368, %v277, 0
      %v496 = vsel %vm368, %v278, 0
      %498 = vmatpush.msra.mxu0 0.0
      %499 = vmatpush.msra.mxu0 0.0
      %500 = vmatpush.msra.mxu0 0.0
      %501 = vmatpush.msra.mxu0 0.0
      %502 = vmatpush.msra.mxu0 0.0
      %503 = vmatpush.msra.mxu0 0.0
      %504 = vmatpush.msra.mxu0 0.0
      %505 = vmatpush.msra.mxu0 0.0
      %506 = vmatpush.msra.mxu0 %v293
      %507 = vmatpush.msra.mxu0 %v292
      %508 = vmatpush.msra.mxu0 %v291
      %509 = vmatpush.msra.mxu0 %v290
      %510 = vmatpush.msra.mxu0 %v289
      %511 = vmatpush.msra.mxu0 %v288
      %512 = vmatpush.msra.mxu0 %v287
      %513 = vmatpush.msra.mxu0 %v286
      %514 = vmatmul.f32.gmra.mxu0 %v466
      %v515 = vpop.f32.mrf.mxu0
      %v516 = vadd.f32 %v419, %v515
      %517 = vmatmul.f32.gmra.mxu0 %v468
      %v518 = vpop.f32.mrf.mxu0
      %v519 = vadd.f32 %v422, %v518
      %520 = vmatmul.f32.gmra.mxu0 %v470
      %v521 = vpop.f32.mrf.mxu0
      %v522 = vadd.f32 %v425, %v521
      %523 = vmatmul.f32.gmra.mxu0 %v472
      %v524 = vpop.f32.mrf.mxu0
      %v525 = vadd.f32 %v428, %v524
      %526 = vmatmul.f32.gmra.mxu0 %v474
      %v527 = vpop.f32.mrf.mxu0
      %v528 = vadd.f32 %v431, %v527
      %529 = vmatmul.f32.gmra.mxu0 %v476
      %v530 = vpop.f32.mrf.mxu0
      %v531 = vadd.f32 %v434, %v530
      %532 = vmatmul.f32.gmra.mxu0 %v478
      %v533 = vpop.f32.mrf.mxu0
      %v534 = vadd.f32 %v437, %v533
      %535 = vmatmul.f32.gmra.mxu0 %v480
      %v536 = vpop.f32.mrf.mxu0
      %v537 = vadd.f32 %v440, %v536
      %538 = vmatmul.f32.gmra.mxu0 %v482
      %v539 = vpop.f32.mrf.mxu0
      %v540 = vadd.f32 %v443, %v539
      %541 = vmatmul.f32.gmra.mxu0 %v484
      %v542 = vpop.f32.mrf.mxu0
      %v543 = vadd.f32 %v446, %v542
      %544 = vmatmul.f32.gmra.mxu0 %v486
      %v545 = vpop.f32.mrf.mxu0
      %v546 = vadd.f32 %v449, %v545
      %547 = vmatmul.f32.gmra.mxu0 %v488
      %v548 = vpop.f32.mrf.mxu0
      %v549 = vadd.f32 %v452, %v548
      %550 = vmatmul.f32.gmra.mxu0 %v490
      %v551 = vpop.f32.mrf.mxu0
      %v552 = vadd.f32 %v455, %v551
      %553 = vmatmul.f32.gmra.mxu0 %v492
      %v554 = vpop.f32.mrf.mxu0
      %v555 = vadd.f32 %v458, %v554
      %556 = vmatmul.f32.gmra.mxu0 %v494
      %v557 = vpop.f32.mrf.mxu0
      %v558 = vadd.f32 %v461, %v557
      %559 = vmatmul.f32.gmra.mxu0 %v496
      %v560 = vpop.f32.mrf.mxu0
      %v561 = vadd.f32 %v464, %v560
      %562 = vdwg.mxu0
      %vm563 = vcmask 1045504
      %v564 = vrot.slane %v256, 2
      %v565 = vrot.slane %v257, 2
      %v566 = vsel %vm563, %v564, %v565
      %v567 = vrot.slane %v258, 2
      %v568 = vsel %vm563, %v565, %v567
      %v569 = vrot.slane %v259, 2
      %v570 = vrot.slane %v260, 2
      %v571 = vsel %vm563, %v569, %v570
      %v572 = vrot.slane %v261, 2
      %v573 = vsel %vm563, %v570, %v572
      %v574 = vrot.slane %v262, 2
      %v575 = vrot.slane %v263, 2
      %v576 = vsel %vm563, %v574, %v575
      %v577 = vrot.slane %v264, 2
      %v578 = vsel %vm563, %v575, %v577
      %v579 = vrot.slane %v265, 2
      %v580 = vrot.slane %v266, 2
      %v581 = vsel %vm563, %v579, %v580
      %v582 = vrot.slane %v267, 2
      %v583 = vsel %vm563, %v580, %v582
      %v584 = vrot.slane %v268, 2
      %v585 = vrot.slane %v269, 2
      %v586 = vsel %vm563, %v584, %v585
      %v587 = vrot.slane %v270, 2
      %v588 = vsel %vm563, %v585, %v587
      %v589 = vrot.slane %v271, 2
      %v590 = vrot.slane %v272, 2
      %v591 = vsel %vm563, %v589, %v590
      %v592 = vrot.slane %v273, 2
      %v593 = vsel %vm563, %v590, %v592
      %v594 = vrot.slane %v274, 2
      %v595 = vrot.slane %v275, 2
      %v596 = vsel %vm563, %v594, %v595
      %v597 = vrot.slane %v276, 2
      %v598 = vsel %vm563, %v595, %v597
      %v599 = vrot.slane %v277, 2
      %v600 = vrot.slane %v278, 2
      %v601 = vsel %vm563, %v599, %v600
      %v602 = vrot.slane %v279, 2
      %v603 = vsel %vm563, %v600, %v602
      %s604 = scalar_lea.vmem %s1, 128
      %v605 = vld [vmem:[%s604] sm:$0xff]
      %v606 = vld [vmem:[%s604 + $0x8] sm:$0xff]
      %v607 = vld [vmem:[%s604 + $0x10] sm:$0xff]
      %v608 = vld [vmem:[%s604 + $0x18] sm:$0xff]
      %v609 = vld [vmem:[%s604 + $0x20] sm:$0xff]
      %v610 = vld [vmem:[%s604 + $0x28] sm:$0xff]
      %v611 = vld [vmem:[%s604 + $0x30] sm:$0xff]
      %v612 = vld [vmem:[%s604 + $0x38] sm:$0xff]
      %v613 = vsel %vm368, %v566, 0
      %v615 = vsel %vm368, %v568, 0
      %v617 = vsel %vm368, %v571, 0
      %v619 = vsel %vm368, %v573, 0
      %v621 = vsel %vm368, %v576, 0
      %v623 = vsel %vm368, %v578, 0
      %v625 = vsel %vm368, %v581, 0
      %v627 = vsel %vm368, %v583, 0
      %v629 = vsel %vm368, %v586, 0
      %v631 = vsel %vm368, %v588, 0
      %v633 = vsel %vm368, %v591, 0
      %v635 = vsel %vm368, %v593, 0
      %v637 = vsel %vm368, %v596, 0
      %v639 = vsel %vm368, %v598, 0
      %v641 = vsel %vm368, %v601, 0
      %v643 = vsel %vm368, %v603, 0
      %645 = vmatpush.msra.mxu0 0.0
      %646 = vmatpush.msra.mxu0 0.0
      %647 = vmatpush.msra.mxu0 0.0
      %648 = vmatpush.msra.mxu0 0.0
      %649 = vmatpush.msra.mxu0 0.0
      %650 = vmatpush.msra.mxu0 0.0
      %651 = vmatpush.msra.mxu0 0.0
      %652 = vmatpush.msra.mxu0 0.0
      %653 = vmatpush.msra.mxu0 %v612
      %654 = vmatpush.msra.mxu0 %v611
      %655 = vmatpush.msra.mxu0 %v610
      %656 = vmatpush.msra.mxu0 %v609
      %657 = vmatpush.msra.mxu0 %v608
      %658 = vmatpush.msra.mxu0 %v607
      %659 = vmatpush.msra.mxu0 %v606
      %660 = vmatpush.msra.mxu0 %v605
      %661 = vmatmul.f32.gmra.mxu0 %v613
      %v662 = vpop.f32.mrf.mxu0
      %v663 = vadd.f32 0.0, %v662
      %664 = vmatmul.f32.gmra.mxu0 %v615
      %v665 = vpop.f32.mrf.mxu0
      %v666 = vadd.f32 0.0, %v665
      %667 = vmatmul.f32.gmra.mxu0 %v617
      %v668 = vpop.f32.mrf.mxu0
      %v669 = vadd.f32 0.0, %v668
      %670 = vmatmul.f32.gmra.mxu0 %v619
      %v671 = vpop.f32.mrf.mxu0
      %v672 = vadd.f32 0.0, %v671
      %673 = vmatmul.f32.gmra.mxu0 %v621
      %v674 = vpop.f32.mrf.mxu0
      %v675 = vadd.f32 0.0, %v674
      %676 = vmatmul.f32.gmra.mxu0 %v623
      %v677 = vpop.f32.mrf.mxu0
      %v678 = vadd.f32 0.0, %v677
      %679 = vmatmul.f32.gmra.mxu0 %v625
      %v680 = vpop.f32.mrf.mxu0
      %v681 = vadd.f32 0.0, %v680
      %682 = vmatmul.f32.gmra.mxu0 %v627
      %v683 = vpop.f32.mrf.mxu0
      %v684 = vadd.f32 0.0, %v683
      %685 = vmatmul.f32.gmra.mxu0 %v629
      %v686 = vpop.f32.mrf.mxu0
      %v687 = vadd.f32 0.0, %v686
      %688 = vmatmul.f32.gmra.mxu0 %v631
      %v689 = vpop.f32.mrf.mxu0
      %v690 = vadd.f32 0.0, %v689
      %691 = vmatmul.f32.gmra.mxu0 %v633
      %v692 = vpop.f32.mrf.mxu0
      %v693 = vadd.f32 0.0, %v692
      %694 = vmatmul.f32.gmra.mxu0 %v635
      %v695 = vpop.f32.mrf.mxu0
      %v696 = vadd.f32 0.0, %v695
      %697 = vmatmul.f32.gmra.mxu0 %v637
      %v698 = vpop.f32.mrf.mxu0
      %v699 = vadd.f32 0.0, %v698
      %700 = vmatmul.f32.gmra.mxu0 %v639
      %v701 = vpop.f32.mrf.mxu0
      %v702 = vadd.f32 0.0, %v701
      %703 = vmatmul.f32.gmra.mxu0 %v641
      %v704 = vpop.f32.mrf.mxu0
      %v705 = vadd.f32 0.0, %v704
      %706 = vmatmul.f32.gmra.mxu0 %v643
      %v707 = vpop.f32.mrf.mxu0
      %v708 = vadd.f32 0.0, %v707
      %709 = vdwg.mxu0
      %v710 = vadd.f32 %v516, %v663
      %v711 = vadd.f32 %v519, %v666
      %v712 = vadd.f32 %v522, %v669
      %v713 = vadd.f32 %v525, %v672
      %v714 = vadd.f32 %v528, %v675
      %v715 = vadd.f32 %v531, %v678
      %v716 = vadd.f32 %v534, %v681
      %v717 = vadd.f32 %v537, %v684
      %v718 = vadd.f32 %v540, %v687
      %v719 = vadd.f32 %v543, %v690
      %v720 = vadd.f32 %v546, %v693
      %v721 = vadd.f32 %v549, %v696
      %v722 = vadd.f32 %v552, %v699
      %v723 = vadd.f32 %v555, %v702
      %v724 = vadd.f32 %v558, %v705
      %v725 = vadd.f32 %v561, %v708
      %s726 = scalar_lea.vmem %s1, 192
      %v727 = vld [vmem:[%s726] sm:$0xff]
      %v728 = vld [vmem:[%s726 + $0x8] sm:$0xff]
      %v729 = vld [vmem:[%s726 + $0x10] sm:$0xff]
      %v730 = vld [vmem:[%s726 + $0x18] sm:$0xff]
      %v731 = vld [vmem:[%s726 + $0x20] sm:$0xff]
      %v732 = vld [vmem:[%s726 + $0x28] sm:$0xff]
      %v733 = vld [vmem:[%s726 + $0x30] sm:$0xff]
      %v734 = vld [vmem:[%s726 + $0x38] sm:$0xff]
      %v736 = vsel %vm368, %v280, 0
      %v739 = vsel %vm368, %v281, 0
      %741 = vmatpush.msra.mxu0 0.0
      %742 = vmatpush.msra.mxu0 0.0
      %743 = vmatpush.msra.mxu0 0.0
      %744 = vmatpush.msra.mxu0 0.0
      %745 = vmatpush.msra.mxu0 0.0
      %746 = vmatpush.msra.mxu0 0.0
      %747 = vmatpush.msra.mxu0 0.0
      %748 = vmatpush.msra.mxu0 0.0
      %749 = vmatpush.msra.mxu0 %v734
      %750 = vmatpush.msra.mxu0 %v733
      %751 = vmatpush.msra.mxu0 %v732
      %752 = vmatpush.msra.mxu0 %v731
      %753 = vmatpush.msra.mxu0 %v730
      %754 = vmatpush.msra.mxu0 %v729
      %755 = vmatpush.msra.mxu0 %v728
      %756 = vmatpush.msra.mxu0 %v727
      %757 = vmatmul.f32.gmra.mxu0 %v470
      %v758 = vpop.f32.mrf.mxu0
      %v759 = vadd.f32 0.0, %v758
      %760 = vmatmul.f32.gmra.mxu0 %v472
      %v761 = vpop.f32.mrf.mxu0
      %v762 = vadd.f32 0.0, %v761
      %763 = vmatmul.f32.gmra.mxu0 %v474
      %v764 = vpop.f32.mrf.mxu0
      %v765 = vadd.f32 0.0, %v764
      %766 = vmatmul.f32.gmra.mxu0 %v476
      %v767 = vpop.f32.mrf.mxu0
      %v768 = vadd.f32 0.0, %v767
      %769 = vmatmul.f32.gmra.mxu0 %v478
      %v770 = vpop.f32.mrf.mxu0
      %v771 = vadd.f32 0.0, %v770
      %772 = vmatmul.f32.gmra.mxu0 %v480
      %v773 = vpop.f32.mrf.mxu0
      %v774 = vadd.f32 0.0, %v773
      %775 = vmatmul.f32.gmra.mxu0 %v482
      %v776 = vpop.f32.mrf.mxu0
      %v777 = vadd.f32 0.0, %v776
      %778 = vmatmul.f32.gmra.mxu0 %v484
      %v779 = vpop.f32.mrf.mxu0
      %v780 = vadd.f32 0.0, %v779
      %781 = vmatmul.f32.gmra.mxu0 %v486
      %v782 = vpop.f32.mrf.mxu0
      %v783 = vadd.f32 0.0, %v782
      %784 = vmatmul.f32.gmra.mxu0 %v488
      %v785 = vpop.f32.mrf.mxu0
      %v786 = vadd.f32 0.0, %v785
      %787 = vmatmul.f32.gmra.mxu0 %v490
      %v788 = vpop.f32.mrf.mxu0
      %v789 = vadd.f32 0.0, %v788
      %790 = vmatmul.f32.gmra.mxu0 %v492
      %v791 = vpop.f32.mrf.mxu0
      %v792 = vadd.f32 0.0, %v791
      %793 = vmatmul.f32.gmra.mxu0 %v494
      %v794 = vpop.f32.mrf.mxu0
      %v795 = vadd.f32 0.0, %v794
      %796 = vmatmul.f32.gmra.mxu0 %v496
      %v797 = vpop.f32.mrf.mxu0
      %v798 = vadd.f32 0.0, %v797
      %799 = vmatmul.f32.gmra.mxu0 %v736
      %v800 = vpop.f32.mrf.mxu0
      %v801 = vadd.f32 0.0, %v800
      %802 = vmatmul.f32.gmra.mxu0 %v739
      %v803 = vpop.f32.mrf.mxu0
      %v804 = vadd.f32 0.0, %v803
      %805 = vdwg.mxu0
      %v806 = vadd.f32 %v710, %v759
      %v807 = vadd.f32 %v711, %v762
      %v808 = vadd.f32 %v712, %v765
      %v809 = vadd.f32 %v713, %v768
      %v810 = vadd.f32 %v714, %v771
      %v811 = vadd.f32 %v715, %v774
      %v812 = vadd.f32 %v716, %v777
      %v813 = vadd.f32 %v717, %v780
      %v814 = vadd.f32 %v718, %v783
      %v815 = vadd.f32 %v719, %v786
      %v816 = vadd.f32 %v720, %v789
      %v817 = vadd.f32 %v721, %v792
      %v818 = vadd.f32 %v722, %v795
      %v819 = vadd.f32 %v723, %v798
      %v820 = vadd.f32 %v724, %v801
      %v821 = vadd.f32 %v725, %v804
      %v823 = vrot.slane %v280, 1
      %v824 = vrot.slane %v281, 1
      %v825 = vsel %vm318, %v823, %v824
      %v826 = vrot.slane %v282, 1
      %v827 = vsel %vm318, %v824, %v826
      %s828 = scalar_lea.vmem %s1, 256
      %v829 = vld [vmem:[%s828] sm:$0xff]
      %v830 = vld [vmem:[%s828 + $0x8] sm:$0xff]
      %v831 = vld [vmem:[%s828 + $0x10] sm:$0xff]
      %v832 = vld [vmem:[%s828 + $0x18] sm:$0xff]
      %v833 = vld [vmem:[%s828 + $0x20] sm:$0xff]
      %v834 = vld [vmem:[%s828 + $0x28] sm:$0xff]
      %v835 = vld [vmem:[%s828 + $0x30] sm:$0xff]
      %v836 = vld [vmem:[%s828 + $0x38] sm:$0xff]
      %v837 = vsel %vm368, %v825, 0
      %v839 = vsel %vm368, %v827, 0
      %841 = vmatpush.msra.mxu0 0.0
      %842 = vmatpush.msra.mxu0 0.0
      %843 = vmatpush.msra.mxu0 0.0
      %844 = vmatpush.msra.mxu0 0.0
      %845 = vmatpush.msra.mxu0 0.0
      %846 = vmatpush.msra.mxu0 0.0
      %847 = vmatpush.msra.mxu0 0.0
      %848 = vmatpush.msra.mxu0 0.0
      %849 = vmatpush.msra.mxu0 %v836
      %850 = vmatpush.msra.mxu0 %v835
      %851 = vmatpush.msra.mxu0 %v834
      %852 = vmatpush.msra.mxu0 %v833
      %853 = vmatpush.msra.mxu0 %v832
      %854 = vmatpush.msra.mxu0 %v831
      %855 = vmatpush.msra.mxu0 %v830
      %856 = vmatpush.msra.mxu0 %v829
      %857 = vmatmul.f32.gmra.mxu0 %v373
      %v858 = vpop.f32.mrf.mxu0
      %v859 = vadd.f32 0.0, %v858
      %860 = vmatmul.f32.gmra.mxu0 %v375
      %v861 = vpop.f32.mrf.mxu0
      %v862 = vadd.f32 0.0, %v861
      %863 = vmatmul.f32.gmra.mxu0 %v377
      %v864 = vpop.f32.mrf.mxu0
      %v865 = vadd.f32 0.0, %v864
      %866 = vmatmul.f32.gmra.mxu0 %v379
      %v867 = vpop.f32.mrf.mxu0
      %v868 = vadd.f32 0.0, %v867
      %869 = vmatmul.f32.gmra.mxu0 %v381
      %v870 = vpop.f32.mrf.mxu0
      %v871 = vadd.f32 0.0, %v870
      %872 = vmatmul.f32.gmra.mxu0 %v383
      %v873 = vpop.f32.mrf.mxu0
      %v874 = vadd.f32 0.0, %v873
      %875 = vmatmul.f32.gmra.mxu0 %v385
      %v876 = vpop.f32.mrf.mxu0
      %v877 = vadd.f32 0.0, %v876
      %878 = vmatmul.f32.gmra.mxu0 %v387
      %v879 = vpop.f32.mrf.mxu0
      %v880 = vadd.f32 0.0, %v879
      %881 = vmatmul.f32.gmra.mxu0 %v389
      %v882 = vpop.f32.mrf.mxu0
      %v883 = vadd.f32 0.0, %v882
      %884 = vmatmul.f32.gmra.mxu0 %v391
      %v885 = vpop.f32.mrf.mxu0
      %v886 = vadd.f32 0.0, %v885
      %887 = vmatmul.f32.gmra.mxu0 %v393
      %v888 = vpop.f32.mrf.mxu0
      %v889 = vadd.f32 0.0, %v888
      %890 = vmatmul.f32.gmra.mxu0 %v395
      %v891 = vpop.f32.mrf.mxu0
      %v892 = vadd.f32 0.0, %v891
      %893 = vmatmul.f32.gmra.mxu0 %v397
      %v894 = vpop.f32.mrf.mxu0
      %v895 = vadd.f32 0.0, %v894
      %896 = vmatmul.f32.gmra.mxu0 %v399
      %v897 = vpop.f32.mrf.mxu0
      %v898 = vadd.f32 0.0, %v897
      %899 = vmatmul.f32.gmra.mxu0 %v837
      %v900 = vpop.f32.mrf.mxu0
      %v901 = vadd.f32 0.0, %v900
      %902 = vmatmul.f32.gmra.mxu0 %v839
      %v903 = vpop.f32.mrf.mxu0
      %v904 = vadd.f32 0.0, %v903
      %905 = vdwg.mxu0
      %v906 = vadd.f32 %v806, %v859
      %v907 = vadd.f32 %v807, %v862
      %v908 = vadd.f32 %v808, %v865
      %v909 = vadd.f32 %v809, %v868
      %v910 = vadd.f32 %v810, %v871
      %v911 = vadd.f32 %v811, %v874
      %v912 = vadd.f32 %v812, %v877
      %v913 = vadd.f32 %v813, %v880
      %v914 = vadd.f32 %v814, %v883
      %v915 = vadd.f32 %v815, %v886
      %v916 = vadd.f32 %v816, %v889
      %v917 = vadd.f32 %v817, %v892
      %v918 = vadd.f32 %v818, %v895
      %v919 = vadd.f32 %v819, %v898
      %v920 = vadd.f32 %v820, %v901
      %v921 = vadd.f32 %v821, %v904
      %v922 = vrot.slane %v280, 2
      %v923 = vrot.slane %v281, 2
      %v924 = vsel %vm563, %v922, %v923
      %v925 = vrot.slane %v282, 2
      %v926 = vsel %vm563, %v923, %v925
      %s927 = scalar_lea.vmem %s1, 320
      %v928 = vld [vmem:[%s927] sm:$0xff]
      %v929 = vld [vmem:[%s927 + $0x8] sm:$0xff]
      %v930 = vld [vmem:[%s927 + $0x10] sm:$0xff]
      %v931 = vld [vmem:[%s927 + $0x18] sm:$0xff]
      %v932 = vld [vmem:[%s927 + $0x20] sm:$0xff]
      %v933 = vld [vmem:[%s927 + $0x28] sm:$0xff]
      %v934 = vld [vmem:[%s927 + $0x30] sm:$0xff]
      %v935 = vld [vmem:[%s927 + $0x38] sm:$0xff]
      %v936 = vsel %vm368, %v924, 0
      %v938 = vsel %vm368, %v926, 0
      %940 = vmatpush.msra.mxu0 0.0
      %941 = vmatpush.msra.mxu0 0.0
      %942 = vmatpush.msra.mxu0 0.0
      %943 = vmatpush.msra.mxu0 0.0
      %944 = vmatpush.msra.mxu0 0.0
      %945 = vmatpush.msra.mxu0 0.0
      %946 = vmatpush.msra.mxu0 0.0
      %947 = vmatpush.msra.mxu0 0.0
      %948 = vmatpush.msra.mxu0 %v935
      %949 = vmatpush.msra.mxu0 %v934
      %950 = vmatpush.msra.mxu0 %v933
      %951 = vmatpush.msra.mxu0 %v932
      %952 = vmatpush.msra.mxu0 %v931
      %953 = vmatpush.msra.mxu0 %v930
      %954 = vmatpush.msra.mxu0 %v929
      %955 = vmatpush.msra.mxu0 %v928
      %956 = vmatmul.f32.gmra.mxu0 %v617
      %v957 = vpop.f32.mrf.mxu0
      %v958 = vadd.f32 0.0, %v957
      %959 = vmatmul.f32.gmra.mxu0 %v619
      %v960 = vpop.f32.mrf.mxu0
      %v961 = vadd.f32 0.0, %v960
      %962 = vmatmul.f32.gmra.mxu0 %v621
      %v963 = vpop.f32.mrf.mxu0
      %v964 = vadd.f32 0.0, %v963
      %965 = vmatmul.f32.gmra.mxu0 %v623
      %v966 = vpop.f32.mrf.mxu0
      %v967 = vadd.f32 0.0, %v966
      %968 = vmatmul.f32.gmra.mxu0 %v625
      %v969 = vpop.f32.mrf.mxu0
      %v970 = vadd.f32 0.0, %v969
      %971 = vmatmul.f32.gmra.mxu0 %v627
      %v972 = vpop.f32.mrf.mxu0
      %v973 = vadd.f32 0.0, %v972
      %974 = vmatmul.f32.gmra.mxu0 %v629
      %v975 = vpop.f32.mrf.mxu0
      %v976 = vadd.f32 0.0, %v975
      %977 = vmatmul.f32.gmra.mxu0 %v631
      %v978 = vpop.f32.mrf.mxu0
      %v979 = vadd.f32 0.0, %v978
      %980 = vmatmul.f32.gmra.mxu0 %v633
      %v981 = vpop.f32.mrf.mxu0
      %v982 = vadd.f32 0.0, %v981
      %983 = vmatmul.f32.gmra.mxu0 %v635
      %v984 = vpop.f32.mrf.mxu0
      %v985 = vadd.f32 0.0, %v984
      %986 = vmatmul.f32.gmra.mxu0 %v637
      %v987 = vpop.f32.mrf.mxu0
      %v988 = vadd.f32 0.0, %v987
      %989 = vmatmul.f32.gmra.mxu0 %v639
      %v990 = vpop.f32.mrf.mxu0
      %v991 = vadd.f32 0.0, %v990
      %992 = vmatmul.f32.gmra.mxu0 %v641
      %v993 = vpop.f32.mrf.mxu0
      %v994 = vadd.f32 0.0, %v993
      %995 = vmatmul.f32.gmra.mxu0 %v643
      %v996 = vpop.f32.mrf.mxu0
      %v997 = vadd.f32 0.0, %v996
      %998 = vmatmul.f32.gmra.mxu0 %v936
      %v999 = vpop.f32.mrf.mxu0
      %v1000 = vadd.f32 0.0, %v999
      %1001 = vmatmul.f32.gmra.mxu0 %v938
      %v1002 = vpop.f32.mrf.mxu0
      %v1003 = vadd.f32 0.0, %v1002
      %1004 = vdwg.mxu0
      %v1005 = vadd.f32 %v906, %v958
      %v1006 = vadd.f32 %v907, %v961
      %v1007 = vadd.f32 %v908, %v964
      %v1008 = vadd.f32 %v909, %v967
      %v1009 = vadd.f32 %v910, %v970
      %v1010 = vadd.f32 %v911, %v973
      %v1011 = vadd.f32 %v912, %v976
      %v1012 = vadd.f32 %v913, %v979
      %v1013 = vadd.f32 %v914, %v982
      %v1014 = vadd.f32 %v915, %v985
      %v1015 = vadd.f32 %v916, %v988
      %v1016 = vadd.f32 %v917, %v991
      %v1017 = vadd.f32 %v918, %v994
      %v1018 = vadd.f32 %v919, %v997
      %v1019 = vadd.f32 %v920, %v1000
      %v1020 = vadd.f32 %v921, %v1003
      %s1021 = scalar_lea.vmem %s1, 384
      %v1022 = vld [vmem:[%s1021] sm:$0xff]
      %v1023 = vld [vmem:[%s1021 + $0x8] sm:$0xff]
      %v1024 = vld [vmem:[%s1021 + $0x10] sm:$0xff]
      %v1025 = vld [vmem:[%s1021 + $0x18] sm:$0xff]
      %v1026 = vld [vmem:[%s1021 + $0x20] sm:$0xff]
      %v1027 = vld [vmem:[%s1021 + $0x28] sm:$0xff]
      %v1028 = vld [vmem:[%s1021 + $0x30] sm:$0xff]
      %v1029 = vld [vmem:[%s1021 + $0x38] sm:$0xff]
      %v1031 = vsel %vm368, %v283, 0
      %v1034 = vsel %vm368, %v284, 0
      %1036 = vmatpush.msra.mxu0 0.0
      %1037 = vmatpush.msra.mxu0 0.0
      %1038 = vmatpush.msra.mxu0 0.0
      %1039 = vmatpush.msra.mxu0 0.0
      %1040 = vmatpush.msra.mxu0 0.0
      %1041 = vmatpush.msra.mxu0 0.0
      %1042 = vmatpush.msra.mxu0 0.0
      %1043 = vmatpush.msra.mxu0 0.0
      %1044 = vmatpush.msra.mxu0 %v1029
      %1045 = vmatpush.msra.mxu0 %v1028
      %1046 = vmatpush.msra.mxu0 %v1027
      %1047 = vmatpush.msra.mxu0 %v1026
      %1048 = vmatpush.msra.mxu0 %v1025
      %1049 = vmatpush.msra.mxu0 %v1024
      %1050 = vmatpush.msra.mxu0 %v1023
      %1051 = vmatpush.msra.mxu0 %v1022
      %1052 = vmatmul.f32.gmra.mxu0 %v474
      %v1053 = vpop.f32.mrf.mxu0
      %v1054 = vadd.f32 0.0, %v1053
      %1055 = vmatmul.f32.gmra.mxu0 %v476
      %v1056 = vpop.f32.mrf.mxu0
      %v1057 = vadd.f32 0.0, %v1056
      %1058 = vmatmul.f32.gmra.mxu0 %v478
      %v1059 = vpop.f32.mrf.mxu0
      %v1060 = vadd.f32 0.0, %v1059
      %1061 = vmatmul.f32.gmra.mxu0 %v480
      %v1062 = vpop.f32.mrf.mxu0
      %v1063 = vadd.f32 0.0, %v1062
      %1064 = vmatmul.f32.gmra.mxu0 %v482
      %v1065 = vpop.f32.mrf.mxu0
      %v1066 = vadd.f32 0.0, %v1065
      %1067 = vmatmul.f32.gmra.mxu0 %v484
      %v1068 = vpop.f32.mrf.mxu0
      %v1069 = vadd.f32 0.0, %v1068
      %1070 = vmatmul.f32.gmra.mxu0 %v486
      %v1071 = vpop.f32.mrf.mxu0
      %v1072 = vadd.f32 0.0, %v1071
      %1073 = vmatmul.f32.gmra.mxu0 %v488
      %v1074 = vpop.f32.mrf.mxu0
      %v1075 = vadd.f32 0.0, %v1074
      %1076 = vmatmul.f32.gmra.mxu0 %v490
      %v1077 = vpop.f32.mrf.mxu0
      %v1078 = vadd.f32 0.0, %v1077
      %1079 = vmatmul.f32.gmra.mxu0 %v492
      %v1080 = vpop.f32.mrf.mxu0
      %v1081 = vadd.f32 0.0, %v1080
      %1082 = vmatmul.f32.gmra.mxu0 %v494
      %v1083 = vpop.f32.mrf.mxu0
      %v1084 = vadd.f32 0.0, %v1083
      %1085 = vmatmul.f32.gmra.mxu0 %v496
      %v1086 = vpop.f32.mrf.mxu0
      %v1087 = vadd.f32 0.0, %v1086
      %1088 = vmatmul.f32.gmra.mxu0 %v736
      %v1089 = vpop.f32.mrf.mxu0
      %v1090 = vadd.f32 0.0, %v1089
      %1091 = vmatmul.f32.gmra.mxu0 %v739
      %v1092 = vpop.f32.mrf.mxu0
      %v1093 = vadd.f32 0.0, %v1092
      %1094 = vmatmul.f32.gmra.mxu0 %v1031
      %v1095 = vpop.f32.mrf.mxu0
      %v1096 = vadd.f32 0.0, %v1095
      %1097 = vmatmul.f32.gmra.mxu0 %v1034
      %v1098 = vpop.f32.mrf.mxu0
      %v1099 = vadd.f32 0.0, %v1098
      %1100 = vdwg.mxu0
      %v1101 = vadd.f32 %v1005, %v1054
      %v1102 = vadd.f32 %v1006, %v1057
      %v1103 = vadd.f32 %v1007, %v1060
      %v1104 = vadd.f32 %v1008, %v1063
      %v1105 = vadd.f32 %v1009, %v1066
      %v1106 = vadd.f32 %v1010, %v1069
      %v1107 = vadd.f32 %v1011, %v1072
      %v1108 = vadd.f32 %v1012, %v1075
      %v1109 = vadd.f32 %v1013, %v1078
      %v1110 = vadd.f32 %v1014, %v1081
      %v1111 = vadd.f32 %v1015, %v1084
      %v1112 = vadd.f32 %v1016, %v1087
      %v1113 = vadd.f32 %v1017, %v1090
      %v1114 = vadd.f32 %v1018, %v1093
      %v1115 = vadd.f32 %v1019, %v1096
      %v1116 = vadd.f32 %v1020, %v1099
      %v1118 = vrot.slane %v283, 1
      %v1119 = vrot.slane %v284, 1
      %v1120 = vsel %vm318, %v1118, %v1119
      %v1121 = vrot.slane %v285, 1
      %v1122 = vsel %vm318, %v1119, %v1121
      %s1123 = scalar_lea.vmem %s1, 448
      %v1124 = vld [vmem:[%s1123] sm:$0xff]
      %v1125 = vld [vmem:[%s1123 + $0x8] sm:$0xff]
      %v1126 = vld [vmem:[%s1123 + $0x10] sm:$0xff]
      %v1127 = vld [vmem:[%s1123 + $0x18] sm:$0xff]
      %v1128 = vld [vmem:[%s1123 + $0x20] sm:$0xff]
      %v1129 = vld [vmem:[%s1123 + $0x28] sm:$0xff]
      %v1130 = vld [vmem:[%s1123 + $0x30] sm:$0xff]
      %v1131 = vld [vmem:[%s1123 + $0x38] sm:$0xff]
      %v1132 = vsel %vm368, %v1120, 0
      %v1134 = vsel %vm368, %v1122, 0
      %1136 = vmatpush.msra.mxu0 0.0
      %1137 = vmatpush.msra.mxu0 0.0
      %1138 = vmatpush.msra.mxu0 0.0
      %1139 = vmatpush.msra.mxu0 0.0
      %1140 = vmatpush.msra.mxu0 0.0
      %1141 = vmatpush.msra.mxu0 0.0
      %1142 = vmatpush.msra.mxu0 0.0
      %1143 = vmatpush.msra.mxu0 0.0
      %1144 = vmatpush.msra.mxu0 %v1131
      %1145 = vmatpush.msra.mxu0 %v1130
      %1146 = vmatpush.msra.mxu0 %v1129
      %1147 = vmatpush.msra.mxu0 %v1128
      %1148 = vmatpush.msra.mxu0 %v1127
      %1149 = vmatpush.msra.mxu0 %v1126
      %1150 = vmatpush.msra.mxu0 %v1125
      %1151 = vmatpush.msra.mxu0 %v1124
      %1152 = vmatmul.f32.gmra.mxu0 %v377
      %v1153 = vpop.f32.mrf.mxu0
      %v1154 = vadd.f32 0.0, %v1153
      %1155 = vmatmul.f32.gmra.mxu0 %v379
      %v1156 = vpop.f32.mrf.mxu0
      %v1157 = vadd.f32 0.0, %v1156
      %1158 = vmatmul.f32.gmra.mxu0 %v381
      %v1159 = vpop.f32.mrf.mxu0
      %v1160 = vadd.f32 0.0, %v1159
      %1161 = vmatmul.f32.gmra.mxu0 %v383
      %v1162 = vpop.f32.mrf.mxu0
      %v1163 = vadd.f32 0.0, %v1162
      %1164 = vmatmul.f32.gmra.mxu0 %v385
      %v1165 = vpop.f32.mrf.mxu0
      %v1166 = vadd.f32 0.0, %v1165
      %1167 = vmatmul.f32.gmra.mxu0 %v387
      %v1168 = vpop.f32.mrf.mxu0
      %v1169 = vadd.f32 0.0, %v1168
      %1170 = vmatmul.f32.gmra.mxu0 %v389
      %v1171 = vpop.f32.mrf.mxu0
      %v1172 = vadd.f32 0.0, %v1171
      %1173 = vmatmul.f32.gmra.mxu0 %v391
      %v1174 = vpop.f32.mrf.mxu0
      %v1175 = vadd.f32 0.0, %v1174
      %1176 = vmatmul.f32.gmra.mxu0 %v393
      %v1177 = vpop.f32.mrf.mxu0
      %v1178 = vadd.f32 0.0, %v1177
      %1179 = vmatmul.f32.gmra.mxu0 %v395
      %v1180 = vpop.f32.mrf.mxu0
      %v1181 = vadd.f32 0.0, %v1180
      %1182 = vmatmul.f32.gmra.mxu0 %v397
      %v1183 = vpop.f32.mrf.mxu0
      %v1184 = vadd.f32 0.0, %v1183
      %1185 = vmatmul.f32.gmra.mxu0 %v399
      %v1186 = vpop.f32.mrf.mxu0
      %v1187 = vadd.f32 0.0, %v1186
      %1188 = vmatmul.f32.gmra.mxu0 %v837
      %v1189 = vpop.f32.mrf.mxu0
      %v1190 = vadd.f32 0.0, %v1189
      %1191 = vmatmul.f32.gmra.mxu0 %v839
      %v1192 = vpop.f32.mrf.mxu0
      %v1193 = vadd.f32 0.0, %v1192
      %1194 = vmatmul.f32.gmra.mxu0 %v1132
      %v1195 = vpop.f32.mrf.mxu0
      %v1196 = vadd.f32 0.0, %v1195
      %1197 = vmatmul.f32.gmra.mxu0 %v1134
      %v1198 = vpop.f32.mrf.mxu0
      %v1199 = vadd.f32 0.0, %v1198
      %1200 = vdwg.mxu0
      %v1201 = vadd.f32 %v1101, %v1154
      %v1202 = vadd.f32 %v1102, %v1157
      %v1203 = vadd.f32 %v1103, %v1160
      %v1204 = vadd.f32 %v1104, %v1163
      %v1205 = vadd.f32 %v1105, %v1166
      %v1206 = vadd.f32 %v1106, %v1169
      %v1207 = vadd.f32 %v1107, %v1172
      %v1208 = vadd.f32 %v1108, %v1175
      %v1209 = vadd.f32 %v1109, %v1178
      %v1210 = vadd.f32 %v1110, %v1181
      %v1211 = vadd.f32 %v1111, %v1184
      %v1212 = vadd.f32 %v1112, %v1187
      %v1213 = vadd.f32 %v1113, %v1190
      %v1214 = vadd.f32 %v1114, %v1193
      %v1215 = vadd.f32 %v1115, %v1196
      %v1216 = vadd.f32 %v1116, %v1199
      %v1217 = vrot.slane %v283, 2
      %v1218 = vrot.slane %v284, 2
      %v1219 = vsel %vm563, %v1217, %v1218
      %v1220 = vrot.slane %v285, 2
      %v1221 = vsel %vm563, %v1218, %v1220
      %s1222 = scalar_lea.vmem %s1, 512
      %v1223 = vld [vmem:[%s1222] sm:$0xff]
      %v1224 = vld [vmem:[%s1222 + $0x8] sm:$0xff]
      %v1225 = vld [vmem:[%s1222 + $0x10] sm:$0xff]
      %v1226 = vld [vmem:[%s1222 + $0x18] sm:$0xff]
      %v1227 = vld [vmem:[%s1222 + $0x20] sm:$0xff]
      %v1228 = vld [vmem:[%s1222 + $0x28] sm:$0xff]
      %v1229 = vld [vmem:[%s1222 + $0x30] sm:$0xff]
      %v1230 = vld [vmem:[%s1222 + $0x38] sm:$0xff]
      %v1231 = vsel %vm368, %v1219, 0
      %v1233 = vsel %vm368, %v1221, 0
      %1235 = vmatpush.msra.mxu0 0.0
      %1236 = vmatpush.msra.mxu0 0.0
      %1237 = vmatpush.msra.mxu0 0.0
      %1238 = vmatpush.msra.mxu0 0.0
      %1239 = vmatpush.msra.mxu0 0.0
      %1240 = vmatpush.msra.mxu0 0.0
      %1241 = vmatpush.msra.mxu0 0.0
      %1242 = vmatpush.msra.mxu0 0.0
      %1243 = vmatpush.msra.mxu0 %v1230
      %1244 = vmatpush.msra.mxu0 %v1229
      %1245 = vmatpush.msra.mxu0 %v1228
      %1246 = vmatpush.msra.mxu0 %v1227
      %1247 = vmatpush.msra.mxu0 %v1226
      %1248 = vmatpush.msra.mxu0 %v1225
      %1249 = vmatpush.msra.mxu0 %v1224
      %1250 = vmatpush.msra.mxu0 %v1223
      %1251 = vmatmul.f32.gmra.mxu0 %v621
      %v1252 = vpop.f32.mrf.mxu0
      %v1253 = vadd.f32 0.0, %v1252
      %1254 = vmatmul.f32.gmra.mxu0 %v623
      %v1255 = vpop.f32.mrf.mxu0
      %v1256 = vadd.f32 0.0, %v1255
      %1257 = vmatmul.f32.gmra.mxu0 %v625
      %v1258 = vpop.f32.mrf.mxu0
      %v1259 = vadd.f32 0.0, %v1258
      %1260 = vmatmul.f32.gmra.mxu0 %v627
      %v1261 = vpop.f32.mrf.mxu0
      %v1262 = vadd.f32 0.0, %v1261
      %1263 = vmatmul.f32.gmra.mxu0 %v629
      %v1264 = vpop.f32.mrf.mxu0
      %v1265 = vadd.f32 0.0, %v1264
      %1266 = vmatmul.f32.gmra.mxu0 %v631
      %v1267 = vpop.f32.mrf.mxu0
      %v1268 = vadd.f32 0.0, %v1267
      %1269 = vmatmul.f32.gmra.mxu0 %v633
      %v1270 = vpop.f32.mrf.mxu0
      %v1271 = vadd.f32 0.0, %v1270
      %1272 = vmatmul.f32.gmra.mxu0 %v635
      %v1273 = vpop.f32.mrf.mxu0
      %v1274 = vadd.f32 0.0, %v1273
      %1275 = vmatmul.f32.gmra.mxu0 %v637
      %v1276 = vpop.f32.mrf.mxu0
      %v1277 = vadd.f32 0.0, %v1276
      %1278 = vmatmul.f32.gmra.mxu0 %v639
      %v1279 = vpop.f32.mrf.mxu0
      %v1280 = vadd.f32 0.0, %v1279
      %1281 = vmatmul.f32.gmra.mxu0 %v641
      %v1282 = vpop.f32.mrf.mxu0
      %v1283 = vadd.f32 0.0, %v1282
      %1284 = vmatmul.f32.gmra.mxu0 %v643
      %v1285 = vpop.f32.mrf.mxu0
      %v1286 = vadd.f32 0.0, %v1285
      %1287 = vmatmul.f32.gmra.mxu0 %v936
      %v1288 = vpop.f32.mrf.mxu0
      %v1289 = vadd.f32 0.0, %v1288
      %1290 = vmatmul.f32.gmra.mxu0 %v938
      %v1291 = vpop.f32.mrf.mxu0
      %v1292 = vadd.f32 0.0, %v1291
      %1293 = vmatmul.f32.gmra.mxu0 %v1231
      %v1294 = vpop.f32.mrf.mxu0
      %v1295 = vadd.f32 0.0, %v1294
      %1296 = vmatmul.f32.gmra.mxu0 %v1233
      %v1297 = vpop.f32.mrf.mxu0
      %v1298 = vadd.f32 0.0, %v1297
      %1299 = vdwg.mxu0
      %v1300 = vadd.f32 %v1201, %v1253
      %v1301 = vadd.f32 %v1202, %v1256
      %v1302 = vadd.f32 %v1203, %v1259
      %v1303 = vadd.f32 %v1204, %v1262
      %v1304 = vadd.f32 %v1205, %v1265
      %v1305 = vadd.f32 %v1206, %v1268
      %v1306 = vadd.f32 %v1207, %v1271
      %v1307 = vadd.f32 %v1208, %v1274
      %v1308 = vadd.f32 %v1209, %v1277
      %v1309 = vadd.f32 %v1210, %v1280
      %v1310 = vadd.f32 %v1211, %v1283
      %v1311 = vadd.f32 %v1212, %v1286
      %v1312 = vadd.f32 %v1213, %v1289
      %v1313 = vadd.f32 %v1214, %v1292
      %v1314 = vadd.f32 %v1215, %v1295
      %v1315 = vadd.f32 %v1216, %v1298
      %v1316 = vld [vmem:[%s2] sm:$0x1]
      %v1318 = vperm.slane %v1316, 0
      %v1320 = vadd.f32 %v1300, %v1318
      %v1321 = vadd.f32 %v1301, %v1318
      %v1322 = vadd.f32 %v1302, %v1318
      %v1323 = vadd.f32 %v1303, %v1318
      %v1324 = vadd.f32 %v1304, %v1318
      %v1325 = vadd.f32 %v1305, %v1318
      %v1326 = vadd.f32 %v1306, %v1318
      %v1327 = vadd.f32 %v1307, %v1318
      %v1328 = vadd.f32 %v1308, %v1318
      %v1329 = vadd.f32 %v1309, %v1318
      %v1330 = vadd.f32 %v1310, %v1318
      %v1331 = vadd.f32 %v1311, %v1318
      %v1332 = vadd.f32 %v1312, %v1318
      %v1333 = vadd.f32 %v1313, %v1318
      %v1334 = vadd.f32 %v1314, %v1318
      %v1335 = vadd.f32 %v1315, %v1318
      %vm1336 = vcmask 261120
      %1337 = vst.msk [vmem:[%s246] sm:$0xff] %vm1336, %v1320
      %1338 = vst.msk [vmem:[%s246 + $0x8] sm:$0xff] %vm1336, %v1321
      %1339 = vst.msk [vmem:[%s246 + $0x10] sm:$0xff] %vm1336, %v1322
      %1340 = vst.msk [vmem:[%s246 + $0x18] sm:$0xff] %vm1336, %v1323
      %1341 = vst.msk [vmem:[%s246 + $0x20] sm:$0xff] %vm1336, %v1324
      %1342 = vst.msk [vmem:[%s246 + $0x28] sm:$0xff] %vm1336, %v1325
      %1343 = vst.msk [vmem:[%s246 + $0x30] sm:$0xff] %vm1336, %v1326
      %1344 = vst.msk [vmem:[%s246 + $0x38] sm:$0xff] %vm1336, %v1327
      %1345 = vst.msk [vmem:[%s246 + $0x40] sm:$0xff] %vm1336, %v1328
      %1346 = vst.msk [vmem:[%s246 + $0x48] sm:$0xff] %vm1336, %v1329
      %1347 = vst.msk [vmem:[%s246 + $0x50] sm:$0xff] %vm1336, %v1330
      %1348 = vst.msk [vmem:[%s246 + $0x58] sm:$0xff] %vm1336, %v1331
      %1349 = vst.msk [vmem:[%s246 + $0x60] sm:$0xff] %vm1336, %v1332
      %1350 = vst.msk [vmem:[%s246 + $0x68] sm:$0xff] %vm1336, %v1333
      %1351 = vst.msk [vmem:[%s246 + $0x70] sm:$0xff] %vm1336, %v1334
      %1352 = vst.msk [vmem:[%s246 + $0x78] sm:$0xff] %vm1336, %v1335
      %v1353 = vsel %vm1336, %v1320, 0.0
      %v1354 = vsel %vm1336, %v1321, 0.0
      %v1355 = vadd.f32 %v1353, %v1354
      %v1356 = vsel %vm1336, %v1322, 0.0
      %v1357 = vadd.f32 %v1355, %v1356
      %v1358 = vsel %vm1336, %v1323, 0.0
      %v1359 = vadd.f32 %v1357, %v1358
      %v1360 = vsel %vm1336, %v1324, 0.0
      %v1361 = vadd.f32 %v1359, %v1360
      %v1362 = vsel %vm1336, %v1325, 0.0
      %v1363 = vadd.f32 %v1361, %v1362
      %v1364 = vsel %vm1336, %v1326, 0.0
      %v1365 = vadd.f32 %v1363, %v1364
      %v1366 = vsel %vm1336, %v1327, 0.0
      %v1367 = vadd.f32 %v1365, %v1366
      %v1368 = vsel %vm1336, %v1328, 0.0
      %v1369 = vadd.f32 %v1367, %v1368
      %v1370 = vsel %vm1336, %v1329, 0.0
      %v1371 = vadd.f32 %v1369, %v1370
      %v1372 = vsel %vm1336, %v1330, 0.0
      %v1373 = vadd.f32 %v1371, %v1372
      %v1374 = vsel %vm1336, %v1331, 0.0
      %v1375 = vadd.f32 %v1373, %v1374
      %v1376 = vsel %vm1336, %v1332, 0.0
      %v1377 = vadd.f32 %v1375, %v1376
      %v1378 = vsel %vm1336, %v1333, 0.0
      %v1379 = vadd.f32 %v1377, %v1378
      %v1380 = vsel %vm1336, %v1334, 0.0
      %v1381 = vadd.f32 %v1379, %v1380
      %v1382 = vsel %vm1336, %v1335, 0.0
      %v1383 = vadd.f32 %v1381, %v1382
      %v1384 = vrot.slane %v1383, 4
      %v1385 = vadd.f32 %v1383, %v1384
      %v1386 = vrot.slane %v1385, 2
      %v1387 = vadd.f32 %v1385, %v1386
      %v1388 = vrot.slane %v1387, 1
      %v1389 = vadd.f32 %v1387, %v1388
      %vm1390 = vcmask 253952
      %1391 = vst.msk [vmem:[%s255] sm:$0x1] %vm1390, %v1389
      %v1392 = vmul.f32 %v1320, %v1320
      %v1393 = vmul.f32 %v1321, %v1321
      %v1394 = vmul.f32 %v1322, %v1322
      %v1395 = vmul.f32 %v1323, %v1323
      %v1396 = vmul.f32 %v1324, %v1324
      %v1397 = vmul.f32 %v1325, %v1325
      %v1398 = vmul.f32 %v1326, %v1326
      %v1399 = vmul.f32 %v1327, %v1327
      %v1400 = vmul.f32 %v1328, %v1328
      %v1401 = vmul.f32 %v1329, %v1329
      %v1402 = vmul.f32 %v1330, %v1330
      %v1403 = vmul.f32 %v1331, %v1331
      %v1404 = vmul.f32 %v1332, %v1332
      %v1405 = vmul.f32 %v1333, %v1333
      %v1406 = vmul.f32 %v1334, %v1334
      %v1407 = vmul.f32 %v1335, %v1335
      %v1408 = vsel %vm1336, %v1392, 0.0
      %v1409 = vsel %vm1336, %v1393, 0.0
      %v1410 = vadd.f32 %v1408, %v1409
      %v1411 = vsel %vm1336, %v1394, 0.0
      %v1412 = vadd.f32 %v1410, %v1411
      %v1413 = vsel %vm1336, %v1395, 0.0
      %v1414 = vadd.f32 %v1412, %v1413
      %v1415 = vsel %vm1336, %v1396, 0.0
      %v1416 = vadd.f32 %v1414, %v1415
      %v1417 = vsel %vm1336, %v1397, 0.0
      %v1418 = vadd.f32 %v1416, %v1417
      %v1419 = vsel %vm1336, %v1398, 0.0
      %v1420 = vadd.f32 %v1418, %v1419
      %v1421 = vsel %vm1336, %v1399, 0.0
      %v1422 = vadd.f32 %v1420, %v1421
      %v1423 = vsel %vm1336, %v1400, 0.0
      %v1424 = vadd.f32 %v1422, %v1423
      %v1425 = vsel %vm1336, %v1401, 0.0
      %v1426 = vadd.f32 %v1424, %v1425
      %v1427 = vsel %vm1336, %v1402, 0.0
      %v1428 = vadd.f32 %v1426, %v1427
      %v1429 = vsel %vm1336, %v1403, 0.0
      %v1430 = vadd.f32 %v1428, %v1429
      %v1431 = vsel %vm1336, %v1404, 0.0
      %v1432 = vadd.f32 %v1430, %v1431
      %v1433 = vsel %vm1336, %v1405, 0.0
      %v1434 = vadd.f32 %v1432, %v1433
      %v1435 = vsel %vm1336, %v1406, 0.0
      %v1436 = vadd.f32 %v1434, %v1435
      %v1437 = vsel %vm1336, %v1407, 0.0
      %v1438 = vadd.f32 %v1436, %v1437
      %v1439 = vrot.slane %v1438, 4
      %v1440 = vadd.f32 %v1438, %v1439
      %v1441 = vrot.slane %v1440, 2
      %v1442 = vadd.f32 %v1440, %v1441
      %v1443 = vrot.slane %v1442, 1
      %v1444 = vadd.f32 %v1442, %v1443
      %1445 = vst.msk [vmem:[%s255 + $0x1] sm:$0x1] %vm1390, %v1444
      %s1446 = smul.u32 16, %s21
      %p1447 = scmp.lt.s32.totalorder %s20, 1
      %s1448 = scalar_select %p1447, %s20, 1
      %p1449 = scmp.lt.s32.totalorder %s1446, 31
      %s1450 = scalar_select %p1449, %s1446, 31
      %s1451 = smul.addr %s1448, 32
      %s1452 = sadd.s32 %s1450, %s1451
      %s1453 = smul.addr %s1452, 8
      %s1454 = scalar_lea.vmem %s3, %s1453
      %p1455 = scmp.lt.s32.totalorder %s20, 1
      %s1456 = scalar_select %p1455, %s20, 1
      %p1457 = scmp.lt.s32.totalorder %s21, 1
      %s1458 = scalar_select %p1457, %s21, 1
      %s1459 = smul.addr %s1456, 2
      %s1460 = sadd.s32 %s1458, %s1459
      %s1461 = smul.addr %s1460, 2
      %s1462 = scalar_lea.vmem %s4, %s1461
      // Predicated region
      $region33: #{unet_decoder_forward.16} parent=31 // pred_check
        %p1463 = pneg %p118
      $region34: #{unet_decoder_forward.16} parent=31 // pred_check_branch
        %1465 = sbr.rel (%p1463) target = $region36
      $region35: #{unet_decoder_forward.16} parent=31 // pred_region
        %s1466 = smul.u32 16, %s21
      $region36: #{unet_decoder_forward.16} parent=31 // pred_fallthru
        _
      // Predicated region
      $region37: #{unet_decoder_forward.16} parent=31 // pred_check
        %p1467 = pneg %p146
      $region38: #{unet_decoder_forward.16} parent=31 // pred_check_branch
        %1469 = sbr.rel (%p1467) target = $region40
      $region39: #{unet_decoder_forward.16} parent=31 // pred_region
        _
      $region40: #{unet_decoder_forward.16} parent=31 // pred_fallthru
        _
    $region32: #{unet_decoder_forward.16} parent=5 // pred_fallthru
      _
    %p1470 = scmp.le.s32.totalorder 2, %s11
    // Predicated region
    $region41: #{unet_decoder_forward.16} parent=5 // pred_check
      %p1471 = pneg %p1470
    $region42: #{unet_decoder_forward.16} parent=5 // pred_check_branch
      %1473 = sbr.rel (%p1471) target = $region44
    $region43: #{unet_decoder_forward.16} parent=5 // pred_region
      %s1474 = ssub.s32 %s11, 2
      // Predicated region
      $region45: #{unet_decoder_forward.16} parent=43 // pred_check
        %p1475 = pneg %p124
      $region46: #{unet_decoder_forward.16} parent=43 // pred_check_branch
        %1477 = sbr.rel (%p1475) target = $region48
      $region47: #{unet_decoder_forward.16} parent=43 // pred_region
        %s1478 = smul.u32 16, %s23
        %p1479 = scmp.lt.s32.totalorder %s22, 1
        %s1480 = scalar_select %p1479, %s22, 1
        %p1481 = scmp.lt.s32.totalorder %s1478, 31
        %s1482 = scalar_select %p1481, %s1478, 31
        %s1483 = smul.addr %s1480, 32
        %s1484 = sadd.s32 %s1482, %s1483
        %s1485 = smul.addr %s1484, 8
        %s1486 = scalar_lea.vmem %s3, %s1485
      $region48: #{unet_decoder_forward.16} parent=43 // pred_fallthru
        _
      // Predicated region
      $region49: #{unet_decoder_forward.16} parent=43 // pred_check
        %p1487 = pneg %p152
      $region50: #{unet_decoder_forward.16} parent=43 // pred_check_branch
        %1489 = sbr.rel (%p1487) target = $region52
      $region51: #{unet_decoder_forward.16} parent=43 // pred_region
        %p1490 = scmp.lt.s32.totalorder %s22, 1
        %s1491 = scalar_select %p1490, %s22, 1
        %p1492 = scmp.lt.s32.totalorder %s23, 1
        %s1493 = scalar_select %p1492, %s23, 1
        %s1494 = smul.addr %s1491, 2
        %s1495 = sadd.s32 %s1493, %s1494
        %s1496 = smul.addr %s1495, 2
        %s1497 = scalar_lea.vmem %s4, %s1496
      $region52: #{unet_decoder_forward.16} parent=43 // pred_fallthru
        _
    $region44: #{unet_decoder_forward.16} parent=5 // pred_fallthru
      _
  $region6: #{unet_decoder_forward.16} parent=0 // loop_footer
    %s15 = sadd.s32 1, %s11
  $region7: #{unet_decoder_forward.16} parent=0 // loop_footer_branch
    %10 = sbr.rel target = $region3
  $region8: #{unet_decoder_forward.16} parent=0 // loop_exit
    _

// kernel: unet_decoder_forward.18
$region0: #{unet_decoder_forward.18}
  #allocation0 [shape = 'u32[]', space=smem, size = 0x4, offset = 0x4, fixed_abs, tag = 'smem constant byte address 0x4 - core index']
  #allocation1 [shape = 'u32[72,128]{1,0:T(1,128)}', space=vmem, size = 0x9000, scoped, tag = 'internal scratch']
  %s0 = inlined_call_operand.vmem [shape: f32[2,2,10,18,32], index: 0, kind: input, shape index: {}]
  %s1 = inlined_call_operand.vmem [shape: f32[9,32,32], index: 1, kind: input, shape index: {}]
  %s2 = inlined_call_operand.vmem [shape: f32[1,32], index: 2, kind: input, shape index: {}]
  %s3 = inlined_call_operand.vmem [shape: f32[2,256,32], index: 3, kind: output, shape index: {0}]
  %s4 = inlined_call_operand.vmem [shape: f32[2,2,2,32], index: 4, kind: output, shape index: {1}]
  %5 = xla_tuple %s3, %s4
  %s6 = sld [smem:[#allocation0]]
  $region53: #{unet_decoder_forward.18} parent=0
    _
  %s8 = ssub.s32 1, %s6
  %s9 = scalar_select 0, %s8, %s6
  loop: start=0, step=1, limit=6
  $region2: #{unet_decoder_forward.18} parent=0 // loop_pre_header
    _
  $region3: #{unet_decoder_forward.18} parent=0 // loop_header
    %s11 = sphi 0, %s15
    %p12 = scmp.ge.s32.totalorder %s11, 6
    %s18 = sphi 0, %s30
    %s19 = sphi 0, %s26
    %s20 = sphi 0, %s18
    %s21 = sphi 0, %s19
    %s22 = sphi 0, %s20
    %s23 = sphi 0, %s21
    %s35 = sphi 0, %s37
    %s38 = sphi 0, %s35
    %s39 = sphi 0, %s38
    %s55 = sphi 0, %s39
    %s59 = sphi 0, %s59
    %s61 = sphi 0, %s59
    %s62 = sphi 0, %s61
    %s76 = sphi 0, %s62
    %s80 = sphi 0, %s80
    %s82 = sphi 0, %s80
    %s83 = sphi 0, %s82
    %s97 = sphi 0, %s83
    %s105 = sphi 0, %s107
    %s108 = sphi 0, %s105
    %s109 = sphi 0, %s108
    %s125 = sphi 0, %s109
    %s133 = sphi 0, %s135
    %s136 = sphi 0, %s133
    %s137 = sphi 0, %s136
    %s153 = sphi 0, %s137
  $region4: #{unet_decoder_forward.18} parent=0 // loop_header_branch
    %14 = sbr.rel (%p12) target = $region8
  $region5: #{unet_decoder_forward.18} parent=0 // loop_body
    %s16 = ssub.s32 %s11, 1
    %s17 = ssub.s32 %s11, 2
    %s24 = sadd.s32 1, %s19
    %p25 = scmp.ge.s32.totalorder %s24, 2
    %s26 = scalar_select %p25, 0, %s24
    %s27 = sadd.s32 1, %s18
    %s28 = scalar_select %p25, %s27, %s18
    %p29 = scmp.ge.s32.totalorder %s28, 2
    %s30 = scalar_select %p29, 0, %s28
    %s31 = ssub.s32 %s18, %s30
    %s32 = ssub.s32 %s19, %s26
    %s33 = sor.u32 %s31, %s32
    %p34 = scmp.eq.s32.totalorder %s33, 0
    %s36 = sadd.s32 %s35, 1
    %s37 = scalar_select %p34, %s35, %s36
    %p40 = pneg %p34
    %p41 = scmp.eq.s32.totalorder %s11, 3
    %p42 = por %p40, %p41
    %p43 = scmp.ne.s32.totalorder %s35, %s38
    %p44 = scmp.eq.s32.totalorder %s11, 0
    %p45 = por %p43, %p44
    %p46 = scmp.ne.s32.totalorder %s35, %s38
    %p47 = scmp.eq.s32.totalorder %s16, 3
    %p48 = por %p46, %p47
    %p49 = scmp.ne.s32.totalorder %s38, %s39
    %p50 = scmp.eq.s32.totalorder %s16, 0
    %p51 = por %p49, %p50
    %p52 = scmp.ne.s32.totalorder %s38, %s39
    %p53 = scmp.eq.s32.totalorder %s17, 3
    %p54 = por %p52, %p53
    %p56 = scmp.ne.s32.totalorder %s39, %s55
    %p57 = scmp.eq.s32.totalorder %s17, 0
    %p58 = por %p56, %p57
    %s60 = sadd.s32 %s59, 1
    %p63 = scmp.eq.s32.totalorder %s11, 3
    %p64 = scmp.ne.s32.totalorder %s59, %s61
    %p65 = scmp.eq.s32.totalorder %s11, 0
    %p66 = por %p64, %p65
    %p67 = scmp.ne.s32.totalorder %s59, %s61
    %p68 = scmp.eq.s32.totalorder %s16, 3
    %p69 = por %p67, %p68
    %p70 = scmp.ne.s32.totalorder %s61, %s62
    %p71 = scmp.eq.s32.totalorder %s16, 0
    %p72 = por %p70, %p71
    %p73 = scmp.ne.s32.totalorder %s61, %s62
    %p74 = scmp.eq.s32.totalorder %s17, 3
    %p75 = por %p73, %p74
    %p77 = scmp.ne.s32.totalorder %s62, %s76
    %p78 = scmp.eq.s32.totalorder %s17, 0
    %p79 = por %p77, %p78
    %s81 = sadd.s32 %s80, 1
    %p84 = scmp.eq.s32.totalorder %s11, 3
    %p85 = scmp.ne.s32.totalorder %s80, %s82
    %p86 = scmp.eq.s32.totalorder %s11, 0
    %p87 = por %p85, %p86
    %p88 = scmp.ne.s32.totalorder %s80, %s82
    %p89 = scmp.eq.s32.totalorder %s16, 3
    %p90 = por %p88, %p89
    %p91 = scmp.ne.s32.totalorder %s82, %s83
    %p92 = scmp.eq.s32.totalorder %s16, 0
    %p93 = por %p91, %p92
    %p94 = scmp.ne.s32.totalorder %s82, %s83
    %p95 = scmp.eq.s32.totalorder %s17, 3
    %p96 = por %p94, %p95
    %p98 = scmp.ne.s32.totalorder %s83, %s97
    %p99 = scmp.eq.s32.totalorder %s17, 0
    %p100 = por %p98, %p99
    %s101 = ssub.s32 %s18, %s30
    %s102 = ssub.s32 %s19, %s26
    %s103 = sor.u32 %s101, %s102
    %p104 = scmp.eq.s32.totalorder %s103, 0
    %s106 = sadd.s32 %s105, 1
    %s107 = scalar_select %p104, %s105, %s106
    %p110 = pneg %p104
    %p111 = scmp.eq.s32.totalorder %s11, 3
    %p112 = por %p110, %p111
    %p113 = scmp.ne.s32.totalorder %s105, %s108
    %p114 = scmp.eq.s32.totalorder %s11, 0
    %p115 = por %p113, %p114
    %p116 = scmp.ne.s32.totalorder %s105, %s108
    %p117 = scmp.eq.s32.totalorder %s16, 3
    %p118 = por %p116, %p117
    %p119 = scmp.ne.s32.totalorder %s108, %s109
    %p120 = scmp.eq.s32.totalorder %s16, 0
    %p121 = por %p119, %p120
    %p122 = scmp.ne.s32.totalorder %s108, %s109
    %p123 = scmp.eq.s32.totalorder %s17, 3
    %p124 = por %p122, %p123
    %p126 = scmp.ne.s32.totalorder %s109, %s125
    %p127 = scmp.eq.s32.totalorder %s17, 0
    %p128 = por %p126, %p127
    %s129 = ssub.s32 %s18, %s30
    %s130 = ssub.s32 %s19, %s26
    %s131 = sor.u32 %s129, %s130
    %p132 = scmp.eq.s32.totalorder %s131, 0
    %s134 = sadd.s32 %s133, 1
    %s135 = scalar_select %p132, %s133, %s134
    %p138 = pneg %p132
    %p139 = scmp.eq.s32.totalorder %s11, 3
    %p140 = por %p138, %p139
    %p141 = scmp.ne.s32.totalorder %s133, %s136
    %p142 = scmp.eq.s32.totalorder %s11, 0
    %p143 = por %p141, %p142
    %p144 = scmp.ne.s32.totalorder %s133, %s136
    %p145 = scmp.eq.s32.totalorder %s16, 3
    %p146 = por %p144, %p145
    %p147 = scmp.ne.s32.totalorder %s136, %s137
    %p148 = scmp.eq.s32.totalorder %s16, 0
    %p149 = por %p147, %p148
    %p150 = scmp.ne.s32.totalorder %s136, %s137
    %p151 = scmp.eq.s32.totalorder %s17, 3
    %p152 = por %p150, %p151
    %p154 = scmp.ne.s32.totalorder %s137, %s153
    %p155 = scmp.eq.s32.totalorder %s17, 0
    %p156 = por %p154, %p155
    %p157 = scmp.le.s32.totalorder 1, %s11
    %p158 = scmp.lt.s32.totalorder %s11, 5
    %p159 = pnand %p157, %p158
    %p160 = pneg %p159
    // Predicated region
    $region9: #{unet_decoder_forward.18} parent=5 // pred_check
      _
    $region10: #{unet_decoder_forward.18} parent=5 // pred_check_branch
      %162 = sbr.rel (%p159) target = $region12
    $region11: #{unet_decoder_forward.18} parent=5 // pred_region
      %s163 = ssub.s32 %s11, 1
      // Predicated region
      $region13: #{unet_decoder_forward.18} parent=11 // pred_check
        %p164 = pneg %p72
      $region14: #{unet_decoder_forward.18} parent=11 // pred_check_branch
        %166 = sbr.rel (%p164) target = $region16
      $region15: #{unet_decoder_forward.18} parent=11 // pred_region
        _
      $region16: #{unet_decoder_forward.18} parent=11 // pred_fallthru
        _
      // Predicated region
      $region17: #{unet_decoder_forward.18} parent=11 // pred_check
        %p167 = pneg %p93
      $region18: #{unet_decoder_forward.18} parent=11 // pred_check_branch
        %169 = sbr.rel (%p167) target = $region20
      $region19: #{unet_decoder_forward.18} parent=11 // pred_region
        _
      $region20: #{unet_decoder_forward.18} parent=11 // pred_fallthru
        _
    $region12: #{unet_decoder_forward.18} parent=5 // pred_fallthru
      _
    %p170 = scmp.lt.s32.totalorder %s11, 4
    // Predicated region
    $region21: #{unet_decoder_forward.18} parent=5 // pred_check
      %p171 = pneg %p170
    $region22: #{unet_decoder_forward.18} parent=5 // pred_check_branch
      %173 = sbr.rel (%p171) target = $region24
    $region23: #{unet_decoder_forward.18} parent=5 // pred_region
      // Predicated region
      $region25: #{unet_decoder_forward.18} parent=23 // pred_check
        %p174 = pneg %p45
      $region26: #{unet_decoder_forward.18} parent=23 // pred_check_branch
        %176 = sbr.rel (%p174) target = $region28
      $region27: #{unet_decoder_forward.18} parent=23 // pred_region
        %p177 = scmp.lt.s32.totalorder %s18, 1
        %s178 = scalar_select %p177, %s18, 1
        %p179 = scmp.lt.s32.totalorder %s19, 1
        %s180 = scalar_select %p179, %s19, 1
        %s181 = smul.addr %s180, 30
        %s182 = smul.addr %s178, 60
        %s183 = sadd.s32 %s181, %s182
        %s184 = smul.addr %s183, 8
        %s185 = scalar_lea.vmem %s0, %s184
      $region28: #{unet_decoder_forward.18} parent=23 // pred_fallthru
        _
    $region24: #{unet_decoder_forward.18} parent=5 // pred_fallthru
      _
    %p186 = scmp.le.s32.totalorder 1, %s11
    %p187 = scmp.lt.s32.totalorder %s11, 5
    %p188 = pnand %p186, %p187
    %p189 = pneg %p188
    // Predicated region
    $region29: #{unet_decoder_forward.18} parent=5 // pred_check
      _
    $region30: #{unet_decoder_forward.18} parent=5 // pred_check_branch
      %191 = sbr.rel (%p188) target = $region32
    $region31: #{unet_decoder_forward.18} parent=5 // pred_region
      %s192 = ssub.s32 %s11, 1
      %p193 = scmp.lt.s32.totalorder %s20, 1
      %s194 = scalar_select %p193, %s20, 1
      %p195 = scmp.lt.s32.totalorder %s21, 1
      %s196 = scalar_select %p195, %s21, 1
      %s197 = smul.addr %s196, 30
      %s198 = smul.addr %s194, 60
      %s199 = sadd.s32 %s197, %s198
      %s200 = smul.addr %s199, 8
      %s201 = scalar_lea.vmem %s0, %s200
      %p202 = pneg %p51
      %p203 = pneg %p48
      %p204 = pneg %p72
      %p205 = pneg %p69
      %p206 = pneg %p93
      %p207 = pneg %p90
      %p208 = pneg %p121
      %p209 = pneg %p118
      %s210 = smul.u32 16, %s21
      %p211 = scmp.lt.s32.totalorder %s20, 1
      %s212 = scalar_select %p211, %s20, 1
      %p213 = scmp.lt.s32.totalorder %s210, 31
      %s214 = scalar_select %p213, %s210, 31
      %s215 = smul.addr %s212, 32
      %s216 = sadd.s32 %s214, %s215
      %s217 = smul.addr %s216, 8
      %s218 = scalar_lea.vmem %s3, %s217
      %p219 = pneg %p149
      %p220 = pneg %p146
      %p221 = scmp.lt.s32.totalorder %s20, 1
      %s222 = scalar_select %p221, %s20, 1
      %p223 = scmp.lt.s32.totalorder %s21, 1
      %s224 = scalar_select %p223, %s21, 1
      %s225 = smul.addr %s222, 2
      %s226 = sadd.s32 %s224, %s225
      %s227 = smul.addr %s226, 2
      %s228 = scalar_lea.vmem %s4, %s227
      %p229 = scmp.lt.s32.totalorder %s20, 1
      %s230 = scalar_select %p229, %s20, 1
      %p231 = scmp.lt.s32.totalorder %s21, 1
      %s232 = scalar_select %p231, %s21, 1
      %s233 = smul.addr %s232, 30
      %s234 = smul.addr %s230, 60
      %s235 = sadd.s32 %s233, %s234
      %s236 = smul.addr %s235, 8
      %s237 = scalar_lea.vmem %s0, %s236
      %s238 = smul.u32 16, %s21
      %p239 = scmp.lt.s32.totalorder %s20, 1
      %s240 = scalar_select %p239, %s20, 1
      %p241 = scmp.lt.s32.totalorder %s238, 31
      %s242 = scalar_select %p241, %s238, 31
      %s243 = smul.addr %s240, 32
      %s244 = sadd.s32 %s242, %s243
      %s245 = smul.addr %s244, 8
      %s246 = scalar_lea.vmem %s3, %s245
      %s247 = smul.u32 16, %s21
      %p248 = scmp.lt.s32.totalorder %s20, 1
      %s249 = scalar_select %p248, %s20, 1
      %p250 = scmp.lt.s32.totalorder %s21, 1
      %s251 = scalar_select %p250, %s21, 1
      %s252 = smul.addr %s249, 2
      %s253 = sadd.s32 %s251, %s252
      %s254 = smul.addr %s253, 2
      %s255 = scalar_lea.vmem %s4, %s254
      %v256 = vld [vmem:[%s237] sm:$0xff]
      %v257 = vld [vmem:[%s237 + $0x8] sm:$0xff]
      %v258 = vld [vmem:[%s237 + $0x10] sm:$0x3]
      %v259 = vld [vmem:[%s237 + $0x18] sm:$0xff]
      %v260 = vld [vmem:[%s237 + $0x20] sm:$0xff]
      %v261 = vld [vmem:[%s237 + $0x28] sm:$0x3]
      %v262 = vld [vmem:[%s237 + $0x30] sm:$0xff]
      %v263 = vld [vmem:[%s237 + $0x38] sm:$0xff]
      %v264 = vld [vmem:[%s237 + $0x40] sm:$0x3]
      %v265 = vld [vmem:[%s237 + $0x48] sm:$0xff]
      %v266 = vld [vmem:[%s237 + $0x50] sm:$0xff]
      %v267 = vld [vmem:[%s237 + $0x58] sm:$0x3]
      %v268 = vld [vmem:[%s237 + $0x60] sm:$0xff]
      %v269 = vld [vmem:[%s237 + $0x68] sm:$0xff]
      %v270 = vld [vmem:[%s237 + $0x70] sm:$0x3]
      %v271 = vld [vmem:[%s237 + $0x78] sm:$0xff]
      %v272 = vld [vmem:[%s237 + $0x80] sm:$0xff]
      %v273 = vld [vmem:[%s237 + $0x88] sm:$0x3]
      %v274 = vld [vmem:[%s237 + $0x90] sm:$0xff]
      %v275 = vld [vmem:[%s237 + $0x98] sm:$0xff]
      %v276 = vld [vmem:[%s237 + $0xa0] sm:$0x3]
      %v277 = vld [vmem:[%s237 + $0xa8] sm:$0xff]
      %v278 = vld [vmem:[%s237 + $0xb0] sm:$0xff]
      %v279 = vld [vmem:[%s237 + $0xb8] sm:$0x3]
      %v280 = vld [vmem:[%s237 + $0xc0] sm:$0xff]
      %v281 = vld [vmem:[%s237 + $0xc8] sm:$0xff]
      %v282 = vld [vmem:[%s237 + $0xd0] sm:$0x3]
      %v283 = vld [vmem:[%s237 + $0xd8] sm:$0xff]
      %v284 = vld [vmem:[%s237 + $0xe0] sm:$0xff]
      %v285 = vld [vmem:[%s237 + $0xe8] sm:$0x3]
      %v286 = vld [vmem:[%s1] sm:$0xff]
      %v287 = vld [vmem:[%s1 + $0x8] sm:$0xff]
      %v288 = vld [vmem:[%s1 + $0x10] sm:$0xff]
      %v289 = vld [vmem:[%s1 + $0x18] sm:$0xff]
      %vm314 = vcmask 1046528
      %v315 = vrot.slane %v256, 1
      %v316 = vrot.slane %v257, 1
      %v317 = vsel %vm314, %v315, %v316
      %v318 = vrot.slane %v258, 1
      %v319 = vsel %vm314, %v316, %v318
      %v320 = vrot.slane %v259, 1
      %v321 = vrot.slane %v260, 1
      %v322 = vsel %vm314, %v320, %v321
      %v323 = vrot.slane %v261, 1
      %v324 = vsel %vm314, %v321, %v323
      %v325 = vrot.slane %v262, 1
      %v326 = vrot.slane %v263, 1
      %v327 = vsel %vm314, %v325, %v326
      %v328 = vrot.slane %v264, 1
      %v329 = vsel %vm314, %v326, %v328
      %v330 = vrot.slane %v265, 1
      %v331 = vrot.slane %v266, 1
      %v332 = vsel %vm314, %v330, %v331
      %v333 = vrot.slane %v267, 1
      %v334 = vsel %vm314, %v331, %v333
      %v335 = vrot.slane %v268, 1
      %v336 = vrot.slane %v269, 1
      %v337 = vsel %vm314, %v335, %v336
      %v338 = vrot.slane %v270, 1
      %v339 = vsel %vm314, %v336, %v338
      %v340 = vrot.slane %v271, 1
      %v341 = vrot.slane %v272, 1
      %v342 = vsel %vm314, %v340, %v341
      %v343 = vrot.slane %v273, 1
      %v344 = vsel %vm314, %v341, %v343
      %v345 = vrot.slane %v274, 1
      %v346 = vrot.slane %v275, 1
      %v347 = vsel %vm314, %v345, %v346
      %v348 = vrot.slane %v276, 1
      %v349 = vsel %vm314, %v346, %v348
      %v350 = vrot.slane %v277, 1
      %v351 = vrot.slane %v278, 1
      %v352 = vsel %vm314, %v350, %v351
      %v353 = vrot.slane %v279, 1
      %v354 = vsel %vm314, %v351, %v353
      %s355 = scalar_lea.vmem %s1, 32
      %v356 = vld [vmem:[%s355] sm:$0xff]
      %v357 = vld [vmem:[%s355 + $0x8] sm:$0xff]
      %v358 = vld [vmem:[%s355 + $0x10] sm:$0xff]
      %v359 = vld [vmem:[%s355 + $0x18] sm:$0xff]
      %vm360 = vcmask 261120
      %v361 = vsel %vm360, %v317, 0
      %v363 = vsel %vm360, %v319, 0
      %v365 = vsel %vm360, %v322, 0
      %v367 = vsel %vm360, %v324, 0
      %v369 = vsel %vm360, %v327, 0
      %v371 = vsel %vm360, %v329, 0
      %v373 = vsel %vm360, %v332, 0
      %v375 = vsel %vm360, %v334, 0
      %v377 = vsel %vm360, %v337, 0
      %v379 = vsel %vm360, %v339, 0
      %v381 = vsel %vm360, %v342, 0
      %v383 = vsel %vm360, %v344, 0
      %v385 = vsel %vm360, %v347, 0
      %v387 = vsel %vm360, %v349, 0
      %v389 = vsel %vm360, %v352, 0
      %v391 = vsel %vm360, %v354, 0
      %393 = vmatpush.msra.mxu0 0.0
      %394 = vmatpush.msra.mxu0 0.0
      %395 = vmatpush.msra.mxu0 0.0
      %396 = vmatpush.msra.mxu0 0.0
      %397 = vmatpush.msra.mxu0 0.0
      %398 = vmatpush.msra.mxu0 0.0
      %399 = vmatpush.msra.mxu0 0.0
      %400 = vmatpush.msra.mxu0 0.0
      %401 = vmatpush.msra.mxu0 0.0
      %402 = vmatpush.msra.mxu0 0.0
      %403 = vmatpush.msra.mxu0 0.0
      %404 = vmatpush.msra.mxu0 0.0
      %405 = vmatpush.msra.mxu0 %v359
      %406 = vmatpush.msra.mxu0 %v358
      %407 = vmatpush.msra.mxu0 %v357
      %408 = vmatpush.msra.mxu0 %v356
      %409 = vmatmul.f32.gmra.mxu0 %v361
      %v410 = vpop.f32.mrf.mxu0
      %v411 = vadd.f32 0.0, %v410
      %412 = vmatmul.f32.gmra.mxu0 %v363
      %v413 = vpop.f32.mrf.mxu0
      %v414 = vadd.f32 0.0, %v413
      %415 = vmatmul.f32.gmra.mxu0 %v365
      %v416 = vpop.f32.mrf.mxu0
      %v417 = vadd.f32 0.0, %v416
      %418 = vmatmul.f32.gmra.mxu0 %v367
      %v419 = vpop.f32.mrf.mxu0
      %v420 = vadd.f32 0.0, %v419
      %421 = vmatmul.f32.gmra.mxu0 %v369
      %v422 = vpop.f32.mrf.mxu0
      %v423 = vadd.f32 0.0, %v422
      %424 = vmatmul.f32.gmra.mxu0 %v371
      %v425 = vpop.f32.mrf.mxu0
      %v426 = vadd.f32 0.0, %v425
      %427 = vmatmul.f32.gmra.mxu0 %v373
      %v428 = vpop.f32.mrf.mxu0
      %v429 = vadd.f32 0.0, %v428
      %430 = vmatmul.f32.gmra.mxu0 %v375
      %v431 = vpop.f32.mrf.mxu0
      %v432 = vadd.f32 0.0, %v431
      %433 = vmatmul.f32.gmra.mxu0 %v377
      %v434 = vpop.f32.mrf.mxu0
      %v435 = vadd.f32 0.0, %v434
      %436 = vmatmul.f32.gmra.mxu0 %v379
      %v437 = vpop.f32.mrf.mxu0
      %v438 = vadd.f32 0.0, %v437
      %439 = vmatmul.f32.gmra.mxu0 %v381
      %v440 = vpop.f32.mrf.mxu0
      %v441 = vadd.f32 0.0, %v440
      %442 = vmatmul.f32.gmra.mxu0 %v383
      %v443 = vpop.f32.mrf.mxu0
      %v444 = vadd.f32 0.0, %v443
      %445 = vmatmul.f32.gmra.mxu0 %v385
      %v446 = vpop.f32.mrf.mxu0
      %v447 = vadd.f32 0.0, %v446
      %448 = vmatmul.f32.gmra.mxu0 %v387
      %v449 = vpop.f32.mrf.mxu0
      %v450 = vadd.f32 0.0, %v449
      %451 = vmatmul.f32.gmra.mxu0 %v389
      %v452 = vpop.f32.mrf.mxu0
      %v453 = vadd.f32 0.0, %v452
      %454 = vmatmul.f32.gmra.mxu0 %v391
      %v455 = vpop.f32.mrf.mxu0
      %v456 = vadd.f32 0.0, %v455
      %457 = vdwg.mxu0
      %v458 = vsel %vm360, %v256, 0
      %v460 = vsel %vm360, %v257, 0
      %v462 = vsel %vm360, %v259, 0
      %v464 = vsel %vm360, %v260, 0
      %v466 = vsel %vm360, %v262, 0
      %v468 = vsel %vm360, %v263, 0
      %v470 = vsel %vm360, %v265, 0
      %v472 = vsel %vm360, %v266, 0
      %v474 = vsel %vm360, %v268, 0
      %v476 = vsel %vm360, %v269, 0
      %v478 = vsel %vm360, %v271, 0
      %v480 = vsel %vm360, %v272, 0
      %v482 = vsel %vm360, %v274, 0
      %v484 = vsel %vm360, %v275, 0
      %v486 = vsel %vm360, %v277, 0
      %v488 = vsel %vm360, %v278, 0
      %490 = vmatpush.msra.mxu0 0.0
      %491 = vmatpush.msra.mxu0 0.0
      %492 = vmatpush.msra.mxu0 0.0
      %493 = vmatpush.msra.mxu0 0.0
      %494 = vmatpush.msra.mxu0 0.0
      %495 = vmatpush.msra.mxu0 0.0
      %496 = vmatpush.msra.mxu0 0.0
      %497 = vmatpush.msra.mxu0 0.0
      %498 = vmatpush.msra.mxu0 0.0
      %499 = vmatpush.msra.mxu0 0.0
      %500 = vmatpush.msra.mxu0 0.0
      %501 = vmatpush.msra.mxu0 0.0
      %502 = vmatpush.msra.mxu0 %v289
      %503 = vmatpush.msra.mxu0 %v288
      %504 = vmatpush.msra.mxu0 %v287
      %505 = vmatpush.msra.mxu0 %v286
      %506 = vmatmul.f32.gmra.mxu0 %v458
      %v507 = vpop.f32.mrf.mxu0
      %v508 = vadd.f32 %v411, %v507
      %509 = vmatmul.f32.gmra.mxu0 %v460
      %v510 = vpop.f32.mrf.mxu0
      %v511 = vadd.f32 %v414, %v510
      %512 = vmatmul.f32.gmra.mxu0 %v462
      %v513 = vpop.f32.mrf.mxu0
      %v514 = vadd.f32 %v417, %v513
      %515 = vmatmul.f32.gmra.mxu0 %v464
      %v516 = vpop.f32.mrf.mxu0
      %v517 = vadd.f32 %v420, %v516
      %518 = vmatmul.f32.gmra.mxu0 %v466
      %v519 = vpop.f32.mrf.mxu0
      %v520 = vadd.f32 %v423, %v519
      %521 = vmatmul.f32.gmra.mxu0 %v468
      %v522 = vpop.f32.mrf.mxu0
      %v523 = vadd.f32 %v426, %v522
      %524 = vmatmul.f32.gmra.mxu0 %v470
      %v525 = vpop.f32.mrf.mxu0
      %v526 = vadd.f32 %v429, %v525
      %527 = vmatmul.f32.gmra.mxu0 %v472
      %v528 = vpop.f32.mrf.mxu0
      %v529 = vadd.f32 %v432, %v528
      %530 = vmatmul.f32.gmra.mxu0 %v474
      %v531 = vpop.f32.mrf.mxu0
      %v532 = vadd.f32 %v435, %v531
      %533 = vmatmul.f32.gmra.mxu0 %v476
      %v534 = vpop.f32.mrf.mxu0
      %v535 = vadd.f32 %v438, %v534
      %536 = vmatmul.f32.gmra.mxu0 %v478
      %v537 = vpop.f32.mrf.mxu0
      %v538 = vadd.f32 %v441, %v537
      %539 = vmatmul.f32.gmra.mxu0 %v480
      %v540 = vpop.f32.mrf.mxu0
      %v541 = vadd.f32 %v444, %v540
      %542 = vmatmul.f32.gmra.mxu0 %v482
      %v543 = vpop.f32.mrf.mxu0
      %v544 = vadd.f32 %v447, %v543
      %545 = vmatmul.f32.gmra.mxu0 %v484
      %v546 = vpop.f32.mrf.mxu0
      %v547 = vadd.f32 %v450, %v546
      %548 = vmatmul.f32.gmra.mxu0 %v486
      %v549 = vpop.f32.mrf.mxu0
      %v550 = vadd.f32 %v453, %v549
      %551 = vmatmul.f32.gmra.mxu0 %v488
      %v552 = vpop.f32.mrf.mxu0
      %v553 = vadd.f32 %v456, %v552
      %554 = vdwg.mxu0
      %vm555 = vcmask 1045504
      %v556 = vrot.slane %v256, 2
      %v557 = vrot.slane %v257, 2
      %v558 = vsel %vm555, %v556, %v557
      %v559 = vrot.slane %v258, 2
      %v560 = vsel %vm555, %v557, %v559
      %v561 = vrot.slane %v259, 2
      %v562 = vrot.slane %v260, 2
      %v563 = vsel %vm555, %v561, %v562
      %v564 = vrot.slane %v261, 2
      %v565 = vsel %vm555, %v562, %v564
      %v566 = vrot.slane %v262, 2
      %v567 = vrot.slane %v263, 2
      %v568 = vsel %vm555, %v566, %v567
      %v569 = vrot.slane %v264, 2
      %v570 = vsel %vm555, %v567, %v569
      %v571 = vrot.slane %v265, 2
      %v572 = vrot.slane %v266, 2
      %v573 = vsel %vm555, %v571, %v572
      %v574 = vrot.slane %v267, 2
      %v575 = vsel %vm555, %v572, %v574
      %v576 = vrot.slane %v268, 2
      %v577 = vrot.slane %v269, 2
      %v578 = vsel %vm555, %v576, %v577
      %v579 = vrot.slane %v270, 2
      %v580 = vsel %vm555, %v577, %v579
      %v581 = vrot.slane %v271, 2
      %v582 = vrot.slane %v272, 2
      %v583 = vsel %vm555, %v581, %v582
      %v584 = vrot.slane %v273, 2
      %v585 = vsel %vm555, %v582, %v584
      %v586 = vrot.slane %v274, 2
      %v587 = vrot.slane %v275, 2
      %v588 = vsel %vm555, %v586, %v587
      %v589 = vrot.slane %v276, 2
      %v590 = vsel %vm555, %v587, %v589
      %v591 = vrot.slane %v277, 2
      %v592 = vrot.slane %v278, 2
      %v593 = vsel %vm555, %v591, %v592
      %v594 = vrot.slane %v279, 2
      %v595 = vsel %vm555, %v592, %v594
      %s596 = scalar_lea.vmem %s1, 64
      %v597 = vld [vmem:[%s596] sm:$0xff]
      %v598 = vld [vmem:[%s596 + $0x8] sm:$0xff]
      %v599 = vld [vmem:[%s596 + $0x10] sm:$0xff]
      %v600 = vld [vmem:[%s596 + $0x18] sm:$0xff]
      %v601 = vsel %vm360, %v558, 0
      %v603 = vsel %vm360, %v560, 0
      %v605 = vsel %vm360, %v563, 0
      %v607 = vsel %vm360, %v565, 0
      %v609 = vsel %vm360, %v568, 0
      %v611 = vsel %vm360, %v570, 0
      %v613 = vsel %vm360, %v573, 0
      %v615 = vsel %vm360, %v575, 0
      %v617 = vsel %vm360, %v578, 0
      %v619 = vsel %vm360, %v580, 0
      %v621 = vsel %vm360, %v583, 0
      %v623 = vsel %vm360, %v585, 0
      %v625 = vsel %vm360, %v588, 0
      %v627 = vsel %vm360, %v590, 0
      %v629 = vsel %vm360, %v593, 0
      %v631 = vsel %vm360, %v595, 0
      %633 = vmatpush.msra.mxu0 0.0
      %634 = vmatpush.msra.mxu0 0.0
      %635 = vmatpush.msra.mxu0 0.0
      %636 = vmatpush.msra.mxu0 0.0
      %637 = vmatpush.msra.mxu0 0.0
      %638 = vmatpush.msra.mxu0 0.0
      %639 = vmatpush.msra.mxu0 0.0
      %640 = vmatpush.msra.mxu0 0.0
      %641 = vmatpush.msra.mxu0 0.0
      %642 = vmatpush.msra.mxu0 0.0
      %643 = vmatpush.msra.mxu0 0.0
      %644 = vmatpush.msra.mxu0 0.0
      %645 = vmatpush.msra.mxu0 %v600
      %646 = vmatpush.msra.mxu0 %v599
      %647 = vmatpush.msra.mxu0 %v598
      %648 = vmatpush.msra.mxu0 %v597
      %649 = vmatmul.f32.gmra.mxu0 %v601
      %v650 = vpop.f32.mrf.mxu0
      %v651 = vadd.f32 0.0, %v650
      %652 = vmatmul.f32.gmra.mxu0 %v603
      %v653 = vpop.f32.mrf.mxu0
      %v654 = vadd.f32 0.0, %v653
      %655 = vmatmul.f32.gmra.mxu0 %v605
      %v656 = vpop.f32.mrf.mxu0
      %v657 = vadd.f32 0.0, %v656
      %658 = vmatmul.f32.gmra.mxu0 %v607
      %v659 = vpop.f32.mrf.mxu0
      %v660 = vadd.f32 0.0, %v659
      %661 = vmatmul.f32.gmra.mxu0 %v609
      %v662 = vpop.f32.mrf.mxu0
      %v663 = vadd.f32 0.0, %v662
      %664 = vmatmul.f32.gmra.mxu0 %v611
      %v665 = vpop.f32.mrf.mxu0
      %v666 = vadd.f32 0.0, %v665
      %667 = vmatmul.f32.gmra.mxu0 %v613
      %v668 = vpop.f32.mrf.mxu0
      %v669 = vadd.f32 0.0, %v668
      %670 = vmatmul.f32.gmra.mxu0 %v615
      %v671 = vpop.f32.mrf.mxu0
      %v672 = vadd.f32 0.0, %v671
      %673 = vmatmul.f32.gmra.mxu0 %v617
      %v674 = vpop.f32.mrf.mxu0
      %v675 = vadd.f32 0.0, %v674
      %676 = vmatmul.f32.gmra.mxu0 %v619
      %v677 = vpop.f32.mrf.mxu0
      %v678 = vadd.f32 0.0, %v677
      %679 = vmatmul.f32.gmra.mxu0 %v621
      %v680 = vpop.f32.mrf.mxu0
      %v681 = vadd.f32 0.0, %v680
      %682 = vmatmul.f32.gmra.mxu0 %v623
      %v683 = vpop.f32.mrf.mxu0
      %v684 = vadd.f32 0.0, %v683
      %685 = vmatmul.f32.gmra.mxu0 %v625
      %v686 = vpop.f32.mrf.mxu0
      %v687 = vadd.f32 0.0, %v686
      %688 = vmatmul.f32.gmra.mxu0 %v627
      %v689 = vpop.f32.mrf.mxu0
      %v690 = vadd.f32 0.0, %v689
      %691 = vmatmul.f32.gmra.mxu0 %v629
      %v692 = vpop.f32.mrf.mxu0
      %v693 = vadd.f32 0.0, %v692
      %694 = vmatmul.f32.gmra.mxu0 %v631
      %v695 = vpop.f32.mrf.mxu0
      %v696 = vadd.f32 0.0, %v695
      %697 = vdwg.mxu0
      %v698 = vadd.f32 %v508, %v651
      %v699 = vadd.f32 %v511, %v654
      %v700 = vadd.f32 %v514, %v657
      %v701 = vadd.f32 %v517, %v660
      %v702 = vadd.f32 %v520, %v663
      %v703 = vadd.f32 %v523, %v666
      %v704 = vadd.f32 %v526, %v669
      %v705 = vadd.f32 %v529, %v672
      %v706 = vadd.f32 %v532, %v675
      %v707 = vadd.f32 %v535, %v678
      %v708 = vadd.f32 %v538, %v681
      %v709 = vadd.f32 %v541, %v684
      %v710 = vadd.f32 %v544, %v687
      %v711 = vadd.f32 %v547, %v690
      %v712 = vadd.f32 %v550, %v693
      %v713 = vadd.f32 %v553, %v696
      %s714 = scalar_lea.vmem %s1, 96
      %v715 = vld [vmem:[%s714] sm:$0xff]
      %v716 = vld [vmem:[%s714 + $0x8] sm:$0xff]
      %v717 = vld [vmem:[%s714 + $0x10] sm:$0xff]
      %v718 = vld [vmem:[%s714 + $0x18] sm:$0xff]
      %v720 = vsel %vm360, %v280, 0
      %v723 = vsel %vm360, %v281, 0
      %725 = vmatpush.msra.mxu0 0.0
      %726 = vmatpush.msra.mxu0 0.0
      %727 = vmatpush.msra.mxu0 0.0
      %728 = vmatpush.msra.mxu0 0.0
      %729 = vmatpush.msra.mxu0 0.0
      %730 = vmatpush.msra.mxu0 0.0
      %731 = vmatpush.msra.mxu0 0.0
      %732 = vmatpush.msra.mxu0 0.0
      %733 = vmatpush.msra.mxu0 0.0
      %734 = vmatpush.msra.mxu0 0.0
      %735 = vmatpush.msra.mxu0 0.0
      %736 = vmatpush.msra.mxu0 0.0
      %737 = vmatpush.msra.mxu0 %v718
      %738 = vmatpush.msra.mxu0 %v717
      %739 = vmatpush.msra.mxu0 %v716
      %740 = vmatpush.msra.mxu0 %v715
      %741 = vmatmul.f32.gmra.mxu0 %v462
      %v742 = vpop.f32.mrf.mxu0
      %v743 = vadd.f32 0.0, %v742
      %744 = vmatmul.f32.gmra.mxu0 %v464
      %v745 = vpop.f32.mrf.mxu0
      %v746 = vadd.f32 0.0, %v745
      %747 = vmatmul.f32.gmra.mxu0 %v466
      %v748 = vpop.f32.mrf.mxu0
      %v749 = vadd.f32 0.0, %v748
      %750 = vmatmul.f32.gmra.mxu0 %v468
      %v751 = vpop.f32.mrf.mxu0
      %v752 = vadd.f32 0.0, %v751
      %753 = vmatmul.f32.gmra.mxu0 %v470
      %v754 = vpop.f32.mrf.mxu0
      %v755 = vadd.f32 0.0, %v754
      %756 = vmatmul.f32.gmra.mxu0 %v472
      %v757 = vpop.f32.mrf.mxu0
      %v758 = vadd.f32 0.0, %v757
      %759 = vmatmul.f32.gmra.mxu0 %v474
      %v760 = vpop.f32.mrf.mxu0
      %v761 = vadd.f32 0.0, %v760
      %762 = vmatmul.f32.gmra.mxu0 %v476
      %v763 = vpop.f32.mrf.mxu0
      %v764 = vadd.f32 0.0, %v763
      %765 = vmatmul.f32.gmra.mxu0 %v478
      %v766 = vpop.f32.mrf.mxu0
      %v767 = vadd.f32 0.0, %v766
      %768 = vmatmul.f32.gmra.mxu0 %v480
      %v769 = vpop.f32.mrf.mxu0
      %v770 = vadd.f32 0.0, %v769
      %771 = vmatmul.f32.gmra.mxu0 %v482
      %v772 = vpop.f32.mrf.mxu0
      %v773 = vadd.f32 0.0, %v772
      %774 = vmatmul.f32.gmra.mxu0 %v484
      %v775 = vpop.f32.mrf.mxu0
      %v776 = vadd.f32 0.0, %v775
      %777 = vmatmul.f32.gmra.mxu0 %v486
      %v778 = vpop.f32.mrf.mxu0
      %v779 = vadd.f32 0.0, %v778
      %780 = vmatmul.f32.gmra.mxu0 %v488
      %v781 = vpop.f32.mrf.mxu0
      %v782 = vadd.f32 0.0, %v781
      %783 = vmatmul.f32.gmra.mxu0 %v720
      %v784 = vpop.f32.mrf.mxu0
      %v785 = vadd.f32 0.0, %v784
      %786 = vmatmul.f32.gmra.mxu0 %v723
      %v787 = vpop.f32.mrf.mxu0
      %v788 = vadd.f32 0.0, %v787
      %789 = vdwg.mxu0
      %v790 = vadd.f32 %v698, %v743
      %v791 = vadd.f32 %v699, %v746
      %v792 = vadd.f32 %v700, %v749
      %v793 = vadd.f32 %v701, %v752
      %v794 = vadd.f32 %v702, %v755
      %v795 = vadd.f32 %v703, %v758
      %v796 = vadd.f32 %v704, %v761
      %v797 = vadd.f32 %v705, %v764
      %v798 = vadd.f32 %v706, %v767
      %v799 = vadd.f32 %v707, %v770
      %v800 = vadd.f32 %v708, %v773
      %v801 = vadd.f32 %v709, %v776
      %v802 = vadd.f32 %v710, %v779
      %v803 = vadd.f32 %v711, %v782
      %v804 = vadd.f32 %v712, %v785
      %v805 = vadd.f32 %v713, %v788
      %v807 = vrot.slane %v280, 1
      %v808 = vrot.slane %v281, 1
      %v809 = vsel %vm314, %v807, %v808
      %v810 = vrot.slane %v282, 1
      %v811 = vsel %vm314, %v808, %v810
      %s812 = scalar_lea.vmem %s1, 128
      %v813 = vld [vmem:[%s812] sm:$0xff]
      %v814 = vld [vmem:[%s812 + $0x8] sm:$0xff]
      %v815 = vld [vmem:[%s812 + $0x10] sm:$0xff]
      %v816 = vld [vmem:[%s812 + $0x18] sm:$0xff]
      %v817 = vsel %vm360, %v809, 0
      %v819 = vsel %vm360, %v811, 0
      %821 = vmatpush.msra.mxu0 0.0
      %822 = vmatpush.msra.mxu0 0.0
      %823 = vmatpush.msra.mxu0 0.0
      %824 = vmatpush.msra.mxu0 0.0
      %825 = vmatpush.msra.mxu0 0.0
      %826 = vmatpush.msra.mxu0 0.0
      %827 = vmatpush.msra.mxu0 0.0
      %828 = vmatpush.msra.mxu0 0.0
      %829 = vmatpush.msra.mxu0 0.0
      %830 = vmatpush.msra.mxu0 0.0
      %831 = vmatpush.msra.mxu0 0.0
      %832 = vmatpush.msra.mxu0 0.0
      %833 = vmatpush.msra.mxu0 %v816
      %834 = vmatpush.msra.mxu0 %v815
      %835 = vmatpush.msra.mxu0 %v814
      %836 = vmatpush.msra.mxu0 %v813
      %837 = vmatmul.f32.gmra.mxu0 %v365
      %v838 = vpop.f32.mrf.mxu0
      %v839 = vadd.f32 0.0, %v838
      %840 = vmatmul.f32.gmra.mxu0 %v367
      %v841 = vpop.f32.mrf.mxu0
      %v842 = vadd.f32 0.0, %v841
      %843 = vmatmul.f32.gmra.mxu0 %v369
      %v844 = vpop.f32.mrf.mxu0
      %v845 = vadd.f32 0.0, %v844
      %846 = vmatmul.f32.gmra.mxu0 %v371
      %v847 = vpop.f32.mrf.mxu0
      %v848 = vadd.f32 0.0, %v847
      %849 = vmatmul.f32.gmra.mxu0 %v373
      %v850 = vpop.f32.mrf.mxu0
      %v851 = vadd.f32 0.0, %v850
      %852 = vmatmul.f32.gmra.mxu0 %v375
      %v853 = vpop.f32.mrf.mxu0
      %v854 = vadd.f32 0.0, %v853
      %855 = vmatmul.f32.gmra.mxu0 %v377
      %v856 = vpop.f32.mrf.mxu0
      %v857 = vadd.f32 0.0, %v856
      %858 = vmatmul.f32.gmra.mxu0 %v379
      %v859 = vpop.f32.mrf.mxu0
      %v860 = vadd.f32 0.0, %v859
      %861 = vmatmul.f32.gmra.mxu0 %v381
      %v862 = vpop.f32.mrf.mxu0
      %v863 = vadd.f32 0.0, %v862
      %864 = vmatmul.f32.gmra.mxu0 %v383
      %v865 = vpop.f32.mrf.mxu0
      %v866 = vadd.f32 0.0, %v865
      %867 = vmatmul.f32.gmra.mxu0 %v385
      %v868 = vpop.f32.mrf.mxu0
      %v869 = vadd.f32 0.0, %v868
      %870 = vmatmul.f32.gmra.mxu0 %v387
      %v871 = vpop.f32.mrf.mxu0
      %v872 = vadd.f32 0.0, %v871
      %873 = vmatmul.f32.gmra.mxu0 %v389
      %v874 = vpop.f32.mrf.mxu0
      %v875 = vadd.f32 0.0, %v874
      %876 = vmatmul.f32.gmra.mxu0 %v391
      %v877 = vpop.f32.mrf.mxu0
      %v878 = vadd.f32 0.0, %v877
      %879 = vmatmul.f32.gmra.mxu0 %v817
      %v880 = vpop.f32.mrf.mxu0
      %v881 = vadd.f32 0.0, %v880
      %882 = vmatmul.f32.gmra.mxu0 %v819
      %v883 = vpop.f32.mrf.mxu0
      %v884 = vadd.f32 0.0, %v883
      %885 = vdwg.mxu0
      %v886 = vadd.f32 %v790, %v839
      %v887 = vadd.f32 %v791, %v842
      %v888 = vadd.f32 %v792, %v845
      %v889 = vadd.f32 %v793, %v848
      %v890 = vadd.f32 %v794, %v851
      %v891 = vadd.f32 %v795, %v854
      %v892 = vadd.f32 %v796, %v857
      %v893 = vadd.f32 %v797, %v860
      %v894 = vadd.f32 %v798, %v863
      %v895 = vadd.f32 %v799, %v866
      %v896 = vadd.f32 %v800, %v869
      %v897 = vadd.f32 %v801, %v872
      %v898 = vadd.f32 %v802, %v875
      %v899 = vadd.f32 %v803, %v878
      %v900 = vadd.f32 %v804, %v881
      %v901 = vadd.f32 %v805, %v884
      %v902 = vrot.slane %v280, 2
      %v903 = vrot.slane %v281, 2
      %v904 = vsel %vm555, %v902, %v903
      %v905 = vrot.slane %v282, 2
      %v906 = vsel %vm555, %v903, %v905
      %s907 = scalar_lea.vmem %s1, 160
      %v908 = vld [vmem:[%s907] sm:$0xff]
      %v909 = vld [vmem:[%s907 + $0x8] sm:$0xff]
      %v910 = vld [vmem:[%s907 + $0x10] sm:$0xff]
      %v911 = vld [vmem:[%s907 + $0x18] sm:$0xff]
      %v912 = vsel %vm360, %v904, 0
      %v914 = vsel %vm360, %v906, 0
      %916 = vmatpush.msra.mxu0 0.0
      %917 = vmatpush.msra.mxu0 0.0
      %918 = vmatpush.msra.mxu0 0.0
      %919 = vmatpush.msra.mxu0 0.0
      %920 = vmatpush.msra.mxu0 0.0
      %921 = vmatpush.msra.mxu0 0.0
      %922 = vmatpush.msra.mxu0 0.0
      %923 = vmatpush.msra.mxu0 0.0
      %924 = vmatpush.msra.mxu0 0.0
      %925 = vmatpush.msra.mxu0 0.0
      %926 = vmatpush.msra.mxu0 0.0
      %927 = vmatpush.msra.mxu0 0.0
      %928 = vmatpush.msra.mxu0 %v911
      %929 = vmatpush.msra.mxu0 %v910
      %930 = vmatpush.msra.mxu0 %v909
      %931 = vmatpush.msra.mxu0 %v908
      %932 = vmatmul.f32.gmra.mxu0 %v605
      %v933 = vpop.f32.mrf.mxu0
      %v934 = vadd.f32 0.0, %v933
      %935 = vmatmul.f32.gmra.mxu0 %v607
      %v936 = vpop.f32.mrf.mxu0
      %v937 = vadd.f32 0.0, %v936
      %938 = vmatmul.f32.gmra.mxu0 %v609
      %v939 = vpop.f32.mrf.mxu0
      %v940 = vadd.f32 0.0, %v939
      %941 = vmatmul.f32.gmra.mxu0 %v611
      %v942 = vpop.f32.mrf.mxu0
      %v943 = vadd.f32 0.0, %v942
      %944 = vmatmul.f32.gmra.mxu0 %v613
      %v945 = vpop.f32.mrf.mxu0
      %v946 = vadd.f32 0.0, %v945
      %947 = vmatmul.f32.gmra.mxu0 %v615
      %v948 = vpop.f32.mrf.mxu0
      %v949 = vadd.f32 0.0, %v948
      %950 = vmatmul.f32.gmra.mxu0 %v617
      %v951 = vpop.f32.mrf.mxu0
      %v952 = vadd.f32 0.0, %v951
      %953 = vmatmul.f32.gmra.mxu0 %v619
      %v954 = vpop.f32.mrf.mxu0
      %v955 = vadd.f32 0.0, %v954
      %956 = vmatmul.f32.gmra.mxu0 %v621
      %v957 = vpop.f32.mrf.mxu0
      %v958 = vadd.f32 0.0, %v957
      %959 = vmatmul.f32.gmra.mxu0 %v623
      %v960 = vpop.f32.mrf.mxu0
      %v961 = vadd.f32 0.0, %v960
      %962 = vmatmul.f32.gmra.mxu0 %v625
      %v963 = vpop.f32.mrf.mxu0
      %v964 = vadd.f32 0.0, %v963
      %965 = vmatmul.f32.gmra.mxu0 %v627
      %v966 = vpop.f32.mrf.mxu0
      %v967 = vadd.f32 0.0, %v966
      %968 = vmatmul.f32.gmra.mxu0 %v629
      %v969 = vpop.f32.mrf.mxu0
      %v970 = vadd.f32 0.0, %v969
      %971 = vmatmul.f32.gmra.mxu0 %v631
      %v972 = vpop.f32.mrf.mxu0
      %v973 = vadd.f32 0.0, %v972
      %974 = vmatmul.f32.gmra.mxu0 %v912
      %v975 = vpop.f32.mrf.mxu0
      %v976 = vadd.f32 0.0, %v975
      %977 = vmatmul.f32.gmra.mxu0 %v914
      %v978 = vpop.f32.mrf.mxu0
      %v979 = vadd.f32 0.0, %v978
      %980 = vdwg.mxu0
      %v981 = vadd.f32 %v886, %v934
      %v982 = vadd.f32 %v887, %v937
      %v983 = vadd.f32 %v888, %v940
      %v984 = vadd.f32 %v889, %v943
      %v985 = vadd.f32 %v890, %v946
      %v986 = vadd.f32 %v891, %v949
      %v987 = vadd.f32 %v892, %v952
      %v988 = vadd.f32 %v893, %v955
      %v989 = vadd.f32 %v894, %v958
      %v990 = vadd.f32 %v895, %v961
      %v991 = vadd.f32 %v896, %v964
      %v992 = vadd.f32 %v897, %v967
      %v993 = vadd.f32 %v898, %v970
      %v994 = vadd.f32 %v899, %v973
      %v995 = vadd.f32 %v900, %v976
      %v996 = vadd.f32 %v901, %v979
      %s997 = scalar_lea.vmem %s1, 192
      %v998 = vld [vmem:[%s997] sm:$0xff]
      %v999 = vld [vmem:[%s997 + $0x8] sm:$0xff]
      %v1000 = vld [vmem:[%s997 + $0x10] sm:$0xff]
      %v1001 = vld [vmem:[%s997 + $0x18] sm:$0xff]
      %v1003 = vsel %vm360, %v283, 0
      %v1006 = vsel %vm360, %v284, 0
      %1008 = vmatpush.msra.mxu0 0.0
      %1009 = vmatpush.msra.mxu0 0.0
      %1010 = vmatpush.msra.mxu0 0.0
      %1011 = vmatpush.msra.mxu0 0.0
      %1012 = vmatpush.msra.mxu0 0.0
      %1013 = vmatpush.msra.mxu0 0.0
      %1014 = vmatpush.msra.mxu0 0.0
      %1015 = vmatpush.msra.mxu0 0.0
      %1016 = vmatpush.msra.mxu0 0.0
      %1017 = vmatpush.msra.mxu0 0.0
      %1018 = vmatpush.msra.mxu0 0.0
      %1019 = vmatpush.msra.mxu0 0.0
      %1020 = vmatpush.msra.mxu0 %v1001
      %1021 = vmatpush.msra.mxu0 %v1000
      %1022 = vmatpush.msra.mxu0 %v999
      %1023 = vmatpush.msra.mxu0 %v998
      %1024 = vmatmul.f32.gmra.mxu0 %v466
      %v1025 = vpop.f32.mrf.mxu0
      %v1026 = vadd.f32 0.0, %v1025
      %1027 = vmatmul.f32.gmra.mxu0 %v468
      %v1028 = vpop.f32.mrf.mxu0
      %v1029 = vadd.f32 0.0, %v1028
      %1030 = vmatmul.f32.gmra.mxu0 %v470
      %v1031 = vpop.f32.mrf.mxu0
      %v1032 = vadd.f32 0.0, %v1031
      %1033 = vmatmul.f32.gmra.mxu0 %v472
      %v1034 = vpop.f32.mrf.mxu0
      %v1035 = vadd.f32 0.0, %v1034
      %1036 = vmatmul.f32.gmra.mxu0 %v474
      %v1037 = vpop.f32.mrf.mxu0
      %v1038 = vadd.f32 0.0, %v1037
      %1039 = vmatmul.f32.gmra.mxu0 %v476
      %v1040 = vpop.f32.mrf.mxu0
      %v1041 = vadd.f32 0.0, %v1040
      %1042 = vmatmul.f32.gmra.mxu0 %v478
      %v1043 = vpop.f32.mrf.mxu0
      %v1044 = vadd.f32 0.0, %v1043
      %1045 = vmatmul.f32.gmra.mxu0 %v480
      %v1046 = vpop.f32.mrf.mxu0
      %v1047 = vadd.f32 0.0, %v1046
      %1048 = vmatmul.f32.gmra.mxu0 %v482
      %v1049 = vpop.f32.mrf.mxu0
      %v1050 = vadd.f32 0.0, %v1049
      %1051 = vmatmul.f32.gmra.mxu0 %v484
      %v1052 = vpop.f32.mrf.mxu0
      %v1053 = vadd.f32 0.0, %v1052
      %1054 = vmatmul.f32.gmra.mxu0 %v486
      %v1055 = vpop.f32.mrf.mxu0
      %v1056 = vadd.f32 0.0, %v1055
      %1057 = vmatmul.f32.gmra.mxu0 %v488
      %v1058 = vpop.f32.mrf.mxu0
      %v1059 = vadd.f32 0.0, %v1058
      %1060 = vmatmul.f32.gmra.mxu0 %v720
      %v1061 = vpop.f32.mrf.mxu0
      %v1062 = vadd.f32 0.0, %v1061
      %1063 = vmatmul.f32.gmra.mxu0 %v723
      %v1064 = vpop.f32.mrf.mxu0
      %v1065 = vadd.f32 0.0, %v1064
      %1066 = vmatmul.f32.gmra.mxu0 %v1003
      %v1067 = vpop.f32.mrf.mxu0
      %v1068 = vadd.f32 0.0, %v1067
      %1069 = vmatmul.f32.gmra.mxu0 %v1006
      %v1070 = vpop.f32.mrf.mxu0
      %v1071 = vadd.f32 0.0, %v1070
      %1072 = vdwg.mxu0
      %v1073 = vadd.f32 %v981, %v1026
      %v1074 = vadd.f32 %v982, %v1029
      %v1075 = vadd.f32 %v983, %v1032
      %v1076 = vadd.f32 %v984, %v1035
      %v1077 = vadd.f32 %v985, %v1038
      %v1078 = vadd.f32 %v986, %v1041
      %v1079 = vadd.f32 %v987, %v1044
      %v1080 = vadd.f32 %v988, %v1047
      %v1081 = vadd.f32 %v989, %v1050
      %v1082 = vadd.f32 %v990, %v1053
      %v1083 = vadd.f32 %v991, %v1056
      %v1084 = vadd.f32 %v992, %v1059
      %v1085 = vadd.f32 %v993, %v1062
      %v1086 = vadd.f32 %v994, %v1065
      %v1087 = vadd.f32 %v995, %v1068
      %v1088 = vadd.f32 %v996, %v1071
      %v1090 = vrot.slane %v283, 1
      %v1091 = vrot.slane %v284, 1
      %v1092 = vsel %vm314, %v1090, %v1091
      %v1093 = vrot.slane %v285, 1
      %v1094 = vsel %vm314, %v1091, %v1093
      %s1095 = scalar_lea.vmem %s1, 224
      %v1096 = vld [vmem:[%s1095] sm:$0xff]
      %v1097 = vld [vmem:[%s1095 + $0x8] sm:$0xff]
      %v1098 = vld [vmem:[%s1095 + $0x10] sm:$0xff]
      %v1099 = vld [vmem:[%s1095 + $0x18] sm:$0xff]
      %v1100 = vsel %vm360, %v1092, 0
      %v1102 = vsel %vm360, %v1094, 0
      %1104 = vmatpush.msra.mxu0 0.0
      %1105 = vmatpush.msra.mxu0 0.0
      %1106 = vmatpush.msra.mxu0 0.0
      %1107 = vmatpush.msra.mxu0 0.0
      %1108 = vmatpush.msra.mxu0 0.0
      %1109 = vmatpush.msra.mxu0 0.0
      %1110 = vmatpush.msra.mxu0 0.0
      %1111 = vmatpush.msra.mxu0 0.0
      %1112 = vmatpush.msra.mxu0 0.0
      %1113 = vmatpush.msra.mxu0 0.0
      %1114 = vmatpush.msra.mxu0 0.0
      %1115 = vmatpush.msra.mxu0 0.0
      %1116 = vmatpush.msra.mxu0 %v1099
      %1117 = vmatpush.msra.mxu0 %v1098
      %1118 = vmatpush.msra.mxu0 %v1097
      %1119 = vmatpush.msra.mxu0 %v1096
      %1120 = vmatmul.f32.gmra.mxu0 %v369
      %v1121 = vpop.f32.mrf.mxu0
      %v1122 = vadd.f32 0.0, %v1121
      %1123 = vmatmul.f32.gmra.mxu0 %v371
      %v1124 = vpop.f32.mrf.mxu0
      %v1125 = vadd.f32 0.0, %v1124
      %1126 = vmatmul.f32.gmra.mxu0 %v373
      %v1127 = vpop.f32.mrf.mxu0
      %v1128 = vadd.f32 0.0, %v1127
      %1129 = vmatmul.f32.gmra.mxu0 %v375
      %v1130 = vpop.f32.mrf.mxu0
      %v1131 = vadd.f32 0.0, %v1130
      %1132 = vmatmul.f32.gmra.mxu0 %v377
      %v1133 = vpop.f32.mrf.mxu0
      %v1134 = vadd.f32 0.0, %v1133
      %1135 = vmatmul.f32.gmra.mxu0 %v379
      %v1136 = vpop.f32.mrf.mxu0
      %v1137 = vadd.f32 0.0, %v1136
      %1138 = vmatmul.f32.gmra.mxu0 %v381
      %v1139 = vpop.f32.mrf.mxu0
      %v1140 = vadd.f32 0.0, %v1139
      %1141 = vmatmul.f32.gmra.mxu0 %v383
      %v1142 = vpop.f32.mrf.mxu0
      %v1143 = vadd.f32 0.0, %v1142
      %1144 = vmatmul.f32.gmra.mxu0 %v385
      %v1145 = vpop.f32.mrf.mxu0
      %v1146 = vadd.f32 0.0, %v1145
      %1147 = vmatmul.f32.gmra.mxu0 %v387
      %v1148 = vpop.f32.mrf.mxu0
      %v1149 = vadd.f32 0.0, %v1148
      %1150 = vmatmul.f32.gmra.mxu0 %v389
      %v1151 = vpop.f32.mrf.mxu0
      %v1152 = vadd.f32 0.0, %v1151
      %1153 = vmatmul.f32.gmra.mxu0 %v391
      %v1154 = vpop.f32.mrf.mxu0
      %v1155 = vadd.f32 0.0, %v1154
      %1156 = vmatmul.f32.gmra.mxu0 %v817
      %v1157 = vpop.f32.mrf.mxu0
      %v1158 = vadd.f32 0.0, %v1157
      %1159 = vmatmul.f32.gmra.mxu0 %v819
      %v1160 = vpop.f32.mrf.mxu0
      %v1161 = vadd.f32 0.0, %v1160
      %1162 = vmatmul.f32.gmra.mxu0 %v1100
      %v1163 = vpop.f32.mrf.mxu0
      %v1164 = vadd.f32 0.0, %v1163
      %1165 = vmatmul.f32.gmra.mxu0 %v1102
      %v1166 = vpop.f32.mrf.mxu0
      %v1167 = vadd.f32 0.0, %v1166
      %1168 = vdwg.mxu0
      %v1169 = vadd.f32 %v1073, %v1122
      %v1170 = vadd.f32 %v1074, %v1125
      %v1171 = vadd.f32 %v1075, %v1128
      %v1172 = vadd.f32 %v1076, %v1131
      %v1173 = vadd.f32 %v1077, %v1134
      %v1174 = vadd.f32 %v1078, %v1137
      %v1175 = vadd.f32 %v1079, %v1140
      %v1176 = vadd.f32 %v1080, %v1143
      %v1177 = vadd.f32 %v1081, %v1146
      %v1178 = vadd.f32 %v1082, %v1149
      %v1179 = vadd.f32 %v1083, %v1152
      %v1180 = vadd.f32 %v1084, %v1155
      %v1181 = vadd.f32 %v1085, %v1158
      %v1182 = vadd.f32 %v1086, %v1161
      %v1183 = vadd.f32 %v1087, %v1164
      %v1184 = vadd.f32 %v1088, %v1167
      %v1185 = vrot.slane %v283, 2
      %v1186 = vrot.slane %v284, 2
      %v1187 = vsel %vm555, %v1185, %v1186
      %v1188 = vrot.slane %v285, 2
      %v1189 = vsel %vm555, %v1186, %v1188
      %s1190 = scalar_lea.vmem %s1, 256
      %v1191 = vld [vmem:[%s1190] sm:$0xff]
      %v1192 = vld [vmem:[%s1190 + $0x8] sm:$0xff]
      %v1193 = vld [vmem:[%s1190 + $0x10] sm:$0xff]
      %v1194 = vld [vmem:[%s1190 + $0x18] sm:$0xff]
      %v1195 = vsel %vm360, %v1187, 0
      %v1197 = vsel %vm360, %v1189, 0
      %1199 = vmatpush.msra.mxu0 0.0
      %1200 = vmatpush.msra.mxu0 0.0
      %1201 = vmatpush.msra.mxu0 0.0
      %1202 = vmatpush.msra.mxu0 0.0
      %1203 = vmatpush.msra.mxu0 0.0
      %1204 = vmatpush.msra.mxu0 0.0
      %1205 = vmatpush.msra.mxu0 0.0
      %1206 = vmatpush.msra.mxu0 0.0
      %1207 = vmatpush.msra.mxu0 0.0
      %1208 = vmatpush.msra.mxu0 0.0
      %1209 = vmatpush.msra.mxu0 0.0
      %1210 = vmatpush.msra.mxu0 0.0
      %1211 = vmatpush.msra.mxu0 %v1194
      %1212 = vmatpush.msra.mxu0 %v1193
      %1213 = vmatpush.msra.mxu0 %v1192
      %1214 = vmatpush.msra.mxu0 %v1191
      %1215 = vmatmul.f32.gmra.mxu0 %v609
      %v1216 = vpop.f32.mrf.mxu0
      %v1217 = vadd.f32 0.0, %v1216
      %1218 = vmatmul.f32.gmra.mxu0 %v611
      %v1219 = vpop.f32.mrf.mxu0
      %v1220 = vadd.f32 0.0, %v1219
      %1221 = vmatmul.f32.gmra.mxu0 %v613
      %v1222 = vpop.f32.mrf.mxu0
      %v1223 = vadd.f32 0.0, %v1222
      %1224 = vmatmul.f32.gmra.mxu0 %v615
      %v1225 = vpop.f32.mrf.mxu0
      %v1226 = vadd.f32 0.0, %v1225
      %1227 = vmatmul.f32.gmra.mxu0 %v617
      %v1228 = vpop.f32.mrf.mxu0
      %v1229 = vadd.f32 0.0, %v1228
      %1230 = vmatmul.f32.gmra.mxu0 %v619
      %v1231 = vpop.f32.mrf.mxu0
      %v1232 = vadd.f32 0.0, %v1231
      %1233 = vmatmul.f32.gmra.mxu0 %v621
      %v1234 = vpop.f32.mrf.mxu0
      %v1235 = vadd.f32 0.0, %v1234
      %1236 = vmatmul.f32.gmra.mxu0 %v623
      %v1237 = vpop.f32.mrf.mxu0
      %v1238 = vadd.f32 0.0, %v1237
      %1239 = vmatmul.f32.gmra.mxu0 %v625
      %v1240 = vpop.f32.mrf.mxu0
      %v1241 = vadd.f32 0.0, %v1240
      %1242 = vmatmul.f32.gmra.mxu0 %v627
      %v1243 = vpop.f32.mrf.mxu0
      %v1244 = vadd.f32 0.0, %v1243
      %1245 = vmatmul.f32.gmra.mxu0 %v629
      %v1246 = vpop.f32.mrf.mxu0
      %v1247 = vadd.f32 0.0, %v1246
      %1248 = vmatmul.f32.gmra.mxu0 %v631
      %v1249 = vpop.f32.mrf.mxu0
      %v1250 = vadd.f32 0.0, %v1249
      %1251 = vmatmul.f32.gmra.mxu0 %v912
      %v1252 = vpop.f32.mrf.mxu0
      %v1253 = vadd.f32 0.0, %v1252
      %1254 = vmatmul.f32.gmra.mxu0 %v914
      %v1255 = vpop.f32.mrf.mxu0
      %v1256 = vadd.f32 0.0, %v1255
      %1257 = vmatmul.f32.gmra.mxu0 %v1195
      %v1258 = vpop.f32.mrf.mxu0
      %v1259 = vadd.f32 0.0, %v1258
      %1260 = vmatmul.f32.gmra.mxu0 %v1197
      %v1261 = vpop.f32.mrf.mxu0
      %v1262 = vadd.f32 0.0, %v1261
      %1263 = vdwg.mxu0
      %v1264 = vadd.f32 %v1169, %v1217
      %v1265 = vadd.f32 %v1170, %v1220
      %v1266 = vadd.f32 %v1171, %v1223
      %v1267 = vadd.f32 %v1172, %v1226
      %v1268 = vadd.f32 %v1173, %v1229
      %v1269 = vadd.f32 %v1174, %v1232
      %v1270 = vadd.f32 %v1175, %v1235
      %v1271 = vadd.f32 %v1176, %v1238
      %v1272 = vadd.f32 %v1177, %v1241
      %v1273 = vadd.f32 %v1178, %v1244
      %v1274 = vadd.f32 %v1179, %v1247
      %v1275 = vadd.f32 %v1180, %v1250
      %v1276 = vadd.f32 %v1181, %v1253
      %v1277 = vadd.f32 %v1182, %v1256
      %v1278 = vadd.f32 %v1183, %v1259
      %v1279 = vadd.f32 %v1184, %v1262
      %v1280 = vld [vmem:[%s2] sm:$0x1]
      %v1282 = vperm.slane %v1280, 0
      %v1284 = vadd.f32 %v1264, %v1282
      %v1285 = vadd.f32 %v1265, %v1282
      %v1286 = vadd.f32 %v1266, %v1282
      %v1287 = vadd.f32 %v1267, %v1282
      %v1288 = vadd.f32 %v1268, %v1282
      %v1289 = vadd.f32 %v1269, %v1282
      %v1290 = vadd.f32 %v1270, %v1282
      %v1291 = vadd.f32 %v1271, %v1282
      %v1292 = vadd.f32 %v1272, %v1282
      %v1293 = vadd.f32 %v1273, %v1282
      %v1294 = vadd.f32 %v1274, %v1282
      %v1295 = vadd.f32 %v1275, %v1282
      %v1296 = vadd.f32 %v1276, %v1282
      %v1297 = vadd.f32 %v1277, %v1282
      %v1298 = vadd.f32 %v1278, %v1282
      %v1299 = vadd.f32 %v1279, %v1282
      %1300 = vst.msk [vmem:[%s246] sm:$0xff] %vm360, %v1284
      %1301 = vst.msk [vmem:[%s246 + $0x8] sm:$0xff] %vm360, %v1285
      %1302 = vst.msk [vmem:[%s246 + $0x10] sm:$0xff] %vm360, %v1286
      %1303 = vst.msk [vmem:[%s246 + $0x18] sm:$0xff] %vm360, %v1287
      %1304 = vst.msk [vmem:[%s246 + $0x20] sm:$0xff] %vm360, %v1288
      %1305 = vst.msk [vmem:[%s246 + $0x28] sm:$0xff] %vm360, %v1289
      %1306 = vst.msk [vmem:[%s246 + $0x30] sm:$0xff] %vm360, %v1290
      %1307 = vst.msk [vmem:[%s246 + $0x38] sm:$0xff] %vm360, %v1291
      %1308 = vst.msk [vmem:[%s246 + $0x40] sm:$0xff] %vm360, %v1292
      %1309 = vst.msk [vmem:[%s246 + $0x48] sm:$0xff] %vm360, %v1293
      %1310 = vst.msk [vmem:[%s246 + $0x50] sm:$0xff] %vm360, %v1294
      %1311 = vst.msk [vmem:[%s246 + $0x58] sm:$0xff] %vm360, %v1295
      %1312 = vst.msk [vmem:[%s246 + $0x60] sm:$0xff] %vm360, %v1296
      %1313 = vst.msk [vmem:[%s246 + $0x68] sm:$0xff] %vm360, %v1297
      %1314 = vst.msk [vmem:[%s246 + $0x70] sm:$0xff] %vm360, %v1298
      %1315 = vst.msk [vmem:[%s246 + $0x78] sm:$0xff] %vm360, %v1299
      %v1316 = vsel %vm360, %v1284, 0.0
      %v1317 = vsel %vm360, %v1285, 0.0
      %v1318 = vadd.f32 %v1316, %v1317
      %v1319 = vsel %vm360, %v1286, 0.0
      %v1320 = vadd.f32 %v1318, %v1319
      %v1321 = vsel %vm360, %v1287, 0.0
      %v1322 = vadd.f32 %v1320, %v1321
      %v1323 = vsel %vm360, %v1288, 0.0
      %v1324 = vadd.f32 %v1322, %v1323
      %v1325 = vsel %vm360, %v1289, 0.0
      %v1326 = vadd.f32 %v1324, %v1325
      %v1327 = vsel %vm360, %v1290, 0.0
      %v1328 = vadd.f32 %v1326, %v1327
      %v1329 = vsel %vm360, %v1291, 0.0
      %v1330 = vadd.f32 %v1328, %v1329
      %v1331 = vsel %vm360, %v1292, 0.0
      %v1332 = vadd.f32 %v1330, %v1331
      %v1333 = vsel %vm360, %v1293, 0.0
      %v1334 = vadd.f32 %v1332, %v1333
      %v1335 = vsel %vm360, %v1294, 0.0
      %v1336 = vadd.f32 %v1334, %v1335
      %v1337 = vsel %vm360, %v1295, 0.0
      %v1338 = vadd.f32 %v1336, %v1337
      %v1339 = vsel %vm360, %v1296, 0.0
      %v1340 = vadd.f32 %v1338, %v1339
      %v1341 = vsel %vm360, %v1297, 0.0
      %v1342 = vadd.f32 %v1340, %v1341
      %v1343 = vsel %vm360, %v1298, 0.0
      %v1344 = vadd.f32 %v1342, %v1343
      %v1345 = vsel %vm360, %v1299, 0.0
      %v1346 = vadd.f32 %v1344, %v1345
      %v1347 = vrot.slane %v1346, 4
      %v1348 = vadd.f32 %v1346, %v1347
      %v1349 = vrot.slane %v1348, 2
      %v1350 = vadd.f32 %v1348, %v1349
      %v1351 = vrot.slane %v1350, 1
      %v1352 = vadd.f32 %v1350, %v1351
      %vm1353 = vcmask 253952
      %1354 = vst.msk [vmem:[%s255] sm:$0x1] %vm1353, %v1352
      %v1355 = vmul.f32 %v1284, %v1284
      %v1356 = vmul.f32 %v1285, %v1285
      %v1357 = vmul.f32 %v1286, %v1286
      %v1358 = vmul.f32 %v1287, %v1287
      %v1359 = vmul.f32 %v1288, %v1288
      %v1360 = vmul.f32 %v1289, %v1289
      %v1361 = vmul.f32 %v1290, %v1290
      %v1362 = vmul.f32 %v1291, %v1291
      %v1363 = vmul.f32 %v1292, %v1292
      %v1364 = vmul.f32 %v1293, %v1293
      %v1365 = vmul.f32 %v1294, %v1294
      %v1366 = vmul.f32 %v1295, %v1295
      %v1367 = vmul.f32 %v1296, %v1296
      %v1368 = vmul.f32 %v1297, %v1297
      %v1369 = vmul.f32 %v1298, %v1298
      %v1370 = vmul.f32 %v1299, %v1299
      %v1371 = vsel %vm360, %v1355, 0.0
      %v1372 = vsel %vm360, %v1356, 0.0
      %v1373 = vadd.f32 %v1371, %v1372
      %v1374 = vsel %vm360, %v1357, 0.0
      %v1375 = vadd.f32 %v1373, %v1374
      %v1376 = vsel %vm360, %v1358, 0.0
      %v1377 = vadd.f32 %v1375, %v1376
      %v1378 = vsel %vm360, %v1359, 0.0
      %v1379 = vadd.f32 %v1377, %v1378
      %v1380 = vsel %vm360, %v1360, 0.0
      %v1381 = vadd.f32 %v1379, %v1380
      %v1382 = vsel %vm360, %v1361, 0.0
      %v1383 = vadd.f32 %v1381, %v1382
      %v1384 = vsel %vm360, %v1362, 0.0
      %v1385 = vadd.f32 %v1383, %v1384
      %v1386 = vsel %vm360, %v1363, 0.0
      %v1387 = vadd.f32 %v1385, %v1386
      %v1388 = vsel %vm360, %v1364, 0.0
      %v1389 = vadd.f32 %v1387, %v1388
      %v1390 = vsel %vm360, %v1365, 0.0
      %v1391 = vadd.f32 %v1389, %v1390
      %v1392 = vsel %vm360, %v1366, 0.0
      %v1393 = vadd.f32 %v1391, %v1392
      %v1394 = vsel %vm360, %v1367, 0.0
      %v1395 = vadd.f32 %v1393, %v1394
      %v1396 = vsel %vm360, %v1368, 0.0
      %v1397 = vadd.f32 %v1395, %v1396
      %v1398 = vsel %vm360, %v1369, 0.0
      %v1399 = vadd.f32 %v1397, %v1398
      %v1400 = vsel %vm360, %v1370, 0.0
      %v1401 = vadd.f32 %v1399, %v1400
      %v1402 = vrot.slane %v1401, 4
      %v1403 = vadd.f32 %v1401, %v1402
      %v1404 = vrot.slane %v1403, 2
      %v1405 = vadd.f32 %v1403, %v1404
      %v1406 = vrot.slane %v1405, 1
      %v1407 = vadd.f32 %v1405, %v1406
      %1408 = vst.msk [vmem:[%s255 + $0x1] sm:$0x1] %vm1353, %v1407
      %s1409 = smul.u32 16, %s21
      %p1410 = scmp.lt.s32.totalorder %s20, 1
      %s1411 = scalar_select %p1410, %s20, 1
      %p1412 = scmp.lt.s32.totalorder %s1409, 31
      %s1413 = scalar_select %p1412, %s1409, 31
      %s1414 = smul.addr %s1411, 32
      %s1415 = sadd.s32 %s1413, %s1414
      %s1416 = smul.addr %s1415, 8
      %s1417 = scalar_lea.vmem %s3, %s1416
      %p1418 = scmp.lt.s32.totalorder %s20, 1
      %s1419 = scalar_select %p1418, %s20, 1
      %p1420 = scmp.lt.s32.totalorder %s21, 1
      %s1421 = scalar_select %p1420, %s21, 1
      %s1422 = smul.addr %s1419, 2
      %s1423 = sadd.s32 %s1421, %s1422
      %s1424 = smul.addr %s1423, 2
      %s1425 = scalar_lea.vmem %s4, %s1424
      // Predicated region
      $region33: #{unet_decoder_forward.18} parent=31 // pred_check
        %p1426 = pneg %p118
      $region34: #{unet_decoder_forward.18} parent=31 // pred_check_branch
        %1428 = sbr.rel (%p1426) target = $region36
      $region35: #{unet_decoder_forward.18} parent=31 // pred_region
        %s1429 = smul.u32 16, %s21
      $region36: #{unet_decoder_forward.18} parent=31 // pred_fallthru
        _
      // Predicated region
      $region37: #{unet_decoder_forward.18} parent=31 // pred_check
        %p1430 = pneg %p146
      $region38: #{unet_decoder_forward.18} parent=31 // pred_check_branch
        %1432 = sbr.rel (%p1430) target = $region40
      $region39: #{unet_decoder_forward.18} parent=31 // pred_region
        _
      $region40: #{unet_decoder_forward.18} parent=31 // pred_fallthru
        _
    $region32: #{unet_decoder_forward.18} parent=5 // pred_fallthru
      _
    %p1433 = scmp.le.s32.totalorder 2, %s11
    // Predicated region
    $region41: #{unet_decoder_forward.18} parent=5 // pred_check
      %p1434 = pneg %p1433
    $region42: #{unet_decoder_forward.18} parent=5 // pred_check_branch
      %1436 = sbr.rel (%p1434) target = $region44
    $region43: #{unet_decoder_forward.18} parent=5 // pred_region
      %s1437 = ssub.s32 %s11, 2
      // Predicated region
      $region45: #{unet_decoder_forward.18} parent=43 // pred_check
        %p1438 = pneg %p124
      $region46: #{unet_decoder_forward.18} parent=43 // pred_check_branch
        %1440 = sbr.rel (%p1438) target = $region48
      $region47: #{unet_decoder_forward.18} parent=43 // pred_region
        %s1441 = smul.u32 16, %s23
        %p1442 = scmp.lt.s32.totalorder %s22, 1
        %s1443 = scalar_select %p1442, %s22, 1
        %p1444 = scmp.lt.s32.totalorder %s1441, 31
        %s1445 = scalar_select %p1444, %s1441, 31
        %s1446 = smul.addr %s1443, 32
        %s1447 = sadd.s32 %s1445, %s1446
        %s1448 = smul.addr %s1447, 8
        %s1449 = scalar_lea.vmem %s3, %s1448
      $region48: #{unet_decoder_forward.18} parent=43 // pred_fallthru
        _
      // Predicated region
      $region49: #{unet_decoder_forward.18} parent=43 // pred_check
        %p1450 = pneg %p152
      $region50: #{unet_decoder_forward.18} parent=43 // pred_check_branch
        %1452 = sbr.rel (%p1450) target = $region52
      $region51: #{unet_decoder_forward.18} parent=43 // pred_region
        %p1453 = scmp.lt.s32.totalorder %s22, 1
        %s1454 = scalar_select %p1453, %s22, 1
        %p1455 = scmp.lt.s32.totalorder %s23, 1
        %s1456 = scalar_select %p1455, %s23, 1
        %s1457 = smul.addr %s1454, 2
        %s1458 = sadd.s32 %s1456, %s1457
        %s1459 = smul.addr %s1458, 2
        %s1460 = scalar_lea.vmem %s4, %s1459
      $region52: #{unet_decoder_forward.18} parent=43 // pred_fallthru
        _
    $region44: #{unet_decoder_forward.18} parent=5 // pred_fallthru
      _
  $region6: #{unet_decoder_forward.18} parent=0 // loop_footer
    %s15 = sadd.s32 1, %s11
  $region7: #{unet_decoder_forward.18} parent=0 // loop_footer_branch
    %10 = sbr.rel target = $region3
  $region8: #{unet_decoder_forward.18} parent=0 // loop_exit
    _

// kernel: unet_decoder_forward.19
$region0: #{unet_decoder_forward.19}
  #allocation0 [shape = 'u32[]', space=smem, size = 0x4, offset = 0x4, fixed_abs, tag = 'smem constant byte address 0x4 - core index']
  #allocation1 [shape = 'u32[72,128]{1,0:T(1,128)}', space=vmem, size = 0x9000, scoped, tag = 'internal scratch']
  #allocation2 [shape = 'f32[256,3]{1,0:T(8,128)}', space=vmem, size = 0x20000, scoped, tag = 'scratch operand']
  %s0 = inlined_call_operand.vmem [shape: f32[512,32], index: 0, kind: input, shape index: {}]
  %s1 = inlined_call_operand.vmem [shape: f32[1,32], index: 1, kind: input, shape index: {}]
  %s2 = inlined_call_operand.vmem [shape: f32[1,32], index: 2, kind: input, shape index: {}]
  %s3 = inlined_call_operand.vmem [shape: f32[32,3], index: 3, kind: input, shape index: {}]
  %s4 = inlined_call_operand.vmem [shape: f32[1,3], index: 4, kind: input, shape index: {}]
  %s5 = inlined_call_operand.vmem [shape: f32[512,3], index: 5, kind: output, shape index: {}]
  %s6 = sld [smem:[#allocation0]]
  $region61: #{unet_decoder_forward.19} parent=0
    _
  %s8 = ssub.s32 1, %s6
  %s9 = scalar_select 0, %s8, %s6
  loop: start=0, step=1, limit=4
  $region2: #{unet_decoder_forward.19} parent=0 // loop_pre_header
    _
  $region3: #{unet_decoder_forward.19} parent=0 // loop_header
    %s11 = sphi 0, %s15
    %p12 = scmp.ge.s32.totalorder %s11, 4
    %s18 = sphi 0, %s37
    %s19 = sphi 0, %s33
    %s20 = sphi 0, %s29
    %s21 = sphi 0, %s18
    %s22 = sphi 0, %s19
    %s23 = sphi 0, %s20
    %s24 = sphi 0, %s21
    %s25 = sphi 0, %s22
    %s26 = sphi 0, %s23
    %s42 = sphi 0, %s44
    %s45 = sphi 0, %s42
    %s46 = sphi 0, %s45
    %s62 = sphi 0, %s46
    %s68 = sphi 0, %s70
    %s71 = sphi 0, %s68
    %s72 = sphi 0, %s71
    %s88 = sphi 0, %s72
    %s94 = sphi 0, %s96
    %s97 = sphi 0, %s94
    %s98 = sphi 0, %s97
    %s114 = sphi 0, %s98
    %s122 = sphi 0, %s124
    %s125 = sphi 0, %s122
    %s126 = sphi 0, %s125
    %s142 = sphi 0, %s126
    %s148 = sphi 0, %s150
    %s151 = sphi 0, %s148
    %s152 = sphi 0, %s151
    %s168 = sphi 0, %s152
    %s176 = sphi 0, %s178
    %s179 = sphi 0, %s176
    %s180 = sphi 0, %s179
    %s196 = sphi 0, %s180
  $region4: #{unet_decoder_forward.19} parent=0 // loop_header_branch
    %14 = sbr.rel (%p12) target = $region8
  $region5: #{unet_decoder_forward.19} parent=0 // loop_body
    %s16 = ssub.s32 %s11, 1
    %s17 = ssub.s32 %s11, 2
    %s27 = sadd.s32 1, %s20
    %p28 = scmp.ge.s32.totalorder %s27, 1
    %s29 = scalar_select %p28, 0, %s27
    %s30 = sadd.s32 1, %s19
    %s31 = scalar_select %p28, %s30, %s19
    %p32 = scmp.ge.s32.totalorder %s31, 1
    %s33 = scalar_select %p32, 0, %s31
    %s34 = sadd.s32 1, %s18
    %s35 = scalar_select %p32, %s34, %s18
    %p36 = scmp.ge.s32.totalorder %s35, 2
    %s37 = scalar_select %p36, 0, %s35
    %s38 = ssub.s32 %s18, %s37
    %s39 = ssub.s32 %s20, %s29
    %s40 = sor.u32 %s38, %s39
    %p41 = scmp.eq.s32.totalorder %s40, 0
    %s43 = sadd.s32 %s42, 1
    %s44 = scalar_select %p41, %s42, %s43
    %p47 = pneg %p41
    %p48 = scmp.eq.s32.totalorder %s11, 1
    %p49 = por %p47, %p48
    %p50 = scmp.ne.s32.totalorder %s42, %s45
    %p51 = scmp.eq.s32.totalorder %s11, 0
    %p52 = por %p50, %p51
    %p53 = scmp.ne.s32.totalorder %s42, %s45
    %p54 = scmp.eq.s32.totalorder %s16, 1
    %p55 = por %p53, %p54
    %p56 = scmp.ne.s32.totalorder %s45, %s46
    %p57 = scmp.eq.s32.totalorder %s16, 0
    %p58 = por %p56, %p57
    %p59 = scmp.ne.s32.totalorder %s45, %s46
    %p60 = scmp.eq.s32.totalorder %s17, 1
    %p61 = por %p59, %p60
    %p63 = scmp.ne.s32.totalorder %s46, %s62
    %p64 = scmp.eq.s32.totalorder %s17, 0
    %p65 = por %p63, %p64
    %s66 = ssub.s32 %s20, %s29
    %p67 = scmp.eq.s32.totalorder %s66, 0
    %s69 = sadd.s32 %s68, 1
    %s70 = scalar_select %p67, %s68, %s69
    %p73 = pneg %p67
    %p74 = scmp.eq.s32.totalorder %s11, 1
    %p75 = por %p73, %p74
    %p76 = scmp.ne.s32.totalorder %s68, %s71
    %p77 = scmp.eq.s32.totalorder %s11, 0
    %p78 = por %p76, %p77
    %p79 = scmp.ne.s32.totalorder %s68, %s71
    %p80 = scmp.eq.s32.totalorder %s16, 1
    %p81 = por %p79, %p80
    %p82 = scmp.ne.s32.totalorder %s71, %s72
    %p83 = scmp.eq.s32.totalorder %s16, 0
    %p84 = por %p82, %p83
    %p85 = scmp.ne.s32.totalorder %s71, %s72
    %p86 = scmp.eq.s32.totalorder %s17, 1
    %p87 = por %p85, %p86
    %p89 = scmp.ne.s32.totalorder %s72, %s88
    %p90 = scmp.eq.s32.totalorder %s17, 0
    %p91 = por %p89, %p90
    %s92 = ssub.s32 %s20, %s29
    %p93 = scmp.eq.s32.totalorder %s92, 0
    %s95 = sadd.s32 %s94, 1
    %s96 = scalar_select %p93, %s94, %s95
    %p99 = pneg %p93
    %p100 = scmp.eq.s32.totalorder %s11, 1
    %p101 = por %p99, %p100
    %p102 = scmp.ne.s32.totalorder %s94, %s97
    %p103 = scmp.eq.s32.totalorder %s11, 0
    %p104 = por %p102, %p103
    %p105 = scmp.ne.s32.totalorder %s94, %s97
    %p106 = scmp.eq.s32.totalorder %s16, 1
    %p107 = por %p105, %p106
    %p108 = scmp.ne.s32.totalorder %s97, %s98
    %p109 = scmp.eq.s32.totalorder %s16, 0
    %p110 = por %p108, %p109
    %p111 = scmp.ne.s32.totalorder %s97, %s98
    %p112 = scmp.eq.s32.totalorder %s17, 1
    %p113 = por %p111, %p112
    %p115 = scmp.ne.s32.totalorder %s98, %s114
    %p116 = scmp.eq.s32.totalorder %s17, 0
    %p117 = por %p115, %p116
    %s118 = ssub.s32 %s20, %s29
    %s119 = ssub.s32 %s19, %s33
    %s120 = sor.u32 %s118, %s119
    %p121 = scmp.eq.s32.totalorder %s120, 0
    %s123 = sadd.s32 %s122, 1
    %s124 = scalar_select %p121, %s122, %s123
    %p127 = pneg %p121
    %p128 = scmp.eq.s32.totalorder %s11, 1
    %p129 = por %p127, %p128
    %p130 = scmp.ne.s32.totalorder %s122, %s125
    %p131 = scmp.eq.s32.totalorder %s11, 0
    %p132 = por %p130, %p131
    %p133 = scmp.ne.s32.totalorder %s122, %s125
    %p134 = scmp.eq.s32.totalorder %s16, 1
    %p135 = por %p133, %p134
    %p136 = scmp.ne.s32.totalorder %s125, %s126
    %p137 = scmp.eq.s32.totalorder %s16, 0
    %p138 = por %p136, %p137
    %p139 = scmp.ne.s32.totalorder %s125, %s126
    %p140 = scmp.eq.s32.totalorder %s17, 1
    %p141 = por %p139, %p140
    %p143 = scmp.ne.s32.totalorder %s126, %s142
    %p144 = scmp.eq.s32.totalorder %s17, 0
    %p145 = por %p143, %p144
    %s146 = ssub.s32 %s19, %s33
    %p147 = scmp.eq.s32.totalorder %s146, 0
    %s149 = sadd.s32 %s148, 1
    %s150 = scalar_select %p147, %s148, %s149
    %p153 = pneg %p147
    %p154 = scmp.eq.s32.totalorder %s11, 1
    %p155 = por %p153, %p154
    %p156 = scmp.ne.s32.totalorder %s148, %s151
    %p157 = scmp.eq.s32.totalorder %s11, 0
    %p158 = por %p156, %p157
    %p159 = scmp.ne.s32.totalorder %s148, %s151
    %p160 = scmp.eq.s32.totalorder %s16, 1
    %p161 = por %p159, %p160
    %p162 = scmp.ne.s32.totalorder %s151, %s152
    %p163 = scmp.eq.s32.totalorder %s16, 0
    %p164 = por %p162, %p163
    %p165 = scmp.ne.s32.totalorder %s151, %s152
    %p166 = scmp.eq.s32.totalorder %s17, 1
    %p167 = por %p165, %p166
    %p169 = scmp.ne.s32.totalorder %s152, %s168
    %p170 = scmp.eq.s32.totalorder %s17, 0
    %p171 = por %p169, %p170
    %s172 = ssub.s32 %s18, %s37
    %s173 = ssub.s32 %s19, %s33
    %s174 = sor.u32 %s172, %s173
    %p175 = scmp.eq.s32.totalorder %s174, 0
    %s177 = sadd.s32 %s176, 1
    %s178 = scalar_select %p175, %s176, %s177
    %p181 = pneg %p175
    %p182 = scmp.eq.s32.totalorder %s11, 1
    %p183 = por %p181, %p182
    %p184 = scmp.ne.s32.totalorder %s176, %s179
    %p185 = scmp.eq.s32.totalorder %s11, 0
    %p186 = por %p184, %p185
    %p187 = scmp.ne.s32.totalorder %s176, %s179
    %p188 = scmp.eq.s32.totalorder %s16, 1
    %p189 = por %p187, %p188
    %p190 = scmp.ne.s32.totalorder %s179, %s180
    %p191 = scmp.eq.s32.totalorder %s16, 0
    %p192 = por %p190, %p191
    %p193 = scmp.ne.s32.totalorder %s179, %s180
    %p194 = scmp.eq.s32.totalorder %s17, 1
    %p195 = por %p193, %p194
    %p197 = scmp.ne.s32.totalorder %s180, %s196
    %p198 = scmp.eq.s32.totalorder %s17, 0
    %p199 = por %p197, %p198
    %p200 = scmp.le.s32.totalorder 1, %s11
    %p201 = scmp.lt.s32.totalorder %s11, 3
    %p202 = pnand %p200, %p201
    %p203 = pneg %p202
    // Predicated region
    $region9: #{unet_decoder_forward.19} parent=5 // pred_check
      _
    $region10: #{unet_decoder_forward.19} parent=5 // pred_check_branch
      %205 = sbr.rel (%p202) target = $region12
    $region11: #{unet_decoder_forward.19} parent=5 // pred_region
      %s206 = ssub.s32 %s11, 1
      // Predicated region
      $region13: #{unet_decoder_forward.19} parent=11 // pred_check
        %p207 = pneg %p84
      $region14: #{unet_decoder_forward.19} parent=11 // pred_check_branch
        %209 = sbr.rel (%p207) target = $region16
      $region15: #{unet_decoder_forward.19} parent=11 // pred_region
        %p210 = scmp.lt.s32.totalorder %s23, 0
        %s211 = scalar_select %p210, %s23, 0
        %s212 = scalar_lea.vmem %s1, %s211
      $region16: #{unet_decoder_forward.19} parent=11 // pred_fallthru
        _
      // Predicated region
      $region17: #{unet_decoder_forward.19} parent=11 // pred_check
        %p213 = pneg %p110
      $region18: #{unet_decoder_forward.19} parent=11 // pred_check_branch
        %215 = sbr.rel (%p213) target = $region20
      $region19: #{unet_decoder_forward.19} parent=11 // pred_region
        %p216 = scmp.lt.s32.totalorder %s23, 0
        %s217 = scalar_select %p216, %s23, 0
        %s218 = scalar_lea.vmem %s2, %s217
      $region20: #{unet_decoder_forward.19} parent=11 // pred_fallthru
        _
      // Predicated region
      $region21: #{unet_decoder_forward.19} parent=11 // pred_check
        %p219 = pneg %p138
      $region22: #{unet_decoder_forward.19} parent=11 // pred_check_branch
        %221 = sbr.rel (%p219) target = $region24
      $region23: #{unet_decoder_forward.19} parent=11 // pred_region
        %s222 = smul.u32 4, %s23
        %p223 = scmp.lt.s32.totalorder %s222, 3
        %s224 = scalar_select %p223, %s222, 3
        %p225 = scmp.lt.s32.totalorder %s22, 0
        %s226 = scalar_select %p225, %s22, 0
        %s227 = sadd.s32 %s226, %s224
        %s228 = smul.addr %s227, 8
        %s229 = scalar_lea.vmem %s3, %s228
        %s230 = smul.u32 4, %s23
      $region24: #{unet_decoder_forward.19} parent=11 // pred_fallthru
        _
      // Predicated region
      $region25: #{unet_decoder_forward.19} parent=11 // pred_check
        %p231 = pneg %p164
      $region26: #{unet_decoder_forward.19} parent=11 // pred_check_branch
        %233 = sbr.rel (%p231) target = $region28
      $region27: #{unet_decoder_forward.19} parent=11 // pred_region
        %p234 = scmp.lt.s32.totalorder %s22, 0
        %s235 = scalar_select %p234, %s22, 0
        %s236 = scalar_lea.vmem %s4, %s235
      $region28: #{unet_decoder_forward.19} parent=11 // pred_fallthru
        _
    $region12: #{unet_decoder_forward.19} parent=5 // pred_fallthru
      _
    %p237 = scmp.lt.s32.totalorder %s11, 2
    // Predicated region
    $region29: #{unet_decoder_forward.19} parent=5 // pred_check
      %p238 = pneg %p237
    $region30: #{unet_decoder_forward.19} parent=5 // pred_check_branch
      %240 = sbr.rel (%p238) target = $region32
    $region31: #{unet_decoder_forward.19} parent=5 // pred_region
      // Predicated region
      $region33: #{unet_decoder_forward.19} parent=31 // pred_check
        %p241 = pneg %p52
      $region34: #{unet_decoder_forward.19} parent=31 // pred_check_branch
        %243 = sbr.rel (%p241) target = $region36
      $region35: #{unet_decoder_forward.19} parent=31 // pred_region
        %s244 = smul.u32 32, %s18
        %p245 = scmp.lt.s32.totalorder %s244, 63
        %s246 = scalar_select %p245, %s244, 63
        %p247 = scmp.lt.s32.totalorder %s20, 0
        %s248 = scalar_select %p247, %s20, 0
        %s249 = sadd.s32 %s248, %s246
        %s250 = smul.addr %s249, 8
        %s251 = scalar_lea.vmem %s0, %s250
        %s252 = smul.u32 32, %s18
      $region36: #{unet_decoder_forward.19} parent=31 // pred_fallthru
        _
    $region32: #{unet_decoder_forward.19} parent=5 // pred_fallthru
      _
    %p253 = scmp.le.s32.totalorder 1, %s11
    %p254 = scmp.lt.s32.totalorder %s11, 3
    %p255 = pnand %p253, %p254
    %p256 = pneg %p255
    // Predicated region
    $region37: #{unet_decoder_forward.19} parent=5 // pred_check
      _
    $region38: #{unet_decoder_forward.19} parent=5 // pred_check_branch
      %258 = sbr.rel (%p255) target = $region40
    $region39: #{unet_decoder_forward.19} parent=5 // pred_region
      %s259 = ssub.s32 %s11, 1
      %s260 = smul.u32 32, %s21
      %p261 = scmp.lt.s32.totalorder %s260, 63
      %s262 = scalar_select %p261, %s260, 63
      %p263 = scmp.lt.s32.totalorder %s23, 0
      %s264 = scalar_select %p263, %s23, 0
      %s265 = sadd.s32 %s264, %s262
      %s266 = smul.addr %s265, 8
      %s267 = scalar_lea.vmem %s0, %s266
      %p268 = pneg %p58
      %p269 = pneg %p55
      %p270 = scmp.lt.s32.totalorder %s23, 0
      %s271 = scalar_select %p270, %s23, 0
      %s272 = scalar_lea.vmem %s1, %s271
      %p273 = pneg %p84
      %p274 = pneg %p81
      %p275 = scmp.lt.s32.totalorder %s23, 0
      %s276 = scalar_select %p275, %s23, 0
      %s277 = scalar_lea.vmem %s2, %s276
      %p278 = pneg %p110
      %p279 = pneg %p107
      %s280 = smul.u32 4, %s23
      %p281 = scmp.lt.s32.totalorder %s280, 3
      %s282 = scalar_select %p281, %s280, 3
      %p283 = scmp.lt.s32.totalorder %s22, 0
      %s284 = scalar_select %p283, %s22, 0
      %s285 = sadd.s32 %s284, %s282
      %s286 = smul.addr %s285, 8
      %s287 = scalar_lea.vmem %s3, %s286
      %p288 = pneg %p138
      %p289 = pneg %p135
      %p290 = scmp.lt.s32.totalorder %s22, 0
      %s291 = scalar_select %p290, %s22, 0
      %s292 = scalar_lea.vmem %s4, %s291
      %p293 = pneg %p164
      %p294 = pneg %p161
      %p295 = pneg %p192
      %p296 = pneg %p189
      %s297 = smul.u32 32, %s21
      %p298 = scmp.lt.s32.totalorder %s297, 63
      %s299 = scalar_select %p298, %s297, 63
      %p300 = scmp.lt.s32.totalorder %s22, 0
      %s301 = scalar_select %p300, %s22, 0
      %s302 = sadd.s32 %s301, %s299
      %s303 = smul.addr %s302, 8
      %s304 = scalar_lea.vmem %s5, %s303
      %s305 = smul.u32 32, %s21
      %p306 = scmp.lt.s32.totalorder %s305, 63
      %s307 = scalar_select %p306, %s305, 63
      %p308 = scmp.lt.s32.totalorder %s23, 0
      %s309 = scalar_select %p308, %s23, 0
      %s310 = sadd.s32 %s309, %s307
      %s311 = smul.addr %s310, 8
      %s312 = scalar_lea.vmem %s0, %s311
      %s313 = smul.u32 32, %s21
      %p314 = scmp.lt.s32.totalorder %s23, 0
      %s315 = scalar_select %p314, %s23, 0
      %s316 = scalar_lea.vmem %s1, %s315
      %p317 = scmp.lt.s32.totalorder %s23, 0
      %s318 = scalar_select %p317, %s23, 0
      %s319 = scalar_lea.vmem %s2, %s318
      %s320 = smul.u32 4, %s23
      %p321 = scmp.lt.s32.totalorder %s320, 3
      %s322 = scalar_select %p321, %s320, 3
      %p323 = scmp.lt.s32.totalorder %s22, 0
      %s324 = scalar_select %p323, %s22, 0
      %s325 = sadd.s32 %s324, %s322
      %s326 = smul.addr %s325, 8
      %s327 = scalar_lea.vmem %s3, %s326
      %s328 = smul.u32 4, %s23
      %p329 = scmp.lt.s32.totalorder %s22, 0
      %s330 = scalar_select %p329, %s22, 0
      %s331 = scalar_lea.vmem %s4, %s330
      %s332 = smul.u32 32, %s21
      %p333 = scmp.lt.s32.totalorder %s332, 63
      %s334 = scalar_select %p333, %s332, 63
      %p335 = scmp.lt.s32.totalorder %s22, 0
      %s336 = scalar_select %p335, %s22, 0
      %s337 = sadd.s32 %s336, %s334
      %s338 = smul.addr %s337, 8
      %s339 = scalar_lea.vmem %s5, %s338
      %s340 = smul.u32 32, %s21
      %p341 = scmp.eq.s32.totalorder %s23, 0
      // Predicated region
      $region41: #{unet_decoder_forward.19} parent=39 // pred_check
        %p342 = pneg %p341
      $region42: #{unet_decoder_forward.19} parent=39 // pred_check_branch
        %344 = sbr.rel (%p342) target = $region44
      $region43: #{unet_decoder_forward.19} parent=39 // pred_region
        %vm345 = vcmask 23552
        %346 = vst.msk [vmem:[#allocation2] sm:$0xff] %vm345, 0.0
        %347 = vst.msk [vmem:[#allocation2 + $0x8] sm:$0xff] %vm345, 0.0
        %348 = vst.msk [vmem:[#allocation2 + $0x10] sm:$0xff] %vm345, 0.0
        %349 = vst.msk [vmem:[#allocation2 + $0x18] sm:$0xff] %vm345, 0.0
        %350 = vst.msk [vmem:[#allocation2 + $0x20] sm:$0xff] %vm345, 0.0
        %351 = vst.msk [vmem:[#allocation2 + $0x28] sm:$0xff] %vm345, 0.0
        %352 = vst.msk [vmem:[#allocation2 + $0x30] sm:$0xff] %vm345, 0.0
        %353 = vst.msk [vmem:[#allocation2 + $0x38] sm:$0xff] %vm345, 0.0
        %354 = vst.msk [vmem:[#allocation2 + $0x40] sm:$0xff] %vm345, 0.0
        %355 = vst.msk [vmem:[#allocation2 + $0x48] sm:$0xff] %vm345, 0.0
        %356 = vst.msk [vmem:[#allocation2 + $0x50] sm:$0xff] %vm345, 0.0
        %357 = vst.msk [vmem:[#allocation2 + $0x58] sm:$0xff] %vm345, 0.0
        %358 = vst.msk [vmem:[#allocation2 + $0x60] sm:$0xff] %vm345, 0.0
        %359 = vst.msk [vmem:[#allocation2 + $0x68] sm:$0xff] %vm345, 0.0
        %360 = vst.msk [vmem:[#allocation2 + $0x70] sm:$0xff] %vm345, 0.0
        %361 = vst.msk [vmem:[#allocation2 + $0x78] sm:$0xff] %vm345, 0.0
        %362 = vst.msk [vmem:[#allocation2 + $0x80] sm:$0xff] %vm345, 0.0
        %363 = vst.msk [vmem:[#allocation2 + $0x88] sm:$0xff] %vm345, 0.0
        %364 = vst.msk [vmem:[#allocation2 + $0x90] sm:$0xff] %vm345, 0.0
        %365 = vst.msk [vmem:[#allocation2 + $0x98] sm:$0xff] %vm345, 0.0
        %366 = vst.msk [vmem:[#allocation2 + $0xa0] sm:$0xff] %vm345, 0.0
        %367 = vst.msk [vmem:[#allocation2 + $0xa8] sm:$0xff] %vm345, 0.0
        %368 = vst.msk [vmem:[#allocation2 + $0xb0] sm:$0xff] %vm345, 0.0
        %369 = vst.msk [vmem:[#allocation2 + $0xb8] sm:$0xff] %vm345, 0.0
        %370 = vst.msk [vmem:[#allocation2 + $0xc0] sm:$0xff] %vm345, 0.0
        %371 = vst.msk [vmem:[#allocation2 + $0xc8] sm:$0xff] %vm345, 0.0
        %372 = vst.msk [vmem:[#allocation2 + $0xd0] sm:$0xff] %vm345, 0.0
        %373 = vst.msk [vmem:[#allocation2 + $0xd8] sm:$0xff] %vm345, 0.0
        %374 = vst.msk [vmem:[#allocation2 + $0xe0] sm:$0xff] %vm345, 0.0
        %375 = vst.msk [vmem:[#allocation2 + $0xe8] sm:$0xff] %vm345, 0.0
        %376 = vst.msk [vmem:[#allocation2 + $0xf0] sm:$0xff] %vm345, 0.0
        %377 = vst.msk [vmem:[#allocation2 + $0xf8] sm:$0xff] %vm345, 0.0
      $region44: #{unet_decoder_forward.19} parent=39 // pred_fallthru
        _
      %v378 = vld [vmem:[%s312] sm:$0xff]
      %v379 = vld [vmem:[%s312 + $0x8] sm:$0xff]
      %v380 = vld [vmem:[%s312 + $0x10] sm:$0xff]
      %v381 = vld [vmem:[%s312 + $0x18] sm:$0xff]
      %v382 = vld [vmem:[%s312 + $0x20] sm:$0xff]
      %v383 = vld [vmem:[%s312 + $0x28] sm:$0xff]
      %v384 = vld [vmem:[%s312 + $0x30] sm:$0xff]
      %v385 = vld [vmem:[%s312 + $0x38] sm:$0xff]
      %v386 = vld [vmem:[%s312 + $0x40] sm:$0xff]
      %v387 = vld [vmem:[%s312 + $0x48] sm:$0xff]
      %v388 = vld [vmem:[%s312 + $0x50] sm:$0xff]
      %v389 = vld [vmem:[%s312 + $0x58] sm:$0xff]
      %v390 = vld [vmem:[%s312 + $0x60] sm:$0xff]
      %v391 = vld [vmem:[%s312 + $0x68] sm:$0xff]
      %v392 = vld [vmem:[%s312 + $0x70] sm:$0xff]
      %v393 = vld [vmem:[%s312 + $0x78] sm:$0xff]
      %v394 = vld [vmem:[%s312 + $0x80] sm:$0xff]
      %v395 = vld [vmem:[%s312 + $0x88] sm:$0xff]
      %v396 = vld [vmem:[%s312 + $0x90] sm:$0xff]
      %v397 = vld [vmem:[%s312 + $0x98] sm:$0xff]
      %v398 = vld [vmem:[%s312 + $0xa0] sm:$0xff]
      %v399 = vld [vmem:[%s312 + $0xa8] sm:$0xff]
      %v400 = vld [vmem:[%s312 + $0xb0] sm:$0xff]
      %v401 = vld [vmem:[%s312 + $0xb8] sm:$0xff]
      %v402 = vld [vmem:[%s312 + $0xc0] sm:$0xff]
      %v403 = vld [vmem:[%s312 + $0xc8] sm:$0xff]
      %v404 = vld [vmem:[%s312 + $0xd0] sm:$0xff]
      %v405 = vld [vmem:[%s312 + $0xd8] sm:$0xff]
      %v406 = vld [vmem:[%s312 + $0xe0] sm:$0xff]
      %v407 = vld [vmem:[%s312 + $0xe8] sm:$0xff]
      %v408 = vld [vmem:[%s312 + $0xf0] sm:$0xff]
      %v409 = vld [vmem:[%s312 + $0xf8] sm:$0xff]
      %v410 = vld [vmem:[%s316] sm:$0x1]
      %v412 = vperm.slane %v410, 0
      %v414 = vmul.f32 %v378, %v412
      %v415 = vmul.f32 %v379, %v412
      %v416 = vmul.f32 %v380, %v412
      %v417 = vmul.f32 %v381, %v412
      %v418 = vmul.f32 %v382, %v412
      %v419 = vmul.f32 %v383, %v412
      %v420 = vmul.f32 %v384, %v412
      %v421 = vmul.f32 %v385, %v412
      %v422 = vmul.f32 %v386, %v412
      %v423 = vmul.f32 %v387, %v412
      %v424 = vmul.f32 %v388, %v412
      %v425 = vmul.f32 %v389, %v412
      %v426 = vmul.f32 %v390, %v412
      %v427 = vmul.f32 %v391, %v412
      %v428 = vmul.f32 %v392, %v412
      %v429 = vmul.f32 %v393, %v412
      %v430 = vmul.f32 %v394, %v412
      %v431 = vmul.f32 %v395, %v412
      %v432 = vmul.f32 %v396, %v412
      %v433 = vmul.f32 %v397, %v412
      %v434 = vmul.f32 %v398, %v412
      %v435 = vmul.f32 %v399, %v412
      %v436 = vmul.f32 %v400, %v412
      %v437 = vmul.f32 %v401, %v412
      %v438 = vmul.f32 %v402, %v412
      %v439 = vmul.f32 %v403, %v412
      %v440 = vmul.f32 %v404, %v412
      %v441 = vmul.f32 %v405, %v412
      %v442 = vmul.f32 %v406, %v412
      %v443 = vmul.f32 %v407, %v412
      %v444 = vmul.f32 %v408, %v412
      %v445 = vmul.f32 %v409, %v412
      %v446 = vld [vmem:[%s319] sm:$0x1]
      %v448 = vperm.slane %v446, 0
      %v450 = vadd.f32 %v414, %v448
      %v451 = vadd.f32 %v415, %v448
      %v452 = vadd.f32 %v416, %v448
      %v453 = vadd.f32 %v417, %v448
      %v454 = vadd.f32 %v418, %v448
      %v455 = vadd.f32 %v419, %v448
      %v456 = vadd.f32 %v420, %v448
      %v457 = vadd.f32 %v421, %v448
      %v458 = vadd.f32 %v422, %v448
      %v459 = vadd.f32 %v423, %v448
      %v460 = vadd.f32 %v424, %v448
      %v461 = vadd.f32 %v425, %v448
      %v462 = vadd.f32 %v426, %v448
      %v463 = vadd.f32 %v427, %v448
      %v464 = vadd.f32 %v428, %v448
      %v465 = vadd.f32 %v429, %v448
      %v466 = vadd.f32 %v430, %v448
      %v467 = vadd.f32 %v431, %v448
      %v468 = vadd.f32 %v432, %v448
      %v469 = vadd.f32 %v433, %v448
      %v470 = vadd.f32 %v434, %v448
      %v471 = vadd.f32 %v435, %v448
      %v472 = vadd.f32 %v436, %v448
      %v473 = vadd.f32 %v437, %v448
      %v474 = vadd.f32 %v438, %v448
      %v475 = vadd.f32 %v439, %v448
      %v476 = vadd.f32 %v440, %v448
      %v477 = vadd.f32 %v441, %v448
      %v478 = vadd.f32 %v442, %v448
      %v479 = vadd.f32 %v443, %v448
      %v480 = vadd.f32 %v444, %v448
      %v481 = vadd.f32 %v445, %v448
      %v482 = vmax.f32 %v450, 0.0
      %v483 = vmax.f32 %v451, 0.0
      %v484 = vmax.f32 %v452, 0.0
      %v485 = vmax.f32 %v453, 0.0
      %v486 = vmax.f32 %v454, 0.0
      %v487 = vmax.f32 %v455, 0.0
      %v488 = vmax.f32 %v456, 0.0
      %v489 = vmax.f32 %v457, 0.0
      %v490 = vmax.f32 %v458, 0.0
      %v491 = vmax.f32 %v459, 0.0
      %v492 = vmax.f32 %v460, 0.0
      %v493 = vmax.f32 %v461, 0.0
      %v494 = vmax.f32 %v462, 0.0
      %v495 = vmax.f32 %v463, 0.0
      %v496 = vmax.f32 %v464, 0.0
      %v497 = vmax.f32 %v465, 0.0
      %v498 = vmax.f32 %v466, 0.0
      %v499 = vmax.f32 %v467, 0.0
      %v500 = vmax.f32 %v468, 0.0
      %v501 = vmax.f32 %v469, 0.0
      %v502 = vmax.f32 %v470, 0.0
      %v503 = vmax.f32 %v471, 0.0
      %v504 = vmax.f32 %v472, 0.0
      %v505 = vmax.f32 %v473, 0.0
      %v506 = vmax.f32 %v474, 0.0
      %v507 = vmax.f32 %v475, 0.0
      %v508 = vmax.f32 %v476, 0.0
      %v509 = vmax.f32 %v477, 0.0
      %v510 = vmax.f32 %v478, 0.0
      %v511 = vmax.f32 %v479, 0.0
      %v512 = vmax.f32 %v480, 0.0
      %v513 = vmax.f32 %v481, 0.0
      %v514 = vld [vmem:[#allocation2] sm:$0xff]
      %v515 = vld [vmem:[#allocation2 + $0x8] sm:$0xff]
      %v516 = vld [vmem:[#allocation2 + $0x10] sm:$0xff]
      %v517 = vld [vmem:[#allocation2 + $0x18] sm:$0xff]
      %v518 = vld [vmem:[#allocation2 + $0x20] sm:$0xff]
      %v519 = vld [vmem:[#allocation2 + $0x28] sm:$0xff]
      %v520 = vld [vmem:[#allocation2 + $0x30] sm:$0xff]
      %v521 = vld [vmem:[#allocation2 + $0x38] sm:$0xff]
      %v522 = vld [vmem:[#allocation2 + $0x40] sm:$0xff]
      %v523 = vld [vmem:[#allocation2 + $0x48] sm:$0xff]
      %v524 = vld [vmem:[#allocation2 + $0x50] sm:$0xff]
      %v525 = vld [vmem:[#allocation2 + $0x58] sm:$0xff]
      %v526 = vld [vmem:[#allocation2 + $0x60] sm:$0xff]
      %v527 = vld [vmem:[#allocation2 + $0x68] sm:$0xff]
      %v528 = vld [vmem:[#allocation2 + $0x70] sm:$0xff]
      %v529 = vld [vmem:[#allocation2 + $0x78] sm:$0xff]
      %v530 = vld [vmem:[#allocation2 + $0x80] sm:$0xff]
      %v531 = vld [vmem:[#allocation2 + $0x88] sm:$0xff]
      %v532 = vld [vmem:[#allocation2 + $0x90] sm:$0xff]
      %v533 = vld [vmem:[#allocation2 + $0x98] sm:$0xff]
      %v534 = vld [vmem:[#allocation2 + $0xa0] sm:$0xff]
      %v535 = vld [vmem:[#allocation2 + $0xa8] sm:$0xff]
      %v536 = vld [vmem:[#allocation2 + $0xb0] sm:$0xff]
      %v537 = vld [vmem:[#allocation2 + $0xb8] sm:$0xff]
      %v538 = vld [vmem:[#allocation2 + $0xc0] sm:$0xff]
      %v539 = vld [vmem:[#allocation2 + $0xc8] sm:$0xff]
      %v540 = vld [vmem:[#allocation2 + $0xd0] sm:$0xff]
      %v541 = vld [vmem:[#allocation2 + $0xd8] sm:$0xff]
      %v542 = vld [vmem:[#allocation2 + $0xe0] sm:$0xff]
      %v543 = vld [vmem:[#allocation2 + $0xe8] sm:$0xff]
      %v544 = vld [vmem:[#allocation2 + $0xf0] sm:$0xff]
      %v545 = vld [vmem:[#allocation2 + $0xf8] sm:$0xff]
      %v546 = vld [vmem:[%s327] sm:$0xff]
      %v547 = vld [vmem:[%s327 + $0x8] sm:$0xff]
      %v548 = vld [vmem:[%s327 + $0x10] sm:$0xff]
      %v549 = vld [vmem:[%s327 + $0x18] sm:$0xff]
      %vm550 = vcmask 261120
      %v552 = vsel %vm550, %v482, 0
      %v555 = vsel %vm550, %v483, 0
      %v558 = vsel %vm550, %v484, 0
      %v561 = vsel %vm550, %v485, 0
      %v564 = vsel %vm550, %v486, 0
      %v567 = vsel %vm550, %v487, 0
      %v570 = vsel %vm550, %v488, 0
      %v573 = vsel %vm550, %v489, 0
      %v576 = vsel %vm550, %v490, 0
      %v579 = vsel %vm550, %v491, 0
      %v582 = vsel %vm550, %v492, 0
      %v585 = vsel %vm550, %v493, 0
      %v588 = vsel %vm550, %v494, 0
      %v591 = vsel %vm550, %v495, 0
      %v594 = vsel %vm550, %v496, 0
      %v597 = vsel %vm550, %v497, 0
      %v600 = vsel %vm550, %v498, 0
      %v603 = vsel %vm550, %v499, 0
      %v606 = vsel %vm550, %v500, 0
      %v609 = vsel %vm550, %v501, 0
      %v612 = vsel %vm550, %v502, 0
      %v615 = vsel %vm550, %v503, 0
      %v618 = vsel %vm550, %v504, 0
      %v621 = vsel %vm550, %v505, 0
      %v624 = vsel %vm550, %v506, 0
      %v627 = vsel %vm550, %v507, 0
      %v630 = vsel %vm550, %v508, 0
      %v633 = vsel %vm550, %v509, 0
      %v636 = vsel %vm550, %v510, 0
      %v639 = vsel %vm550, %v511, 0
      %v642 = vsel %vm550, %v512, 0
      %v645 = vsel %vm550, %v513, 0
      %647 = vmatpush.msra.mxu0 0.0
      %648 = vmatpush.msra.mxu0 0.0
      %649 = vmatpush.msra.mxu0 0.0
      %650 = vmatpush.msra.mxu0 0.0
      %651 = vmatpush.msra.mxu0 0.0
      %652 = vmatpush.msra.mxu0 0.0
      %653 = vmatpush.msra.mxu0 0.0
      %654 = vmatpush.msra.mxu0 0.0
      %655 = vmatpush.msra.mxu0 0.0
      %656 = vmatpush.msra.mxu0 0.0
      %657 = vmatpush.msra.mxu0 0.0
      %658 = vmatpush.msra.mxu0 0.0
      %659 = vmatpush.msra.mxu0 %v549
      %660 = vmatpush.msra.mxu0 %v548
      %661 = vmatpush.msra.mxu0 %v547
      %662 = vmatpush.msra.mxu0 %v546
      %663 = vmatmul.f32.gmra.mxu0 %v552
      %v664 = vpop.f32.mrf.mxu0
      %v665 = vadd.f32 0.0, %v664
      %666 = vmatmul.f32.gmra.mxu0 %v555
      %v667 = vpop.f32.mrf.mxu0
      %v668 = vadd.f32 0.0, %v667
      %669 = vmatmul.f32.gmra.mxu0 %v558
      %v670 = vpop.f32.mrf.mxu0
      %v671 = vadd.f32 0.0, %v670
      %672 = vmatmul.f32.gmra.mxu0 %v561
      %v673 = vpop.f32.mrf.mxu0
      %v674 = vadd.f32 0.0, %v673
      %675 = vmatmul.f32.gmra.mxu0 %v564
      %v676 = vpop.f32.mrf.mxu0
      %v677 = vadd.f32 0.0, %v676
      %678 = vmatmul.f32.gmra.mxu0 %v567
      %v679 = vpop.f32.mrf.mxu0
      %v680 = vadd.f32 0.0, %v679
      %681 = vmatmul.f32.gmra.mxu0 %v570
      %v682 = vpop.f32.mrf.mxu0
      %v683 = vadd.f32 0.0, %v682
      %684 = vmatmul.f32.gmra.mxu0 %v573
      %v685 = vpop.f32.mrf.mxu0
      %v686 = vadd.f32 0.0, %v685
      %687 = vmatmul.f32.gmra.mxu0 %v576
      %v688 = vpop.f32.mrf.mxu0
      %v689 = vadd.f32 0.0, %v688
      %690 = vmatmul.f32.gmra.mxu0 %v579
      %v691 = vpop.f32.mrf.mxu0
      %v692 = vadd.f32 0.0, %v691
      %693 = vmatmul.f32.gmra.mxu0 %v582
      %v694 = vpop.f32.mrf.mxu0
      %v695 = vadd.f32 0.0, %v694
      %696 = vmatmul.f32.gmra.mxu0 %v585
      %v697 = vpop.f32.mrf.mxu0
      %v698 = vadd.f32 0.0, %v697
      %699 = vmatmul.f32.gmra.mxu0 %v588
      %v700 = vpop.f32.mrf.mxu0
      %v701 = vadd.f32 0.0, %v700
      %702 = vmatmul.f32.gmra.mxu0 %v591
      %v703 = vpop.f32.mrf.mxu0
      %v704 = vadd.f32 0.0, %v703
      %705 = vmatmul.f32.gmra.mxu0 %v594
      %v706 = vpop.f32.mrf.mxu0
      %v707 = vadd.f32 0.0, %v706
      %708 = vmatmul.f32.gmra.mxu0 %v597
      %v709 = vpop.f32.mrf.mxu0
      %v710 = vadd.f32 0.0, %v709
      %711 = vmatmul.f32.gmra.mxu0 %v600
      %v712 = vpop.f32.mrf.mxu0
      %v713 = vadd.f32 0.0, %v712
      %714 = vmatmul.f32.gmra.mxu0 %v603
      %v715 = vpop.f32.mrf.mxu0
      %v716 = vadd.f32 0.0, %v715
      %717 = vmatmul.f32.gmra.mxu0 %v606
      %v718 = vpop.f32.mrf.mxu0
      %v719 = vadd.f32 0.0, %v718
      %720 = vmatmul.f32.gmra.mxu0 %v609
      %v721 = vpop.f32.mrf.mxu0
      %v722 = vadd.f32 0.0, %v721
      %723 = vmatmul.f32.gmra.mxu0 %v612
      %v724 = vpop.f32.mrf.mxu0
      %v725 = vadd.f32 0.0, %v724
      %726 = vmatmul.f32.gmra.mxu0 %v615
      %v727 = vpop.f32.mrf.mxu0
      %v728 = vadd.f32 0.0, %v727
      %729 = vmatmul.f32.gmra.mxu0 %v618
      %v730 = vpop.f32.mrf.mxu0
      %v731 = vadd.f32 0.0, %v730
      %732 = vmatmul.f32.gmra.mxu0 %v621
      %v733 = vpop.f32.mrf.mxu0
      %v734 = vadd.f32 0.0, %v733
      %735 = vmatmul.f32.gmra.mxu0 %v624
      %v736 = vpop.f32.mrf.mxu0
      %v737 = vadd.f32 0.0, %v736
      %738 = vmatmul.f32.gmra.mxu0 %v627
      %v739 = vpop.f32.mrf.mxu0
      %v740 = vadd.f32 0.0, %v739
      %741 = vmatmul.f32.gmra.mxu0 %v630
      %v742 = vpop.f32.mrf.mxu0
      %v743 = vadd.f32 0.0, %v742
      %744 = vmatmul.f32.gmra.mxu0 %v633
      %v745 = vpop.f32.mrf.mxu0
      %v746 = vadd.f32 0.0, %v745
      %747 = vmatmul.f32.gmra.mxu0 %v636
      %v748 = vpop.f32.mrf.mxu0
      %v749 = vadd.f32 0.0, %v748
      %750 = vmatmul.f32.gmra.mxu0 %v639
      %v751 = vpop.f32.mrf.mxu0
      %v752 = vadd.f32 0.0, %v751
      %753 = vmatmul.f32.gmra.mxu0 %v642
      %v754 = vpop.f32.mrf.mxu0
      %v755 = vadd.f32 0.0, %v754
      %756 = vmatmul.f32.gmra.mxu0 %v645
      %v757 = vpop.f32.mrf.mxu0
      %v758 = vadd.f32 0.0, %v757
      %759 = vdwg.mxu0
      %v760 = vadd.f32 %v514, %v665
      %v761 = vadd.f32 %v515, %v668
      %v762 = vadd.f32 %v516, %v671
      %v763 = vadd.f32 %v517, %v674
      %v764 = vadd.f32 %v518, %v677
      %v765 = vadd.f32 %v519, %v680
      %v766 = vadd.f32 %v520, %v683
      %v767 = vadd.f32 %v521, %v686
      %v768 = vadd.f32 %v522, %v689
      %v769 = vadd.f32 %v523, %v692
      %v770 = vadd.f32 %v524, %v695
      %v771 = vadd.f32 %v525, %v698
      %v772 = vadd.f32 %v526, %v701
      %v773 = vadd.f32 %v527, %v704
      %v774 = vadd.f32 %v528, %v707
      %v775 = vadd.f32 %v529, %v710
      %v776 = vadd.f32 %v530, %v713
      %v777 = vadd.f32 %v531, %v716
      %v778 = vadd.f32 %v532, %v719
      %v779 = vadd.f32 %v533, %v722
      %v780 = vadd.f32 %v534, %v725
      %v781 = vadd.f32 %v535, %v728
      %v782 = vadd.f32 %v536, %v731
      %v783 = vadd.f32 %v537, %v734
      %v784 = vadd.f32 %v538, %v737
      %v785 = vadd.f32 %v539, %v740
      %v786 = vadd.f32 %v540, %v743
      %v787 = vadd.f32 %v541, %v746
      %v788 = vadd.f32 %v542, %v749
      %v789 = vadd.f32 %v543, %v752
      %v790 = vadd.f32 %v544, %v755
      %v791 = vadd.f32 %v545, %v758
      %vm792 = vcmask 23552
      %793 = vst.msk [vmem:[#allocation2] sm:$0xff] %vm792, %v760
      %794 = vst.msk [vmem:[#allocation2 + $0x8] sm:$0xff] %vm792, %v761
      %795 = vst.msk [vmem:[#allocation2 + $0x10] sm:$0xff] %vm792, %v762
      %796 = vst.msk [vmem:[#allocation2 + $0x18] sm:$0xff] %vm792, %v763
      %797 = vst.msk [vmem:[#allocation2 + $0x20] sm:$0xff] %vm792, %v764
      %798 = vst.msk [vmem:[#allocation2 + $0x28] sm:$0xff] %vm792, %v765
      %799 = vst.msk [vmem:[#allocation2 + $0x30] sm:$0xff] %vm792, %v766
      %800 = vst.msk [vmem:[#allocation2 + $0x38] sm:$0xff] %vm792, %v767
      %801 = vst.msk [vmem:[#allocation2 + $0x40] sm:$0xff] %vm792, %v768
      %802 = vst.msk [vmem:[#allocation2 + $0x48] sm:$0xff] %vm792, %v769
      %803 = vst.msk [vmem:[#allocation2 + $0x50] sm:$0xff] %vm792, %v770
      %804 = vst.msk [vmem:[#allocation2 + $0x58] sm:$0xff] %vm792, %v771
      %805 = vst.msk [vmem:[#allocation2 + $0x60] sm:$0xff] %vm792, %v772
      %806 = vst.msk [vmem:[#allocation2 + $0x68] sm:$0xff] %vm792, %v773
      %807 = vst.msk [vmem:[#allocation2 + $0x70] sm:$0xff] %vm792, %v774
      %808 = vst.msk [vmem:[#allocation2 + $0x78] sm:$0xff] %vm792, %v775
      %809 = vst.msk [vmem:[#allocation2 + $0x80] sm:$0xff] %vm792, %v776
      %810 = vst.msk [vmem:[#allocation2 + $0x88] sm:$0xff] %vm792, %v777
      %811 = vst.msk [vmem:[#allocation2 + $0x90] sm:$0xff] %vm792, %v778
      %812 = vst.msk [vmem:[#allocation2 + $0x98] sm:$0xff] %vm792, %v779
      %813 = vst.msk [vmem:[#allocation2 + $0xa0] sm:$0xff] %vm792, %v780
      %814 = vst.msk [vmem:[#allocation2 + $0xa8] sm:$0xff] %vm792, %v781
      %815 = vst.msk [vmem:[#allocation2 + $0xb0] sm:$0xff] %vm792, %v782
      %816 = vst.msk [vmem:[#allocation2 + $0xb8] sm:$0xff] %vm792, %v783
      %817 = vst.msk [vmem:[#allocation2 + $0xc0] sm:$0xff] %vm792, %v784
      %818 = vst.msk [vmem:[#allocation2 + $0xc8] sm:$0xff] %vm792, %v785
      %819 = vst.msk [vmem:[#allocation2 + $0xd0] sm:$0xff] %vm792, %v786
      %820 = vst.msk [vmem:[#allocation2 + $0xd8] sm:$0xff] %vm792, %v787
      %821 = vst.msk [vmem:[#allocation2 + $0xe0] sm:$0xff] %vm792, %v788
      %822 = vst.msk [vmem:[#allocation2 + $0xe8] sm:$0xff] %vm792, %v789
      %823 = vst.msk [vmem:[#allocation2 + $0xf0] sm:$0xff] %vm792, %v790
      %824 = vst.msk [vmem:[#allocation2 + $0xf8] sm:$0xff] %vm792, %v791
      // Predicated region
      $region45: #{unet_decoder_forward.19} parent=39 // pred_check
        %p825 = pneg %p341
      $region46: #{unet_decoder_forward.19} parent=39 // pred_check_branch
        %827 = sbr.rel (%p825) target = $region48
      $region47: #{unet_decoder_forward.19} parent=39 // pred_region
        %v828 = vld [vmem:[#allocation2] sm:$0xff]
        %v829 = vld [vmem:[#allocation2 + $0x8] sm:$0xff]
        %v830 = vld [vmem:[#allocation2 + $0x10] sm:$0xff]
        %v831 = vld [vmem:[#allocation2 + $0x18] sm:$0xff]
        %v832 = vld [vmem:[#allocation2 + $0x20] sm:$0xff]
        %v833 = vld [vmem:[#allocation2 + $0x28] sm:$0xff]
        %v834 = vld [vmem:[#allocation2 + $0x30] sm:$0xff]
        %v835 = vld [vmem:[#allocation2 + $0x38] sm:$0xff]
        %v836 = vld [vmem:[#allocation2 + $0x40] sm:$0xff]
        %v837 = vld [vmem:[#allocation2 + $0x48] sm:$0xff]
        %v838 = vld [vmem:[#allocation2 + $0x50] sm:$0xff]
        %v839 = vld [vmem:[#allocation2 + $0x58] sm:$0xff]
        %v840 = vld [vmem:[#allocation2 + $0x60] sm:$0xff]
        %v841 = vld [vmem:[#allocation2 + $0x68] sm:$0xff]
        %v842 = vld [vmem:[#allocation2 + $0x70] sm:$0xff]
        %v843 = vld [vmem:[#allocation2 + $0x78] sm:$0xff]
        %v844 = vld [vmem:[#allocation2 + $0x80] sm:$0xff]
        %v845 = vld [vmem:[#allocation2 + $0x88] sm:$0xff]
        %v846 = vld [vmem:[#allocation2 + $0x90] sm:$0xff]
        %v847 = vld [vmem:[#allocation2 + $0x98] sm:$0xff]
        %v848 = vld [vmem:[#allocation2 + $0xa0] sm:$0xff]
        %v849 = vld [vmem:[#allocation2 + $0xa8] sm:$0xff]
        %v850 = vld [vmem:[#allocation2 + $0xb0] sm:$0xff]
        %v851 = vld [vmem:[#allocation2 + $0xb8] sm:$0xff]
        %v852 = vld [vmem:[#allocation2 + $0xc0] sm:$0xff]
        %v853 = vld [vmem:[#allocation2 + $0xc8] sm:$0xff]
        %v854 = vld [vmem:[#allocation2 + $0xd0] sm:$0xff]
        %v855 = vld [vmem:[#allocation2 + $0xd8] sm:$0xff]
        %v856 = vld [vmem:[#allocation2 + $0xe0] sm:$0xff]
        %v857 = vld [vmem:[#allocation2 + $0xe8] sm:$0xff]
        %v858 = vld [vmem:[#allocation2 + $0xf0] sm:$0xff]
        %v859 = vld [vmem:[#allocation2 + $0xf8] sm:$0xff]
        %v860 = vld [vmem:[%s331] sm:$0x1]
        %v862 = vperm.slane %v860, 0
        %v864 = vadd.f32 %v828, %v862
        %v865 = vadd.f32 %v829, %v862
        %v866 = vadd.f32 %v830, %v862
        %v867 = vadd.f32 %v831, %v862
        %v868 = vadd.f32 %v832, %v862
        %v869 = vadd.f32 %v833, %v862
        %v870 = vadd.f32 %v834, %v862
        %v871 = vadd.f32 %v835, %v862
        %v872 = vadd.f32 %v836, %v862
        %v873 = vadd.f32 %v837, %v862
        %v874 = vadd.f32 %v838, %v862
        %v875 = vadd.f32 %v839, %v862
        %v876 = vadd.f32 %v840, %v862
        %v877 = vadd.f32 %v841, %v862
        %v878 = vadd.f32 %v842, %v862
        %v879 = vadd.f32 %v843, %v862
        %v880 = vadd.f32 %v844, %v862
        %v881 = vadd.f32 %v845, %v862
        %v882 = vadd.f32 %v846, %v862
        %v883 = vadd.f32 %v847, %v862
        %v884 = vadd.f32 %v848, %v862
        %v885 = vadd.f32 %v849, %v862
        %v886 = vadd.f32 %v850, %v862
        %v887 = vadd.f32 %v851, %v862
        %v888 = vadd.f32 %v852, %v862
        %v889 = vadd.f32 %v853, %v862
        %v890 = vadd.f32 %v854, %v862
        %v891 = vadd.f32 %v855, %v862
        %v892 = vadd.f32 %v856, %v862
        %v893 = vadd.f32 %v857, %v862
        %v894 = vadd.f32 %v858, %v862
        %v895 = vadd.f32 %v859, %v862
        %896 = vst.msk [vmem:[%s339] sm:$0xff] %vm792, %v864
        %897 = vst.msk [vmem:[%s339 + $0x8] sm:$0xff] %vm792, %v865
        %898 = vst.msk [vmem:[%s339 + $0x10] sm:$0xff] %vm792, %v866
        %899 = vst.msk [vmem:[%s339 + $0x18] sm:$0xff] %vm792, %v867
        %900 = vst.msk [vmem:[%s339 + $0x20] sm:$0xff] %vm792, %v868
        %901 = vst.msk [vmem:[%s339 + $0x28] sm:$0xff] %vm792, %v869
        %902 = vst.msk [vmem:[%s339 + $0x30] sm:$0xff] %vm792, %v870
        %903 = vst.msk [vmem:[%s339 + $0x38] sm:$0xff] %vm792, %v871
        %904 = vst.msk [vmem:[%s339 + $0x40] sm:$0xff] %vm792, %v872
        %905 = vst.msk [vmem:[%s339 + $0x48] sm:$0xff] %vm792, %v873
        %906 = vst.msk [vmem:[%s339 + $0x50] sm:$0xff] %vm792, %v874
        %907 = vst.msk [vmem:[%s339 + $0x58] sm:$0xff] %vm792, %v875
        %908 = vst.msk [vmem:[%s339 + $0x60] sm:$0xff] %vm792, %v876
        %909 = vst.msk [vmem:[%s339 + $0x68] sm:$0xff] %vm792, %v877
        %910 = vst.msk [vmem:[%s339 + $0x70] sm:$0xff] %vm792, %v878
        %911 = vst.msk [vmem:[%s339 + $0x78] sm:$0xff] %vm792, %v879
        %912 = vst.msk [vmem:[%s339 + $0x80] sm:$0xff] %vm792, %v880
        %913 = vst.msk [vmem:[%s339 + $0x88] sm:$0xff] %vm792, %v881
        %914 = vst.msk [vmem:[%s339 + $0x90] sm:$0xff] %vm792, %v882
        %915 = vst.msk [vmem:[%s339 + $0x98] sm:$0xff] %vm792, %v883
        %916 = vst.msk [vmem:[%s339 + $0xa0] sm:$0xff] %vm792, %v884
        %917 = vst.msk [vmem:[%s339 + $0xa8] sm:$0xff] %vm792, %v885
        %918 = vst.msk [vmem:[%s339 + $0xb0] sm:$0xff] %vm792, %v886
        %919 = vst.msk [vmem:[%s339 + $0xb8] sm:$0xff] %vm792, %v887
        %920 = vst.msk [vmem:[%s339 + $0xc0] sm:$0xff] %vm792, %v888
        %921 = vst.msk [vmem:[%s339 + $0xc8] sm:$0xff] %vm792, %v889
        %922 = vst.msk [vmem:[%s339 + $0xd0] sm:$0xff] %vm792, %v890
        %923 = vst.msk [vmem:[%s339 + $0xd8] sm:$0xff] %vm792, %v891
        %924 = vst.msk [vmem:[%s339 + $0xe0] sm:$0xff] %vm792, %v892
        %925 = vst.msk [vmem:[%s339 + $0xe8] sm:$0xff] %vm792, %v893
        %926 = vst.msk [vmem:[%s339 + $0xf0] sm:$0xff] %vm792, %v894
        %927 = vst.msk [vmem:[%s339 + $0xf8] sm:$0xff] %vm792, %v895
      $region48: #{unet_decoder_forward.19} parent=39 // pred_fallthru
        _
      %s928 = smul.u32 32, %s21
      %p929 = scmp.lt.s32.totalorder %s928, 63
      %s930 = scalar_select %p929, %s928, 63
      %p931 = scmp.lt.s32.totalorder %s22, 0
      %s932 = scalar_select %p931, %s22, 0
      %s933 = sadd.s32 %s932, %s930
      %s934 = smul.addr %s933, 8
      %s935 = scalar_lea.vmem %s5, %s934
      // Predicated region
      $region49: #{unet_decoder_forward.19} parent=39 // pred_check
        %p936 = pneg %p189
      $region50: #{unet_decoder_forward.19} parent=39 // pred_check_branch
        %938 = sbr.rel (%p936) target = $region52
      $region51: #{unet_decoder_forward.19} parent=39 // pred_region
        %s939 = smul.u32 32, %s21
      $region52: #{unet_decoder_forward.19} parent=39 // pred_fallthru
        _
    $region40: #{unet_decoder_forward.19} parent=5 // pred_fallthru
      _
    %p940 = scmp.le.s32.totalorder 2, %s11
    // Predicated region
    $region53: #{unet_decoder_forward.19} parent=5 // pred_check
      %p941 = pneg %p940
    $region54: #{unet_decoder_forward.19} parent=5 // pred_check_branch
      %943 = sbr.rel (%p941) target = $region56
    $region55: #{unet_decoder_forward.19} parent=5 // pred_region
      %s944 = ssub.s32 %s11, 2
      // Predicated region
      $region57: #{unet_decoder_forward.19} parent=55 // pred_check
        %p945 = pneg %p195
      $region58: #{unet_decoder_forward.19} parent=55 // pred_check_branch
        %947 = sbr.rel (%p945) target = $region60
      $region59: #{unet_decoder_forward.19} parent=55 // pred_region
        %s948 = smul.u32 32, %s24
        %p949 = scmp.lt.s32.totalorder %s948, 63
        %s950 = scalar_select %p949, %s948, 63
        %p951 = scmp.lt.s32.totalorder %s25, 0
        %s952 = scalar_select %p951, %s25, 0
        %s953 = sadd.s32 %s952, %s950
        %s954 = smul.addr %s953, 8
        %s955 = scalar_lea.vmem %s5, %s954
      $region60: #{unet_decoder_forward.19} parent=55 // pred_fallthru
        _
    $region56: #{unet_decoder_forward.19} parent=5 // pred_fallthru
      _
  $region6: #{unet_decoder_forward.19} parent=0 // loop_footer
    %s15 = sadd.s32 1, %s11
  $region7: #{unet_decoder_forward.19} parent=0 // loop_footer_branch
    %10 = sbr.rel target = $region3
  $region8: #{unet_decoder_forward.19} parent=0 // loop_exit
    _

</llo_original>
